<compile_context>
chip_gen: v7x
topology: tpu7x:2x2x1
jax: 0.10.0
libtpu: 0.0.40
codegen_flags: <defaults>
</compile_context>

<pallas_src>
import functools
import math

import jax
import jax.numpy as jnp
from jax import lax
from jax.experimental import pallas as pl
from jax.experimental.pallas import tpu as pltpu

EPS = 1e-5
LANE = 128


def _round_up(n, m):
    return ((n + m - 1) // m) * m


def _bottleneck_kernel(xpad_ref, w1_ref, g1_ref, b1_ref, w2_ref, g2_ref, b2_ref,
                       out_ref, ypad_ref, *, N, H, W, Cin, C1p, C2p):
    """Fused (conv3x3 -> BN(train) -> ReLU) x 2, everything resident in VMEM.

    xpad_ref: (N, H+2, W+2, Cin)  halo-padded NHWC input
    w1_ref  : (9, Cin, C1p)       stage-1 weights, one block per (dy, dx)
    g1/b1   : (1, C1p)            BN1 gamma / beta (padded entries = 0)
    w2_ref  : (9, C1p, C2p)       stage-2 weights (input channels lane-padded)
    g2/b2   : (1, C2p)
    out_ref : (N, H, W, C2p)      lane-dense NHWC output
    ypad_ref: (N, H+2, W+2, C1p)  VMEM scratch: halo-padded stage-1 activation
    """
    M = N * H * W
    inv_m = 1.0 / M
    ones_m = jnp.ones((1, M), jnp.float32)
    offs = [(dy, dx) for dy in range(3) for dx in range(3)]

    def conv9(src_ref, w_ref, cin, cout):
        # Nine accumulating K=cin matmuls; no (M, 9*cin) im2col temp.
        acc = jnp.zeros((M, cout), jnp.float32)
        for k, (dy, dx) in enumerate(offs):          # static, fully unrolled
            slab = src_ref[:, dy:dy + H, dx:dx + W, :].reshape(M, cin)
            acc = acc + jnp.dot(slab, w_ref[k],
                                preferred_element_type=jnp.float32)
        return acc

    def bn_relu(acc, gamma, beta):
        # Single-pass per-channel stats on the MXU (ones-vector matmuls),
        # folded into one per-channel affine => epilogue is mul/add/max only.
        s = jnp.dot(ones_m, acc, preferred_element_type=jnp.float32)
        sq = jnp.dot(ones_m, acc * acc, preferred_element_type=jnp.float32)
        mean = s * inv_m
        var = jnp.maximum(sq * inv_m - mean * mean, 0.0)
        scale = gamma * lax.rsqrt(var + EPS)          # (1, C)
        shift = beta - mean * scale                   # (1, C)
        return jnp.maximum(acc * scale + shift, 0.0)

    # ---- stage 1: conv3x3 + BN + ReLU ------------------------------------
    acc1 = conv9(xpad_ref, w1_ref, Cin, C1p)
    y1 = bn_relu(acc1, g1_ref[...], b1_ref[...])                 # (M, C1p)

    # ---- halo-pad the intermediate: zero only the 1-px ring ---------------
    zrow = jnp.zeros((N, 1, W + 2, C1p), jnp.float32)
    zcol = jnp.zeros((N, H, 1, C1p), jnp.float32)
    ypad_ref[:, 0:1, :, :] = zrow
    ypad_ref[:, H + 1:H + 2, :, :] = zrow
    ypad_ref[:, 1:H + 1, 0:1, :] = zcol
    ypad_ref[:, 1:H + 1, W + 1:W + 2, :] = zcol
    ypad_ref[:, 1:H + 1, 1:W + 1, :] = y1.reshape(N, H, W, C1p)

    # ---- stage 2: conv3x3 + BN + ReLU ------------------------------------
    acc2 = conv9(ypad_ref, w2_ref, C1p, C2p)
    y2 = bn_relu(acc2, g2_ref[...], b2_ref[...])                 # (M, C2p)

    out_ref[...] = y2.reshape(N, H, W, C2p)


def _pack_weight(w, cin_pad, cout_pad):
    """(3, 3, cin, cout) HWIO -> (9, cin_pad, cout_pad), zero padded."""
    kh, kw, cin, cout = w.shape
    w = jnp.pad(w, ((0, 0), (0, 0), (0, cin_pad - cin), (0, cout_pad - cout)))
    return w.reshape(kh * kw, cin_pad, cout_pad)


def _pad_vec(v, cpad):
    return jnp.pad(v, (0, cpad - v.shape[0])).reshape(1, cpad)


def _tile_bytes(shape, elem=4):
    """Bytes of a VMEM-resident f32 array including (8,128) layout padding."""
    s = list(shape)
    s[-1] = _round_up(s[-1], LANE)
    if len(s) >= 2:
        s[-2] = _round_up(s[-2], 8)
    return int(math.prod(s)) * elem


def _vmem_limit_bytes(N, H, W, Cin, C1p, C2p):
    M = N * H * W
    need = 0
    need += _tile_bytes((N, H + 2, W + 2, Cin))          # padded input
    need += _tile_bytes((9, Cin, C1p)) + _tile_bytes((9, C1p, C2p))
    need += 4 * _tile_bytes((1, max(C1p, C2p)))          # gamma/beta rows
    need += _tile_bytes((N, H, W, C2p))                  # output
    need += _tile_bytes((N, H + 2, W + 2, C1p))          # ypad scratch
    need += 6 * _tile_bytes((M, max(C1p, C2p)))          # acc/slab/sq temps
    need = 2 * need + (4 << 20)                          # margin for temps
    return max(16 << 20, min(need, 64 << 20))            # v7x physical ceiling


@jax.jit
def bottleneck_forward(x_nchw, params):
    """BottleNeck forward. x_nchw: (N, Cin, H, W) -> (N, Cout, H, W)."""
    x = jnp.transpose(x_nchw, (0, 2, 3, 1)).astype(jnp.float32)      # NHWC
    N, H, W, Cin = x.shape
    C1 = params["w1"].shape[-1]
    C2 = params["w2"].shape[-1]
    C1p, C2p = _round_up(C1, LANE), _round_up(C2, LANE)

    xpad = jnp.pad(x, ((0, 0), (1, 1), (1, 1), (0, 0)))              # 1-px halo
    w1 = _pack_weight(params["w1"], Cin, C1p)                        # (9,Cin,C1p)
    w2 = _pack_weight(params["w2"], C1p, C2p)                        # (9,C1p,C2p)
    g1, b1 = _pad_vec(params["g1"], C1p), _pad_vec(params["beta1"], C1p)
    g2, b2 = _pad_vec(params["g2"], C2p), _pad_vec(params["beta2"], C2p)
    # NOTE: conv biases params["b1"]/["b2"] intentionally unused: a per-channel
    # constant is exactly removed by train-mode BN mean subtraction.

    kernel = functools.partial(_bottleneck_kernel,
                               N=N, H=H, W=W, Cin=Cin, C1p=C1p, C2p=C2p)
    vmem = pl.BlockSpec(memory_space=pltpu.MemorySpace.VMEM)
    y = pl.pallas_call(
        kernel,
        out_shape=jax.ShapeDtypeStruct((N, H, W, C2p), jnp.float32),
        in_specs=[vmem] * 7,
        out_specs=vmem,
        scratch_shapes=[pltpu.VMEM((N, H + 2, W + 2, C1p), jnp.float32)],
        compiler_params=pltpu.CompilerParams(
            vmem_limit_bytes=_vmem_limit_bytes(N, H, W, Cin, C1p, C2p)),
    )(xpad, w1, g1, b1, w2, g2, b2)

    return jnp.transpose(y[..., :C2], (0, 3, 1, 2))                  # NCHW


def make_params(key, in_channel, out_channel):
    k1, k2, k3, k4 = jax.random.split(key, 4)
    return {
        "w1": 0.1 * jax.random.normal(k1, (3, 3, in_channel, out_channel), jnp.float32),
        "b1": 0.05 * jax.random.normal(k2, (out_channel,), jnp.float32),
        "g1": jnp.ones((out_channel,), jnp.float32),     # BN default init
        "beta1": jnp.zeros((out_channel,), jnp.float32),
        "w2": 0.1 * jax.random.normal(k3, (3, 3, out_channel, out_channel), jnp.float32),
        "b2": 0.05 * jax.random.normal(k4, (out_channel,), jnp.float32),
        "g2": jnp.ones((out_channel,), jnp.float32),
        "beta2": jnp.zeros((out_channel,), jnp.float32),
    }


def _reference(x_nchw, params):
    """Pure-JAX reference (lax conv + bias + train-mode BN + ReLU)."""
    def stage(x, w, b, g, beta):
        y = lax.conv_general_dilated(
            x, w, window_strides=(1, 1), padding="SAME",
            dimension_numbers=("NHWC", "HWIO", "NHWC"),
            precision=lax.Precision.HIGHEST) + b
        mean = jnp.mean(y, axis=(0, 1, 2), keepdims=True)
        var = jnp.mean((y - mean) ** 2, axis=(0, 1, 2), keepdims=True)
        y = (y - mean) * lax.rsqrt(var + EPS) * g + beta
        return jnp.maximum(y, 0.0)

    x = jnp.transpose(x_nchw, (0, 2, 3, 1)).astype(jnp.float32)
    y = stage(x, params["w1"], params["b1"], params["g1"], params["beta1"])
    y = stage(y, params["w2"], params["b2"], params["g2"], params["beta2"])
    return jnp.transpose(y, (0, 3, 1, 2))


if __name__ == "__main__":
    N, Cin, Cout, H, W = 2, 4, 8, 16, 16
    key = jax.random.PRNGKey(0)
    kx, kp = jax.random.split(key)
    x = jax.random.normal(kx, (N, Cin, H, W), jnp.float32)   # NCHW, like PyTorch
    params = make_params(kp, Cin, Cout)

    out = jax.block_until_ready(bottleneck_forward(x, params))
    ref = _reference(x, params)

    assert out.shape == (N, Cout, H, W), out.shape
    max_err = float(jnp.max(jnp.abs(out - ref)))
    assert max_err < 2e-3, max_err

    print("KERNEL_OK")
</pallas_src>

<mosaic_0001>
module attributes {stable_mosaic.version = 11 : i64} {
  func.func @_bottleneck_kernel(%arg0: memref<2x18x18x4xf32, #tpu.memory_space<vmem>>, %arg1: memref<9x4x128xf32, #tpu.memory_space<vmem>>, %arg2: memref<1x128xf32, #tpu.memory_space<vmem>>, %arg3: memref<1x128xf32, #tpu.memory_space<vmem>>, %arg4: memref<9x128x128xf32, #tpu.memory_space<vmem>>, %arg5: memref<1x128xf32, #tpu.memory_space<vmem>>, %arg6: memref<1x128xf32, #tpu.memory_space<vmem>>, %arg7: memref<2x16x16x128xf32, #tpu.memory_space<vmem>>, %arg8: memref<2x18x18x128xf32, #tpu.memory_space<vmem>>) attributes {dimension_semantics = [], scalar_prefetch = 0 : i64, scratch_operands = 1 : i64, tpu.core_type = #tpu.core_type<tc>} {
    %cst = arith.constant 1.000000e+00 : f32
    %0 = vector.broadcast %cst : f32 to vector<1x512xf32>
    %cst_0 = arith.constant 0.000000e+00 : f32
    %1 = vector.broadcast %cst_0 : f32 to vector<512x128xf32>
    %c0 = arith.constant 0 : index
    %c0_1 = arith.constant 0 : index
    %c0_2 = arith.constant 0 : index
    %c0_3 = arith.constant 0 : index
    %2 = vector.load %arg0[%c0, %c0_1, %c0_2, %c0_3] : memref<2x18x18x4xf32, #tpu.memory_space<vmem>>, vector<2x16x16x4xf32>
    %3 = vector.shape_cast %2 : vector<2x16x16x4xf32> to vector<512x4xf32>
    %c0_4 = arith.constant 0 : index
    %c0_5 = arith.constant 0 : index
    %c0_6 = arith.constant 0 : index
    %4 = vector.load %arg1[%c0_4, %c0_5, %c0_6] : memref<9x4x128xf32, #tpu.memory_space<vmem>>, vector<1x4x128xf32>
    %5 = vector.shape_cast %4 : vector<1x4x128xf32> to vector<4x128xf32>
    %cst_7 = arith.constant dense<0.000000e+00> : vector<512x128xf32>
    %6 = tpu.matmul %3, %5, %cst_7 {dimension_numbers = #tpu.dot_dimension_numbers<[1], [0], [0], [1], [0, 0, 1, 1], [], []>} : vector<512x4xf32>, vector<4x128xf32>, vector<512x128xf32> -> vector<512x128xf32>
    %7 = arith.addf %1, %6 : vector<512x128xf32>
    %c0_8 = arith.constant 0 : index
    %c0_9 = arith.constant 0 : index
    %c1 = arith.constant 1 : index
    %c0_10 = arith.constant 0 : index
    %8 = vector.load %arg0[%c0_8, %c0_9, %c1, %c0_10] : memref<2x18x18x4xf32, #tpu.memory_space<vmem>>, vector<2x16x16x4xf32>
    %9 = vector.shape_cast %8 : vector<2x16x16x4xf32> to vector<512x4xf32>
    %c1_11 = arith.constant 1 : index
    %c0_12 = arith.constant 0 : index
    %c0_13 = arith.constant 0 : index
    %10 = vector.load %arg1[%c1_11, %c0_12, %c0_13] : memref<9x4x128xf32, #tpu.memory_space<vmem>>, vector<1x4x128xf32>
    %11 = vector.shape_cast %10 : vector<1x4x128xf32> to vector<4x128xf32>
    %cst_14 = arith.constant dense<0.000000e+00> : vector<512x128xf32>
    %12 = tpu.matmul %9, %11, %cst_14 {dimension_numbers = #tpu.dot_dimension_numbers<[1], [0], [0], [1], [0, 0, 1, 1], [], []>} : vector<512x4xf32>, vector<4x128xf32>, vector<512x128xf32> -> vector<512x128xf32>
    %13 = arith.addf %7, %12 : vector<512x128xf32>
    %c0_15 = arith.constant 0 : index
    %c0_16 = arith.constant 0 : index
    %c2 = arith.constant 2 : index
    %c0_17 = arith.constant 0 : index
    %14 = vector.load %arg0[%c0_15, %c0_16, %c2, %c0_17] : memref<2x18x18x4xf32, #tpu.memory_space<vmem>>, vector<2x16x16x4xf32>
    %15 = vector.shape_cast %14 : vector<2x16x16x4xf32> to vector<512x4xf32>
    %c2_18 = arith.constant 2 : index
    %c0_19 = arith.constant 0 : index
    %c0_20 = arith.constant 0 : index
    %16 = vector.load %arg1[%c2_18, %c0_19, %c0_20] : memref<9x4x128xf32, #tpu.memory_space<vmem>>, vector<1x4x128xf32>
    %17 = vector.shape_cast %16 : vector<1x4x128xf32> to vector<4x128xf32>
    %cst_21 = arith.constant dense<0.000000e+00> : vector<512x128xf32>
    %18 = tpu.matmul %15, %17, %cst_21 {dimension_numbers = #tpu.dot_dimension_numbers<[1], [0], [0], [1], [0, 0, 1, 1], [], []>} : vector<512x4xf32>, vector<4x128xf32>, vector<512x128xf32> -> vector<512x128xf32>
    %19 = arith.addf %13, %18 : vector<512x128xf32>
    %c0_22 = arith.constant 0 : index
    %c1_23 = arith.constant 1 : index
    %c0_24 = arith.constant 0 : index
    %c0_25 = arith.constant 0 : index
    %20 = vector.load %arg0[%c0_22, %c1_23, %c0_24, %c0_25] : memref<2x18x18x4xf32, #tpu.memory_space<vmem>>, vector<2x16x16x4xf32>
    %21 = vector.shape_cast %20 : vector<2x16x16x4xf32> to vector<512x4xf32>
    %c3 = arith.constant 3 : index
    %c0_26 = arith.constant 0 : index
    %c0_27 = arith.constant 0 : index
    %22 = vector.load %arg1[%c3, %c0_26, %c0_27] : memref<9x4x128xf32, #tpu.memory_space<vmem>>, vector<1x4x128xf32>
    %23 = vector.shape_cast %22 : vector<1x4x128xf32> to vector<4x128xf32>
    %cst_28 = arith.constant dense<0.000000e+00> : vector<512x128xf32>
    %24 = tpu.matmul %21, %23, %cst_28 {dimension_numbers = #tpu.dot_dimension_numbers<[1], [0], [0], [1], [0, 0, 1, 1], [], []>} : vector<512x4xf32>, vector<4x128xf32>, vector<512x128xf32> -> vector<512x128xf32>
    %25 = arith.addf %19, %24 : vector<512x128xf32>
    %c0_29 = arith.constant 0 : index
    %c1_30 = arith.constant 1 : index
    %c1_31 = arith.constant 1 : index
    %c0_32 = arith.constant 0 : index
    %26 = vector.load %arg0[%c0_29, %c1_30, %c1_31, %c0_32] : memref<2x18x18x4xf32, #tpu.memory_space<vmem>>, vector<2x16x16x4xf32>
    %27 = vector.shape_cast %26 : vector<2x16x16x4xf32> to vector<512x4xf32>
    %c4 = arith.constant 4 : index
    %c0_33 = arith.constant 0 : index
    %c0_34 = arith.constant 0 : index
    %28 = vector.load %arg1[%c4, %c0_33, %c0_34] : memref<9x4x128xf32, #tpu.memory_space<vmem>>, vector<1x4x128xf32>
    %29 = vector.shape_cast %28 : vector<1x4x128xf32> to vector<4x128xf32>
    %cst_35 = arith.constant dense<0.000000e+00> : vector<512x128xf32>
    %30 = tpu.matmul %27, %29, %cst_35 {dimension_numbers = #tpu.dot_dimension_numbers<[1], [0], [0], [1], [0, 0, 1, 1], [], []>} : vector<512x4xf32>, vector<4x128xf32>, vector<512x128xf32> -> vector<512x128xf32>
    %31 = arith.addf %25, %30 : vector<512x128xf32>
    %c0_36 = arith.constant 0 : index
    %c1_37 = arith.constant 1 : index
    %c2_38 = arith.constant 2 : index
    %c0_39 = arith.constant 0 : index
    %32 = vector.load %arg0[%c0_36, %c1_37, %c2_38, %c0_39] : memref<2x18x18x4xf32, #tpu.memory_space<vmem>>, vector<2x16x16x4xf32>
    %33 = vector.shape_cast %32 : vector<2x16x16x4xf32> to vector<512x4xf32>
    %c5 = arith.constant 5 : index
    %c0_40 = arith.constant 0 : index
    %c0_41 = arith.constant 0 : index
    %34 = vector.load %arg1[%c5, %c0_40, %c0_41] : memref<9x4x128xf32, #tpu.memory_space<vmem>>, vector<1x4x128xf32>
    %35 = vector.shape_cast %34 : vector<1x4x128xf32> to vector<4x128xf32>
    %cst_42 = arith.constant dense<0.000000e+00> : vector<512x128xf32>
    %36 = tpu.matmul %33, %35, %cst_42 {dimension_numbers = #tpu.dot_dimension_numbers<[1], [0], [0], [1], [0, 0, 1, 1], [], []>} : vector<512x4xf32>, vector<4x128xf32>, vector<512x128xf32> -> vector<512x128xf32>
    %37 = arith.addf %31, %36 : vector<512x128xf32>
    %c0_43 = arith.constant 0 : index
    %c2_44 = arith.constant 2 : index
    %c0_45 = arith.constant 0 : index
    %c0_46 = arith.constant 0 : index
    %38 = vector.load %arg0[%c0_43, %c2_44, %c0_45, %c0_46] : memref<2x18x18x4xf32, #tpu.memory_space<vmem>>, vector<2x16x16x4xf32>
    %39 = vector.shape_cast %38 : vector<2x16x16x4xf32> to vector<512x4xf32>
    %c6 = arith.constant 6 : index
    %c0_47 = arith.constant 0 : index
    %c0_48 = arith.constant 0 : index
    %40 = vector.load %arg1[%c6, %c0_47, %c0_48] : memref<9x4x128xf32, #tpu.memory_space<vmem>>, vector<1x4x128xf32>
    %41 = vector.shape_cast %40 : vector<1x4x128xf32> to vector<4x128xf32>
    %cst_49 = arith.constant dense<0.000000e+00> : vector<512x128xf32>
    %42 = tpu.matmul %39, %41, %cst_49 {dimension_numbers = #tpu.dot_dimension_numbers<[1], [0], [0], [1], [0, 0, 1, 1], [], []>} : vector<512x4xf32>, vector<4x128xf32>, vector<512x128xf32> -> vector<512x128xf32>
    %43 = arith.addf %37, %42 : vector<512x128xf32>
    %c0_50 = arith.constant 0 : index
    %c2_51 = arith.constant 2 : index
    %c1_52 = arith.constant 1 : index
    %c0_53 = arith.constant 0 : index
    %44 = vector.load %arg0[%c0_50, %c2_51, %c1_52, %c0_53] : memref<2x18x18x4xf32, #tpu.memory_space<vmem>>, vector<2x16x16x4xf32>
    %45 = vector.shape_cast %44 : vector<2x16x16x4xf32> to vector<512x4xf32>
    %c7 = arith.constant 7 : index
    %c0_54 = arith.constant 0 : index
    %c0_55 = arith.constant 0 : index
    %46 = vector.load %arg1[%c7, %c0_54, %c0_55] : memref<9x4x128xf32, #tpu.memory_space<vmem>>, vector<1x4x128xf32>
    %47 = vector.shape_cast %46 : vector<1x4x128xf32> to vector<4x128xf32>
    %cst_56 = arith.constant dense<0.000000e+00> : vector<512x128xf32>
    %48 = tpu.matmul %45, %47, %cst_56 {dimension_numbers = #tpu.dot_dimension_numbers<[1], [0], [0], [1], [0, 0, 1, 1], [], []>} : vector<512x4xf32>, vector<4x128xf32>, vector<512x128xf32> -> vector<512x128xf32>
    %49 = arith.addf %43, %48 : vector<512x128xf32>
    %c0_57 = arith.constant 0 : index
    %c2_58 = arith.constant 2 : index
    %c2_59 = arith.constant 2 : index
    %c0_60 = arith.constant 0 : index
    %50 = vector.load %arg0[%c0_57, %c2_58, %c2_59, %c0_60] : memref<2x18x18x4xf32, #tpu.memory_space<vmem>>, vector<2x16x16x4xf32>
    %51 = vector.shape_cast %50 : vector<2x16x16x4xf32> to vector<512x4xf32>
    %c8 = arith.constant 8 : index
    %c0_61 = arith.constant 0 : index
    %c0_62 = arith.constant 0 : index
    %52 = vector.load %arg1[%c8, %c0_61, %c0_62] : memref<9x4x128xf32, #tpu.memory_space<vmem>>, vector<1x4x128xf32>
    %53 = vector.shape_cast %52 : vector<1x4x128xf32> to vector<4x128xf32>
    %cst_63 = arith.constant dense<0.000000e+00> : vector<512x128xf32>
    %54 = tpu.matmul %51, %53, %cst_63 {dimension_numbers = #tpu.dot_dimension_numbers<[1], [0], [0], [1], [0, 0, 1, 1], [], []>} : vector<512x4xf32>, vector<4x128xf32>, vector<512x128xf32> -> vector<512x128xf32>
    %55 = arith.addf %49, %54 : vector<512x128xf32>
    %c0_64 = arith.constant 0 : index
    %c0_65 = arith.constant 0 : index
    %56 = vector.load %arg2[%c0_64, %c0_65] : memref<1x128xf32, #tpu.memory_space<vmem>>, vector<1x128xf32>
    %c0_66 = arith.constant 0 : index
    %c0_67 = arith.constant 0 : index
    %57 = vector.load %arg3[%c0_66, %c0_67] : memref<1x128xf32, #tpu.memory_space<vmem>>, vector<1x128xf32>
    %cst_68 = arith.constant dense<0.000000e+00> : vector<1x128xf32>
    %58 = tpu.matmul %0, %55, %cst_68 {dimension_numbers = #tpu.dot_dimension_numbers<[1], [0], [0], [1], [0, 0, 1, 1], [], []>} : vector<1x512xf32>, vector<512x128xf32>, vector<1x128xf32> -> vector<1x128xf32>
    %59 = arith.mulf %55, %55 : vector<512x128xf32>
    %cst_69 = arith.constant dense<0.000000e+00> : vector<1x128xf32>
    %60 = tpu.matmul %0, %59, %cst_69 {dimension_numbers = #tpu.dot_dimension_numbers<[1], [0], [0], [1], [0, 0, 1, 1], [], []>} : vector<1x512xf32>, vector<512x128xf32>, vector<1x128xf32> -> vector<1x128xf32>
    %cst_70 = arith.constant 0.001953125 : f32
    %61 = vector.broadcast %cst_70 : f32 to vector<1x128xf32>
    %62 = arith.mulf %58, %61 : vector<1x128xf32>
    %cst_71 = arith.constant 0.001953125 : f32
    %63 = vector.broadcast %cst_71 : f32 to vector<1x128xf32>
    %64 = arith.mulf %60, %63 : vector<1x128xf32>
    %65 = arith.mulf %62, %62 : vector<1x128xf32>
    %66 = arith.subf %64, %65 : vector<1x128xf32>
    %cst_72 = arith.constant 0.000000e+00 : f32
    %67 = vector.broadcast %cst_72 : f32 to vector<1x128xf32>
    %68 = arith.maximumf %66, %67 : vector<1x128xf32>
    %cst_73 = arith.constant 9.99999974E-6 : f32
    %69 = vector.broadcast %cst_73 : f32 to vector<1x128xf32>
    %70 = arith.addf %68, %69 : vector<1x128xf32>
    %71 = math.rsqrt %70 : vector<1x128xf32>
    %72 = arith.mulf %56, %71 : vector<1x128xf32>
    %73 = arith.mulf %62, %72 : vector<1x128xf32>
    %74 = arith.subf %57, %73 : vector<1x128xf32>
    %75 = vector.broadcast %72 : vector<1x128xf32> to vector<512x128xf32>
    %76 = arith.mulf %55, %75 : vector<512x128xf32>
    %77 = vector.broadcast %74 : vector<1x128xf32> to vector<512x128xf32>
    %78 = arith.addf %76, %77 : vector<512x128xf32>
    %cst_74 = arith.constant 0.000000e+00 : f32
    %79 = vector.broadcast %cst_74 : f32 to vector<512x128xf32>
    %80 = arith.maximumf %78, %79 : vector<512x128xf32>
    %cst_75 = arith.constant 0.000000e+00 : f32
    %81 = vector.broadcast %cst_75 : f32 to vector<2x1x18x128xf32>
    %cst_76 = arith.constant 0.000000e+00 : f32
    %82 = vector.broadcast %cst_76 : f32 to vector<2x16x1x128xf32>
    %c0_77 = arith.constant 0 : index
    %c0_78 = arith.constant 0 : index
    %c0_79 = arith.constant 0 : index
    %c0_80 = arith.constant 0 : index
    %83 = vector.load %arg8[%c0_77, %c0_78, %c0_79, %c0_80] : memref<2x18x18x128xf32, #tpu.memory_space<vmem>>, vector<2x1x18x128xf32>
    tpu.vector_store %arg8[%c0_77, %c0_78, %c0_79, %c0_80], %81 {strides = array<i32>} : memref<2x18x18x128xf32, #tpu.memory_space<vmem>>, vector<2x1x18x128xf32>,
    %c0_81 = arith.constant 0 : index
    %c17 = arith.constant 17 : index
    %c0_82 = arith.constant 0 : index
    %c0_83 = arith.constant 0 : index
    %84 = vector.load %arg8[%c0_81, %c17, %c0_82, %c0_83] : memref<2x18x18x128xf32, #tpu.memory_space<vmem>>, vector<2x1x18x128xf32>
    tpu.vector_store %arg8[%c0_81, %c17, %c0_82, %c0_83], %81 {strides = array<i32>} : memref<2x18x18x128xf32, #tpu.memory_space<vmem>>, vector<2x1x18x128xf32>,
    %c0_84 = arith.constant 0 : index
    %c1_85 = arith.constant 1 : index
    %c0_86 = arith.constant 0 : index
    %c0_87 = arith.constant 0 : index
    %85 = vector.load %arg8[%c0_84, %c1_85, %c0_86, %c0_87] : memref<2x18x18x128xf32, #tpu.memory_space<vmem>>, vector<2x16x1x128xf32>
    tpu.vector_store %arg8[%c0_84, %c1_85, %c0_86, %c0_87], %82 {strides = array<i32>} : memref<2x18x18x128xf32, #tpu.memory_space<vmem>>, vector<2x16x1x128xf32>,
    %c0_88 = arith.constant 0 : index
    %c1_89 = arith.constant 1 : index
    %c17_90 = arith.constant 17 : index
    %c0_91 = arith.constant 0 : index
    %86 = vector.load %arg8[%c0_88, %c1_89, %c17_90, %c0_91] : memref<2x18x18x128xf32, #tpu.memory_space<vmem>>, vector<2x16x1x128xf32>
    tpu.vector_store %arg8[%c0_88, %c1_89, %c17_90, %c0_91], %82 {strides = array<i32>} : memref<2x18x18x128xf32, #tpu.memory_space<vmem>>, vector<2x16x1x128xf32>,
    %87 = vector.shape_cast %80 : vector<512x128xf32> to vector<2x16x16x128xf32>
    %c0_92 = arith.constant 0 : index
    %c1_93 = arith.constant 1 : index
    %c1_94 = arith.constant 1 : index
    %c0_95 = arith.constant 0 : index
    %88 = vector.load %arg8[%c0_92, %c1_93, %c1_94, %c0_95] : memref<2x18x18x128xf32, #tpu.memory_space<vmem>>, vector<2x16x16x128xf32>
    tpu.vector_store %arg8[%c0_92, %c1_93, %c1_94, %c0_95], %87 {strides = array<i32>} : memref<2x18x18x128xf32, #tpu.memory_space<vmem>>, vector<2x16x16x128xf32>,
    %cst_96 = arith.constant 0.000000e+00 : f32
    %89 = vector.broadcast %cst_96 : f32 to vector<512x128xf32>
    %c0_97 = arith.constant 0 : index
    %c0_98 = arith.constant 0 : index
    %c0_99 = arith.constant 0 : index
    %c0_100 = arith.constant 0 : index
    %90 = vector.load %arg8[%c0_97, %c0_98, %c0_99, %c0_100] : memref<2x18x18x128xf32, #tpu.memory_space<vmem>>, vector<2x16x16x128xf32>
    %91 = vector.shape_cast %90 : vector<2x16x16x128xf32> to vector<512x128xf32>
    %c0_101 = arith.constant 0 : index
    %c0_102 = arith.constant 0 : index
    %c0_103 = arith.constant 0 : index
    %92 = vector.load %arg4[%c0_101, %c0_102, %c0_103] : memref<9x128x128xf32, #tpu.memory_space<vmem>>, vector<1x128x128xf32>
    %93 = vector.shape_cast %92 : vector<1x128x128xf32> to vector<128x128xf32>
    %cst_104 = arith.constant dense<0.000000e+00> : vector<512x128xf32>
    %94 = tpu.matmul %91, %93, %cst_104 {dimension_numbers = #tpu.dot_dimension_numbers<[1], [0], [0], [1], [0, 0, 1, 1], [], []>} : vector<512x128xf32>, vector<128x128xf32>, vector<512x128xf32> -> vector<512x128xf32>
    %95 = arith.addf %89, %94 : vector<512x128xf32>
    %c0_105 = arith.constant 0 : index
    %c0_106 = arith.constant 0 : index
    %c1_107 = arith.constant 1 : index
    %c0_108 = arith.constant 0 : index
    %96 = vector.load %arg8[%c0_105, %c0_106, %c1_107, %c0_108] : memref<2x18x18x128xf32, #tpu.memory_space<vmem>>, vector<2x16x16x128xf32>
    %97 = vector.shape_cast %96 : vector<2x16x16x128xf32> to vector<512x128xf32>
    %c1_109 = arith.constant 1 : index
    %c0_110 = arith.constant 0 : index
    %c0_111 = arith.constant 0 : index
    %98 = vector.load %arg4[%c1_109, %c0_110, %c0_111] : memref<9x128x128xf32, #tpu.memory_space<vmem>>, vector<1x128x128xf32>
    %99 = vector.shape_cast %98 : vector<1x128x128xf32> to vector<128x128xf32>
    %cst_112 = arith.constant dense<0.000000e+00> : vector<512x128xf32>
    %100 = tpu.matmul %97, %99, %cst_112 {dimension_numbers = #tpu.dot_dimension_numbers<[1], [0], [0], [1], [0, 0, 1, 1], [], []>} : vector<512x128xf32>, vector<128x128xf32>, vector<512x128xf32> -> vector<512x128xf32>
    %101 = arith.addf %95, %100 : vector<512x128xf32>
    %c0_113 = arith.constant 0 : index
    %c0_114 = arith.constant 0 : index
    %c2_115 = arith.constant 2 : index
    %c0_116 = arith.constant 0 : index
    %102 = vector.load %arg8[%c0_113, %c0_114, %c2_115, %c0_116] : memref<2x18x18x128xf32, #tpu.memory_space<vmem>>, vector<2x16x16x128xf32>
    %103 = vector.shape_cast %102 : vector<2x16x16x128xf32> to vector<512x128xf32>
    %c2_117 = arith.constant 2 : index
    %c0_118 = arith.constant 0 : index
    %c0_119 = arith.constant 0 : index
    %104 = vector.load %arg4[%c2_117, %c0_118, %c0_119] : memref<9x128x128xf32, #tpu.memory_space<vmem>>, vector<1x128x128xf32>
    %105 = vector.shape_cast %104 : vector<1x128x128xf32> to vector<128x128xf32>
    %cst_120 = arith.constant dense<0.000000e+00> : vector<512x128xf32>
    %106 = tpu.matmul %103, %105, %cst_120 {dimension_numbers = #tpu.dot_dimension_numbers<[1], [0], [0], [1], [0, 0, 1, 1], [], []>} : vector<512x128xf32>, vector<128x128xf32>, vector<512x128xf32> -> vector<512x128xf32>
    %107 = arith.addf %101, %106 : vector<512x128xf32>
    %c0_121 = arith.constant 0 : index
    %c1_122 = arith.constant 1 : index
    %c0_123 = arith.constant 0 : index
    %c0_124 = arith.constant 0 : index
    %108 = vector.load %arg8[%c0_121, %c1_122, %c0_123, %c0_124] : memref<2x18x18x128xf32, #tpu.memory_space<vmem>>, vector<2x16x16x128xf32>
    %109 = vector.shape_cast %108 : vector<2x16x16x128xf32> to vector<512x128xf32>
    %c3_125 = arith.constant 3 : index
    %c0_126 = arith.constant 0 : index
    %c0_127 = arith.constant 0 : index
    %110 = vector.load %arg4[%c3_125, %c0_126, %c0_127] : memref<9x128x128xf32, #tpu.memory_space<vmem>>, vector<1x128x128xf32>
    %111 = vector.shape_cast %110 : vector<1x128x128xf32> to vector<128x128xf32>
    %cst_128 = arith.constant dense<0.000000e+00> : vector<512x128xf32>
    %112 = tpu.matmul %109, %111, %cst_128 {dimension_numbers = #tpu.dot_dimension_numbers<[1], [0], [0], [1], [0, 0, 1, 1], [], []>} : vector<512x128xf32>, vector<128x128xf32>, vector<512x128xf32> -> vector<512x128xf32>
    %113 = arith.addf %107, %112 : vector<512x128xf32>
    %c0_129 = arith.constant 0 : index
    %c1_130 = arith.constant 1 : index
    %c1_131 = arith.constant 1 : index
    %c0_132 = arith.constant 0 : index
    %114 = vector.load %arg8[%c0_129, %c1_130, %c1_131, %c0_132] : memref<2x18x18x128xf32, #tpu.memory_space<vmem>>, vector<2x16x16x128xf32>
    %115 = vector.shape_cast %114 : vector<2x16x16x128xf32> to vector<512x128xf32>
    %c4_133 = arith.constant 4 : index
    %c0_134 = arith.constant 0 : index
    %c0_135 = arith.constant 0 : index
    %116 = vector.load %arg4[%c4_133, %c0_134, %c0_135] : memref<9x128x128xf32, #tpu.memory_space<vmem>>, vector<1x128x128xf32>
    %117 = vector.shape_cast %116 : vector<1x128x128xf32> to vector<128x128xf32>
    %cst_136 = arith.constant dense<0.000000e+00> : vector<512x128xf32>
    %118 = tpu.matmul %115, %117, %cst_136 {dimension_numbers = #tpu.dot_dimension_numbers<[1], [0], [0], [1], [0, 0, 1, 1], [], []>} : vector<512x128xf32>, vector<128x128xf32>, vector<512x128xf32> -> vector<512x128xf32>
    %119 = arith.addf %113, %118 : vector<512x128xf32>
    %c0_137 = arith.constant 0 : index
    %c1_138 = arith.constant 1 : index
    %c2_139 = arith.constant 2 : index
    %c0_140 = arith.constant 0 : index
    %120 = vector.load %arg8[%c0_137, %c1_138, %c2_139, %c0_140] : memref<2x18x18x128xf32, #tpu.memory_space<vmem>>, vector<2x16x16x128xf32>
    %121 = vector.shape_cast %120 : vector<2x16x16x128xf32> to vector<512x128xf32>
    %c5_141 = arith.constant 5 : index
    %c0_142 = arith.constant 0 : index
    %c0_143 = arith.constant 0 : index
    %122 = vector.load %arg4[%c5_141, %c0_142, %c0_143] : memref<9x128x128xf32, #tpu.memory_space<vmem>>, vector<1x128x128xf32>
    %123 = vector.shape_cast %122 : vector<1x128x128xf32> to vector<128x128xf32>
    %cst_144 = arith.constant dense<0.000000e+00> : vector<512x128xf32>
    %124 = tpu.matmul %121, %123, %cst_144 {dimension_numbers = #tpu.dot_dimension_numbers<[1], [0], [0], [1], [0, 0, 1, 1], [], []>} : vector<512x128xf32>, vector<128x128xf32>, vector<512x128xf32> -> vector<512x128xf32>
    %125 = arith.addf %119, %124 : vector<512x128xf32>
    %c0_145 = arith.constant 0 : index
    %c2_146 = arith.constant 2 : index
    %c0_147 = arith.constant 0 : index
    %c0_148 = arith.constant 0 : index
    %126 = vector.load %arg8[%c0_145, %c2_146, %c0_147, %c0_148] : memref<2x18x18x128xf32, #tpu.memory_space<vmem>>, vector<2x16x16x128xf32>
    %127 = vector.shape_cast %126 : vector<2x16x16x128xf32> to vector<512x128xf32>
    %c6_149 = arith.constant 6 : index
    %c0_150 = arith.constant 0 : index
    %c0_151 = arith.constant 0 : index
    %128 = vector.load %arg4[%c6_149, %c0_150, %c0_151] : memref<9x128x128xf32, #tpu.memory_space<vmem>>, vector<1x128x128xf32>
    %129 = vector.shape_cast %128 : vector<1x128x128xf32> to vector<128x128xf32>
    %cst_152 = arith.constant dense<0.000000e+00> : vector<512x128xf32>
    %130 = tpu.matmul %127, %129, %cst_152 {dimension_numbers = #tpu.dot_dimension_numbers<[1], [0], [0], [1], [0, 0, 1, 1], [], []>} : vector<512x128xf32>, vector<128x128xf32>, vector<512x128xf32> -> vector<512x128xf32>
    %131 = arith.addf %125, %130 : vector<512x128xf32>
    %c0_153 = arith.constant 0 : index
    %c2_154 = arith.constant 2 : index
    %c1_155 = arith.constant 1 : index
    %c0_156 = arith.constant 0 : index
    %132 = vector.load %arg8[%c0_153, %c2_154, %c1_155, %c0_156] : memref<2x18x18x128xf32, #tpu.memory_space<vmem>>, vector<2x16x16x128xf32>
    %133 = vector.shape_cast %132 : vector<2x16x16x128xf32> to vector<512x128xf32>
    %c7_157 = arith.constant 7 : index
    %c0_158 = arith.constant 0 : index
    %c0_159 = arith.constant 0 : index
    %134 = vector.load %arg4[%c7_157, %c0_158, %c0_159] : memref<9x128x128xf32, #tpu.memory_space<vmem>>, vector<1x128x128xf32>
    %135 = vector.shape_cast %134 : vector<1x128x128xf32> to vector<128x128xf32>
    %cst_160 = arith.constant dense<0.000000e+00> : vector<512x128xf32>
    %136 = tpu.matmul %133, %135, %cst_160 {dimension_numbers = #tpu.dot_dimension_numbers<[1], [0], [0], [1], [0, 0, 1, 1], [], []>} : vector<512x128xf32>, vector<128x128xf32>, vector<512x128xf32> -> vector<512x128xf32>
    %137 = arith.addf %131, %136 : vector<512x128xf32>
    %c0_161 = arith.constant 0 : index
    %c2_162 = arith.constant 2 : index
    %c2_163 = arith.constant 2 : index
    %c0_164 = arith.constant 0 : index
    %138 = vector.load %arg8[%c0_161, %c2_162, %c2_163, %c0_164] : memref<2x18x18x128xf32, #tpu.memory_space<vmem>>, vector<2x16x16x128xf32>
    %139 = vector.shape_cast %138 : vector<2x16x16x128xf32> to vector<512x128xf32>
    %c8_165 = arith.constant 8 : index
    %c0_166 = arith.constant 0 : index
    %c0_167 = arith.constant 0 : index
    %140 = vector.load %arg4[%c8_165, %c0_166, %c0_167] : memref<9x128x128xf32, #tpu.memory_space<vmem>>, vector<1x128x128xf32>
    %141 = vector.shape_cast %140 : vector<1x128x128xf32> to vector<128x128xf32>
    %cst_168 = arith.constant dense<0.000000e+00> : vector<512x128xf32>
    %142 = tpu.matmul %139, %141, %cst_168 {dimension_numbers = #tpu.dot_dimension_numbers<[1], [0], [0], [1], [0, 0, 1, 1], [], []>} : vector<512x128xf32>, vector<128x128xf32>, vector<512x128xf32> -> vector<512x128xf32>
    %143 = arith.addf %137, %142 : vector<512x128xf32>
    %c0_169 = arith.constant 0 : index
    %c0_170 = arith.constant 0 : index
    %144 = vector.load %arg5[%c0_169, %c0_170] : memref<1x128xf32, #tpu.memory_space<vmem>>, vector<1x128xf32>
    %c0_171 = arith.constant 0 : index
    %c0_172 = arith.constant 0 : index
    %145 = vector.load %arg6[%c0_171, %c0_172] : memref<1x128xf32, #tpu.memory_space<vmem>>, vector<1x128xf32>
    %cst_173 = arith.constant dense<0.000000e+00> : vector<1x128xf32>
    %146 = tpu.matmul %0, %143, %cst_173 {dimension_numbers = #tpu.dot_dimension_numbers<[1], [0], [0], [1], [0, 0, 1, 1], [], []>} : vector<1x512xf32>, vector<512x128xf32>, vector<1x128xf32> -> vector<1x128xf32>
    %147 = arith.mulf %143, %143 : vector<512x128xf32>
    %cst_174 = arith.constant dense<0.000000e+00> : vector<1x128xf32>
    %148 = tpu.matmul %0, %147, %cst_174 {dimension_numbers = #tpu.dot_dimension_numbers<[1], [0], [0], [1], [0, 0, 1, 1], [], []>} : vector<1x512xf32>, vector<512x128xf32>, vector<1x128xf32> -> vector<1x128xf32>
    %cst_175 = arith.constant 0.001953125 : f32
    %149 = vector.broadcast %cst_175 : f32 to vector<1x128xf32>
    %150 = arith.mulf %146, %149 : vector<1x128xf32>
    %cst_176 = arith.constant 0.001953125 : f32
    %151 = vector.broadcast %cst_176 : f32 to vector<1x128xf32>
    %152 = arith.mulf %148, %151 : vector<1x128xf32>
    %153 = arith.mulf %150, %150 : vector<1x128xf32>
    %154 = arith.subf %152, %153 : vector<1x128xf32>
    %cst_177 = arith.constant 0.000000e+00 : f32
    %155 = vector.broadcast %cst_177 : f32 to vector<1x128xf32>
    %156 = arith.maximumf %154, %155 : vector<1x128xf32>
    %cst_178 = arith.constant 9.99999974E-6 : f32
    %157 = vector.broadcast %cst_178 : f32 to vector<1x128xf32>
    %158 = arith.addf %156, %157 : vector<1x128xf32>
    %159 = math.rsqrt %158 : vector<1x128xf32>
    %160 = arith.mulf %144, %159 : vector<1x128xf32>
    %161 = arith.mulf %150, %160 : vector<1x128xf32>
    %162 = arith.subf %145, %161 : vector<1x128xf32>
    %163 = vector.broadcast %160 : vector<1x128xf32> to vector<512x128xf32>
    %164 = arith.mulf %143, %163 : vector<512x128xf32>
    %165 = vector.broadcast %162 : vector<1x128xf32> to vector<512x128xf32>
    %166 = arith.addf %164, %165 : vector<512x128xf32>
    %cst_179 = arith.constant 0.000000e+00 : f32
    %167 = vector.broadcast %cst_179 : f32 to vector<512x128xf32>
    %168 = arith.maximumf %166, %167 : vector<512x128xf32>
    %169 = vector.shape_cast %168 : vector<512x128xf32> to vector<2x16x16x128xf32>
    %c0_180 = arith.constant 0 : index
    %c0_181 = arith.constant 0 : index
    %c0_182 = arith.constant 0 : index
    %c0_183 = arith.constant 0 : index
    %170 = vector.load %arg7[%c0_180, %c0_181, %c0_182, %c0_183] : memref<2x16x16x128xf32, #tpu.memory_space<vmem>>, vector<2x16x16x128xf32>
    tpu.vector_store %arg7[%c0_180, %c0_181, %c0_182, %c0_183], %169 {strides = array<i32>} : memref<2x16x16x128xf32, #tpu.memory_space<vmem>>, vector<2x16x16x128xf32>,
    return
  }
}

</mosaic_0001>

<llo_original>
// kernel: bottleneck_forward.1
$region0: #{bottleneck_forward.1}
  #allocation0 [shape = 'u32[]', space=smem, size = 0x4, offset = 0x4, fixed_abs, tag = 'smem constant byte address 0x4 - core index']
  #allocation1 [shape = 'u32[144,128]{1,0:T(1,128)}', space=vmem, size = 0x12000, scoped, tag = 'internal scratch']
  #allocation2 [shape = 'f32[2,18,18,128]{3,2,1,0:T(8,128)}', space=vmem, size = 0x6c000, scoped, tag = 'scratch operand']
  %s0 = inlined_call_operand.vmem [shape: f32[2,18,18,4], index: 0, kind: input, shape index: {}]
  %s1 = inlined_call_operand.vmem [shape: f32[9,4,128], index: 1, kind: input, shape index: {}]
  %s2 = inlined_call_operand.vmem [shape: f32[1,128], index: 2, kind: input, shape index: {}]
  %s3 = inlined_call_operand.vmem [shape: f32[1,128], index: 3, kind: input, shape index: {}]
  %s4 = inlined_call_operand.vmem [shape: f32[9,128,128], index: 4, kind: input, shape index: {}]
  %s5 = inlined_call_operand.vmem [shape: f32[1,128], index: 5, kind: input, shape index: {}]
  %s6 = inlined_call_operand.vmem [shape: f32[1,128], index: 6, kind: input, shape index: {}]
  %s7 = inlined_call_operand.vmem [shape: f32[2,16,16,128], index: 7, kind: output, shape index: {}]
  %s8 = sld [smem:[#allocation0]]
  $region38: #{bottleneck_forward.1} parent=0
    _
  %s10 = ssub.s32 1, %s8
  %s11 = scalar_select 0, %s10, %s8
  // Predicated region
  $region2: #{bottleneck_forward.1} parent=0 // pred_check
    _
  $region3: #{bottleneck_forward.1} parent=0 // pred_check_branch
    %13 = sbr.rel (0) target = $region5
  $region4: #{bottleneck_forward.1} parent=0 // pred_region
    _
  $region5: #{bottleneck_forward.1} parent=0 // pred_fallthru
    _
  // Predicated region
  $region6: #{bottleneck_forward.1} parent=0 // pred_check
    _
  $region7: #{bottleneck_forward.1} parent=0 // pred_check_branch
    %15 = sbr.rel (0) target = $region9
  $region8: #{bottleneck_forward.1} parent=0 // pred_region
    _
  $region9: #{bottleneck_forward.1} parent=0 // pred_fallthru
    _
  // Predicated region
  $region10: #{bottleneck_forward.1} parent=0 // pred_check
    _
  $region11: #{bottleneck_forward.1} parent=0 // pred_check_branch
    %17 = sbr.rel (0) target = $region13
  $region12: #{bottleneck_forward.1} parent=0 // pred_region
    _
  $region13: #{bottleneck_forward.1} parent=0 // pred_fallthru
    _
  // Predicated region
  $region14: #{bottleneck_forward.1} parent=0 // pred_check
    _
  $region15: #{bottleneck_forward.1} parent=0 // pred_check_branch
    %19 = sbr.rel (0) target = $region17
  $region16: #{bottleneck_forward.1} parent=0 // pred_region
    _
  $region17: #{bottleneck_forward.1} parent=0 // pred_fallthru
    _
  // Predicated region
  $region18: #{bottleneck_forward.1} parent=0 // pred_check
    _
  $region19: #{bottleneck_forward.1} parent=0 // pred_check_branch
    %21 = sbr.rel (0) target = $region21
  $region20: #{bottleneck_forward.1} parent=0 // pred_region
    _
  $region21: #{bottleneck_forward.1} parent=0 // pred_fallthru
    _
  // Predicated region
  $region22: #{bottleneck_forward.1} parent=0 // pred_check
    _
  $region23: #{bottleneck_forward.1} parent=0 // pred_check_branch
    %23 = sbr.rel (0) target = $region25
  $region24: #{bottleneck_forward.1} parent=0 // pred_region
    _
  $region25: #{bottleneck_forward.1} parent=0 // pred_fallthru
    _
  // Predicated region
  $region26: #{bottleneck_forward.1} parent=0 // pred_check
    _
  $region27: #{bottleneck_forward.1} parent=0 // pred_check_branch
    %25 = sbr.rel (0) target = $region29
  $region28: #{bottleneck_forward.1} parent=0 // pred_region
    _
  $region29: #{bottleneck_forward.1} parent=0 // pred_fallthru
    _
  %v26 = vld [vmem:[%s0] sm:$0xff]
  %v27 = vld [vmem:[%s0 + $0x8] sm:$0xff]
  %v28 = vld [vmem:[%s0 + $0x18] sm:$0xff]
  %v29 = vld [vmem:[%s0 + $0x20] sm:$0xff]
  %v30 = vld [vmem:[%s0 + $0x30] sm:$0xff]
  %v31 = vld [vmem:[%s0 + $0x38] sm:$0xff]
  %v32 = vld [vmem:[%s0 + $0x48] sm:$0xff]
  %v33 = vld [vmem:[%s0 + $0x50] sm:$0xff]
  %v34 = vld [vmem:[%s0 + $0x60] sm:$0xff]
  %v35 = vld [vmem:[%s0 + $0x68] sm:$0xff]
  %v36 = vld [vmem:[%s0 + $0x78] sm:$0xff]
  %v37 = vld [vmem:[%s0 + $0x80] sm:$0xff]
  %v38 = vld [vmem:[%s0 + $0x90] sm:$0xff]
  %v39 = vld [vmem:[%s0 + $0x98] sm:$0xff]
  %v40 = vld [vmem:[%s0 + $0xa8] sm:$0xff]
  %v41 = vld [vmem:[%s0 + $0xb0] sm:$0xff]
  %v42 = vld [vmem:[%s0 + $0xc0] sm:$0xff]
  %v43 = vld [vmem:[%s0 + $0xc8] sm:$0xff]
  %v44 = vld [vmem:[%s0 + $0xd8] sm:$0xff]
  %v45 = vld [vmem:[%s0 + $0xe0] sm:$0xff]
  %v46 = vld [vmem:[%s0 + $0xf0] sm:$0xff]
  %v47 = vld [vmem:[%s0 + $0xf8] sm:$0xff]
  %v48 = vld [vmem:[%s0 + $0x108] sm:$0xff]
  %v49 = vld [vmem:[%s0 + $0x110] sm:$0xff]
  %v50 = vld [vmem:[%s0 + $0x120] sm:$0xff]
  %v51 = vld [vmem:[%s0 + $0x128] sm:$0xff]
  %v52 = vld [vmem:[%s0 + $0x138] sm:$0xff]
  %v53 = vld [vmem:[%s0 + $0x140] sm:$0xff]
  %v54 = vld [vmem:[%s0 + $0x150] sm:$0xff]
  %v55 = vld [vmem:[%s0 + $0x158] sm:$0xff]
  %v56 = vld [vmem:[%s0 + $0x168] sm:$0xff]
  %v57 = vld [vmem:[%s0 + $0x170] sm:$0xff]
  %v58 = vld [vmem:[%s0 + $0x1b0] sm:$0xff]
  %v59 = vld [vmem:[%s0 + $0x1b8] sm:$0xff]
  %v60 = vld [vmem:[%s0 + $0x1c8] sm:$0xff]
  %v61 = vld [vmem:[%s0 + $0x1d0] sm:$0xff]
  %v62 = vld [vmem:[%s0 + $0x1e0] sm:$0xff]
  %v63 = vld [vmem:[%s0 + $0x1e8] sm:$0xff]
  %v64 = vld [vmem:[%s0 + $0x1f8] sm:$0xff]
  %v65 = vld [vmem:[%s0 + $0x200] sm:$0xff]
  %v66 = vld [vmem:[%s0 + $0x210] sm:$0xff]
  %v67 = vld [vmem:[%s0 + $0x218] sm:$0xff]
  %v68 = vld [vmem:[%s0 + $0x228] sm:$0xff]
  %v69 = vld [vmem:[%s0 + $0x230] sm:$0xff]
  %v70 = vld [vmem:[%s0 + $0x240] sm:$0xff]
  %v71 = vld [vmem:[%s0 + $0x248] sm:$0xff]
  %v72 = vld [vmem:[%s0 + $0x258] sm:$0xff]
  %v73 = vld [vmem:[%s0 + $0x260] sm:$0xff]
  %v74 = vld [vmem:[%s0 + $0x270] sm:$0xff]
  %v75 = vld [vmem:[%s0 + $0x278] sm:$0xff]
  %v76 = vld [vmem:[%s0 + $0x288] sm:$0xff]
  %v77 = vld [vmem:[%s0 + $0x290] sm:$0xff]
  %v78 = vld [vmem:[%s0 + $0x2a0] sm:$0xff]
  %v79 = vld [vmem:[%s0 + $0x2a8] sm:$0xff]
  %v80 = vld [vmem:[%s0 + $0x2b8] sm:$0xff]
  %v81 = vld [vmem:[%s0 + $0x2c0] sm:$0xff]
  %v82 = vld [vmem:[%s0 + $0x2d0] sm:$0xff]
  %v83 = vld [vmem:[%s0 + $0x2d8] sm:$0xff]
  %v84 = vld [vmem:[%s0 + $0x2e8] sm:$0xff]
  %v85 = vld [vmem:[%s0 + $0x2f0] sm:$0xff]
  %v86 = vld [vmem:[%s0 + $0x300] sm:$0xff]
  %v87 = vld [vmem:[%s0 + $0x308] sm:$0xff]
  %v88 = vld [vmem:[%s0 + $0x318] sm:$0xff]
  %v89 = vld [vmem:[%s0 + $0x320] sm:$0xff]
  %v90 = vld [vmem:[%s1] sm:$0xf]
  %v91 = vld [vmem:[%s0 + $0x1] sm:$0xff]
  %v92 = vld [vmem:[%s0 + $0x9] sm:$0xff]
  %v93 = vld [vmem:[%s0 + $0x19] sm:$0xff]
  %v94 = vld [vmem:[%s0 + $0x21] sm:$0xff]
  %v95 = vld [vmem:[%s0 + $0x31] sm:$0xff]
  %v96 = vld [vmem:[%s0 + $0x39] sm:$0xff]
  %v97 = vld [vmem:[%s0 + $0x49] sm:$0xff]
  %v98 = vld [vmem:[%s0 + $0x51] sm:$0xff]
  %v99 = vld [vmem:[%s0 + $0x61] sm:$0xff]
  %v100 = vld [vmem:[%s0 + $0x69] sm:$0xff]
  %v101 = vld [vmem:[%s0 + $0x79] sm:$0xff]
  %v102 = vld [vmem:[%s0 + $0x81] sm:$0xff]
  %v103 = vld [vmem:[%s0 + $0x91] sm:$0xff]
  %v104 = vld [vmem:[%s0 + $0x99] sm:$0xff]
  %v105 = vld [vmem:[%s0 + $0xa9] sm:$0xff]
  %v106 = vld [vmem:[%s0 + $0xb1] sm:$0xff]
  %v107 = vld [vmem:[%s0 + $0xc1] sm:$0xff]
  %v108 = vld [vmem:[%s0 + $0xc9] sm:$0xff]
  %v109 = vld [vmem:[%s0 + $0xd9] sm:$0xff]
  %v110 = vld [vmem:[%s0 + $0xe1] sm:$0xff]
  %v111 = vld [vmem:[%s0 + $0xf1] sm:$0xff]
  %v112 = vld [vmem:[%s0 + $0xf9] sm:$0xff]
  %v113 = vld [vmem:[%s0 + $0x109] sm:$0xff]
  %v114 = vld [vmem:[%s0 + $0x111] sm:$0xff]
  %v115 = vld [vmem:[%s0 + $0x121] sm:$0xff]
  %v116 = vld [vmem:[%s0 + $0x129] sm:$0xff]
  %v117 = vld [vmem:[%s0 + $0x139] sm:$0xff]
  %v118 = vld [vmem:[%s0 + $0x141] sm:$0xff]
  %v119 = vld [vmem:[%s0 + $0x151] sm:$0xff]
  %v120 = vld [vmem:[%s0 + $0x159] sm:$0xff]
  %v121 = vld [vmem:[%s0 + $0x169] sm:$0xff]
  %v122 = vld [vmem:[%s0 + $0x171] sm:$0xff]
  %v123 = vld [vmem:[%s0 + $0x1b1] sm:$0xff]
  %v124 = vld [vmem:[%s0 + $0x1b9] sm:$0xff]
  %v125 = vld [vmem:[%s0 + $0x1c9] sm:$0xff]
  %v126 = vld [vmem:[%s0 + $0x1d1] sm:$0xff]
  %v127 = vld [vmem:[%s0 + $0x1e1] sm:$0xff]
  %v128 = vld [vmem:[%s0 + $0x1e9] sm:$0xff]
  %v129 = vld [vmem:[%s0 + $0x1f9] sm:$0xff]
  %v130 = vld [vmem:[%s0 + $0x201] sm:$0xff]
  %v131 = vld [vmem:[%s0 + $0x211] sm:$0xff]
  %v132 = vld [vmem:[%s0 + $0x219] sm:$0xff]
  %v133 = vld [vmem:[%s0 + $0x229] sm:$0xff]
  %v134 = vld [vmem:[%s0 + $0x231] sm:$0xff]
  %v135 = vld [vmem:[%s0 + $0x241] sm:$0xff]
  %v136 = vld [vmem:[%s0 + $0x249] sm:$0xff]
  %v137 = vld [vmem:[%s0 + $0x259] sm:$0xff]
  %v138 = vld [vmem:[%s0 + $0x261] sm:$0xff]
  %v139 = vld [vmem:[%s0 + $0x271] sm:$0xff]
  %v140 = vld [vmem:[%s0 + $0x279] sm:$0xff]
  %v141 = vld [vmem:[%s0 + $0x289] sm:$0xff]
  %v142 = vld [vmem:[%s0 + $0x291] sm:$0xff]
  %v143 = vld [vmem:[%s0 + $0x2a1] sm:$0xff]
  %v144 = vld [vmem:[%s0 + $0x2a9] sm:$0xff]
  %v145 = vld [vmem:[%s0 + $0x2b9] sm:$0xff]
  %v146 = vld [vmem:[%s0 + $0x2c1] sm:$0xff]
  %v147 = vld [vmem:[%s0 + $0x2d1] sm:$0xff]
  %v148 = vld [vmem:[%s0 + $0x2d9] sm:$0xff]
  %v149 = vld [vmem:[%s0 + $0x2e9] sm:$0xff]
  %v150 = vld [vmem:[%s0 + $0x2f1] sm:$0xff]
  %v151 = vld [vmem:[%s0 + $0x301] sm:$0xff]
  %v152 = vld [vmem:[%s0 + $0x309] sm:$0xff]
  %v153 = vld [vmem:[%s0 + $0x319] sm:$0xff]
  %v154 = vld [vmem:[%s0 + $0x321] sm:$0xff]
  %s155 = scalar_lea.vmem %s1, 4
  %v156 = vld [vmem:[%s155] sm:$0xf]
  %vm157 = vcmask 31744
  %v159 = vsel %vm157, %v91, 0
  %v162 = vsel %vm157, %v92, 0
  %v165 = vsel %vm157, %v93, 0
  %v168 = vsel %vm157, %v94, 0
  %v171 = vsel %vm157, %v95, 0
  %v174 = vsel %vm157, %v96, 0
  %v177 = vsel %vm157, %v97, 0
  %v180 = vsel %vm157, %v98, 0
  %v183 = vsel %vm157, %v99, 0
  %v186 = vsel %vm157, %v100, 0
  %v189 = vsel %vm157, %v101, 0
  %v192 = vsel %vm157, %v102, 0
  %v195 = vsel %vm157, %v103, 0
  %v198 = vsel %vm157, %v104, 0
  %v201 = vsel %vm157, %v105, 0
  %v204 = vsel %vm157, %v106, 0
  %v207 = vsel %vm157, %v107, 0
  %v210 = vsel %vm157, %v108, 0
  %v213 = vsel %vm157, %v109, 0
  %v216 = vsel %vm157, %v110, 0
  %v219 = vsel %vm157, %v111, 0
  %v222 = vsel %vm157, %v112, 0
  %v225 = vsel %vm157, %v113, 0
  %v228 = vsel %vm157, %v114, 0
  %v231 = vsel %vm157, %v115, 0
  %v234 = vsel %vm157, %v116, 0
  %v237 = vsel %vm157, %v117, 0
  %v240 = vsel %vm157, %v118, 0
  %v243 = vsel %vm157, %v119, 0
  %v246 = vsel %vm157, %v120, 0
  %v249 = vsel %vm157, %v121, 0
  %v252 = vsel %vm157, %v122, 0
  %v255 = vsel %vm157, %v123, 0
  %v258 = vsel %vm157, %v124, 0
  %v261 = vsel %vm157, %v125, 0
  %v264 = vsel %vm157, %v126, 0
  %v267 = vsel %vm157, %v127, 0
  %v270 = vsel %vm157, %v128, 0
  %v273 = vsel %vm157, %v129, 0
  %v276 = vsel %vm157, %v130, 0
  %v279 = vsel %vm157, %v131, 0
  %v282 = vsel %vm157, %v132, 0
  %v285 = vsel %vm157, %v133, 0
  %v288 = vsel %vm157, %v134, 0
  %v291 = vsel %vm157, %v135, 0
  %v294 = vsel %vm157, %v136, 0
  %v297 = vsel %vm157, %v137, 0
  %v300 = vsel %vm157, %v138, 0
  %v303 = vsel %vm157, %v139, 0
  %v306 = vsel %vm157, %v140, 0
  %v309 = vsel %vm157, %v141, 0
  %v312 = vsel %vm157, %v142, 0
  %v315 = vsel %vm157, %v143, 0
  %v318 = vsel %vm157, %v144, 0
  %v321 = vsel %vm157, %v145, 0
  %v324 = vsel %vm157, %v146, 0
  %v327 = vsel %vm157, %v147, 0
  %v330 = vsel %vm157, %v148, 0
  %v333 = vsel %vm157, %v149, 0
  %v336 = vsel %vm157, %v150, 0
  %v339 = vsel %vm157, %v151, 0
  %v342 = vsel %vm157, %v152, 0
  %v345 = vsel %vm157, %v153, 0
  %v348 = vsel %vm157, %v154, 0
  %vm350 = vcmask 1043456
  %v352 = vsel %vm350, %v156, 0
  %354 = vmatprep.subr.mxu0 0.0
  %355 = vmatpush1.msra.mxu0 %v352
  %356 = vmatprep.subr.mxu0 0.0
  %357 = vmatpush1.msra.mxu0 0.0
  %358 = vmatprep.subr.mxu0 0.0
  %359 = vmatpush1.msra.mxu0 0.0
  %360 = vmatprep.subr.mxu0 0.0
  %361 = vmatpush1.msra.mxu0 0.0
  %362 = vmatprep.subr.mxu0 0.0
  %363 = vmatpush1.msra.mxu0 0.0
  %364 = vmatprep.subr.mxu0 0.0
  %365 = vmatpush1.msra.mxu0 0.0
  %366 = vmatprep.subr.mxu0 0.0
  %367 = vmatpush1.msra.mxu0 0.0
  %368 = vmatprep.subr.mxu0 0.0
  %369 = vmatpush1.msra.mxu0 0.0
  %370 = vmatprep.subr.mxu0 0.0
  %371 = vmatpush1.msra.mxu0 0.0
  %372 = vmatprep.subr.mxu0 0.0
  %373 = vmatpush1.msra.mxu0 0.0
  %374 = vmatprep.subr.mxu0 0.0
  %375 = vmatpush1.msra.mxu0 0.0
  %376 = vmatprep.subr.mxu0 0.0
  %377 = vmatpush1.msra.mxu0 0.0
  %378 = vmatprep.subr.mxu0 0.0
  %379 = vmatpush1.msra.mxu0 0.0
  %380 = vmatprep.subr.mxu0 0.0
  %381 = vmatpush1.msra.mxu0 0.0
  %382 = vmatprep.subr.mxu0 0.0
  %383 = vmatpush1.msra.mxu0 0.0
  %384 = vmatprep.subr.mxu0 0.0
  %385 = vmatpush1.msra.mxu0 0.0
  %386 = vmatprep.subr.mxu0 0.0
  %387 = vmatpush1.msra.mxu0 0.0
  %388 = vmatprep.subr.mxu0 0.0
  %389 = vmatpush1.msra.mxu0 0.0
  %390 = vmatprep.subr.mxu0 0.0
  %391 = vmatpush1.msra.mxu0 0.0
  %392 = vmatprep.subr.mxu0 0.0
  %393 = vmatpush1.msra.mxu0 0.0
  %394 = vmatprep.subr.mxu0 0.0
  %395 = vmatpush1.msra.mxu0 0.0
  %396 = vmatprep.subr.mxu0 0.0
  %397 = vmatpush1.msra.mxu0 0.0
  %398 = vmatprep.subr.mxu0 0.0
  %399 = vmatpush1.msra.mxu0 0.0
  %400 = vmatprep.subr.mxu0 0.0
  %401 = vmatpush1.msra.mxu0 0.0
  %402 = vmatprep.subr.mxu0 0.0
  %403 = vmatpush1.msra.mxu0 0.0
  %404 = vmatprep.subr.mxu0 0.0
  %405 = vmatpush1.msra.mxu0 0.0
  %406 = vmatprep.subr.mxu0 0.0
  %407 = vmatpush1.msra.mxu0 0.0
  %408 = vmatprep.subr.mxu0 0.0
  %409 = vmatpush1.msra.mxu0 0.0
  %410 = vmatprep.subr.mxu0 0.0
  %411 = vmatpush1.msra.mxu0 0.0
  %412 = vmatprep.subr.mxu0 0.0
  %413 = vmatpush1.msra.mxu0 0.0
  %414 = vmatprep.subr.mxu0 0.0
  %415 = vmatpush1.msra.mxu0 0.0
  %416 = vmatprep.subr.mxu0 0.0
  %417 = vmatpush1.msra.mxu0 0.0
  %418 = vmatprep.mubr.f32.mxu0 0.0
  %419 = vmatmul.mubr.f32.gmra.mrb[0].mxu0 %v159
  %v420 = vpop.f32.mrb[0].mxu0
  %v421 = vadd.f32 0.0, %v420
  %v422 = vpop.f32.mrb[0].mxu0
  %423 = vmatprep.mubr.f32.mxu0 0.0
  %424 = vmatmul.mubr.f32.gmra.mrb[0].mxu0 %v162
  %v425 = vpop.f32.mrb[0].mxu0
  %v426 = vadd.f32 0.0, %v425
  %v427 = vpop.f32.mrb[0].mxu0
  %428 = vmatprep.mubr.f32.mxu0 0.0
  %429 = vmatmul.mubr.f32.gmra.mrb[0].mxu0 %v165
  %v430 = vpop.f32.mrb[0].mxu0
  %v431 = vadd.f32 0.0, %v430
  %v432 = vpop.f32.mrb[0].mxu0
  %433 = vmatprep.mubr.f32.mxu0 0.0
  %434 = vmatmul.mubr.f32.gmra.mrb[0].mxu0 %v168
  %v435 = vpop.f32.mrb[0].mxu0
  %v436 = vadd.f32 0.0, %v435
  %v437 = vpop.f32.mrb[0].mxu0
  %438 = vmatprep.mubr.f32.mxu0 0.0
  %439 = vmatmul.mubr.f32.gmra.mrb[0].mxu0 %v171
  %v440 = vpop.f32.mrb[0].mxu0
  %v441 = vadd.f32 0.0, %v440
  %v442 = vpop.f32.mrb[0].mxu0
  %443 = vmatprep.mubr.f32.mxu0 0.0
  %444 = vmatmul.mubr.f32.gmra.mrb[0].mxu0 %v174
  %v445 = vpop.f32.mrb[0].mxu0
  %v446 = vadd.f32 0.0, %v445
  %v447 = vpop.f32.mrb[0].mxu0
  %448 = vmatprep.mubr.f32.mxu0 0.0
  %449 = vmatmul.mubr.f32.gmra.mrb[0].mxu0 %v177
  %v450 = vpop.f32.mrb[0].mxu0
  %v451 = vadd.f32 0.0, %v450
  %v452 = vpop.f32.mrb[0].mxu0
  %453 = vmatprep.mubr.f32.mxu0 0.0
  %454 = vmatmul.mubr.f32.gmra.mrb[0].mxu0 %v180
  %v455 = vpop.f32.mrb[0].mxu0
  %v456 = vadd.f32 0.0, %v455
  %v457 = vpop.f32.mrb[0].mxu0
  %458 = vmatprep.mubr.f32.mxu0 0.0
  %459 = vmatmul.mubr.f32.gmra.mrb[0].mxu0 %v183
  %v460 = vpop.f32.mrb[0].mxu0
  %v461 = vadd.f32 0.0, %v460
  %v462 = vpop.f32.mrb[0].mxu0
  %463 = vmatprep.mubr.f32.mxu0 0.0
  %464 = vmatmul.mubr.f32.gmra.mrb[0].mxu0 %v186
  %v465 = vpop.f32.mrb[0].mxu0
  %v466 = vadd.f32 0.0, %v465
  %v467 = vpop.f32.mrb[0].mxu0
  %468 = vmatprep.mubr.f32.mxu0 0.0
  %469 = vmatmul.mubr.f32.gmra.mrb[0].mxu0 %v189
  %v470 = vpop.f32.mrb[0].mxu0
  %v471 = vadd.f32 0.0, %v470
  %v472 = vpop.f32.mrb[0].mxu0
  %473 = vmatprep.mubr.f32.mxu0 0.0
  %474 = vmatmul.mubr.f32.gmra.mrb[0].mxu0 %v192
  %v475 = vpop.f32.mrb[0].mxu0
  %v476 = vadd.f32 0.0, %v475
  %v477 = vpop.f32.mrb[0].mxu0
  %478 = vmatprep.mubr.f32.mxu0 0.0
  %479 = vmatmul.mubr.f32.gmra.mrb[0].mxu0 %v195
  %v480 = vpop.f32.mrb[0].mxu0
  %v481 = vadd.f32 0.0, %v480
  %v482 = vpop.f32.mrb[0].mxu0
  %483 = vmatprep.mubr.f32.mxu0 0.0
  %484 = vmatmul.mubr.f32.gmra.mrb[0].mxu0 %v198
  %v485 = vpop.f32.mrb[0].mxu0
  %v486 = vadd.f32 0.0, %v485
  %v487 = vpop.f32.mrb[0].mxu0
  %488 = vmatprep.mubr.f32.mxu0 0.0
  %489 = vmatmul.mubr.f32.gmra.mrb[0].mxu0 %v201
  %v490 = vpop.f32.mrb[0].mxu0
  %v491 = vadd.f32 0.0, %v490
  %v492 = vpop.f32.mrb[0].mxu0
  %493 = vmatprep.mubr.f32.mxu0 0.0
  %494 = vmatmul.mubr.f32.gmra.mrb[0].mxu0 %v204
  %v495 = vpop.f32.mrb[0].mxu0
  %v496 = vadd.f32 0.0, %v495
  %v497 = vpop.f32.mrb[0].mxu0
  %498 = vmatprep.mubr.f32.mxu0 0.0
  %499 = vmatmul.mubr.f32.gmra.mrb[0].mxu0 %v207
  %v500 = vpop.f32.mrb[0].mxu0
  %v501 = vadd.f32 0.0, %v500
  %v502 = vpop.f32.mrb[0].mxu0
  %503 = vmatprep.mubr.f32.mxu0 0.0
  %504 = vmatmul.mubr.f32.gmra.mrb[0].mxu0 %v210
  %v505 = vpop.f32.mrb[0].mxu0
  %v506 = vadd.f32 0.0, %v505
  %v507 = vpop.f32.mrb[0].mxu0
  %508 = vmatprep.mubr.f32.mxu0 0.0
  %509 = vmatmul.mubr.f32.gmra.mrb[0].mxu0 %v213
  %v510 = vpop.f32.mrb[0].mxu0
  %v511 = vadd.f32 0.0, %v510
  %v512 = vpop.f32.mrb[0].mxu0
  %513 = vmatprep.mubr.f32.mxu0 0.0
  %514 = vmatmul.mubr.f32.gmra.mrb[0].mxu0 %v216
  %v515 = vpop.f32.mrb[0].mxu0
  %v516 = vadd.f32 0.0, %v515
  %v517 = vpop.f32.mrb[0].mxu0
  %518 = vmatprep.mubr.f32.mxu0 0.0
  %519 = vmatmul.mubr.f32.gmra.mrb[0].mxu0 %v219
  %v520 = vpop.f32.mrb[0].mxu0
  %v521 = vadd.f32 0.0, %v520
  %v522 = vpop.f32.mrb[0].mxu0
  %523 = vmatprep.mubr.f32.mxu0 0.0
  %524 = vmatmul.mubr.f32.gmra.mrb[0].mxu0 %v222
  %v525 = vpop.f32.mrb[0].mxu0
  %v526 = vadd.f32 0.0, %v525
  %v527 = vpop.f32.mrb[0].mxu0
  %528 = vmatprep.mubr.f32.mxu0 0.0
  %529 = vmatmul.mubr.f32.gmra.mrb[0].mxu0 %v225
  %v530 = vpop.f32.mrb[0].mxu0
  %v531 = vadd.f32 0.0, %v530
  %v532 = vpop.f32.mrb[0].mxu0
  %533 = vmatprep.mubr.f32.mxu0 0.0
  %534 = vmatmul.mubr.f32.gmra.mrb[0].mxu0 %v228
  %v535 = vpop.f32.mrb[0].mxu0
  %v536 = vadd.f32 0.0, %v535
  %v537 = vpop.f32.mrb[0].mxu0
  %538 = vmatprep.mubr.f32.mxu0 0.0
  %539 = vmatmul.mubr.f32.gmra.mrb[0].mxu0 %v231
  %v540 = vpop.f32.mrb[0].mxu0
  %v541 = vadd.f32 0.0, %v540
  %v542 = vpop.f32.mrb[0].mxu0
  %543 = vmatprep.mubr.f32.mxu0 0.0
  %544 = vmatmul.mubr.f32.gmra.mrb[0].mxu0 %v234
  %v545 = vpop.f32.mrb[0].mxu0
  %v546 = vadd.f32 0.0, %v545
  %v547 = vpop.f32.mrb[0].mxu0
  %548 = vmatprep.mubr.f32.mxu0 0.0
  %549 = vmatmul.mubr.f32.gmra.mrb[0].mxu0 %v237
  %v550 = vpop.f32.mrb[0].mxu0
  %v551 = vadd.f32 0.0, %v550
  %v552 = vpop.f32.mrb[0].mxu0
  %553 = vmatprep.mubr.f32.mxu0 0.0
  %554 = vmatmul.mubr.f32.gmra.mrb[0].mxu0 %v240
  %v555 = vpop.f32.mrb[0].mxu0
  %v556 = vadd.f32 0.0, %v555
  %v557 = vpop.f32.mrb[0].mxu0
  %558 = vmatprep.mubr.f32.mxu0 0.0
  %559 = vmatmul.mubr.f32.gmra.mrb[0].mxu0 %v243
  %v560 = vpop.f32.mrb[0].mxu0
  %v561 = vadd.f32 0.0, %v560
  %v562 = vpop.f32.mrb[0].mxu0
  %563 = vmatprep.mubr.f32.mxu0 0.0
  %564 = vmatmul.mubr.f32.gmra.mrb[0].mxu0 %v246
  %v565 = vpop.f32.mrb[0].mxu0
  %v566 = vadd.f32 0.0, %v565
  %v567 = vpop.f32.mrb[0].mxu0
  %568 = vmatprep.mubr.f32.mxu0 0.0
  %569 = vmatmul.mubr.f32.gmra.mrb[0].mxu0 %v249
  %v570 = vpop.f32.mrb[0].mxu0
  %v571 = vadd.f32 0.0, %v570
  %v572 = vpop.f32.mrb[0].mxu0
  %573 = vmatprep.mubr.f32.mxu0 0.0
  %574 = vmatmul.mubr.f32.gmra.mrb[0].mxu0 %v252
  %v575 = vpop.f32.mrb[0].mxu0
  %v576 = vadd.f32 0.0, %v575
  %v577 = vpop.f32.mrb[0].mxu0
  %578 = vmatprep.mubr.f32.mxu0 0.0
  %579 = vmatmul.mubr.f32.gmra.mrb[0].mxu0 %v255
  %v580 = vpop.f32.mrb[0].mxu0
  %v581 = vadd.f32 0.0, %v580
  %v582 = vpop.f32.mrb[0].mxu0
  %583 = vmatprep.mubr.f32.mxu0 0.0
  %584 = vmatmul.mubr.f32.gmra.mrb[0].mxu0 %v258
  %v585 = vpop.f32.mrb[0].mxu0
  %v586 = vadd.f32 0.0, %v585
  %v587 = vpop.f32.mrb[0].mxu0
  %588 = vmatprep.mubr.f32.mxu0 0.0
  %589 = vmatmul.mubr.f32.gmra.mrb[0].mxu0 %v261
  %v590 = vpop.f32.mrb[0].mxu0
  %v591 = vadd.f32 0.0, %v590
  %v592 = vpop.f32.mrb[0].mxu0
  %593 = vmatprep.mubr.f32.mxu0 0.0
  %594 = vmatmul.mubr.f32.gmra.mrb[0].mxu0 %v264
  %v595 = vpop.f32.mrb[0].mxu0
  %v596 = vadd.f32 0.0, %v595
  %v597 = vpop.f32.mrb[0].mxu0
  %598 = vmatprep.mubr.f32.mxu0 0.0
  %599 = vmatmul.mubr.f32.gmra.mrb[0].mxu0 %v267
  %v600 = vpop.f32.mrb[0].mxu0
  %v601 = vadd.f32 0.0, %v600
  %v602 = vpop.f32.mrb[0].mxu0
  %603 = vmatprep.mubr.f32.mxu0 0.0
  %604 = vmatmul.mubr.f32.gmra.mrb[0].mxu0 %v270
  %v605 = vpop.f32.mrb[0].mxu0
  %v606 = vadd.f32 0.0, %v605
  %v607 = vpop.f32.mrb[0].mxu0
  %608 = vmatprep.mubr.f32.mxu0 0.0
  %609 = vmatmul.mubr.f32.gmra.mrb[0].mxu0 %v273
  %v610 = vpop.f32.mrb[0].mxu0
  %v611 = vadd.f32 0.0, %v610
  %v612 = vpop.f32.mrb[0].mxu0
  %613 = vmatprep.mubr.f32.mxu0 0.0
  %614 = vmatmul.mubr.f32.gmra.mrb[0].mxu0 %v276
  %v615 = vpop.f32.mrb[0].mxu0
  %v616 = vadd.f32 0.0, %v615
  %v617 = vpop.f32.mrb[0].mxu0
  %618 = vmatprep.mubr.f32.mxu0 0.0
  %619 = vmatmul.mubr.f32.gmra.mrb[0].mxu0 %v279
  %v620 = vpop.f32.mrb[0].mxu0
  %v621 = vadd.f32 0.0, %v620
  %v622 = vpop.f32.mrb[0].mxu0
  %623 = vmatprep.mubr.f32.mxu0 0.0
  %624 = vmatmul.mubr.f32.gmra.mrb[0].mxu0 %v282
  %v625 = vpop.f32.mrb[0].mxu0
  %v626 = vadd.f32 0.0, %v625
  %v627 = vpop.f32.mrb[0].mxu0
  %628 = vmatprep.mubr.f32.mxu0 0.0
  %629 = vmatmul.mubr.f32.gmra.mrb[0].mxu0 %v285
  %v630 = vpop.f32.mrb[0].mxu0
  %v631 = vadd.f32 0.0, %v630
  %v632 = vpop.f32.mrb[0].mxu0
  %633 = vmatprep.mubr.f32.mxu0 0.0
  %634 = vmatmul.mubr.f32.gmra.mrb[0].mxu0 %v288
  %v635 = vpop.f32.mrb[0].mxu0
  %v636 = vadd.f32 0.0, %v635
  %v637 = vpop.f32.mrb[0].mxu0
  %638 = vmatprep.mubr.f32.mxu0 0.0
  %639 = vmatmul.mubr.f32.gmra.mrb[0].mxu0 %v291
  %v640 = vpop.f32.mrb[0].mxu0
  %v641 = vadd.f32 0.0, %v640
  %v642 = vpop.f32.mrb[0].mxu0
  %643 = vmatprep.mubr.f32.mxu0 0.0
  %644 = vmatmul.mubr.f32.gmra.mrb[0].mxu0 %v294
  %v645 = vpop.f32.mrb[0].mxu0
  %v646 = vadd.f32 0.0, %v645
  %v647 = vpop.f32.mrb[0].mxu0
  %648 = vmatprep.mubr.f32.mxu0 0.0
  %649 = vmatmul.mubr.f32.gmra.mrb[0].mxu0 %v297
  %v650 = vpop.f32.mrb[0].mxu0
  %v651 = vadd.f32 0.0, %v650
  %v652 = vpop.f32.mrb[0].mxu0
  %653 = vmatprep.mubr.f32.mxu0 0.0
  %654 = vmatmul.mubr.f32.gmra.mrb[0].mxu0 %v300
  %v655 = vpop.f32.mrb[0].mxu0
  %v656 = vadd.f32 0.0, %v655
  %v657 = vpop.f32.mrb[0].mxu0
  %658 = vmatprep.mubr.f32.mxu0 0.0
  %659 = vmatmul.mubr.f32.gmra.mrb[0].mxu0 %v303
  %v660 = vpop.f32.mrb[0].mxu0
  %v661 = vadd.f32 0.0, %v660
  %v662 = vpop.f32.mrb[0].mxu0
  %663 = vmatprep.mubr.f32.mxu0 0.0
  %664 = vmatmul.mubr.f32.gmra.mrb[0].mxu0 %v306
  %v665 = vpop.f32.mrb[0].mxu0
  %v666 = vadd.f32 0.0, %v665
  %v667 = vpop.f32.mrb[0].mxu0
  %668 = vmatprep.mubr.f32.mxu0 0.0
  %669 = vmatmul.mubr.f32.gmra.mrb[0].mxu0 %v309
  %v670 = vpop.f32.mrb[0].mxu0
  %v671 = vadd.f32 0.0, %v670
  %v672 = vpop.f32.mrb[0].mxu0
  %673 = vmatprep.mubr.f32.mxu0 0.0
  %674 = vmatmul.mubr.f32.gmra.mrb[0].mxu0 %v312
  %v675 = vpop.f32.mrb[0].mxu0
  %v676 = vadd.f32 0.0, %v675
  %v677 = vpop.f32.mrb[0].mxu0
  %678 = vmatprep.mubr.f32.mxu0 0.0
  %679 = vmatmul.mubr.f32.gmra.mrb[0].mxu0 %v315
  %v680 = vpop.f32.mrb[0].mxu0
  %v681 = vadd.f32 0.0, %v680
  %v682 = vpop.f32.mrb[0].mxu0
  %683 = vmatprep.mubr.f32.mxu0 0.0
  %684 = vmatmul.mubr.f32.gmra.mrb[0].mxu0 %v318
  %v685 = vpop.f32.mrb[0].mxu0
  %v686 = vadd.f32 0.0, %v685
  %v687 = vpop.f32.mrb[0].mxu0
  %688 = vmatprep.mubr.f32.mxu0 0.0
  %689 = vmatmul.mubr.f32.gmra.mrb[0].mxu0 %v321
  %v690 = vpop.f32.mrb[0].mxu0
  %v691 = vadd.f32 0.0, %v690
  %v692 = vpop.f32.mrb[0].mxu0
  %693 = vmatprep.mubr.f32.mxu0 0.0
  %694 = vmatmul.mubr.f32.gmra.mrb[0].mxu0 %v324
  %v695 = vpop.f32.mrb[0].mxu0
  %v696 = vadd.f32 0.0, %v695
  %v697 = vpop.f32.mrb[0].mxu0
  %698 = vmatprep.mubr.f32.mxu0 0.0
  %699 = vmatmul.mubr.f32.gmra.mrb[0].mxu0 %v327
  %v700 = vpop.f32.mrb[0].mxu0
  %v701 = vadd.f32 0.0, %v700
  %v702 = vpop.f32.mrb[0].mxu0
  %703 = vmatprep.mubr.f32.mxu0 0.0
  %704 = vmatmul.mubr.f32.gmra.mrb[0].mxu0 %v330
  %v705 = vpop.f32.mrb[0].mxu0
  %v706 = vadd.f32 0.0, %v705
  %v707 = vpop.f32.mrb[0].mxu0
  %708 = vmatprep.mubr.f32.mxu0 0.0
  %709 = vmatmul.mubr.f32.gmra.mrb[0].mxu0 %v333
  %v710 = vpop.f32.mrb[0].mxu0
  %v711 = vadd.f32 0.0, %v710
  %v712 = vpop.f32.mrb[0].mxu0
  %713 = vmatprep.mubr.f32.mxu0 0.0
  %714 = vmatmul.mubr.f32.gmra.mrb[0].mxu0 %v336
  %v715 = vpop.f32.mrb[0].mxu0
  %v716 = vadd.f32 0.0, %v715
  %v717 = vpop.f32.mrb[0].mxu0
  %718 = vmatprep.mubr.f32.mxu0 0.0
  %719 = vmatmul.mubr.f32.gmra.mrb[0].mxu0 %v339
  %v720 = vpop.f32.mrb[0].mxu0
  %v721 = vadd.f32 0.0, %v720
  %v722 = vpop.f32.mrb[0].mxu0
  %723 = vmatprep.mubr.f32.mxu0 0.0
  %724 = vmatmul.mubr.f32.gmra.mrb[0].mxu0 %v342
  %v725 = vpop.f32.mrb[0].mxu0
  %v726 = vadd.f32 0.0, %v725
  %v727 = vpop.f32.mrb[0].mxu0
  %728 = vmatprep.mubr.f32.mxu0 0.0
  %729 = vmatmul.mubr.f32.gmra.mrb[0].mxu0 %v345
  %v730 = vpop.f32.mrb[0].mxu0
  %v731 = vadd.f32 0.0, %v730
  %v732 = vpop.f32.mrb[0].mxu0
  %733 = vmatprep.mubr.f32.mxu0 0.0
  %734 = vmatmul.mubr.f32.gmra.mrb[0].mxu0 %v348
  %v735 = vpop.f32.mrb[0].mxu0
  %v736 = vadd.f32 0.0, %v735
  %v737 = vpop.f32.mrb[0].mxu0
  %738 = vdwg.mxu0
  %v740 = vsel %vm157, %v26, 0
  %v743 = vsel %vm157, %v27, 0
  %v746 = vsel %vm157, %v28, 0
  %v749 = vsel %vm157, %v29, 0
  %v752 = vsel %vm157, %v30, 0
  %v755 = vsel %vm157, %v31, 0
  %v758 = vsel %vm157, %v32, 0
  %v761 = vsel %vm157, %v33, 0
  %v764 = vsel %vm157, %v34, 0
  %v767 = vsel %vm157, %v35, 0
  %v770 = vsel %vm157, %v36, 0
  %v773 = vsel %vm157, %v37, 0
  %v776 = vsel %vm157, %v38, 0
  %v779 = vsel %vm157, %v39, 0
  %v782 = vsel %vm157, %v40, 0
  %v785 = vsel %vm157, %v41, 0
  %v788 = vsel %vm157, %v42, 0
  %v791 = vsel %vm157, %v43, 0
  %v794 = vsel %vm157, %v44, 0
  %v797 = vsel %vm157, %v45, 0
  %v800 = vsel %vm157, %v46, 0
  %v803 = vsel %vm157, %v47, 0
  %v806 = vsel %vm157, %v48, 0
  %v809 = vsel %vm157, %v49, 0
  %v812 = vsel %vm157, %v50, 0
  %v815 = vsel %vm157, %v51, 0
  %v818 = vsel %vm157, %v52, 0
  %v821 = vsel %vm157, %v53, 0
  %v824 = vsel %vm157, %v54, 0
  %v827 = vsel %vm157, %v55, 0
  %v830 = vsel %vm157, %v56, 0
  %v833 = vsel %vm157, %v57, 0
  %v836 = vsel %vm157, %v58, 0
  %v839 = vsel %vm157, %v59, 0
  %v842 = vsel %vm157, %v60, 0
  %v845 = vsel %vm157, %v61, 0
  %v848 = vsel %vm157, %v62, 0
  %v851 = vsel %vm157, %v63, 0
  %v854 = vsel %vm157, %v64, 0
  %v857 = vsel %vm157, %v65, 0
  %v860 = vsel %vm157, %v66, 0
  %v863 = vsel %vm157, %v67, 0
  %v866 = vsel %vm157, %v68, 0
  %v869 = vsel %vm157, %v69, 0
  %v872 = vsel %vm157, %v70, 0
  %v875 = vsel %vm157, %v71, 0
  %v878 = vsel %vm157, %v72, 0
  %v881 = vsel %vm157, %v73, 0
  %v884 = vsel %vm157, %v74, 0
  %v887 = vsel %vm157, %v75, 0
  %v890 = vsel %vm157, %v76, 0
  %v893 = vsel %vm157, %v77, 0
  %v896 = vsel %vm157, %v78, 0
  %v899 = vsel %vm157, %v79, 0
  %v902 = vsel %vm157, %v80, 0
  %v905 = vsel %vm157, %v81, 0
  %v908 = vsel %vm157, %v82, 0
  %v911 = vsel %vm157, %v83, 0
  %v914 = vsel %vm157, %v84, 0
  %v917 = vsel %vm157, %v85, 0
  %v920 = vsel %vm157, %v86, 0
  %v923 = vsel %vm157, %v87, 0
  %v926 = vsel %vm157, %v88, 0
  %v929 = vsel %vm157, %v89, 0
  %v932 = vsel %vm350, %v90, 0
  %934 = vmatprep.subr.mxu0 0.0
  %935 = vmatpush1.msra.mxu0 %v932
  %936 = vmatprep.subr.mxu0 0.0
  %937 = vmatpush1.msra.mxu0 0.0
  %938 = vmatprep.subr.mxu0 0.0
  %939 = vmatpush1.msra.mxu0 0.0
  %940 = vmatprep.subr.mxu0 0.0
  %941 = vmatpush1.msra.mxu0 0.0
  %942 = vmatprep.subr.mxu0 0.0
  %943 = vmatpush1.msra.mxu0 0.0
  %944 = vmatprep.subr.mxu0 0.0
  %945 = vmatpush1.msra.mxu0 0.0
  %946 = vmatprep.subr.mxu0 0.0
  %947 = vmatpush1.msra.mxu0 0.0
  %948 = vmatprep.subr.mxu0 0.0
  %949 = vmatpush1.msra.mxu0 0.0
  %950 = vmatprep.subr.mxu0 0.0
  %951 = vmatpush1.msra.mxu0 0.0
  %952 = vmatprep.subr.mxu0 0.0
  %953 = vmatpush1.msra.mxu0 0.0
  %954 = vmatprep.subr.mxu0 0.0
  %955 = vmatpush1.msra.mxu0 0.0
  %956 = vmatprep.subr.mxu0 0.0
  %957 = vmatpush1.msra.mxu0 0.0
  %958 = vmatprep.subr.mxu0 0.0
  %959 = vmatpush1.msra.mxu0 0.0
  %960 = vmatprep.subr.mxu0 0.0
  %961 = vmatpush1.msra.mxu0 0.0
  %962 = vmatprep.subr.mxu0 0.0
  %963 = vmatpush1.msra.mxu0 0.0
  %964 = vmatprep.subr.mxu0 0.0
  %965 = vmatpush1.msra.mxu0 0.0
  %966 = vmatprep.subr.mxu0 0.0
  %967 = vmatpush1.msra.mxu0 0.0
  %968 = vmatprep.subr.mxu0 0.0
  %969 = vmatpush1.msra.mxu0 0.0
  %970 = vmatprep.subr.mxu0 0.0
  %971 = vmatpush1.msra.mxu0 0.0
  %972 = vmatprep.subr.mxu0 0.0
  %973 = vmatpush1.msra.mxu0 0.0
  %974 = vmatprep.subr.mxu0 0.0
  %975 = vmatpush1.msra.mxu0 0.0
  %976 = vmatprep.subr.mxu0 0.0
  %977 = vmatpush1.msra.mxu0 0.0
  %978 = vmatprep.subr.mxu0 0.0
  %979 = vmatpush1.msra.mxu0 0.0
  %980 = vmatprep.subr.mxu0 0.0
  %981 = vmatpush1.msra.mxu0 0.0
  %982 = vmatprep.subr.mxu0 0.0
  %983 = vmatpush1.msra.mxu0 0.0
  %984 = vmatprep.subr.mxu0 0.0
  %985 = vmatpush1.msra.mxu0 0.0
  %986 = vmatprep.subr.mxu0 0.0
  %987 = vmatpush1.msra.mxu0 0.0
  %988 = vmatprep.subr.mxu0 0.0
  %989 = vmatpush1.msra.mxu0 0.0
  %990 = vmatprep.subr.mxu0 0.0
  %991 = vmatpush1.msra.mxu0 0.0
  %992 = vmatprep.subr.mxu0 0.0
  %993 = vmatpush1.msra.mxu0 0.0
  %994 = vmatprep.subr.mxu0 0.0
  %995 = vmatpush1.msra.mxu0 0.0
  %996 = vmatprep.subr.mxu0 0.0
  %997 = vmatpush1.msra.mxu0 0.0
  %998 = vmatprep.mubr.f32.mxu0 0.0
  %999 = vmatmul.mubr.f32.gmra.mrb[0].mxu0 %v740
  %v1000 = vpop.f32.mrb[0].mxu0
  %v1001 = vadd.f32 %v421, %v1000
  %v1002 = vpop.f32.mrb[0].mxu0
  %1003 = vmatprep.mubr.f32.mxu0 0.0
  %1004 = vmatmul.mubr.f32.gmra.mrb[0].mxu0 %v743
  %v1005 = vpop.f32.mrb[0].mxu0
  %v1006 = vadd.f32 %v426, %v1005
  %v1007 = vpop.f32.mrb[0].mxu0
  %1008 = vmatprep.mubr.f32.mxu0 0.0
  %1009 = vmatmul.mubr.f32.gmra.mrb[0].mxu0 %v746
  %v1010 = vpop.f32.mrb[0].mxu0
  %v1011 = vadd.f32 %v431, %v1010
  %v1012 = vpop.f32.mrb[0].mxu0
  %1013 = vmatprep.mubr.f32.mxu0 0.0
  %1014 = vmatmul.mubr.f32.gmra.mrb[0].mxu0 %v749
  %v1015 = vpop.f32.mrb[0].mxu0
  %v1016 = vadd.f32 %v436, %v1015
  %v1017 = vpop.f32.mrb[0].mxu0
  %1018 = vmatprep.mubr.f32.mxu0 0.0
  %1019 = vmatmul.mubr.f32.gmra.mrb[0].mxu0 %v752
  %v1020 = vpop.f32.mrb[0].mxu0
  %v1021 = vadd.f32 %v441, %v1020
  %v1022 = vpop.f32.mrb[0].mxu0
  %1023 = vmatprep.mubr.f32.mxu0 0.0
  %1024 = vmatmul.mubr.f32.gmra.mrb[0].mxu0 %v755
  %v1025 = vpop.f32.mrb[0].mxu0
  %v1026 = vadd.f32 %v446, %v1025
  %v1027 = vpop.f32.mrb[0].mxu0
  %1028 = vmatprep.mubr.f32.mxu0 0.0
  %1029 = vmatmul.mubr.f32.gmra.mrb[0].mxu0 %v758
  %v1030 = vpop.f32.mrb[0].mxu0
  %v1031 = vadd.f32 %v451, %v1030
  %v1032 = vpop.f32.mrb[0].mxu0
  %1033 = vmatprep.mubr.f32.mxu0 0.0
  %1034 = vmatmul.mubr.f32.gmra.mrb[0].mxu0 %v761
  %v1035 = vpop.f32.mrb[0].mxu0
  %v1036 = vadd.f32 %v456, %v1035
  %v1037 = vpop.f32.mrb[0].mxu0
  %1038 = vmatprep.mubr.f32.mxu0 0.0
  %1039 = vmatmul.mubr.f32.gmra.mrb[0].mxu0 %v764
  %v1040 = vpop.f32.mrb[0].mxu0
  %v1041 = vadd.f32 %v461, %v1040
  %v1042 = vpop.f32.mrb[0].mxu0
  %1043 = vmatprep.mubr.f32.mxu0 0.0
  %1044 = vmatmul.mubr.f32.gmra.mrb[0].mxu0 %v767
  %v1045 = vpop.f32.mrb[0].mxu0
  %v1046 = vadd.f32 %v466, %v1045
  %v1047 = vpop.f32.mrb[0].mxu0
  %1048 = vmatprep.mubr.f32.mxu0 0.0
  %1049 = vmatmul.mubr.f32.gmra.mrb[0].mxu0 %v770
  %v1050 = vpop.f32.mrb[0].mxu0
  %v1051 = vadd.f32 %v471, %v1050
  %v1052 = vpop.f32.mrb[0].mxu0
  %1053 = vmatprep.mubr.f32.mxu0 0.0
  %1054 = vmatmul.mubr.f32.gmra.mrb[0].mxu0 %v773
  %v1055 = vpop.f32.mrb[0].mxu0
  %v1056 = vadd.f32 %v476, %v1055
  %v1057 = vpop.f32.mrb[0].mxu0
  %1058 = vmatprep.mubr.f32.mxu0 0.0
  %1059 = vmatmul.mubr.f32.gmra.mrb[0].mxu0 %v776
  %v1060 = vpop.f32.mrb[0].mxu0
  %v1061 = vadd.f32 %v481, %v1060
  %v1062 = vpop.f32.mrb[0].mxu0
  %1063 = vmatprep.mubr.f32.mxu0 0.0
  %1064 = vmatmul.mubr.f32.gmra.mrb[0].mxu0 %v779
  %v1065 = vpop.f32.mrb[0].mxu0
  %v1066 = vadd.f32 %v486, %v1065
  %v1067 = vpop.f32.mrb[0].mxu0
  %1068 = vmatprep.mubr.f32.mxu0 0.0
  %1069 = vmatmul.mubr.f32.gmra.mrb[0].mxu0 %v782
  %v1070 = vpop.f32.mrb[0].mxu0
  %v1071 = vadd.f32 %v491, %v1070
  %v1072 = vpop.f32.mrb[0].mxu0
  %1073 = vmatprep.mubr.f32.mxu0 0.0
  %1074 = vmatmul.mubr.f32.gmra.mrb[0].mxu0 %v785
  %v1075 = vpop.f32.mrb[0].mxu0
  %v1076 = vadd.f32 %v496, %v1075
  %v1077 = vpop.f32.mrb[0].mxu0
  %1078 = vmatprep.mubr.f32.mxu0 0.0
  %1079 = vmatmul.mubr.f32.gmra.mrb[0].mxu0 %v788
  %v1080 = vpop.f32.mrb[0].mxu0
  %v1081 = vadd.f32 %v501, %v1080
  %v1082 = vpop.f32.mrb[0].mxu0
  %1083 = vmatprep.mubr.f32.mxu0 0.0
  %1084 = vmatmul.mubr.f32.gmra.mrb[0].mxu0 %v791
  %v1085 = vpop.f32.mrb[0].mxu0
  %v1086 = vadd.f32 %v506, %v1085
  %v1087 = vpop.f32.mrb[0].mxu0
  %1088 = vmatprep.mubr.f32.mxu0 0.0
  %1089 = vmatmul.mubr.f32.gmra.mrb[0].mxu0 %v794
  %v1090 = vpop.f32.mrb[0].mxu0
  %v1091 = vadd.f32 %v511, %v1090
  %v1092 = vpop.f32.mrb[0].mxu0
  %1093 = vmatprep.mubr.f32.mxu0 0.0
  %1094 = vmatmul.mubr.f32.gmra.mrb[0].mxu0 %v797
  %v1095 = vpop.f32.mrb[0].mxu0
  %v1096 = vadd.f32 %v516, %v1095
  %v1097 = vpop.f32.mrb[0].mxu0
  %1098 = vmatprep.mubr.f32.mxu0 0.0
  %1099 = vmatmul.mubr.f32.gmra.mrb[0].mxu0 %v800
  %v1100 = vpop.f32.mrb[0].mxu0
  %v1101 = vadd.f32 %v521, %v1100
  %v1102 = vpop.f32.mrb[0].mxu0
  %1103 = vmatprep.mubr.f32.mxu0 0.0
  %1104 = vmatmul.mubr.f32.gmra.mrb[0].mxu0 %v803
  %v1105 = vpop.f32.mrb[0].mxu0
  %v1106 = vadd.f32 %v526, %v1105
  %v1107 = vpop.f32.mrb[0].mxu0
  %1108 = vmatprep.mubr.f32.mxu0 0.0
  %1109 = vmatmul.mubr.f32.gmra.mrb[0].mxu0 %v806
  %v1110 = vpop.f32.mrb[0].mxu0
  %v1111 = vadd.f32 %v531, %v1110
  %v1112 = vpop.f32.mrb[0].mxu0
  %1113 = vmatprep.mubr.f32.mxu0 0.0
  %1114 = vmatmul.mubr.f32.gmra.mrb[0].mxu0 %v809
  %v1115 = vpop.f32.mrb[0].mxu0
  %v1116 = vadd.f32 %v536, %v1115
  %v1117 = vpop.f32.mrb[0].mxu0
  %1118 = vmatprep.mubr.f32.mxu0 0.0
  %1119 = vmatmul.mubr.f32.gmra.mrb[0].mxu0 %v812
  %v1120 = vpop.f32.mrb[0].mxu0
  %v1121 = vadd.f32 %v541, %v1120
  %v1122 = vpop.f32.mrb[0].mxu0
  %1123 = vmatprep.mubr.f32.mxu0 0.0
  %1124 = vmatmul.mubr.f32.gmra.mrb[0].mxu0 %v815
  %v1125 = vpop.f32.mrb[0].mxu0
  %v1126 = vadd.f32 %v546, %v1125
  %v1127 = vpop.f32.mrb[0].mxu0
  %1128 = vmatprep.mubr.f32.mxu0 0.0
  %1129 = vmatmul.mubr.f32.gmra.mrb[0].mxu0 %v818
  %v1130 = vpop.f32.mrb[0].mxu0
  %v1131 = vadd.f32 %v551, %v1130
  %v1132 = vpop.f32.mrb[0].mxu0
  %1133 = vmatprep.mubr.f32.mxu0 0.0
  %1134 = vmatmul.mubr.f32.gmra.mrb[0].mxu0 %v821
  %v1135 = vpop.f32.mrb[0].mxu0
  %v1136 = vadd.f32 %v556, %v1135
  %v1137 = vpop.f32.mrb[0].mxu0
  %1138 = vmatprep.mubr.f32.mxu0 0.0
  %1139 = vmatmul.mubr.f32.gmra.mrb[0].mxu0 %v824
  %v1140 = vpop.f32.mrb[0].mxu0
  %v1141 = vadd.f32 %v561, %v1140
  %v1142 = vpop.f32.mrb[0].mxu0
  %1143 = vmatprep.mubr.f32.mxu0 0.0
  %1144 = vmatmul.mubr.f32.gmra.mrb[0].mxu0 %v827
  %v1145 = vpop.f32.mrb[0].mxu0
  %v1146 = vadd.f32 %v566, %v1145
  %v1147 = vpop.f32.mrb[0].mxu0
  %1148 = vmatprep.mubr.f32.mxu0 0.0
  %1149 = vmatmul.mubr.f32.gmra.mrb[0].mxu0 %v830
  %v1150 = vpop.f32.mrb[0].mxu0
  %v1151 = vadd.f32 %v571, %v1150
  %v1152 = vpop.f32.mrb[0].mxu0
  %1153 = vmatprep.mubr.f32.mxu0 0.0
  %1154 = vmatmul.mubr.f32.gmra.mrb[0].mxu0 %v833
  %v1155 = vpop.f32.mrb[0].mxu0
  %v1156 = vadd.f32 %v576, %v1155
  %v1157 = vpop.f32.mrb[0].mxu0
  %1158 = vmatprep.mubr.f32.mxu0 0.0
  %1159 = vmatmul.mubr.f32.gmra.mrb[0].mxu0 %v836
  %v1160 = vpop.f32.mrb[0].mxu0
  %v1161 = vadd.f32 %v581, %v1160
  %v1162 = vpop.f32.mrb[0].mxu0
  %1163 = vmatprep.mubr.f32.mxu0 0.0
  %1164 = vmatmul.mubr.f32.gmra.mrb[0].mxu0 %v839
  %v1165 = vpop.f32.mrb[0].mxu0
  %v1166 = vadd.f32 %v586, %v1165
  %v1167 = vpop.f32.mrb[0].mxu0
  %1168 = vmatprep.mubr.f32.mxu0 0.0
  %1169 = vmatmul.mubr.f32.gmra.mrb[0].mxu0 %v842
  %v1170 = vpop.f32.mrb[0].mxu0
  %v1171 = vadd.f32 %v591, %v1170
  %v1172 = vpop.f32.mrb[0].mxu0
  %1173 = vmatprep.mubr.f32.mxu0 0.0
  %1174 = vmatmul.mubr.f32.gmra.mrb[0].mxu0 %v845
  %v1175 = vpop.f32.mrb[0].mxu0
  %v1176 = vadd.f32 %v596, %v1175
  %v1177 = vpop.f32.mrb[0].mxu0
  %1178 = vmatprep.mubr.f32.mxu0 0.0
  %1179 = vmatmul.mubr.f32.gmra.mrb[0].mxu0 %v848
  %v1180 = vpop.f32.mrb[0].mxu0
  %v1181 = vadd.f32 %v601, %v1180
  %v1182 = vpop.f32.mrb[0].mxu0
  %1183 = vmatprep.mubr.f32.mxu0 0.0
  %1184 = vmatmul.mubr.f32.gmra.mrb[0].mxu0 %v851
  %v1185 = vpop.f32.mrb[0].mxu0
  %v1186 = vadd.f32 %v606, %v1185
  %v1187 = vpop.f32.mrb[0].mxu0
  %1188 = vmatprep.mubr.f32.mxu0 0.0
  %1189 = vmatmul.mubr.f32.gmra.mrb[0].mxu0 %v854
  %v1190 = vpop.f32.mrb[0].mxu0
  %v1191 = vadd.f32 %v611, %v1190
  %v1192 = vpop.f32.mrb[0].mxu0
  %1193 = vmatprep.mubr.f32.mxu0 0.0
  %1194 = vmatmul.mubr.f32.gmra.mrb[0].mxu0 %v857
  %v1195 = vpop.f32.mrb[0].mxu0
  %v1196 = vadd.f32 %v616, %v1195
  %v1197 = vpop.f32.mrb[0].mxu0
  %1198 = vmatprep.mubr.f32.mxu0 0.0
  %1199 = vmatmul.mubr.f32.gmra.mrb[0].mxu0 %v860
  %v1200 = vpop.f32.mrb[0].mxu0
  %v1201 = vadd.f32 %v621, %v1200
  %v1202 = vpop.f32.mrb[0].mxu0
  %1203 = vmatprep.mubr.f32.mxu0 0.0
  %1204 = vmatmul.mubr.f32.gmra.mrb[0].mxu0 %v863
  %v1205 = vpop.f32.mrb[0].mxu0
  %v1206 = vadd.f32 %v626, %v1205
  %v1207 = vpop.f32.mrb[0].mxu0
  %1208 = vmatprep.mubr.f32.mxu0 0.0
  %1209 = vmatmul.mubr.f32.gmra.mrb[0].mxu0 %v866
  %v1210 = vpop.f32.mrb[0].mxu0
  %v1211 = vadd.f32 %v631, %v1210
  %v1212 = vpop.f32.mrb[0].mxu0
  %1213 = vmatprep.mubr.f32.mxu0 0.0
  %1214 = vmatmul.mubr.f32.gmra.mrb[0].mxu0 %v869
  %v1215 = vpop.f32.mrb[0].mxu0
  %v1216 = vadd.f32 %v636, %v1215
  %v1217 = vpop.f32.mrb[0].mxu0
  %1218 = vmatprep.mubr.f32.mxu0 0.0
  %1219 = vmatmul.mubr.f32.gmra.mrb[0].mxu0 %v872
  %v1220 = vpop.f32.mrb[0].mxu0
  %v1221 = vadd.f32 %v641, %v1220
  %v1222 = vpop.f32.mrb[0].mxu0
  %1223 = vmatprep.mubr.f32.mxu0 0.0
  %1224 = vmatmul.mubr.f32.gmra.mrb[0].mxu0 %v875
  %v1225 = vpop.f32.mrb[0].mxu0
  %v1226 = vadd.f32 %v646, %v1225
  %v1227 = vpop.f32.mrb[0].mxu0
  %1228 = vmatprep.mubr.f32.mxu0 0.0
  %1229 = vmatmul.mubr.f32.gmra.mrb[0].mxu0 %v878
  %v1230 = vpop.f32.mrb[0].mxu0
  %v1231 = vadd.f32 %v651, %v1230
  %v1232 = vpop.f32.mrb[0].mxu0
  %1233 = vmatprep.mubr.f32.mxu0 0.0
  %1234 = vmatmul.mubr.f32.gmra.mrb[0].mxu0 %v881
  %v1235 = vpop.f32.mrb[0].mxu0
  %v1236 = vadd.f32 %v656, %v1235
  %v1237 = vpop.f32.mrb[0].mxu0
  %1238 = vmatprep.mubr.f32.mxu0 0.0
  %1239 = vmatmul.mubr.f32.gmra.mrb[0].mxu0 %v884
  %v1240 = vpop.f32.mrb[0].mxu0
  %v1241 = vadd.f32 %v661, %v1240
  %v1242 = vpop.f32.mrb[0].mxu0
  %1243 = vmatprep.mubr.f32.mxu0 0.0
  %1244 = vmatmul.mubr.f32.gmra.mrb[0].mxu0 %v887
  %v1245 = vpop.f32.mrb[0].mxu0
  %v1246 = vadd.f32 %v666, %v1245
  %v1247 = vpop.f32.mrb[0].mxu0
  %1248 = vmatprep.mubr.f32.mxu0 0.0
  %1249 = vmatmul.mubr.f32.gmra.mrb[0].mxu0 %v890
  %v1250 = vpop.f32.mrb[0].mxu0
  %v1251 = vadd.f32 %v671, %v1250
  %v1252 = vpop.f32.mrb[0].mxu0
  %1253 = vmatprep.mubr.f32.mxu0 0.0
  %1254 = vmatmul.mubr.f32.gmra.mrb[0].mxu0 %v893
  %v1255 = vpop.f32.mrb[0].mxu0
  %v1256 = vadd.f32 %v676, %v1255
  %v1257 = vpop.f32.mrb[0].mxu0
  %1258 = vmatprep.mubr.f32.mxu0 0.0
  %1259 = vmatmul.mubr.f32.gmra.mrb[0].mxu0 %v896
  %v1260 = vpop.f32.mrb[0].mxu0
  %v1261 = vadd.f32 %v681, %v1260
  %v1262 = vpop.f32.mrb[0].mxu0
  %1263 = vmatprep.mubr.f32.mxu0 0.0
  %1264 = vmatmul.mubr.f32.gmra.mrb[0].mxu0 %v899
  %v1265 = vpop.f32.mrb[0].mxu0
  %v1266 = vadd.f32 %v686, %v1265
  %v1267 = vpop.f32.mrb[0].mxu0
  %1268 = vmatprep.mubr.f32.mxu0 0.0
  %1269 = vmatmul.mubr.f32.gmra.mrb[0].mxu0 %v902
  %v1270 = vpop.f32.mrb[0].mxu0
  %v1271 = vadd.f32 %v691, %v1270
  %v1272 = vpop.f32.mrb[0].mxu0
  %1273 = vmatprep.mubr.f32.mxu0 0.0
  %1274 = vmatmul.mubr.f32.gmra.mrb[0].mxu0 %v905
  %v1275 = vpop.f32.mrb[0].mxu0
  %v1276 = vadd.f32 %v696, %v1275
  %v1277 = vpop.f32.mrb[0].mxu0
  %1278 = vmatprep.mubr.f32.mxu0 0.0
  %1279 = vmatmul.mubr.f32.gmra.mrb[0].mxu0 %v908
  %v1280 = vpop.f32.mrb[0].mxu0
  %v1281 = vadd.f32 %v701, %v1280
  %v1282 = vpop.f32.mrb[0].mxu0
  %1283 = vmatprep.mubr.f32.mxu0 0.0
  %1284 = vmatmul.mubr.f32.gmra.mrb[0].mxu0 %v911
  %v1285 = vpop.f32.mrb[0].mxu0
  %v1286 = vadd.f32 %v706, %v1285
  %v1287 = vpop.f32.mrb[0].mxu0
  %1288 = vmatprep.mubr.f32.mxu0 0.0
  %1289 = vmatmul.mubr.f32.gmra.mrb[0].mxu0 %v914
  %v1290 = vpop.f32.mrb[0].mxu0
  %v1291 = vadd.f32 %v711, %v1290
  %v1292 = vpop.f32.mrb[0].mxu0
  %1293 = vmatprep.mubr.f32.mxu0 0.0
  %1294 = vmatmul.mubr.f32.gmra.mrb[0].mxu0 %v917
  %v1295 = vpop.f32.mrb[0].mxu0
  %v1296 = vadd.f32 %v716, %v1295
  %v1297 = vpop.f32.mrb[0].mxu0
  %1298 = vmatprep.mubr.f32.mxu0 0.0
  %1299 = vmatmul.mubr.f32.gmra.mrb[0].mxu0 %v920
  %v1300 = vpop.f32.mrb[0].mxu0
  %v1301 = vadd.f32 %v721, %v1300
  %v1302 = vpop.f32.mrb[0].mxu0
  %1303 = vmatprep.mubr.f32.mxu0 0.0
  %1304 = vmatmul.mubr.f32.gmra.mrb[0].mxu0 %v923
  %v1305 = vpop.f32.mrb[0].mxu0
  %v1306 = vadd.f32 %v726, %v1305
  %v1307 = vpop.f32.mrb[0].mxu0
  %1308 = vmatprep.mubr.f32.mxu0 0.0
  %1309 = vmatmul.mubr.f32.gmra.mrb[0].mxu0 %v926
  %v1310 = vpop.f32.mrb[0].mxu0
  %v1311 = vadd.f32 %v731, %v1310
  %v1312 = vpop.f32.mrb[0].mxu0
  %1313 = vmatprep.mubr.f32.mxu0 0.0
  %1314 = vmatmul.mubr.f32.gmra.mrb[0].mxu0 %v929
  %v1315 = vpop.f32.mrb[0].mxu0
  %v1316 = vadd.f32 %v736, %v1315
  %v1317 = vpop.f32.mrb[0].mxu0
  %1318 = vdwg.mxu0
  %v1319 = vld [vmem:[%s0 + $0x2] sm:$0xff]
  %v1320 = vld [vmem:[%s0 + $0xa] sm:$0xff]
  %v1321 = vld [vmem:[%s0 + $0x1a] sm:$0xff]
  %v1322 = vld [vmem:[%s0 + $0x22] sm:$0xff]
  %v1323 = vld [vmem:[%s0 + $0x32] sm:$0xff]
  %v1324 = vld [vmem:[%s0 + $0x3a] sm:$0xff]
  %v1325 = vld [vmem:[%s0 + $0x4a] sm:$0xff]
  %v1326 = vld [vmem:[%s0 + $0x52] sm:$0xff]
  %v1327 = vld [vmem:[%s0 + $0x62] sm:$0xff]
  %v1328 = vld [vmem:[%s0 + $0x6a] sm:$0xff]
  %v1329 = vld [vmem:[%s0 + $0x7a] sm:$0xff]
  %v1330 = vld [vmem:[%s0 + $0x82] sm:$0xff]
  %v1331 = vld [vmem:[%s0 + $0x92] sm:$0xff]
  %v1332 = vld [vmem:[%s0 + $0x9a] sm:$0xff]
  %v1333 = vld [vmem:[%s0 + $0xaa] sm:$0xff]
  %v1334 = vld [vmem:[%s0 + $0xb2] sm:$0xff]
  %v1335 = vld [vmem:[%s0 + $0xc2] sm:$0xff]
  %v1336 = vld [vmem:[%s0 + $0xca] sm:$0xff]
  %v1337 = vld [vmem:[%s0 + $0xda] sm:$0xff]
  %v1338 = vld [vmem:[%s0 + $0xe2] sm:$0xff]
  %v1339 = vld [vmem:[%s0 + $0xf2] sm:$0xff]
  %v1340 = vld [vmem:[%s0 + $0xfa] sm:$0xff]
  %v1341 = vld [vmem:[%s0 + $0x10a] sm:$0xff]
  %v1342 = vld [vmem:[%s0 + $0x112] sm:$0xff]
  %v1343 = vld [vmem:[%s0 + $0x122] sm:$0xff]
  %v1344 = vld [vmem:[%s0 + $0x12a] sm:$0xff]
  %v1345 = vld [vmem:[%s0 + $0x13a] sm:$0xff]
  %v1346 = vld [vmem:[%s0 + $0x142] sm:$0xff]
  %v1347 = vld [vmem:[%s0 + $0x152] sm:$0xff]
  %v1348 = vld [vmem:[%s0 + $0x15a] sm:$0xff]
  %v1349 = vld [vmem:[%s0 + $0x16a] sm:$0xff]
  %v1350 = vld [vmem:[%s0 + $0x172] sm:$0xff]
  %v1351 = vld [vmem:[%s0 + $0x1b2] sm:$0xff]
  %v1352 = vld [vmem:[%s0 + $0x1ba] sm:$0xff]
  %v1353 = vld [vmem:[%s0 + $0x1ca] sm:$0xff]
  %v1354 = vld [vmem:[%s0 + $0x1d2] sm:$0xff]
  %v1355 = vld [vmem:[%s0 + $0x1e2] sm:$0xff]
  %v1356 = vld [vmem:[%s0 + $0x1ea] sm:$0xff]
  %v1357 = vld [vmem:[%s0 + $0x1fa] sm:$0xff]
  %v1358 = vld [vmem:[%s0 + $0x202] sm:$0xff]
  %v1359 = vld [vmem:[%s0 + $0x212] sm:$0xff]
  %v1360 = vld [vmem:[%s0 + $0x21a] sm:$0xff]
  %v1361 = vld [vmem:[%s0 + $0x22a] sm:$0xff]
  %v1362 = vld [vmem:[%s0 + $0x232] sm:$0xff]
  %v1363 = vld [vmem:[%s0 + $0x242] sm:$0xff]
  %v1364 = vld [vmem:[%s0 + $0x24a] sm:$0xff]
  %v1365 = vld [vmem:[%s0 + $0x25a] sm:$0xff]
  %v1366 = vld [vmem:[%s0 + $0x262] sm:$0xff]
  %v1367 = vld [vmem:[%s0 + $0x272] sm:$0xff]
  %v1368 = vld [vmem:[%s0 + $0x27a] sm:$0xff]
  %v1369 = vld [vmem:[%s0 + $0x28a] sm:$0xff]
  %v1370 = vld [vmem:[%s0 + $0x292] sm:$0xff]
  %v1371 = vld [vmem:[%s0 + $0x2a2] sm:$0xff]
  %v1372 = vld [vmem:[%s0 + $0x2aa] sm:$0xff]
  %v1373 = vld [vmem:[%s0 + $0x2ba] sm:$0xff]
  %v1374 = vld [vmem:[%s0 + $0x2c2] sm:$0xff]
  %v1375 = vld [vmem:[%s0 + $0x2d2] sm:$0xff]
  %v1376 = vld [vmem:[%s0 + $0x2da] sm:$0xff]
  %v1377 = vld [vmem:[%s0 + $0x2ea] sm:$0xff]
  %v1378 = vld [vmem:[%s0 + $0x2f2] sm:$0xff]
  %v1379 = vld [vmem:[%s0 + $0x302] sm:$0xff]
  %v1380 = vld [vmem:[%s0 + $0x30a] sm:$0xff]
  %v1381 = vld [vmem:[%s0 + $0x31a] sm:$0xff]
  %v1382 = vld [vmem:[%s0 + $0x322] sm:$0xff]
  %s1383 = scalar_lea.vmem %s1, 8
  %v1384 = vld [vmem:[%s1383] sm:$0xf]
  %v1386 = vsel %vm157, %v1319, 0
  %v1389 = vsel %vm157, %v1320, 0
  %v1392 = vsel %vm157, %v1321, 0
  %v1395 = vsel %vm157, %v1322, 0
  %v1398 = vsel %vm157, %v1323, 0
  %v1401 = vsel %vm157, %v1324, 0
  %v1404 = vsel %vm157, %v1325, 0
  %v1407 = vsel %vm157, %v1326, 0
  %v1410 = vsel %vm157, %v1327, 0
  %v1413 = vsel %vm157, %v1328, 0
  %v1416 = vsel %vm157, %v1329, 0
  %v1419 = vsel %vm157, %v1330, 0
  %v1422 = vsel %vm157, %v1331, 0
  %v1425 = vsel %vm157, %v1332, 0
  %v1428 = vsel %vm157, %v1333, 0
  %v1431 = vsel %vm157, %v1334, 0
  %v1434 = vsel %vm157, %v1335, 0
  %v1437 = vsel %vm157, %v1336, 0
  %v1440 = vsel %vm157, %v1337, 0
  %v1443 = vsel %vm157, %v1338, 0
  %v1446 = vsel %vm157, %v1339, 0
  %v1449 = vsel %vm157, %v1340, 0
  %v1452 = vsel %vm157, %v1341, 0
  %v1455 = vsel %vm157, %v1342, 0
  %v1458 = vsel %vm157, %v1343, 0
  %v1461 = vsel %vm157, %v1344, 0
  %v1464 = vsel %vm157, %v1345, 0
  %v1467 = vsel %vm157, %v1346, 0
  %v1470 = vsel %vm157, %v1347, 0
  %v1473 = vsel %vm157, %v1348, 0
  %v1476 = vsel %vm157, %v1349, 0
  %v1479 = vsel %vm157, %v1350, 0
  %v1482 = vsel %vm157, %v1351, 0
  %v1485 = vsel %vm157, %v1352, 0
  %v1488 = vsel %vm157, %v1353, 0
  %v1491 = vsel %vm157, %v1354, 0
  %v1494 = vsel %vm157, %v1355, 0
  %v1497 = vsel %vm157, %v1356, 0
  %v1500 = vsel %vm157, %v1357, 0
  %v1503 = vsel %vm157, %v1358, 0
  %v1506 = vsel %vm157, %v1359, 0
  %v1509 = vsel %vm157, %v1360, 0
  %v1512 = vsel %vm157, %v1361, 0
  %v1515 = vsel %vm157, %v1362, 0
  %v1518 = vsel %vm157, %v1363, 0
  %v1521 = vsel %vm157, %v1364, 0
  %v1524 = vsel %vm157, %v1365, 0
  %v1527 = vsel %vm157, %v1366, 0
  %v1530 = vsel %vm157, %v1367, 0
  %v1533 = vsel %vm157, %v1368, 0
  %v1536 = vsel %vm157, %v1369, 0
  %v1539 = vsel %vm157, %v1370, 0
  %v1542 = vsel %vm157, %v1371, 0
  %v1545 = vsel %vm157, %v1372, 0
  %v1548 = vsel %vm157, %v1373, 0
  %v1551 = vsel %vm157, %v1374, 0
  %v1554 = vsel %vm157, %v1375, 0
  %v1557 = vsel %vm157, %v1376, 0
  %v1560 = vsel %vm157, %v1377, 0
  %v1563 = vsel %vm157, %v1378, 0
  %v1566 = vsel %vm157, %v1379, 0
  %v1569 = vsel %vm157, %v1380, 0
  %v1572 = vsel %vm157, %v1381, 0
  %v1575 = vsel %vm157, %v1382, 0
  %v1578 = vsel %vm350, %v1384, 0
  %1580 = vmatprep.subr.mxu0 0.0
  %1581 = vmatpush1.msra.mxu0 %v1578
  %1582 = vmatprep.subr.mxu0 0.0
  %1583 = vmatpush1.msra.mxu0 0.0
  %1584 = vmatprep.subr.mxu0 0.0
  %1585 = vmatpush1.msra.mxu0 0.0
  %1586 = vmatprep.subr.mxu0 0.0
  %1587 = vmatpush1.msra.mxu0 0.0
  %1588 = vmatprep.subr.mxu0 0.0
  %1589 = vmatpush1.msra.mxu0 0.0
  %1590 = vmatprep.subr.mxu0 0.0
  %1591 = vmatpush1.msra.mxu0 0.0
  %1592 = vmatprep.subr.mxu0 0.0
  %1593 = vmatpush1.msra.mxu0 0.0
  %1594 = vmatprep.subr.mxu0 0.0
  %1595 = vmatpush1.msra.mxu0 0.0
  %1596 = vmatprep.subr.mxu0 0.0
  %1597 = vmatpush1.msra.mxu0 0.0
  %1598 = vmatprep.subr.mxu0 0.0
  %1599 = vmatpush1.msra.mxu0 0.0
  %1600 = vmatprep.subr.mxu0 0.0
  %1601 = vmatpush1.msra.mxu0 0.0
  %1602 = vmatprep.subr.mxu0 0.0
  %1603 = vmatpush1.msra.mxu0 0.0
  %1604 = vmatprep.subr.mxu0 0.0
  %1605 = vmatpush1.msra.mxu0 0.0
  %1606 = vmatprep.subr.mxu0 0.0
  %1607 = vmatpush1.msra.mxu0 0.0
  %1608 = vmatprep.subr.mxu0 0.0
  %1609 = vmatpush1.msra.mxu0 0.0
  %1610 = vmatprep.subr.mxu0 0.0
  %1611 = vmatpush1.msra.mxu0 0.0
  %1612 = vmatprep.subr.mxu0 0.0
  %1613 = vmatpush1.msra.mxu0 0.0
  %1614 = vmatprep.subr.mxu0 0.0
  %1615 = vmatpush1.msra.mxu0 0.0
  %1616 = vmatprep.subr.mxu0 0.0
  %1617 = vmatpush1.msra.mxu0 0.0
  %1618 = vmatprep.subr.mxu0 0.0
  %1619 = vmatpush1.msra.mxu0 0.0
  %1620 = vmatprep.subr.mxu0 0.0
  %1621 = vmatpush1.msra.mxu0 0.0
  %1622 = vmatprep.subr.mxu0 0.0
  %1623 = vmatpush1.msra.mxu0 0.0
  %1624 = vmatprep.subr.mxu0 0.0
  %1625 = vmatpush1.msra.mxu0 0.0
  %1626 = vmatprep.subr.mxu0 0.0
  %1627 = vmatpush1.msra.mxu0 0.0
  %1628 = vmatprep.subr.mxu0 0.0
  %1629 = vmatpush1.msra.mxu0 0.0
  %1630 = vmatprep.subr.mxu0 0.0
  %1631 = vmatpush1.msra.mxu0 0.0
  %1632 = vmatprep.subr.mxu0 0.0
  %1633 = vmatpush1.msra.mxu0 0.0
  %1634 = vmatprep.subr.mxu0 0.0
  %1635 = vmatpush1.msra.mxu0 0.0
  %1636 = vmatprep.subr.mxu0 0.0
  %1637 = vmatpush1.msra.mxu0 0.0
  %1638 = vmatprep.subr.mxu0 0.0
  %1639 = vmatpush1.msra.mxu0 0.0
  %1640 = vmatprep.subr.mxu0 0.0
  %1641 = vmatpush1.msra.mxu0 0.0
  %1642 = vmatprep.subr.mxu0 0.0
  %1643 = vmatpush1.msra.mxu0 0.0
  %1644 = vmatprep.mubr.f32.mxu0 0.0
  %1645 = vmatmul.mubr.f32.gmra.mrb[0].mxu0 %v1386
  %v1646 = vpop.f32.mrb[0].mxu0
  %v1647 = vadd.f32 0.0, %v1646
  %v1648 = vpop.f32.mrb[0].mxu0
  %1649 = vmatprep.mubr.f32.mxu0 0.0
  %1650 = vmatmul.mubr.f32.gmra.mrb[0].mxu0 %v1389
  %v1651 = vpop.f32.mrb[0].mxu0
  %v1652 = vadd.f32 0.0, %v1651
  %v1653 = vpop.f32.mrb[0].mxu0
  %1654 = vmatprep.mubr.f32.mxu0 0.0
  %1655 = vmatmul.mubr.f32.gmra.mrb[0].mxu0 %v1392
  %v1656 = vpop.f32.mrb[0].mxu0
  %v1657 = vadd.f32 0.0, %v1656
  %v1658 = vpop.f32.mrb[0].mxu0
  %1659 = vmatprep.mubr.f32.mxu0 0.0
  %1660 = vmatmul.mubr.f32.gmra.mrb[0].mxu0 %v1395
  %v1661 = vpop.f32.mrb[0].mxu0
  %v1662 = vadd.f32 0.0, %v1661
  %v1663 = vpop.f32.mrb[0].mxu0
  %1664 = vmatprep.mubr.f32.mxu0 0.0
  %1665 = vmatmul.mubr.f32.gmra.mrb[0].mxu0 %v1398
  %v1666 = vpop.f32.mrb[0].mxu0
  %v1667 = vadd.f32 0.0, %v1666
  %v1668 = vpop.f32.mrb[0].mxu0
  %1669 = vmatprep.mubr.f32.mxu0 0.0
  %1670 = vmatmul.mubr.f32.gmra.mrb[0].mxu0 %v1401
  %v1671 = vpop.f32.mrb[0].mxu0
  %v1672 = vadd.f32 0.0, %v1671
  %v1673 = vpop.f32.mrb[0].mxu0
  %1674 = vmatprep.mubr.f32.mxu0 0.0
  %1675 = vmatmul.mubr.f32.gmra.mrb[0].mxu0 %v1404
  %v1676 = vpop.f32.mrb[0].mxu0
  %v1677 = vadd.f32 0.0, %v1676
  %v1678 = vpop.f32.mrb[0].mxu0
  %1679 = vmatprep.mubr.f32.mxu0 0.0
  %1680 = vmatmul.mubr.f32.gmra.mrb[0].mxu0 %v1407
  %v1681 = vpop.f32.mrb[0].mxu0
  %v1682 = vadd.f32 0.0, %v1681
  %v1683 = vpop.f32.mrb[0].mxu0
  %1684 = vmatprep.mubr.f32.mxu0 0.0
  %1685 = vmatmul.mubr.f32.gmra.mrb[0].mxu0 %v1410
  %v1686 = vpop.f32.mrb[0].mxu0
  %v1687 = vadd.f32 0.0, %v1686
  %v1688 = vpop.f32.mrb[0].mxu0
  %1689 = vmatprep.mubr.f32.mxu0 0.0
  %1690 = vmatmul.mubr.f32.gmra.mrb[0].mxu0 %v1413
  %v1691 = vpop.f32.mrb[0].mxu0
  %v1692 = vadd.f32 0.0, %v1691
  %v1693 = vpop.f32.mrb[0].mxu0
  %1694 = vmatprep.mubr.f32.mxu0 0.0
  %1695 = vmatmul.mubr.f32.gmra.mrb[0].mxu0 %v1416
  %v1696 = vpop.f32.mrb[0].mxu0
  %v1697 = vadd.f32 0.0, %v1696
  %v1698 = vpop.f32.mrb[0].mxu0
  %1699 = vmatprep.mubr.f32.mxu0 0.0
  %1700 = vmatmul.mubr.f32.gmra.mrb[0].mxu0 %v1419
  %v1701 = vpop.f32.mrb[0].mxu0
  %v1702 = vadd.f32 0.0, %v1701
  %v1703 = vpop.f32.mrb[0].mxu0
  %1704 = vmatprep.mubr.f32.mxu0 0.0
  %1705 = vmatmul.mubr.f32.gmra.mrb[0].mxu0 %v1422
  %v1706 = vpop.f32.mrb[0].mxu0
  %v1707 = vadd.f32 0.0, %v1706
  %v1708 = vpop.f32.mrb[0].mxu0
  %1709 = vmatprep.mubr.f32.mxu0 0.0
  %1710 = vmatmul.mubr.f32.gmra.mrb[0].mxu0 %v1425
  %v1711 = vpop.f32.mrb[0].mxu0
  %v1712 = vadd.f32 0.0, %v1711
  %v1713 = vpop.f32.mrb[0].mxu0
  %1714 = vmatprep.mubr.f32.mxu0 0.0
  %1715 = vmatmul.mubr.f32.gmra.mrb[0].mxu0 %v1428
  %v1716 = vpop.f32.mrb[0].mxu0
  %v1717 = vadd.f32 0.0, %v1716
  %v1718 = vpop.f32.mrb[0].mxu0
  %1719 = vmatprep.mubr.f32.mxu0 0.0
  %1720 = vmatmul.mubr.f32.gmra.mrb[0].mxu0 %v1431
  %v1721 = vpop.f32.mrb[0].mxu0
  %v1722 = vadd.f32 0.0, %v1721
  %v1723 = vpop.f32.mrb[0].mxu0
  %1724 = vmatprep.mubr.f32.mxu0 0.0
  %1725 = vmatmul.mubr.f32.gmra.mrb[0].mxu0 %v1434
  %v1726 = vpop.f32.mrb[0].mxu0
  %v1727 = vadd.f32 0.0, %v1726
  %v1728 = vpop.f32.mrb[0].mxu0
  %1729 = vmatprep.mubr.f32.mxu0 0.0
  %1730 = vmatmul.mubr.f32.gmra.mrb[0].mxu0 %v1437
  %v1731 = vpop.f32.mrb[0].mxu0
  %v1732 = vadd.f32 0.0, %v1731
  %v1733 = vpop.f32.mrb[0].mxu0
  %1734 = vmatprep.mubr.f32.mxu0 0.0
  %1735 = vmatmul.mubr.f32.gmra.mrb[0].mxu0 %v1440
  %v1736 = vpop.f32.mrb[0].mxu0
  %v1737 = vadd.f32 0.0, %v1736
  %v1738 = vpop.f32.mrb[0].mxu0
  %1739 = vmatprep.mubr.f32.mxu0 0.0
  %1740 = vmatmul.mubr.f32.gmra.mrb[0].mxu0 %v1443
  %v1741 = vpop.f32.mrb[0].mxu0
  %v1742 = vadd.f32 0.0, %v1741
  %v1743 = vpop.f32.mrb[0].mxu0
  %1744 = vmatprep.mubr.f32.mxu0 0.0
  %1745 = vmatmul.mubr.f32.gmra.mrb[0].mxu0 %v1446
  %v1746 = vpop.f32.mrb[0].mxu0
  %v1747 = vadd.f32 0.0, %v1746
  %v1748 = vpop.f32.mrb[0].mxu0
  %1749 = vmatprep.mubr.f32.mxu0 0.0
  %1750 = vmatmul.mubr.f32.gmra.mrb[0].mxu0 %v1449
  %v1751 = vpop.f32.mrb[0].mxu0
  %v1752 = vadd.f32 0.0, %v1751
  %v1753 = vpop.f32.mrb[0].mxu0
  %1754 = vmatprep.mubr.f32.mxu0 0.0
  %1755 = vmatmul.mubr.f32.gmra.mrb[0].mxu0 %v1452
  %v1756 = vpop.f32.mrb[0].mxu0
  %v1757 = vadd.f32 0.0, %v1756
  %v1758 = vpop.f32.mrb[0].mxu0
  %1759 = vmatprep.mubr.f32.mxu0 0.0
  %1760 = vmatmul.mubr.f32.gmra.mrb[0].mxu0 %v1455
  %v1761 = vpop.f32.mrb[0].mxu0
  %v1762 = vadd.f32 0.0, %v1761
  %v1763 = vpop.f32.mrb[0].mxu0
  %1764 = vmatprep.mubr.f32.mxu0 0.0
  %1765 = vmatmul.mubr.f32.gmra.mrb[0].mxu0 %v1458
  %v1766 = vpop.f32.mrb[0].mxu0
  %v1767 = vadd.f32 0.0, %v1766
  %v1768 = vpop.f32.mrb[0].mxu0
  %1769 = vmatprep.mubr.f32.mxu0 0.0
  %1770 = vmatmul.mubr.f32.gmra.mrb[0].mxu0 %v1461
  %v1771 = vpop.f32.mrb[0].mxu0
  %v1772 = vadd.f32 0.0, %v1771
  %v1773 = vpop.f32.mrb[0].mxu0
  %1774 = vmatprep.mubr.f32.mxu0 0.0
  %1775 = vmatmul.mubr.f32.gmra.mrb[0].mxu0 %v1464
  %v1776 = vpop.f32.mrb[0].mxu0
  %v1777 = vadd.f32 0.0, %v1776
  %v1778 = vpop.f32.mrb[0].mxu0
  %1779 = vmatprep.mubr.f32.mxu0 0.0
  %1780 = vmatmul.mubr.f32.gmra.mrb[0].mxu0 %v1467
  %v1781 = vpop.f32.mrb[0].mxu0
  %v1782 = vadd.f32 0.0, %v1781
  %v1783 = vpop.f32.mrb[0].mxu0
  %1784 = vmatprep.mubr.f32.mxu0 0.0
  %1785 = vmatmul.mubr.f32.gmra.mrb[0].mxu0 %v1470
  %v1786 = vpop.f32.mrb[0].mxu0
  %v1787 = vadd.f32 0.0, %v1786
  %v1788 = vpop.f32.mrb[0].mxu0
  %1789 = vmatprep.mubr.f32.mxu0 0.0
  %1790 = vmatmul.mubr.f32.gmra.mrb[0].mxu0 %v1473
  %v1791 = vpop.f32.mrb[0].mxu0
  %v1792 = vadd.f32 0.0, %v1791
  %v1793 = vpop.f32.mrb[0].mxu0
  %1794 = vmatprep.mubr.f32.mxu0 0.0
  %1795 = vmatmul.mubr.f32.gmra.mrb[0].mxu0 %v1476
  %v1796 = vpop.f32.mrb[0].mxu0
  %v1797 = vadd.f32 0.0, %v1796
  %v1798 = vpop.f32.mrb[0].mxu0
  %1799 = vmatprep.mubr.f32.mxu0 0.0
  %1800 = vmatmul.mubr.f32.gmra.mrb[0].mxu0 %v1479
  %v1801 = vpop.f32.mrb[0].mxu0
  %v1802 = vadd.f32 0.0, %v1801
  %v1803 = vpop.f32.mrb[0].mxu0
  %1804 = vmatprep.mubr.f32.mxu0 0.0
  %1805 = vmatmul.mubr.f32.gmra.mrb[0].mxu0 %v1482
  %v1806 = vpop.f32.mrb[0].mxu0
  %v1807 = vadd.f32 0.0, %v1806
  %v1808 = vpop.f32.mrb[0].mxu0
  %1809 = vmatprep.mubr.f32.mxu0 0.0
  %1810 = vmatmul.mubr.f32.gmra.mrb[0].mxu0 %v1485
  %v1811 = vpop.f32.mrb[0].mxu0
  %v1812 = vadd.f32 0.0, %v1811
  %v1813 = vpop.f32.mrb[0].mxu0
  %1814 = vmatprep.mubr.f32.mxu0 0.0
  %1815 = vmatmul.mubr.f32.gmra.mrb[0].mxu0 %v1488
  %v1816 = vpop.f32.mrb[0].mxu0
  %v1817 = vadd.f32 0.0, %v1816
  %v1818 = vpop.f32.mrb[0].mxu0
  %1819 = vmatprep.mubr.f32.mxu0 0.0
  %1820 = vmatmul.mubr.f32.gmra.mrb[0].mxu0 %v1491
  %v1821 = vpop.f32.mrb[0].mxu0
  %v1822 = vadd.f32 0.0, %v1821
  %v1823 = vpop.f32.mrb[0].mxu0
  %1824 = vmatprep.mubr.f32.mxu0 0.0
  %1825 = vmatmul.mubr.f32.gmra.mrb[0].mxu0 %v1494
  %v1826 = vpop.f32.mrb[0].mxu0
  %v1827 = vadd.f32 0.0, %v1826
  %v1828 = vpop.f32.mrb[0].mxu0
  %1829 = vmatprep.mubr.f32.mxu0 0.0
  %1830 = vmatmul.mubr.f32.gmra.mrb[0].mxu0 %v1497
  %v1831 = vpop.f32.mrb[0].mxu0
  %v1832 = vadd.f32 0.0, %v1831
  %v1833 = vpop.f32.mrb[0].mxu0
  %1834 = vmatprep.mubr.f32.mxu0 0.0
  %1835 = vmatmul.mubr.f32.gmra.mrb[0].mxu0 %v1500
  %v1836 = vpop.f32.mrb[0].mxu0
  %v1837 = vadd.f32 0.0, %v1836
  %v1838 = vpop.f32.mrb[0].mxu0
  %1839 = vmatprep.mubr.f32.mxu0 0.0
  %1840 = vmatmul.mubr.f32.gmra.mrb[0].mxu0 %v1503
  %v1841 = vpop.f32.mrb[0].mxu0
  %v1842 = vadd.f32 0.0, %v1841
  %v1843 = vpop.f32.mrb[0].mxu0
  %1844 = vmatprep.mubr.f32.mxu0 0.0
  %1845 = vmatmul.mubr.f32.gmra.mrb[0].mxu0 %v1506
  %v1846 = vpop.f32.mrb[0].mxu0
  %v1847 = vadd.f32 0.0, %v1846
  %v1848 = vpop.f32.mrb[0].mxu0
  %1849 = vmatprep.mubr.f32.mxu0 0.0
  %1850 = vmatmul.mubr.f32.gmra.mrb[0].mxu0 %v1509
  %v1851 = vpop.f32.mrb[0].mxu0
  %v1852 = vadd.f32 0.0, %v1851
  %v1853 = vpop.f32.mrb[0].mxu0
  %1854 = vmatprep.mubr.f32.mxu0 0.0
  %1855 = vmatmul.mubr.f32.gmra.mrb[0].mxu0 %v1512
  %v1856 = vpop.f32.mrb[0].mxu0
  %v1857 = vadd.f32 0.0, %v1856
  %v1858 = vpop.f32.mrb[0].mxu0
  %1859 = vmatprep.mubr.f32.mxu0 0.0
  %1860 = vmatmul.mubr.f32.gmra.mrb[0].mxu0 %v1515
  %v1861 = vpop.f32.mrb[0].mxu0
  %v1862 = vadd.f32 0.0, %v1861
  %v1863 = vpop.f32.mrb[0].mxu0
  %1864 = vmatprep.mubr.f32.mxu0 0.0
  %1865 = vmatmul.mubr.f32.gmra.mrb[0].mxu0 %v1518
  %v1866 = vpop.f32.mrb[0].mxu0
  %v1867 = vadd.f32 0.0, %v1866
  %v1868 = vpop.f32.mrb[0].mxu0
  %1869 = vmatprep.mubr.f32.mxu0 0.0
  %1870 = vmatmul.mubr.f32.gmra.mrb[0].mxu0 %v1521
  %v1871 = vpop.f32.mrb[0].mxu0
  %v1872 = vadd.f32 0.0, %v1871
  %v1873 = vpop.f32.mrb[0].mxu0
  %1874 = vmatprep.mubr.f32.mxu0 0.0
  %1875 = vmatmul.mubr.f32.gmra.mrb[0].mxu0 %v1524
  %v1876 = vpop.f32.mrb[0].mxu0
  %v1877 = vadd.f32 0.0, %v1876
  %v1878 = vpop.f32.mrb[0].mxu0
  %1879 = vmatprep.mubr.f32.mxu0 0.0
  %1880 = vmatmul.mubr.f32.gmra.mrb[0].mxu0 %v1527
  %v1881 = vpop.f32.mrb[0].mxu0
  %v1882 = vadd.f32 0.0, %v1881
  %v1883 = vpop.f32.mrb[0].mxu0
  %1884 = vmatprep.mubr.f32.mxu0 0.0
  %1885 = vmatmul.mubr.f32.gmra.mrb[0].mxu0 %v1530
  %v1886 = vpop.f32.mrb[0].mxu0
  %v1887 = vadd.f32 0.0, %v1886
  %v1888 = vpop.f32.mrb[0].mxu0
  %1889 = vmatprep.mubr.f32.mxu0 0.0
  %1890 = vmatmul.mubr.f32.gmra.mrb[0].mxu0 %v1533
  %v1891 = vpop.f32.mrb[0].mxu0
  %v1892 = vadd.f32 0.0, %v1891
  %v1893 = vpop.f32.mrb[0].mxu0
  %1894 = vmatprep.mubr.f32.mxu0 0.0
  %1895 = vmatmul.mubr.f32.gmra.mrb[0].mxu0 %v1536
  %v1896 = vpop.f32.mrb[0].mxu0
  %v1897 = vadd.f32 0.0, %v1896
  %v1898 = vpop.f32.mrb[0].mxu0
  %1899 = vmatprep.mubr.f32.mxu0 0.0
  %1900 = vmatmul.mubr.f32.gmra.mrb[0].mxu0 %v1539
  %v1901 = vpop.f32.mrb[0].mxu0
  %v1902 = vadd.f32 0.0, %v1901
  %v1903 = vpop.f32.mrb[0].mxu0
  %1904 = vmatprep.mubr.f32.mxu0 0.0
  %1905 = vmatmul.mubr.f32.gmra.mrb[0].mxu0 %v1542
  %v1906 = vpop.f32.mrb[0].mxu0
  %v1907 = vadd.f32 0.0, %v1906
  %v1908 = vpop.f32.mrb[0].mxu0
  %1909 = vmatprep.mubr.f32.mxu0 0.0
  %1910 = vmatmul.mubr.f32.gmra.mrb[0].mxu0 %v1545
  %v1911 = vpop.f32.mrb[0].mxu0
  %v1912 = vadd.f32 0.0, %v1911
  %v1913 = vpop.f32.mrb[0].mxu0
  %1914 = vmatprep.mubr.f32.mxu0 0.0
  %1915 = vmatmul.mubr.f32.gmra.mrb[0].mxu0 %v1548
  %v1916 = vpop.f32.mrb[0].mxu0
  %v1917 = vadd.f32 0.0, %v1916
  %v1918 = vpop.f32.mrb[0].mxu0
  %1919 = vmatprep.mubr.f32.mxu0 0.0
  %1920 = vmatmul.mubr.f32.gmra.mrb[0].mxu0 %v1551
  %v1921 = vpop.f32.mrb[0].mxu0
  %v1922 = vadd.f32 0.0, %v1921
  %v1923 = vpop.f32.mrb[0].mxu0
  %1924 = vmatprep.mubr.f32.mxu0 0.0
  %1925 = vmatmul.mubr.f32.gmra.mrb[0].mxu0 %v1554
  %v1926 = vpop.f32.mrb[0].mxu0
  %v1927 = vadd.f32 0.0, %v1926
  %v1928 = vpop.f32.mrb[0].mxu0
  %1929 = vmatprep.mubr.f32.mxu0 0.0
  %1930 = vmatmul.mubr.f32.gmra.mrb[0].mxu0 %v1557
  %v1931 = vpop.f32.mrb[0].mxu0
  %v1932 = vadd.f32 0.0, %v1931
  %v1933 = vpop.f32.mrb[0].mxu0
  %1934 = vmatprep.mubr.f32.mxu0 0.0
  %1935 = vmatmul.mubr.f32.gmra.mrb[0].mxu0 %v1560
  %v1936 = vpop.f32.mrb[0].mxu0
  %v1937 = vadd.f32 0.0, %v1936
  %v1938 = vpop.f32.mrb[0].mxu0
  %1939 = vmatprep.mubr.f32.mxu0 0.0
  %1940 = vmatmul.mubr.f32.gmra.mrb[0].mxu0 %v1563
  %v1941 = vpop.f32.mrb[0].mxu0
  %v1942 = vadd.f32 0.0, %v1941
  %v1943 = vpop.f32.mrb[0].mxu0
  %1944 = vmatprep.mubr.f32.mxu0 0.0
  %1945 = vmatmul.mubr.f32.gmra.mrb[0].mxu0 %v1566
  %v1946 = vpop.f32.mrb[0].mxu0
  %v1947 = vadd.f32 0.0, %v1946
  %v1948 = vpop.f32.mrb[0].mxu0
  %1949 = vmatprep.mubr.f32.mxu0 0.0
  %1950 = vmatmul.mubr.f32.gmra.mrb[0].mxu0 %v1569
  %v1951 = vpop.f32.mrb[0].mxu0
  %v1952 = vadd.f32 0.0, %v1951
  %v1953 = vpop.f32.mrb[0].mxu0
  %1954 = vmatprep.mubr.f32.mxu0 0.0
  %1955 = vmatmul.mubr.f32.gmra.mrb[0].mxu0 %v1572
  %v1956 = vpop.f32.mrb[0].mxu0
  %v1957 = vadd.f32 0.0, %v1956
  %v1958 = vpop.f32.mrb[0].mxu0
  %1959 = vmatprep.mubr.f32.mxu0 0.0
  %1960 = vmatmul.mubr.f32.gmra.mrb[0].mxu0 %v1575
  %v1961 = vpop.f32.mrb[0].mxu0
  %v1962 = vadd.f32 0.0, %v1961
  %v1963 = vpop.f32.mrb[0].mxu0
  %1964 = vdwg.mxu0
  %v1965 = vadd.f32 %v1001, %v1647
  %v1966 = vadd.f32 %v1006, %v1652
  %v1967 = vadd.f32 %v1011, %v1657
  %v1968 = vadd.f32 %v1016, %v1662
  %v1969 = vadd.f32 %v1021, %v1667
  %v1970 = vadd.f32 %v1026, %v1672
  %v1971 = vadd.f32 %v1031, %v1677
  %v1972 = vadd.f32 %v1036, %v1682
  %v1973 = vadd.f32 %v1041, %v1687
  %v1974 = vadd.f32 %v1046, %v1692
  %v1975 = vadd.f32 %v1051, %v1697
  %v1976 = vadd.f32 %v1056, %v1702
  %v1977 = vadd.f32 %v1061, %v1707
  %v1978 = vadd.f32 %v1066, %v1712
  %v1979 = vadd.f32 %v1071, %v1717
  %v1980 = vadd.f32 %v1076, %v1722
  %v1981 = vadd.f32 %v1081, %v1727
  %v1982 = vadd.f32 %v1086, %v1732
  %v1983 = vadd.f32 %v1091, %v1737
  %v1984 = vadd.f32 %v1096, %v1742
  %v1985 = vadd.f32 %v1101, %v1747
  %v1986 = vadd.f32 %v1106, %v1752
  %v1987 = vadd.f32 %v1111, %v1757
  %v1988 = vadd.f32 %v1116, %v1762
  %v1989 = vadd.f32 %v1121, %v1767
  %v1990 = vadd.f32 %v1126, %v1772
  %v1991 = vadd.f32 %v1131, %v1777
  %v1992 = vadd.f32 %v1136, %v1782
  %v1993 = vadd.f32 %v1141, %v1787
  %v1994 = vadd.f32 %v1146, %v1792
  %v1995 = vadd.f32 %v1151, %v1797
  %v1996 = vadd.f32 %v1156, %v1802
  %v1997 = vadd.f32 %v1161, %v1807
  %v1998 = vadd.f32 %v1166, %v1812
  %v1999 = vadd.f32 %v1171, %v1817
  %v2000 = vadd.f32 %v1176, %v1822
  %v2001 = vadd.f32 %v1181, %v1827
  %v2002 = vadd.f32 %v1186, %v1832
  %v2003 = vadd.f32 %v1191, %v1837
  %v2004 = vadd.f32 %v1196, %v1842
  %v2005 = vadd.f32 %v1201, %v1847
  %v2006 = vadd.f32 %v1206, %v1852
  %v2007 = vadd.f32 %v1211, %v1857
  %v2008 = vadd.f32 %v1216, %v1862
  %v2009 = vadd.f32 %v1221, %v1867
  %v2010 = vadd.f32 %v1226, %v1872
  %v2011 = vadd.f32 %v1231, %v1877
  %v2012 = vadd.f32 %v1236, %v1882
  %v2013 = vadd.f32 %v1241, %v1887
  %v2014 = vadd.f32 %v1246, %v1892
  %v2015 = vadd.f32 %v1251, %v1897
  %v2016 = vadd.f32 %v1256, %v1902
  %v2017 = vadd.f32 %v1261, %v1907
  %v2018 = vadd.f32 %v1266, %v1912
  %v2019 = vadd.f32 %v1271, %v1917
  %v2020 = vadd.f32 %v1276, %v1922
  %v2021 = vadd.f32 %v1281, %v1927
  %v2022 = vadd.f32 %v1286, %v1932
  %v2023 = vadd.f32 %v1291, %v1937
  %v2024 = vadd.f32 %v1296, %v1942
  %v2025 = vadd.f32 %v1301, %v1947
  %v2026 = vadd.f32 %v1306, %v1952
  %v2027 = vadd.f32 %v1311, %v1957
  %v2028 = vadd.f32 %v1316, %v1962
  %s2029 = scalar_lea.vmem %s0, 24
  %v2030 = vld [vmem:[%s2029] sm:$0xff]
  %v2031 = vld [vmem:[%s2029 + $0x8] sm:$0xff]
  %v2032 = vld [vmem:[%s2029 + $0x18] sm:$0xff]
  %v2033 = vld [vmem:[%s2029 + $0x20] sm:$0xff]
  %v2034 = vld [vmem:[%s2029 + $0x30] sm:$0xff]
  %v2035 = vld [vmem:[%s2029 + $0x38] sm:$0xff]
  %v2036 = vld [vmem:[%s2029 + $0x48] sm:$0xff]
  %v2037 = vld [vmem:[%s2029 + $0x50] sm:$0xff]
  %v2038 = vld [vmem:[%s2029 + $0x60] sm:$0xff]
  %v2039 = vld [vmem:[%s2029 + $0x68] sm:$0xff]
  %v2040 = vld [vmem:[%s2029 + $0x78] sm:$0xff]
  %v2041 = vld [vmem:[%s2029 + $0x80] sm:$0xff]
  %v2042 = vld [vmem:[%s2029 + $0x90] sm:$0xff]
  %v2043 = vld [vmem:[%s2029 + $0x98] sm:$0xff]
  %v2044 = vld [vmem:[%s2029 + $0xa8] sm:$0xff]
  %v2045 = vld [vmem:[%s2029 + $0xb0] sm:$0xff]
  %v2046 = vld [vmem:[%s2029 + $0xc0] sm:$0xff]
  %v2047 = vld [vmem:[%s2029 + $0xc8] sm:$0xff]
  %v2048 = vld [vmem:[%s2029 + $0xd8] sm:$0xff]
  %v2049 = vld [vmem:[%s2029 + $0xe0] sm:$0xff]
  %v2050 = vld [vmem:[%s2029 + $0xf0] sm:$0xff]
  %v2051 = vld [vmem:[%s2029 + $0xf8] sm:$0xff]
  %v2052 = vld [vmem:[%s2029 + $0x108] sm:$0xff]
  %v2053 = vld [vmem:[%s2029 + $0x110] sm:$0xff]
  %v2054 = vld [vmem:[%s2029 + $0x120] sm:$0xff]
  %v2055 = vld [vmem:[%s2029 + $0x128] sm:$0xff]
  %v2056 = vld [vmem:[%s2029 + $0x138] sm:$0xff]
  %v2057 = vld [vmem:[%s2029 + $0x140] sm:$0xff]
  %v2058 = vld [vmem:[%s2029 + $0x150] sm:$0xff]
  %v2059 = vld [vmem:[%s2029 + $0x158] sm:$0xff]
  %v2060 = vld [vmem:[%s2029 + $0x168] sm:$0xff]
  %v2061 = vld [vmem:[%s2029 + $0x170] sm:$0xff]
  %v2062 = vld [vmem:[%s2029 + $0x1b0] sm:$0xff]
  %v2063 = vld [vmem:[%s2029 + $0x1b8] sm:$0xff]
  %v2064 = vld [vmem:[%s2029 + $0x1c8] sm:$0xff]
  %v2065 = vld [vmem:[%s2029 + $0x1d0] sm:$0xff]
  %v2066 = vld [vmem:[%s2029 + $0x1e0] sm:$0xff]
  %v2067 = vld [vmem:[%s2029 + $0x1e8] sm:$0xff]
  %v2068 = vld [vmem:[%s2029 + $0x1f8] sm:$0xff]
  %v2069 = vld [vmem:[%s2029 + $0x200] sm:$0xff]
  %v2070 = vld [vmem:[%s2029 + $0x210] sm:$0xff]
  %v2071 = vld [vmem:[%s2029 + $0x218] sm:$0xff]
  %v2072 = vld [vmem:[%s2029 + $0x228] sm:$0xff]
  %v2073 = vld [vmem:[%s2029 + $0x230] sm:$0xff]
  %v2074 = vld [vmem:[%s2029 + $0x240] sm:$0xff]
  %v2075 = vld [vmem:[%s2029 + $0x248] sm:$0xff]
  %v2076 = vld [vmem:[%s2029 + $0x258] sm:$0xff]
  %v2077 = vld [vmem:[%s2029 + $0x260] sm:$0xff]
  %v2078 = vld [vmem:[%s2029 + $0x270] sm:$0xff]
  %v2079 = vld [vmem:[%s2029 + $0x278] sm:$0xff]
  %v2080 = vld [vmem:[%s2029 + $0x288] sm:$0xff]
  %v2081 = vld [vmem:[%s2029 + $0x290] sm:$0xff]
  %v2082 = vld [vmem:[%s2029 + $0x2a0] sm:$0xff]
  %v2083 = vld [vmem:[%s2029 + $0x2a8] sm:$0xff]
  %v2084 = vld [vmem:[%s2029 + $0x2b8] sm:$0xff]
  %v2085 = vld [vmem:[%s2029 + $0x2c0] sm:$0xff]
  %v2086 = vld [vmem:[%s2029 + $0x2d0] sm:$0xff]
  %v2087 = vld [vmem:[%s2029 + $0x2d8] sm:$0xff]
  %v2088 = vld [vmem:[%s2029 + $0x2e8] sm:$0xff]
  %v2089 = vld [vmem:[%s2029 + $0x2f0] sm:$0xff]
  %v2090 = vld [vmem:[%s2029 + $0x300] sm:$0xff]
  %v2091 = vld [vmem:[%s2029 + $0x308] sm:$0xff]
  %v2092 = vld [vmem:[%s2029 + $0x318] sm:$0xff]
  %v2093 = vld [vmem:[%s2029 + $0x320] sm:$0xff]
  %s2094 = scalar_lea.vmem %s1, 12
  %v2095 = vld [vmem:[%s2094] sm:$0xf]
  %v2097 = vsel %vm157, %v2030, 0
  %v2100 = vsel %vm157, %v2031, 0
  %v2103 = vsel %vm157, %v2032, 0
  %v2106 = vsel %vm157, %v2033, 0
  %v2109 = vsel %vm157, %v2034, 0
  %v2112 = vsel %vm157, %v2035, 0
  %v2115 = vsel %vm157, %v2036, 0
  %v2118 = vsel %vm157, %v2037, 0
  %v2121 = vsel %vm157, %v2038, 0
  %v2124 = vsel %vm157, %v2039, 0
  %v2127 = vsel %vm157, %v2040, 0
  %v2130 = vsel %vm157, %v2041, 0
  %v2133 = vsel %vm157, %v2042, 0
  %v2136 = vsel %vm157, %v2043, 0
  %v2139 = vsel %vm157, %v2044, 0
  %v2142 = vsel %vm157, %v2045, 0
  %v2145 = vsel %vm157, %v2046, 0
  %v2148 = vsel %vm157, %v2047, 0
  %v2151 = vsel %vm157, %v2048, 0
  %v2154 = vsel %vm157, %v2049, 0
  %v2157 = vsel %vm157, %v2050, 0
  %v2160 = vsel %vm157, %v2051, 0
  %v2163 = vsel %vm157, %v2052, 0
  %v2166 = vsel %vm157, %v2053, 0
  %v2169 = vsel %vm157, %v2054, 0
  %v2172 = vsel %vm157, %v2055, 0
  %v2175 = vsel %vm157, %v2056, 0
  %v2178 = vsel %vm157, %v2057, 0
  %v2181 = vsel %vm157, %v2058, 0
  %v2184 = vsel %vm157, %v2059, 0
  %v2187 = vsel %vm157, %v2060, 0
  %v2190 = vsel %vm157, %v2061, 0
  %v2193 = vsel %vm157, %v2062, 0
  %v2196 = vsel %vm157, %v2063, 0
  %v2199 = vsel %vm157, %v2064, 0
  %v2202 = vsel %vm157, %v2065, 0
  %v2205 = vsel %vm157, %v2066, 0
  %v2208 = vsel %vm157, %v2067, 0
  %v2211 = vsel %vm157, %v2068, 0
  %v2214 = vsel %vm157, %v2069, 0
  %v2217 = vsel %vm157, %v2070, 0
  %v2220 = vsel %vm157, %v2071, 0
  %v2223 = vsel %vm157, %v2072, 0
  %v2226 = vsel %vm157, %v2073, 0
  %v2229 = vsel %vm157, %v2074, 0
  %v2232 = vsel %vm157, %v2075, 0
  %v2235 = vsel %vm157, %v2076, 0
  %v2238 = vsel %vm157, %v2077, 0
  %v2241 = vsel %vm157, %v2078, 0
  %v2244 = vsel %vm157, %v2079, 0
  %v2247 = vsel %vm157, %v2080, 0
  %v2250 = vsel %vm157, %v2081, 0
  %v2253 = vsel %vm157, %v2082, 0
  %v2256 = vsel %vm157, %v2083, 0
  %v2259 = vsel %vm157, %v2084, 0
  %v2262 = vsel %vm157, %v2085, 0
  %v2265 = vsel %vm157, %v2086, 0
  %v2268 = vsel %vm157, %v2087, 0
  %v2271 = vsel %vm157, %v2088, 0
  %v2274 = vsel %vm157, %v2089, 0
  %v2277 = vsel %vm157, %v2090, 0
  %v2280 = vsel %vm157, %v2091, 0
  %v2283 = vsel %vm157, %v2092, 0
  %v2286 = vsel %vm157, %v2093, 0
  %v2289 = vsel %vm350, %v2095, 0
  %2291 = vmatprep.subr.mxu0 0.0
  %2292 = vmatpush1.msra.mxu0 %v2289
  %2293 = vmatprep.subr.mxu0 0.0
  %2294 = vmatpush1.msra.mxu0 0.0
  %2295 = vmatprep.subr.mxu0 0.0
  %2296 = vmatpush1.msra.mxu0 0.0
  %2297 = vmatprep.subr.mxu0 0.0
  %2298 = vmatpush1.msra.mxu0 0.0
  %2299 = vmatprep.subr.mxu0 0.0
  %2300 = vmatpush1.msra.mxu0 0.0
  %2301 = vmatprep.subr.mxu0 0.0
  %2302 = vmatpush1.msra.mxu0 0.0
  %2303 = vmatprep.subr.mxu0 0.0
  %2304 = vmatpush1.msra.mxu0 0.0
  %2305 = vmatprep.subr.mxu0 0.0
  %2306 = vmatpush1.msra.mxu0 0.0
  %2307 = vmatprep.subr.mxu0 0.0
  %2308 = vmatpush1.msra.mxu0 0.0
  %2309 = vmatprep.subr.mxu0 0.0
  %2310 = vmatpush1.msra.mxu0 0.0
  %2311 = vmatprep.subr.mxu0 0.0
  %2312 = vmatpush1.msra.mxu0 0.0
  %2313 = vmatprep.subr.mxu0 0.0
  %2314 = vmatpush1.msra.mxu0 0.0
  %2315 = vmatprep.subr.mxu0 0.0
  %2316 = vmatpush1.msra.mxu0 0.0
  %2317 = vmatprep.subr.mxu0 0.0
  %2318 = vmatpush1.msra.mxu0 0.0
  %2319 = vmatprep.subr.mxu0 0.0
  %2320 = vmatpush1.msra.mxu0 0.0
  %2321 = vmatprep.subr.mxu0 0.0
  %2322 = vmatpush1.msra.mxu0 0.0
  %2323 = vmatprep.subr.mxu0 0.0
  %2324 = vmatpush1.msra.mxu0 0.0
  %2325 = vmatprep.subr.mxu0 0.0
  %2326 = vmatpush1.msra.mxu0 0.0
  %2327 = vmatprep.subr.mxu0 0.0
  %2328 = vmatpush1.msra.mxu0 0.0
  %2329 = vmatprep.subr.mxu0 0.0
  %2330 = vmatpush1.msra.mxu0 0.0
  %2331 = vmatprep.subr.mxu0 0.0
  %2332 = vmatpush1.msra.mxu0 0.0
  %2333 = vmatprep.subr.mxu0 0.0
  %2334 = vmatpush1.msra.mxu0 0.0
  %2335 = vmatprep.subr.mxu0 0.0
  %2336 = vmatpush1.msra.mxu0 0.0
  %2337 = vmatprep.subr.mxu0 0.0
  %2338 = vmatpush1.msra.mxu0 0.0
  %2339 = vmatprep.subr.mxu0 0.0
  %2340 = vmatpush1.msra.mxu0 0.0
  %2341 = vmatprep.subr.mxu0 0.0
  %2342 = vmatpush1.msra.mxu0 0.0
  %2343 = vmatprep.subr.mxu0 0.0
  %2344 = vmatpush1.msra.mxu0 0.0
  %2345 = vmatprep.subr.mxu0 0.0
  %2346 = vmatpush1.msra.mxu0 0.0
  %2347 = vmatprep.subr.mxu0 0.0
  %2348 = vmatpush1.msra.mxu0 0.0
  %2349 = vmatprep.subr.mxu0 0.0
  %2350 = vmatpush1.msra.mxu0 0.0
  %2351 = vmatprep.subr.mxu0 0.0
  %2352 = vmatpush1.msra.mxu0 0.0
  %2353 = vmatprep.subr.mxu0 0.0
  %2354 = vmatpush1.msra.mxu0 0.0
  %2355 = vmatprep.mubr.f32.mxu0 0.0
  %2356 = vmatmul.mubr.f32.gmra.mrb[0].mxu0 %v2097
  %v2357 = vpop.f32.mrb[0].mxu0
  %v2358 = vadd.f32 0.0, %v2357
  %v2359 = vpop.f32.mrb[0].mxu0
  %2360 = vmatprep.mubr.f32.mxu0 0.0
  %2361 = vmatmul.mubr.f32.gmra.mrb[0].mxu0 %v2100
  %v2362 = vpop.f32.mrb[0].mxu0
  %v2363 = vadd.f32 0.0, %v2362
  %v2364 = vpop.f32.mrb[0].mxu0
  %2365 = vmatprep.mubr.f32.mxu0 0.0
  %2366 = vmatmul.mubr.f32.gmra.mrb[0].mxu0 %v2103
  %v2367 = vpop.f32.mrb[0].mxu0
  %v2368 = vadd.f32 0.0, %v2367
  %v2369 = vpop.f32.mrb[0].mxu0
  %2370 = vmatprep.mubr.f32.mxu0 0.0
  %2371 = vmatmul.mubr.f32.gmra.mrb[0].mxu0 %v2106
  %v2372 = vpop.f32.mrb[0].mxu0
  %v2373 = vadd.f32 0.0, %v2372
  %v2374 = vpop.f32.mrb[0].mxu0
  %2375 = vmatprep.mubr.f32.mxu0 0.0
  %2376 = vmatmul.mubr.f32.gmra.mrb[0].mxu0 %v2109
  %v2377 = vpop.f32.mrb[0].mxu0
  %v2378 = vadd.f32 0.0, %v2377
  %v2379 = vpop.f32.mrb[0].mxu0
  %2380 = vmatprep.mubr.f32.mxu0 0.0
  %2381 = vmatmul.mubr.f32.gmra.mrb[0].mxu0 %v2112
  %v2382 = vpop.f32.mrb[0].mxu0
  %v2383 = vadd.f32 0.0, %v2382
  %v2384 = vpop.f32.mrb[0].mxu0
  %2385 = vmatprep.mubr.f32.mxu0 0.0
  %2386 = vmatmul.mubr.f32.gmra.mrb[0].mxu0 %v2115
  %v2387 = vpop.f32.mrb[0].mxu0
  %v2388 = vadd.f32 0.0, %v2387
  %v2389 = vpop.f32.mrb[0].mxu0
  %2390 = vmatprep.mubr.f32.mxu0 0.0
  %2391 = vmatmul.mubr.f32.gmra.mrb[0].mxu0 %v2118
  %v2392 = vpop.f32.mrb[0].mxu0
  %v2393 = vadd.f32 0.0, %v2392
  %v2394 = vpop.f32.mrb[0].mxu0
  %2395 = vmatprep.mubr.f32.mxu0 0.0
  %2396 = vmatmul.mubr.f32.gmra.mrb[0].mxu0 %v2121
  %v2397 = vpop.f32.mrb[0].mxu0
  %v2398 = vadd.f32 0.0, %v2397
  %v2399 = vpop.f32.mrb[0].mxu0
  %2400 = vmatprep.mubr.f32.mxu0 0.0
  %2401 = vmatmul.mubr.f32.gmra.mrb[0].mxu0 %v2124
  %v2402 = vpop.f32.mrb[0].mxu0
  %v2403 = vadd.f32 0.0, %v2402
  %v2404 = vpop.f32.mrb[0].mxu0
  %2405 = vmatprep.mubr.f32.mxu0 0.0
  %2406 = vmatmul.mubr.f32.gmra.mrb[0].mxu0 %v2127
  %v2407 = vpop.f32.mrb[0].mxu0
  %v2408 = vadd.f32 0.0, %v2407
  %v2409 = vpop.f32.mrb[0].mxu0
  %2410 = vmatprep.mubr.f32.mxu0 0.0
  %2411 = vmatmul.mubr.f32.gmra.mrb[0].mxu0 %v2130
  %v2412 = vpop.f32.mrb[0].mxu0
  %v2413 = vadd.f32 0.0, %v2412
  %v2414 = vpop.f32.mrb[0].mxu0
  %2415 = vmatprep.mubr.f32.mxu0 0.0
  %2416 = vmatmul.mubr.f32.gmra.mrb[0].mxu0 %v2133
  %v2417 = vpop.f32.mrb[0].mxu0
  %v2418 = vadd.f32 0.0, %v2417
  %v2419 = vpop.f32.mrb[0].mxu0
  %2420 = vmatprep.mubr.f32.mxu0 0.0
  %2421 = vmatmul.mubr.f32.gmra.mrb[0].mxu0 %v2136
  %v2422 = vpop.f32.mrb[0].mxu0
  %v2423 = vadd.f32 0.0, %v2422
  %v2424 = vpop.f32.mrb[0].mxu0
  %2425 = vmatprep.mubr.f32.mxu0 0.0
  %2426 = vmatmul.mubr.f32.gmra.mrb[0].mxu0 %v2139
  %v2427 = vpop.f32.mrb[0].mxu0
  %v2428 = vadd.f32 0.0, %v2427
  %v2429 = vpop.f32.mrb[0].mxu0
  %2430 = vmatprep.mubr.f32.mxu0 0.0
  %2431 = vmatmul.mubr.f32.gmra.mrb[0].mxu0 %v2142
  %v2432 = vpop.f32.mrb[0].mxu0
  %v2433 = vadd.f32 0.0, %v2432
  %v2434 = vpop.f32.mrb[0].mxu0
  %2435 = vmatprep.mubr.f32.mxu0 0.0
  %2436 = vmatmul.mubr.f32.gmra.mrb[0].mxu0 %v2145
  %v2437 = vpop.f32.mrb[0].mxu0
  %v2438 = vadd.f32 0.0, %v2437
  %v2439 = vpop.f32.mrb[0].mxu0
  %2440 = vmatprep.mubr.f32.mxu0 0.0
  %2441 = vmatmul.mubr.f32.gmra.mrb[0].mxu0 %v2148
  %v2442 = vpop.f32.mrb[0].mxu0
  %v2443 = vadd.f32 0.0, %v2442
  %v2444 = vpop.f32.mrb[0].mxu0
  %2445 = vmatprep.mubr.f32.mxu0 0.0
  %2446 = vmatmul.mubr.f32.gmra.mrb[0].mxu0 %v2151
  %v2447 = vpop.f32.mrb[0].mxu0
  %v2448 = vadd.f32 0.0, %v2447
  %v2449 = vpop.f32.mrb[0].mxu0
  %2450 = vmatprep.mubr.f32.mxu0 0.0
  %2451 = vmatmul.mubr.f32.gmra.mrb[0].mxu0 %v2154
  %v2452 = vpop.f32.mrb[0].mxu0
  %v2453 = vadd.f32 0.0, %v2452
  %v2454 = vpop.f32.mrb[0].mxu0
  %2455 = vmatprep.mubr.f32.mxu0 0.0
  %2456 = vmatmul.mubr.f32.gmra.mrb[0].mxu0 %v2157
  %v2457 = vpop.f32.mrb[0].mxu0
  %v2458 = vadd.f32 0.0, %v2457
  %v2459 = vpop.f32.mrb[0].mxu0
  %2460 = vmatprep.mubr.f32.mxu0 0.0
  %2461 = vmatmul.mubr.f32.gmra.mrb[0].mxu0 %v2160
  %v2462 = vpop.f32.mrb[0].mxu0
  %v2463 = vadd.f32 0.0, %v2462
  %v2464 = vpop.f32.mrb[0].mxu0
  %2465 = vmatprep.mubr.f32.mxu0 0.0
  %2466 = vmatmul.mubr.f32.gmra.mrb[0].mxu0 %v2163
  %v2467 = vpop.f32.mrb[0].mxu0
  %v2468 = vadd.f32 0.0, %v2467
  %v2469 = vpop.f32.mrb[0].mxu0
  %2470 = vmatprep.mubr.f32.mxu0 0.0
  %2471 = vmatmul.mubr.f32.gmra.mrb[0].mxu0 %v2166
  %v2472 = vpop.f32.mrb[0].mxu0
  %v2473 = vadd.f32 0.0, %v2472
  %v2474 = vpop.f32.mrb[0].mxu0
  %2475 = vmatprep.mubr.f32.mxu0 0.0
  %2476 = vmatmul.mubr.f32.gmra.mrb[0].mxu0 %v2169
  %v2477 = vpop.f32.mrb[0].mxu0
  %v2478 = vadd.f32 0.0, %v2477
  %v2479 = vpop.f32.mrb[0].mxu0
  %2480 = vmatprep.mubr.f32.mxu0 0.0
  %2481 = vmatmul.mubr.f32.gmra.mrb[0].mxu0 %v2172
  %v2482 = vpop.f32.mrb[0].mxu0
  %v2483 = vadd.f32 0.0, %v2482
  %v2484 = vpop.f32.mrb[0].mxu0
  %2485 = vmatprep.mubr.f32.mxu0 0.0
  %2486 = vmatmul.mubr.f32.gmra.mrb[0].mxu0 %v2175
  %v2487 = vpop.f32.mrb[0].mxu0
  %v2488 = vadd.f32 0.0, %v2487
  %v2489 = vpop.f32.mrb[0].mxu0
  %2490 = vmatprep.mubr.f32.mxu0 0.0
  %2491 = vmatmul.mubr.f32.gmra.mrb[0].mxu0 %v2178
  %v2492 = vpop.f32.mrb[0].mxu0
  %v2493 = vadd.f32 0.0, %v2492
  %v2494 = vpop.f32.mrb[0].mxu0
  %2495 = vmatprep.mubr.f32.mxu0 0.0
  %2496 = vmatmul.mubr.f32.gmra.mrb[0].mxu0 %v2181
  %v2497 = vpop.f32.mrb[0].mxu0
  %v2498 = vadd.f32 0.0, %v2497
  %v2499 = vpop.f32.mrb[0].mxu0
  %2500 = vmatprep.mubr.f32.mxu0 0.0
  %2501 = vmatmul.mubr.f32.gmra.mrb[0].mxu0 %v2184
  %v2502 = vpop.f32.mrb[0].mxu0
  %v2503 = vadd.f32 0.0, %v2502
  %v2504 = vpop.f32.mrb[0].mxu0
  %2505 = vmatprep.mubr.f32.mxu0 0.0
  %2506 = vmatmul.mubr.f32.gmra.mrb[0].mxu0 %v2187
  %v2507 = vpop.f32.mrb[0].mxu0
  %v2508 = vadd.f32 0.0, %v2507
  %v2509 = vpop.f32.mrb[0].mxu0
  %2510 = vmatprep.mubr.f32.mxu0 0.0
  %2511 = vmatmul.mubr.f32.gmra.mrb[0].mxu0 %v2190
  %v2512 = vpop.f32.mrb[0].mxu0
  %v2513 = vadd.f32 0.0, %v2512
  %v2514 = vpop.f32.mrb[0].mxu0
  %2515 = vmatprep.mubr.f32.mxu0 0.0
  %2516 = vmatmul.mubr.f32.gmra.mrb[0].mxu0 %v2193
  %v2517 = vpop.f32.mrb[0].mxu0
  %v2518 = vadd.f32 0.0, %v2517
  %v2519 = vpop.f32.mrb[0].mxu0
  %2520 = vmatprep.mubr.f32.mxu0 0.0
  %2521 = vmatmul.mubr.f32.gmra.mrb[0].mxu0 %v2196
  %v2522 = vpop.f32.mrb[0].mxu0
  %v2523 = vadd.f32 0.0, %v2522
  %v2524 = vpop.f32.mrb[0].mxu0
  %2525 = vmatprep.mubr.f32.mxu0 0.0
  %2526 = vmatmul.mubr.f32.gmra.mrb[0].mxu0 %v2199
  %v2527 = vpop.f32.mrb[0].mxu0
  %v2528 = vadd.f32 0.0, %v2527
  %v2529 = vpop.f32.mrb[0].mxu0
  %2530 = vmatprep.mubr.f32.mxu0 0.0
  %2531 = vmatmul.mubr.f32.gmra.mrb[0].mxu0 %v2202
  %v2532 = vpop.f32.mrb[0].mxu0
  %v2533 = vadd.f32 0.0, %v2532
  %v2534 = vpop.f32.mrb[0].mxu0
  %2535 = vmatprep.mubr.f32.mxu0 0.0
  %2536 = vmatmul.mubr.f32.gmra.mrb[0].mxu0 %v2205
  %v2537 = vpop.f32.mrb[0].mxu0
  %v2538 = vadd.f32 0.0, %v2537
  %v2539 = vpop.f32.mrb[0].mxu0
  %2540 = vmatprep.mubr.f32.mxu0 0.0
  %2541 = vmatmul.mubr.f32.gmra.mrb[0].mxu0 %v2208
  %v2542 = vpop.f32.mrb[0].mxu0
  %v2543 = vadd.f32 0.0, %v2542
  %v2544 = vpop.f32.mrb[0].mxu0
  %2545 = vmatprep.mubr.f32.mxu0 0.0
  %2546 = vmatmul.mubr.f32.gmra.mrb[0].mxu0 %v2211
  %v2547 = vpop.f32.mrb[0].mxu0
  %v2548 = vadd.f32 0.0, %v2547
  %v2549 = vpop.f32.mrb[0].mxu0
  %2550 = vmatprep.mubr.f32.mxu0 0.0
  %2551 = vmatmul.mubr.f32.gmra.mrb[0].mxu0 %v2214
  %v2552 = vpop.f32.mrb[0].mxu0
  %v2553 = vadd.f32 0.0, %v2552
  %v2554 = vpop.f32.mrb[0].mxu0
  %2555 = vmatprep.mubr.f32.mxu0 0.0
  %2556 = vmatmul.mubr.f32.gmra.mrb[0].mxu0 %v2217
  %v2557 = vpop.f32.mrb[0].mxu0
  %v2558 = vadd.f32 0.0, %v2557
  %v2559 = vpop.f32.mrb[0].mxu0
  %2560 = vmatprep.mubr.f32.mxu0 0.0
  %2561 = vmatmul.mubr.f32.gmra.mrb[0].mxu0 %v2220
  %v2562 = vpop.f32.mrb[0].mxu0
  %v2563 = vadd.f32 0.0, %v2562
  %v2564 = vpop.f32.mrb[0].mxu0
  %2565 = vmatprep.mubr.f32.mxu0 0.0
  %2566 = vmatmul.mubr.f32.gmra.mrb[0].mxu0 %v2223
  %v2567 = vpop.f32.mrb[0].mxu0
  %v2568 = vadd.f32 0.0, %v2567
  %v2569 = vpop.f32.mrb[0].mxu0
  %2570 = vmatprep.mubr.f32.mxu0 0.0
  %2571 = vmatmul.mubr.f32.gmra.mrb[0].mxu0 %v2226
  %v2572 = vpop.f32.mrb[0].mxu0
  %v2573 = vadd.f32 0.0, %v2572
  %v2574 = vpop.f32.mrb[0].mxu0
  %2575 = vmatprep.mubr.f32.mxu0 0.0
  %2576 = vmatmul.mubr.f32.gmra.mrb[0].mxu0 %v2229
  %v2577 = vpop.f32.mrb[0].mxu0
  %v2578 = vadd.f32 0.0, %v2577
  %v2579 = vpop.f32.mrb[0].mxu0
  %2580 = vmatprep.mubr.f32.mxu0 0.0
  %2581 = vmatmul.mubr.f32.gmra.mrb[0].mxu0 %v2232
  %v2582 = vpop.f32.mrb[0].mxu0
  %v2583 = vadd.f32 0.0, %v2582
  %v2584 = vpop.f32.mrb[0].mxu0
  %2585 = vmatprep.mubr.f32.mxu0 0.0
  %2586 = vmatmul.mubr.f32.gmra.mrb[0].mxu0 %v2235
  %v2587 = vpop.f32.mrb[0].mxu0
  %v2588 = vadd.f32 0.0, %v2587
  %v2589 = vpop.f32.mrb[0].mxu0
  %2590 = vmatprep.mubr.f32.mxu0 0.0
  %2591 = vmatmul.mubr.f32.gmra.mrb[0].mxu0 %v2238
  %v2592 = vpop.f32.mrb[0].mxu0
  %v2593 = vadd.f32 0.0, %v2592
  %v2594 = vpop.f32.mrb[0].mxu0
  %2595 = vmatprep.mubr.f32.mxu0 0.0
  %2596 = vmatmul.mubr.f32.gmra.mrb[0].mxu0 %v2241
  %v2597 = vpop.f32.mrb[0].mxu0
  %v2598 = vadd.f32 0.0, %v2597
  %v2599 = vpop.f32.mrb[0].mxu0
  %2600 = vmatprep.mubr.f32.mxu0 0.0
  %2601 = vmatmul.mubr.f32.gmra.mrb[0].mxu0 %v2244
  %v2602 = vpop.f32.mrb[0].mxu0
  %v2603 = vadd.f32 0.0, %v2602
  %v2604 = vpop.f32.mrb[0].mxu0
  %2605 = vmatprep.mubr.f32.mxu0 0.0
  %2606 = vmatmul.mubr.f32.gmra.mrb[0].mxu0 %v2247
  %v2607 = vpop.f32.mrb[0].mxu0
  %v2608 = vadd.f32 0.0, %v2607
  %v2609 = vpop.f32.mrb[0].mxu0
  %2610 = vmatprep.mubr.f32.mxu0 0.0
  %2611 = vmatmul.mubr.f32.gmra.mrb[0].mxu0 %v2250
  %v2612 = vpop.f32.mrb[0].mxu0
  %v2613 = vadd.f32 0.0, %v2612
  %v2614 = vpop.f32.mrb[0].mxu0
  %2615 = vmatprep.mubr.f32.mxu0 0.0
  %2616 = vmatmul.mubr.f32.gmra.mrb[0].mxu0 %v2253
  %v2617 = vpop.f32.mrb[0].mxu0
  %v2618 = vadd.f32 0.0, %v2617
  %v2619 = vpop.f32.mrb[0].mxu0
  %2620 = vmatprep.mubr.f32.mxu0 0.0
  %2621 = vmatmul.mubr.f32.gmra.mrb[0].mxu0 %v2256
  %v2622 = vpop.f32.mrb[0].mxu0
  %v2623 = vadd.f32 0.0, %v2622
  %v2624 = vpop.f32.mrb[0].mxu0
  %2625 = vmatprep.mubr.f32.mxu0 0.0
  %2626 = vmatmul.mubr.f32.gmra.mrb[0].mxu0 %v2259
  %v2627 = vpop.f32.mrb[0].mxu0
  %v2628 = vadd.f32 0.0, %v2627
  %v2629 = vpop.f32.mrb[0].mxu0
  %2630 = vmatprep.mubr.f32.mxu0 0.0
  %2631 = vmatmul.mubr.f32.gmra.mrb[0].mxu0 %v2262
  %v2632 = vpop.f32.mrb[0].mxu0
  %v2633 = vadd.f32 0.0, %v2632
  %v2634 = vpop.f32.mrb[0].mxu0
  %2635 = vmatprep.mubr.f32.mxu0 0.0
  %2636 = vmatmul.mubr.f32.gmra.mrb[0].mxu0 %v2265
  %v2637 = vpop.f32.mrb[0].mxu0
  %v2638 = vadd.f32 0.0, %v2637
  %v2639 = vpop.f32.mrb[0].mxu0
  %2640 = vmatprep.mubr.f32.mxu0 0.0
  %2641 = vmatmul.mubr.f32.gmra.mrb[0].mxu0 %v2268
  %v2642 = vpop.f32.mrb[0].mxu0
  %v2643 = vadd.f32 0.0, %v2642
  %v2644 = vpop.f32.mrb[0].mxu0
  %2645 = vmatprep.mubr.f32.mxu0 0.0
  %2646 = vmatmul.mubr.f32.gmra.mrb[0].mxu0 %v2271
  %v2647 = vpop.f32.mrb[0].mxu0
  %v2648 = vadd.f32 0.0, %v2647
  %v2649 = vpop.f32.mrb[0].mxu0
  %2650 = vmatprep.mubr.f32.mxu0 0.0
  %2651 = vmatmul.mubr.f32.gmra.mrb[0].mxu0 %v2274
  %v2652 = vpop.f32.mrb[0].mxu0
  %v2653 = vadd.f32 0.0, %v2652
  %v2654 = vpop.f32.mrb[0].mxu0
  %2655 = vmatprep.mubr.f32.mxu0 0.0
  %2656 = vmatmul.mubr.f32.gmra.mrb[0].mxu0 %v2277
  %v2657 = vpop.f32.mrb[0].mxu0
  %v2658 = vadd.f32 0.0, %v2657
  %v2659 = vpop.f32.mrb[0].mxu0
  %2660 = vmatprep.mubr.f32.mxu0 0.0
  %2661 = vmatmul.mubr.f32.gmra.mrb[0].mxu0 %v2280
  %v2662 = vpop.f32.mrb[0].mxu0
  %v2663 = vadd.f32 0.0, %v2662
  %v2664 = vpop.f32.mrb[0].mxu0
  %2665 = vmatprep.mubr.f32.mxu0 0.0
  %2666 = vmatmul.mubr.f32.gmra.mrb[0].mxu0 %v2283
  %v2667 = vpop.f32.mrb[0].mxu0
  %v2668 = vadd.f32 0.0, %v2667
  %v2669 = vpop.f32.mrb[0].mxu0
  %2670 = vmatprep.mubr.f32.mxu0 0.0
  %2671 = vmatmul.mubr.f32.gmra.mrb[0].mxu0 %v2286
  %v2672 = vpop.f32.mrb[0].mxu0
  %v2673 = vadd.f32 0.0, %v2672
  %v2674 = vpop.f32.mrb[0].mxu0
  %2675 = vdwg.mxu0
  %v2676 = vadd.f32 %v1965, %v2358
  %v2677 = vadd.f32 %v1966, %v2363
  %v2678 = vadd.f32 %v1967, %v2368
  %v2679 = vadd.f32 %v1968, %v2373
  %v2680 = vadd.f32 %v1969, %v2378
  %v2681 = vadd.f32 %v1970, %v2383
  %v2682 = vadd.f32 %v1971, %v2388
  %v2683 = vadd.f32 %v1972, %v2393
  %v2684 = vadd.f32 %v1973, %v2398
  %v2685 = vadd.f32 %v1974, %v2403
  %v2686 = vadd.f32 %v1975, %v2408
  %v2687 = vadd.f32 %v1976, %v2413
  %v2688 = vadd.f32 %v1977, %v2418
  %v2689 = vadd.f32 %v1978, %v2423
  %v2690 = vadd.f32 %v1979, %v2428
  %v2691 = vadd.f32 %v1980, %v2433
  %v2692 = vadd.f32 %v1981, %v2438
  %v2693 = vadd.f32 %v1982, %v2443
  %v2694 = vadd.f32 %v1983, %v2448
  %v2695 = vadd.f32 %v1984, %v2453
  %v2696 = vadd.f32 %v1985, %v2458
  %v2697 = vadd.f32 %v1986, %v2463
  %v2698 = vadd.f32 %v1987, %v2468
  %v2699 = vadd.f32 %v1988, %v2473
  %v2700 = vadd.f32 %v1989, %v2478
  %v2701 = vadd.f32 %v1990, %v2483
  %v2702 = vadd.f32 %v1991, %v2488
  %v2703 = vadd.f32 %v1992, %v2493
  %v2704 = vadd.f32 %v1993, %v2498
  %v2705 = vadd.f32 %v1994, %v2503
  %v2706 = vadd.f32 %v1995, %v2508
  %v2707 = vadd.f32 %v1996, %v2513
  %v2708 = vadd.f32 %v1997, %v2518
  %v2709 = vadd.f32 %v1998, %v2523
  %v2710 = vadd.f32 %v1999, %v2528
  %v2711 = vadd.f32 %v2000, %v2533
  %v2712 = vadd.f32 %v2001, %v2538
  %v2713 = vadd.f32 %v2002, %v2543
  %v2714 = vadd.f32 %v2003, %v2548
  %v2715 = vadd.f32 %v2004, %v2553
  %v2716 = vadd.f32 %v2005, %v2558
  %v2717 = vadd.f32 %v2006, %v2563
  %v2718 = vadd.f32 %v2007, %v2568
  %v2719 = vadd.f32 %v2008, %v2573
  %v2720 = vadd.f32 %v2009, %v2578
  %v2721 = vadd.f32 %v2010, %v2583
  %v2722 = vadd.f32 %v2011, %v2588
  %v2723 = vadd.f32 %v2012, %v2593
  %v2724 = vadd.f32 %v2013, %v2598
  %v2725 = vadd.f32 %v2014, %v2603
  %v2726 = vadd.f32 %v2015, %v2608
  %v2727 = vadd.f32 %v2016, %v2613
  %v2728 = vadd.f32 %v2017, %v2618
  %v2729 = vadd.f32 %v2018, %v2623
  %v2730 = vadd.f32 %v2019, %v2628
  %v2731 = vadd.f32 %v2020, %v2633
  %v2732 = vadd.f32 %v2021, %v2638
  %v2733 = vadd.f32 %v2022, %v2643
  %v2734 = vadd.f32 %v2023, %v2648
  %v2735 = vadd.f32 %v2024, %v2653
  %v2736 = vadd.f32 %v2025, %v2658
  %v2737 = vadd.f32 %v2026, %v2663
  %v2738 = vadd.f32 %v2027, %v2668
  %v2739 = vadd.f32 %v2028, %v2673
  %v2740 = vld [vmem:[%s2029 + $0x1] sm:$0xff]
  %v2741 = vld [vmem:[%s2029 + $0x9] sm:$0xff]
  %v2742 = vld [vmem:[%s2029 + $0x19] sm:$0xff]
  %v2743 = vld [vmem:[%s2029 + $0x21] sm:$0xff]
  %v2744 = vld [vmem:[%s2029 + $0x31] sm:$0xff]
  %v2745 = vld [vmem:[%s2029 + $0x39] sm:$0xff]
  %v2746 = vld [vmem:[%s2029 + $0x49] sm:$0xff]
  %v2747 = vld [vmem:[%s2029 + $0x51] sm:$0xff]
  %v2748 = vld [vmem:[%s2029 + $0x61] sm:$0xff]
  %v2749 = vld [vmem:[%s2029 + $0x69] sm:$0xff]
  %v2750 = vld [vmem:[%s2029 + $0x79] sm:$0xff]
  %v2751 = vld [vmem:[%s2029 + $0x81] sm:$0xff]
  %v2752 = vld [vmem:[%s2029 + $0x91] sm:$0xff]
  %v2753 = vld [vmem:[%s2029 + $0x99] sm:$0xff]
  %v2754 = vld [vmem:[%s2029 + $0xa9] sm:$0xff]
  %v2755 = vld [vmem:[%s2029 + $0xb1] sm:$0xff]
  %v2756 = vld [vmem:[%s2029 + $0xc1] sm:$0xff]
  %v2757 = vld [vmem:[%s2029 + $0xc9] sm:$0xff]
  %v2758 = vld [vmem:[%s2029 + $0xd9] sm:$0xff]
  %v2759 = vld [vmem:[%s2029 + $0xe1] sm:$0xff]
  %v2760 = vld [vmem:[%s2029 + $0xf1] sm:$0xff]
  %v2761 = vld [vmem:[%s2029 + $0xf9] sm:$0xff]
  %v2762 = vld [vmem:[%s2029 + $0x109] sm:$0xff]
  %v2763 = vld [vmem:[%s2029 + $0x111] sm:$0xff]
  %v2764 = vld [vmem:[%s2029 + $0x121] sm:$0xff]
  %v2765 = vld [vmem:[%s2029 + $0x129] sm:$0xff]
  %v2766 = vld [vmem:[%s2029 + $0x139] sm:$0xff]
  %v2767 = vld [vmem:[%s2029 + $0x141] sm:$0xff]
  %v2768 = vld [vmem:[%s2029 + $0x151] sm:$0xff]
  %v2769 = vld [vmem:[%s2029 + $0x159] sm:$0xff]
  %v2770 = vld [vmem:[%s2029 + $0x169] sm:$0xff]
  %v2771 = vld [vmem:[%s2029 + $0x171] sm:$0xff]
  %v2772 = vld [vmem:[%s2029 + $0x1b1] sm:$0xff]
  %v2773 = vld [vmem:[%s2029 + $0x1b9] sm:$0xff]
  %v2774 = vld [vmem:[%s2029 + $0x1c9] sm:$0xff]
  %v2775 = vld [vmem:[%s2029 + $0x1d1] sm:$0xff]
  %v2776 = vld [vmem:[%s2029 + $0x1e1] sm:$0xff]
  %v2777 = vld [vmem:[%s2029 + $0x1e9] sm:$0xff]
  %v2778 = vld [vmem:[%s2029 + $0x1f9] sm:$0xff]
  %v2779 = vld [vmem:[%s2029 + $0x201] sm:$0xff]
  %v2780 = vld [vmem:[%s2029 + $0x211] sm:$0xff]
  %v2781 = vld [vmem:[%s2029 + $0x219] sm:$0xff]
  %v2782 = vld [vmem:[%s2029 + $0x229] sm:$0xff]
  %v2783 = vld [vmem:[%s2029 + $0x231] sm:$0xff]
  %v2784 = vld [vmem:[%s2029 + $0x241] sm:$0xff]
  %v2785 = vld [vmem:[%s2029 + $0x249] sm:$0xff]
  %v2786 = vld [vmem:[%s2029 + $0x259] sm:$0xff]
  %v2787 = vld [vmem:[%s2029 + $0x261] sm:$0xff]
  %v2788 = vld [vmem:[%s2029 + $0x271] sm:$0xff]
  %v2789 = vld [vmem:[%s2029 + $0x279] sm:$0xff]
  %v2790 = vld [vmem:[%s2029 + $0x289] sm:$0xff]
  %v2791 = vld [vmem:[%s2029 + $0x291] sm:$0xff]
  %v2792 = vld [vmem:[%s2029 + $0x2a1] sm:$0xff]
  %v2793 = vld [vmem:[%s2029 + $0x2a9] sm:$0xff]
  %v2794 = vld [vmem:[%s2029 + $0x2b9] sm:$0xff]
  %v2795 = vld [vmem:[%s2029 + $0x2c1] sm:$0xff]
  %v2796 = vld [vmem:[%s2029 + $0x2d1] sm:$0xff]
  %v2797 = vld [vmem:[%s2029 + $0x2d9] sm:$0xff]
  %v2798 = vld [vmem:[%s2029 + $0x2e9] sm:$0xff]
  %v2799 = vld [vmem:[%s2029 + $0x2f1] sm:$0xff]
  %v2800 = vld [vmem:[%s2029 + $0x301] sm:$0xff]
  %v2801 = vld [vmem:[%s2029 + $0x309] sm:$0xff]
  %v2802 = vld [vmem:[%s2029 + $0x319] sm:$0xff]
  %v2803 = vld [vmem:[%s2029 + $0x321] sm:$0xff]
  %s2804 = scalar_lea.vmem %s1, 16
  %v2805 = vld [vmem:[%s2804] sm:$0xf]
  %v2807 = vsel %vm157, %v2740, 0
  %v2810 = vsel %vm157, %v2741, 0
  %v2813 = vsel %vm157, %v2742, 0
  %v2816 = vsel %vm157, %v2743, 0
  %v2819 = vsel %vm157, %v2744, 0
  %v2822 = vsel %vm157, %v2745, 0
  %v2825 = vsel %vm157, %v2746, 0
  %v2828 = vsel %vm157, %v2747, 0
  %v2831 = vsel %vm157, %v2748, 0
  %v2834 = vsel %vm157, %v2749, 0
  %v2837 = vsel %vm157, %v2750, 0
  %v2840 = vsel %vm157, %v2751, 0
  %v2843 = vsel %vm157, %v2752, 0
  %v2846 = vsel %vm157, %v2753, 0
  %v2849 = vsel %vm157, %v2754, 0
  %v2852 = vsel %vm157, %v2755, 0
  %v2855 = vsel %vm157, %v2756, 0
  %v2858 = vsel %vm157, %v2757, 0
  %v2861 = vsel %vm157, %v2758, 0
  %v2864 = vsel %vm157, %v2759, 0
  %v2867 = vsel %vm157, %v2760, 0
  %v2870 = vsel %vm157, %v2761, 0
  %v2873 = vsel %vm157, %v2762, 0
  %v2876 = vsel %vm157, %v2763, 0
  %v2879 = vsel %vm157, %v2764, 0
  %v2882 = vsel %vm157, %v2765, 0
  %v2885 = vsel %vm157, %v2766, 0
  %v2888 = vsel %vm157, %v2767, 0
  %v2891 = vsel %vm157, %v2768, 0
  %v2894 = vsel %vm157, %v2769, 0
  %v2897 = vsel %vm157, %v2770, 0
  %v2900 = vsel %vm157, %v2771, 0
  %v2903 = vsel %vm157, %v2772, 0
  %v2906 = vsel %vm157, %v2773, 0
  %v2909 = vsel %vm157, %v2774, 0
  %v2912 = vsel %vm157, %v2775, 0
  %v2915 = vsel %vm157, %v2776, 0
  %v2918 = vsel %vm157, %v2777, 0
  %v2921 = vsel %vm157, %v2778, 0
  %v2924 = vsel %vm157, %v2779, 0
  %v2927 = vsel %vm157, %v2780, 0
  %v2930 = vsel %vm157, %v2781, 0
  %v2933 = vsel %vm157, %v2782, 0
  %v2936 = vsel %vm157, %v2783, 0
  %v2939 = vsel %vm157, %v2784, 0
  %v2942 = vsel %vm157, %v2785, 0
  %v2945 = vsel %vm157, %v2786, 0
  %v2948 = vsel %vm157, %v2787, 0
  %v2951 = vsel %vm157, %v2788, 0
  %v2954 = vsel %vm157, %v2789, 0
  %v2957 = vsel %vm157, %v2790, 0
  %v2960 = vsel %vm157, %v2791, 0
  %v2963 = vsel %vm157, %v2792, 0
  %v2966 = vsel %vm157, %v2793, 0
  %v2969 = vsel %vm157, %v2794, 0
  %v2972 = vsel %vm157, %v2795, 0
  %v2975 = vsel %vm157, %v2796, 0
  %v2978 = vsel %vm157, %v2797, 0
  %v2981 = vsel %vm157, %v2798, 0
  %v2984 = vsel %vm157, %v2799, 0
  %v2987 = vsel %vm157, %v2800, 0
  %v2990 = vsel %vm157, %v2801, 0
  %v2993 = vsel %vm157, %v2802, 0
  %v2996 = vsel %vm157, %v2803, 0
  %v2999 = vsel %vm350, %v2805, 0
  %3001 = vmatprep.subr.mxu0 0.0
  %3002 = vmatpush1.msra.mxu0 %v2999
  %3003 = vmatprep.subr.mxu0 0.0
  %3004 = vmatpush1.msra.mxu0 0.0
  %3005 = vmatprep.subr.mxu0 0.0
  %3006 = vmatpush1.msra.mxu0 0.0
  %3007 = vmatprep.subr.mxu0 0.0
  %3008 = vmatpush1.msra.mxu0 0.0
  %3009 = vmatprep.subr.mxu0 0.0
  %3010 = vmatpush1.msra.mxu0 0.0
  %3011 = vmatprep.subr.mxu0 0.0
  %3012 = vmatpush1.msra.mxu0 0.0
  %3013 = vmatprep.subr.mxu0 0.0
  %3014 = vmatpush1.msra.mxu0 0.0
  %3015 = vmatprep.subr.mxu0 0.0
  %3016 = vmatpush1.msra.mxu0 0.0
  %3017 = vmatprep.subr.mxu0 0.0
  %3018 = vmatpush1.msra.mxu0 0.0
  %3019 = vmatprep.subr.mxu0 0.0
  %3020 = vmatpush1.msra.mxu0 0.0
  %3021 = vmatprep.subr.mxu0 0.0
  %3022 = vmatpush1.msra.mxu0 0.0
  %3023 = vmatprep.subr.mxu0 0.0
  %3024 = vmatpush1.msra.mxu0 0.0
  %3025 = vmatprep.subr.mxu0 0.0
  %3026 = vmatpush1.msra.mxu0 0.0
  %3027 = vmatprep.subr.mxu0 0.0
  %3028 = vmatpush1.msra.mxu0 0.0
  %3029 = vmatprep.subr.mxu0 0.0
  %3030 = vmatpush1.msra.mxu0 0.0
  %3031 = vmatprep.subr.mxu0 0.0
  %3032 = vmatpush1.msra.mxu0 0.0
  %3033 = vmatprep.subr.mxu0 0.0
  %3034 = vmatpush1.msra.mxu0 0.0
  %3035 = vmatprep.subr.mxu0 0.0
  %3036 = vmatpush1.msra.mxu0 0.0
  %3037 = vmatprep.subr.mxu0 0.0
  %3038 = vmatpush1.msra.mxu0 0.0
  %3039 = vmatprep.subr.mxu0 0.0
  %3040 = vmatpush1.msra.mxu0 0.0
  %3041 = vmatprep.subr.mxu0 0.0
  %3042 = vmatpush1.msra.mxu0 0.0
  %3043 = vmatprep.subr.mxu0 0.0
  %3044 = vmatpush1.msra.mxu0 0.0
  %3045 = vmatprep.subr.mxu0 0.0
  %3046 = vmatpush1.msra.mxu0 0.0
  %3047 = vmatprep.subr.mxu0 0.0
  %3048 = vmatpush1.msra.mxu0 0.0
  %3049 = vmatprep.subr.mxu0 0.0
  %3050 = vmatpush1.msra.mxu0 0.0
  %3051 = vmatprep.subr.mxu0 0.0
  %3052 = vmatpush1.msra.mxu0 0.0
  %3053 = vmatprep.subr.mxu0 0.0
  %3054 = vmatpush1.msra.mxu0 0.0
  %3055 = vmatprep.subr.mxu0 0.0
  %3056 = vmatpush1.msra.mxu0 0.0
  %3057 = vmatprep.subr.mxu0 0.0
  %3058 = vmatpush1.msra.mxu0 0.0
  %3059 = vmatprep.subr.mxu0 0.0
  %3060 = vmatpush1.msra.mxu0 0.0
  %3061 = vmatprep.subr.mxu0 0.0
  %3062 = vmatpush1.msra.mxu0 0.0
  %3063 = vmatprep.subr.mxu0 0.0
  %3064 = vmatpush1.msra.mxu0 0.0
  %3065 = vmatprep.mubr.f32.mxu0 0.0
  %3066 = vmatmul.mubr.f32.gmra.mrb[0].mxu0 %v2807
  %v3067 = vpop.f32.mrb[0].mxu0
  %v3068 = vadd.f32 0.0, %v3067
  %v3069 = vpop.f32.mrb[0].mxu0
  %3070 = vmatprep.mubr.f32.mxu0 0.0
  %3071 = vmatmul.mubr.f32.gmra.mrb[0].mxu0 %v2810
  %v3072 = vpop.f32.mrb[0].mxu0
  %v3073 = vadd.f32 0.0, %v3072
  %v3074 = vpop.f32.mrb[0].mxu0
  %3075 = vmatprep.mubr.f32.mxu0 0.0
  %3076 = vmatmul.mubr.f32.gmra.mrb[0].mxu0 %v2813
  %v3077 = vpop.f32.mrb[0].mxu0
  %v3078 = vadd.f32 0.0, %v3077
  %v3079 = vpop.f32.mrb[0].mxu0
  %3080 = vmatprep.mubr.f32.mxu0 0.0
  %3081 = vmatmul.mubr.f32.gmra.mrb[0].mxu0 %v2816
  %v3082 = vpop.f32.mrb[0].mxu0
  %v3083 = vadd.f32 0.0, %v3082
  %v3084 = vpop.f32.mrb[0].mxu0
  %3085 = vmatprep.mubr.f32.mxu0 0.0
  %3086 = vmatmul.mubr.f32.gmra.mrb[0].mxu0 %v2819
  %v3087 = vpop.f32.mrb[0].mxu0
  %v3088 = vadd.f32 0.0, %v3087
  %v3089 = vpop.f32.mrb[0].mxu0
  %3090 = vmatprep.mubr.f32.mxu0 0.0
  %3091 = vmatmul.mubr.f32.gmra.mrb[0].mxu0 %v2822
  %v3092 = vpop.f32.mrb[0].mxu0
  %v3093 = vadd.f32 0.0, %v3092
  %v3094 = vpop.f32.mrb[0].mxu0
  %3095 = vmatprep.mubr.f32.mxu0 0.0
  %3096 = vmatmul.mubr.f32.gmra.mrb[0].mxu0 %v2825
  %v3097 = vpop.f32.mrb[0].mxu0
  %v3098 = vadd.f32 0.0, %v3097
  %v3099 = vpop.f32.mrb[0].mxu0
  %3100 = vmatprep.mubr.f32.mxu0 0.0
  %3101 = vmatmul.mubr.f32.gmra.mrb[0].mxu0 %v2828
  %v3102 = vpop.f32.mrb[0].mxu0
  %v3103 = vadd.f32 0.0, %v3102
  %v3104 = vpop.f32.mrb[0].mxu0
  %3105 = vmatprep.mubr.f32.mxu0 0.0
  %3106 = vmatmul.mubr.f32.gmra.mrb[0].mxu0 %v2831
  %v3107 = vpop.f32.mrb[0].mxu0
  %v3108 = vadd.f32 0.0, %v3107
  %v3109 = vpop.f32.mrb[0].mxu0
  %3110 = vmatprep.mubr.f32.mxu0 0.0
  %3111 = vmatmul.mubr.f32.gmra.mrb[0].mxu0 %v2834
  %v3112 = vpop.f32.mrb[0].mxu0
  %v3113 = vadd.f32 0.0, %v3112
  %v3114 = vpop.f32.mrb[0].mxu0
  %3115 = vmatprep.mubr.f32.mxu0 0.0
  %3116 = vmatmul.mubr.f32.gmra.mrb[0].mxu0 %v2837
  %v3117 = vpop.f32.mrb[0].mxu0
  %v3118 = vadd.f32 0.0, %v3117
  %v3119 = vpop.f32.mrb[0].mxu0
  %3120 = vmatprep.mubr.f32.mxu0 0.0
  %3121 = vmatmul.mubr.f32.gmra.mrb[0].mxu0 %v2840
  %v3122 = vpop.f32.mrb[0].mxu0
  %v3123 = vadd.f32 0.0, %v3122
  %v3124 = vpop.f32.mrb[0].mxu0
  %3125 = vmatprep.mubr.f32.mxu0 0.0
  %3126 = vmatmul.mubr.f32.gmra.mrb[0].mxu0 %v2843
  %v3127 = vpop.f32.mrb[0].mxu0
  %v3128 = vadd.f32 0.0, %v3127
  %v3129 = vpop.f32.mrb[0].mxu0
  %3130 = vmatprep.mubr.f32.mxu0 0.0
  %3131 = vmatmul.mubr.f32.gmra.mrb[0].mxu0 %v2846
  %v3132 = vpop.f32.mrb[0].mxu0
  %v3133 = vadd.f32 0.0, %v3132
  %v3134 = vpop.f32.mrb[0].mxu0
  %3135 = vmatprep.mubr.f32.mxu0 0.0
  %3136 = vmatmul.mubr.f32.gmra.mrb[0].mxu0 %v2849
  %v3137 = vpop.f32.mrb[0].mxu0
  %v3138 = vadd.f32 0.0, %v3137
  %v3139 = vpop.f32.mrb[0].mxu0
  %3140 = vmatprep.mubr.f32.mxu0 0.0
  %3141 = vmatmul.mubr.f32.gmra.mrb[0].mxu0 %v2852
  %v3142 = vpop.f32.mrb[0].mxu0
  %v3143 = vadd.f32 0.0, %v3142
  %v3144 = vpop.f32.mrb[0].mxu0
  %3145 = vmatprep.mubr.f32.mxu0 0.0
  %3146 = vmatmul.mubr.f32.gmra.mrb[0].mxu0 %v2855
  %v3147 = vpop.f32.mrb[0].mxu0
  %v3148 = vadd.f32 0.0, %v3147
  %v3149 = vpop.f32.mrb[0].mxu0
  %3150 = vmatprep.mubr.f32.mxu0 0.0
  %3151 = vmatmul.mubr.f32.gmra.mrb[0].mxu0 %v2858
  %v3152 = vpop.f32.mrb[0].mxu0
  %v3153 = vadd.f32 0.0, %v3152
  %v3154 = vpop.f32.mrb[0].mxu0
  %3155 = vmatprep.mubr.f32.mxu0 0.0
  %3156 = vmatmul.mubr.f32.gmra.mrb[0].mxu0 %v2861
  %v3157 = vpop.f32.mrb[0].mxu0
  %v3158 = vadd.f32 0.0, %v3157
  %v3159 = vpop.f32.mrb[0].mxu0
  %3160 = vmatprep.mubr.f32.mxu0 0.0
  %3161 = vmatmul.mubr.f32.gmra.mrb[0].mxu0 %v2864
  %v3162 = vpop.f32.mrb[0].mxu0
  %v3163 = vadd.f32 0.0, %v3162
  %v3164 = vpop.f32.mrb[0].mxu0
  %3165 = vmatprep.mubr.f32.mxu0 0.0
  %3166 = vmatmul.mubr.f32.gmra.mrb[0].mxu0 %v2867
  %v3167 = vpop.f32.mrb[0].mxu0
  %v3168 = vadd.f32 0.0, %v3167
  %v3169 = vpop.f32.mrb[0].mxu0
  %3170 = vmatprep.mubr.f32.mxu0 0.0
  %3171 = vmatmul.mubr.f32.gmra.mrb[0].mxu0 %v2870
  %v3172 = vpop.f32.mrb[0].mxu0
  %v3173 = vadd.f32 0.0, %v3172
  %v3174 = vpop.f32.mrb[0].mxu0
  %3175 = vmatprep.mubr.f32.mxu0 0.0
  %3176 = vmatmul.mubr.f32.gmra.mrb[0].mxu0 %v2873
  %v3177 = vpop.f32.mrb[0].mxu0
  %v3178 = vadd.f32 0.0, %v3177
  %v3179 = vpop.f32.mrb[0].mxu0
  %3180 = vmatprep.mubr.f32.mxu0 0.0
  %3181 = vmatmul.mubr.f32.gmra.mrb[0].mxu0 %v2876
  %v3182 = vpop.f32.mrb[0].mxu0
  %v3183 = vadd.f32 0.0, %v3182
  %v3184 = vpop.f32.mrb[0].mxu0
  %3185 = vmatprep.mubr.f32.mxu0 0.0
  %3186 = vmatmul.mubr.f32.gmra.mrb[0].mxu0 %v2879
  %v3187 = vpop.f32.mrb[0].mxu0
  %v3188 = vadd.f32 0.0, %v3187
  %v3189 = vpop.f32.mrb[0].mxu0
  %3190 = vmatprep.mubr.f32.mxu0 0.0
  %3191 = vmatmul.mubr.f32.gmra.mrb[0].mxu0 %v2882
  %v3192 = vpop.f32.mrb[0].mxu0
  %v3193 = vadd.f32 0.0, %v3192
  %v3194 = vpop.f32.mrb[0].mxu0
  %3195 = vmatprep.mubr.f32.mxu0 0.0
  %3196 = vmatmul.mubr.f32.gmra.mrb[0].mxu0 %v2885
  %v3197 = vpop.f32.mrb[0].mxu0
  %v3198 = vadd.f32 0.0, %v3197
  %v3199 = vpop.f32.mrb[0].mxu0
  %3200 = vmatprep.mubr.f32.mxu0 0.0
  %3201 = vmatmul.mubr.f32.gmra.mrb[0].mxu0 %v2888
  %v3202 = vpop.f32.mrb[0].mxu0
  %v3203 = vadd.f32 0.0, %v3202
  %v3204 = vpop.f32.mrb[0].mxu0
  %3205 = vmatprep.mubr.f32.mxu0 0.0
  %3206 = vmatmul.mubr.f32.gmra.mrb[0].mxu0 %v2891
  %v3207 = vpop.f32.mrb[0].mxu0
  %v3208 = vadd.f32 0.0, %v3207
  %v3209 = vpop.f32.mrb[0].mxu0
  %3210 = vmatprep.mubr.f32.mxu0 0.0
  %3211 = vmatmul.mubr.f32.gmra.mrb[0].mxu0 %v2894
  %v3212 = vpop.f32.mrb[0].mxu0
  %v3213 = vadd.f32 0.0, %v3212
  %v3214 = vpop.f32.mrb[0].mxu0
  %3215 = vmatprep.mubr.f32.mxu0 0.0
  %3216 = vmatmul.mubr.f32.gmra.mrb[0].mxu0 %v2897
  %v3217 = vpop.f32.mrb[0].mxu0
  %v3218 = vadd.f32 0.0, %v3217
  %v3219 = vpop.f32.mrb[0].mxu0
  %3220 = vmatprep.mubr.f32.mxu0 0.0
  %3221 = vmatmul.mubr.f32.gmra.mrb[0].mxu0 %v2900
  %v3222 = vpop.f32.mrb[0].mxu0
  %v3223 = vadd.f32 0.0, %v3222
  %v3224 = vpop.f32.mrb[0].mxu0
  %3225 = vmatprep.mubr.f32.mxu0 0.0
  %3226 = vmatmul.mubr.f32.gmra.mrb[0].mxu0 %v2903
  %v3227 = vpop.f32.mrb[0].mxu0
  %v3228 = vadd.f32 0.0, %v3227
  %v3229 = vpop.f32.mrb[0].mxu0
  %3230 = vmatprep.mubr.f32.mxu0 0.0
  %3231 = vmatmul.mubr.f32.gmra.mrb[0].mxu0 %v2906
  %v3232 = vpop.f32.mrb[0].mxu0
  %v3233 = vadd.f32 0.0, %v3232
  %v3234 = vpop.f32.mrb[0].mxu0
  %3235 = vmatprep.mubr.f32.mxu0 0.0
  %3236 = vmatmul.mubr.f32.gmra.mrb[0].mxu0 %v2909
  %v3237 = vpop.f32.mrb[0].mxu0
  %v3238 = vadd.f32 0.0, %v3237
  %v3239 = vpop.f32.mrb[0].mxu0
  %3240 = vmatprep.mubr.f32.mxu0 0.0
  %3241 = vmatmul.mubr.f32.gmra.mrb[0].mxu0 %v2912
  %v3242 = vpop.f32.mrb[0].mxu0
  %v3243 = vadd.f32 0.0, %v3242
  %v3244 = vpop.f32.mrb[0].mxu0
  %3245 = vmatprep.mubr.f32.mxu0 0.0
  %3246 = vmatmul.mubr.f32.gmra.mrb[0].mxu0 %v2915
  %v3247 = vpop.f32.mrb[0].mxu0
  %v3248 = vadd.f32 0.0, %v3247
  %v3249 = vpop.f32.mrb[0].mxu0
  %3250 = vmatprep.mubr.f32.mxu0 0.0
  %3251 = vmatmul.mubr.f32.gmra.mrb[0].mxu0 %v2918
  %v3252 = vpop.f32.mrb[0].mxu0
  %v3253 = vadd.f32 0.0, %v3252
  %v3254 = vpop.f32.mrb[0].mxu0
  %3255 = vmatprep.mubr.f32.mxu0 0.0
  %3256 = vmatmul.mubr.f32.gmra.mrb[0].mxu0 %v2921
  %v3257 = vpop.f32.mrb[0].mxu0
  %v3258 = vadd.f32 0.0, %v3257
  %v3259 = vpop.f32.mrb[0].mxu0
  %3260 = vmatprep.mubr.f32.mxu0 0.0
  %3261 = vmatmul.mubr.f32.gmra.mrb[0].mxu0 %v2924
  %v3262 = vpop.f32.mrb[0].mxu0
  %v3263 = vadd.f32 0.0, %v3262
  %v3264 = vpop.f32.mrb[0].mxu0
  %3265 = vmatprep.mubr.f32.mxu0 0.0
  %3266 = vmatmul.mubr.f32.gmra.mrb[0].mxu0 %v2927
  %v3267 = vpop.f32.mrb[0].mxu0
  %v3268 = vadd.f32 0.0, %v3267
  %v3269 = vpop.f32.mrb[0].mxu0
  %3270 = vmatprep.mubr.f32.mxu0 0.0
  %3271 = vmatmul.mubr.f32.gmra.mrb[0].mxu0 %v2930
  %v3272 = vpop.f32.mrb[0].mxu0
  %v3273 = vadd.f32 0.0, %v3272
  %v3274 = vpop.f32.mrb[0].mxu0
  %3275 = vmatprep.mubr.f32.mxu0 0.0
  %3276 = vmatmul.mubr.f32.gmra.mrb[0].mxu0 %v2933
  %v3277 = vpop.f32.mrb[0].mxu0
  %v3278 = vadd.f32 0.0, %v3277
  %v3279 = vpop.f32.mrb[0].mxu0
  %3280 = vmatprep.mubr.f32.mxu0 0.0
  %3281 = vmatmul.mubr.f32.gmra.mrb[0].mxu0 %v2936
  %v3282 = vpop.f32.mrb[0].mxu0
  %v3283 = vadd.f32 0.0, %v3282
  %v3284 = vpop.f32.mrb[0].mxu0
  %3285 = vmatprep.mubr.f32.mxu0 0.0
  %3286 = vmatmul.mubr.f32.gmra.mrb[0].mxu0 %v2939
  %v3287 = vpop.f32.mrb[0].mxu0
  %v3288 = vadd.f32 0.0, %v3287
  %v3289 = vpop.f32.mrb[0].mxu0
  %3290 = vmatprep.mubr.f32.mxu0 0.0
  %3291 = vmatmul.mubr.f32.gmra.mrb[0].mxu0 %v2942
  %v3292 = vpop.f32.mrb[0].mxu0
  %v3293 = vadd.f32 0.0, %v3292
  %v3294 = vpop.f32.mrb[0].mxu0
  %3295 = vmatprep.mubr.f32.mxu0 0.0
  %3296 = vmatmul.mubr.f32.gmra.mrb[0].mxu0 %v2945
  %v3297 = vpop.f32.mrb[0].mxu0
  %v3298 = vadd.f32 0.0, %v3297
  %v3299 = vpop.f32.mrb[0].mxu0
  %3300 = vmatprep.mubr.f32.mxu0 0.0
  %3301 = vmatmul.mubr.f32.gmra.mrb[0].mxu0 %v2948
  %v3302 = vpop.f32.mrb[0].mxu0
  %v3303 = vadd.f32 0.0, %v3302
  %v3304 = vpop.f32.mrb[0].mxu0
  %3305 = vmatprep.mubr.f32.mxu0 0.0
  %3306 = vmatmul.mubr.f32.gmra.mrb[0].mxu0 %v2951
  %v3307 = vpop.f32.mrb[0].mxu0
  %v3308 = vadd.f32 0.0, %v3307
  %v3309 = vpop.f32.mrb[0].mxu0
  %3310 = vmatprep.mubr.f32.mxu0 0.0
  %3311 = vmatmul.mubr.f32.gmra.mrb[0].mxu0 %v2954
  %v3312 = vpop.f32.mrb[0].mxu0
  %v3313 = vadd.f32 0.0, %v3312
  %v3314 = vpop.f32.mrb[0].mxu0
  %3315 = vmatprep.mubr.f32.mxu0 0.0
  %3316 = vmatmul.mubr.f32.gmra.mrb[0].mxu0 %v2957
  %v3317 = vpop.f32.mrb[0].mxu0
  %v3318 = vadd.f32 0.0, %v3317
  %v3319 = vpop.f32.mrb[0].mxu0
  %3320 = vmatprep.mubr.f32.mxu0 0.0
  %3321 = vmatmul.mubr.f32.gmra.mrb[0].mxu0 %v2960
  %v3322 = vpop.f32.mrb[0].mxu0
  %v3323 = vadd.f32 0.0, %v3322
  %v3324 = vpop.f32.mrb[0].mxu0
  %3325 = vmatprep.mubr.f32.mxu0 0.0
  %3326 = vmatmul.mubr.f32.gmra.mrb[0].mxu0 %v2963
  %v3327 = vpop.f32.mrb[0].mxu0
  %v3328 = vadd.f32 0.0, %v3327
  %v3329 = vpop.f32.mrb[0].mxu0
  %3330 = vmatprep.mubr.f32.mxu0 0.0
  %3331 = vmatmul.mubr.f32.gmra.mrb[0].mxu0 %v2966
  %v3332 = vpop.f32.mrb[0].mxu0
  %v3333 = vadd.f32 0.0, %v3332
  %v3334 = vpop.f32.mrb[0].mxu0
  %3335 = vmatprep.mubr.f32.mxu0 0.0
  %3336 = vmatmul.mubr.f32.gmra.mrb[0].mxu0 %v2969
  %v3337 = vpop.f32.mrb[0].mxu0
  %v3338 = vadd.f32 0.0, %v3337
  %v3339 = vpop.f32.mrb[0].mxu0
  %3340 = vmatprep.mubr.f32.mxu0 0.0
  %3341 = vmatmul.mubr.f32.gmra.mrb[0].mxu0 %v2972
  %v3342 = vpop.f32.mrb[0].mxu0
  %v3343 = vadd.f32 0.0, %v3342
  %v3344 = vpop.f32.mrb[0].mxu0
  %3345 = vmatprep.mubr.f32.mxu0 0.0
  %3346 = vmatmul.mubr.f32.gmra.mrb[0].mxu0 %v2975
  %v3347 = vpop.f32.mrb[0].mxu0
  %v3348 = vadd.f32 0.0, %v3347
  %v3349 = vpop.f32.mrb[0].mxu0
  %3350 = vmatprep.mubr.f32.mxu0 0.0
  %3351 = vmatmul.mubr.f32.gmra.mrb[0].mxu0 %v2978
  %v3352 = vpop.f32.mrb[0].mxu0
  %v3353 = vadd.f32 0.0, %v3352
  %v3354 = vpop.f32.mrb[0].mxu0
  %3355 = vmatprep.mubr.f32.mxu0 0.0
  %3356 = vmatmul.mubr.f32.gmra.mrb[0].mxu0 %v2981
  %v3357 = vpop.f32.mrb[0].mxu0
  %v3358 = vadd.f32 0.0, %v3357
  %v3359 = vpop.f32.mrb[0].mxu0
  %3360 = vmatprep.mubr.f32.mxu0 0.0
  %3361 = vmatmul.mubr.f32.gmra.mrb[0].mxu0 %v2984
  %v3362 = vpop.f32.mrb[0].mxu0
  %v3363 = vadd.f32 0.0, %v3362
  %v3364 = vpop.f32.mrb[0].mxu0
  %3365 = vmatprep.mubr.f32.mxu0 0.0
  %3366 = vmatmul.mubr.f32.gmra.mrb[0].mxu0 %v2987
  %v3367 = vpop.f32.mrb[0].mxu0
  %v3368 = vadd.f32 0.0, %v3367
  %v3369 = vpop.f32.mrb[0].mxu0
  %3370 = vmatprep.mubr.f32.mxu0 0.0
  %3371 = vmatmul.mubr.f32.gmra.mrb[0].mxu0 %v2990
  %v3372 = vpop.f32.mrb[0].mxu0
  %v3373 = vadd.f32 0.0, %v3372
  %v3374 = vpop.f32.mrb[0].mxu0
  %3375 = vmatprep.mubr.f32.mxu0 0.0
  %3376 = vmatmul.mubr.f32.gmra.mrb[0].mxu0 %v2993
  %v3377 = vpop.f32.mrb[0].mxu0
  %v3378 = vadd.f32 0.0, %v3377
  %v3379 = vpop.f32.mrb[0].mxu0
  %3380 = vmatprep.mubr.f32.mxu0 0.0
  %3381 = vmatmul.mubr.f32.gmra.mrb[0].mxu0 %v2996
  %v3382 = vpop.f32.mrb[0].mxu0
  %v3383 = vadd.f32 0.0, %v3382
  %v3384 = vpop.f32.mrb[0].mxu0
  %3385 = vdwg.mxu0
  %v3386 = vadd.f32 %v2676, %v3068
  %v3387 = vadd.f32 %v2677, %v3073
  %v3388 = vadd.f32 %v2678, %v3078
  %v3389 = vadd.f32 %v2679, %v3083
  %v3390 = vadd.f32 %v2680, %v3088
  %v3391 = vadd.f32 %v2681, %v3093
  %v3392 = vadd.f32 %v2682, %v3098
  %v3393 = vadd.f32 %v2683, %v3103
  %v3394 = vadd.f32 %v2684, %v3108
  %v3395 = vadd.f32 %v2685, %v3113
  %v3396 = vadd.f32 %v2686, %v3118
  %v3397 = vadd.f32 %v2687, %v3123
  %v3398 = vadd.f32 %v2688, %v3128
  %v3399 = vadd.f32 %v2689, %v3133
  %v3400 = vadd.f32 %v2690, %v3138
  %v3401 = vadd.f32 %v2691, %v3143
  %v3402 = vadd.f32 %v2692, %v3148
  %v3403 = vadd.f32 %v2693, %v3153
  %v3404 = vadd.f32 %v2694, %v3158
  %v3405 = vadd.f32 %v2695, %v3163
  %v3406 = vadd.f32 %v2696, %v3168
  %v3407 = vadd.f32 %v2697, %v3173
  %v3408 = vadd.f32 %v2698, %v3178
  %v3409 = vadd.f32 %v2699, %v3183
  %v3410 = vadd.f32 %v2700, %v3188
  %v3411 = vadd.f32 %v2701, %v3193
  %v3412 = vadd.f32 %v2702, %v3198
  %v3413 = vadd.f32 %v2703, %v3203
  %v3414 = vadd.f32 %v2704, %v3208
  %v3415 = vadd.f32 %v2705, %v3213
  %v3416 = vadd.f32 %v2706, %v3218
  %v3417 = vadd.f32 %v2707, %v3223
  %v3418 = vadd.f32 %v2708, %v3228
  %v3419 = vadd.f32 %v2709, %v3233
  %v3420 = vadd.f32 %v2710, %v3238
  %v3421 = vadd.f32 %v2711, %v3243
  %v3422 = vadd.f32 %v2712, %v3248
  %v3423 = vadd.f32 %v2713, %v3253
  %v3424 = vadd.f32 %v2714, %v3258
  %v3425 = vadd.f32 %v2715, %v3263
  %v3426 = vadd.f32 %v2716, %v3268
  %v3427 = vadd.f32 %v2717, %v3273
  %v3428 = vadd.f32 %v2718, %v3278
  %v3429 = vadd.f32 %v2719, %v3283
  %v3430 = vadd.f32 %v2720, %v3288
  %v3431 = vadd.f32 %v2721, %v3293
  %v3432 = vadd.f32 %v2722, %v3298
  %v3433 = vadd.f32 %v2723, %v3303
  %v3434 = vadd.f32 %v2724, %v3308
  %v3435 = vadd.f32 %v2725, %v3313
  %v3436 = vadd.f32 %v2726, %v3318
  %v3437 = vadd.f32 %v2727, %v3323
  %v3438 = vadd.f32 %v2728, %v3328
  %v3439 = vadd.f32 %v2729, %v3333
  %v3440 = vadd.f32 %v2730, %v3338
  %v3441 = vadd.f32 %v2731, %v3343
  %v3442 = vadd.f32 %v2732, %v3348
  %v3443 = vadd.f32 %v2733, %v3353
  %v3444 = vadd.f32 %v2734, %v3358
  %v3445 = vadd.f32 %v2735, %v3363
  %v3446 = vadd.f32 %v2736, %v3368
  %v3447 = vadd.f32 %v2737, %v3373
  %v3448 = vadd.f32 %v2738, %v3378
  %v3449 = vadd.f32 %v2739, %v3383
  %v3450 = vld [vmem:[%s2029 + $0x2] sm:$0xff]
  %v3451 = vld [vmem:[%s2029 + $0xa] sm:$0xff]
  %v3452 = vld [vmem:[%s2029 + $0x1a] sm:$0xff]
  %v3453 = vld [vmem:[%s2029 + $0x22] sm:$0xff]
  %v3454 = vld [vmem:[%s2029 + $0x32] sm:$0xff]
  %v3455 = vld [vmem:[%s2029 + $0x3a] sm:$0xff]
  %v3456 = vld [vmem:[%s2029 + $0x4a] sm:$0xff]
  %v3457 = vld [vmem:[%s2029 + $0x52] sm:$0xff]
  %v3458 = vld [vmem:[%s2029 + $0x62] sm:$0xff]
  %v3459 = vld [vmem:[%s2029 + $0x6a] sm:$0xff]
  %v3460 = vld [vmem:[%s2029 + $0x7a] sm:$0xff]
  %v3461 = vld [vmem:[%s2029 + $0x82] sm:$0xff]
  %v3462 = vld [vmem:[%s2029 + $0x92] sm:$0xff]
  %v3463 = vld [vmem:[%s2029 + $0x9a] sm:$0xff]
  %v3464 = vld [vmem:[%s2029 + $0xaa] sm:$0xff]
  %v3465 = vld [vmem:[%s2029 + $0xb2] sm:$0xff]
  %v3466 = vld [vmem:[%s2029 + $0xc2] sm:$0xff]
  %v3467 = vld [vmem:[%s2029 + $0xca] sm:$0xff]
  %v3468 = vld [vmem:[%s2029 + $0xda] sm:$0xff]
  %v3469 = vld [vmem:[%s2029 + $0xe2] sm:$0xff]
  %v3470 = vld [vmem:[%s2029 + $0xf2] sm:$0xff]
  %v3471 = vld [vmem:[%s2029 + $0xfa] sm:$0xff]
  %v3472 = vld [vmem:[%s2029 + $0x10a] sm:$0xff]
  %v3473 = vld [vmem:[%s2029 + $0x112] sm:$0xff]
  %v3474 = vld [vmem:[%s2029 + $0x122] sm:$0xff]
  %v3475 = vld [vmem:[%s2029 + $0x12a] sm:$0xff]
  %v3476 = vld [vmem:[%s2029 + $0x13a] sm:$0xff]
  %v3477 = vld [vmem:[%s2029 + $0x142] sm:$0xff]
  %v3478 = vld [vmem:[%s2029 + $0x152] sm:$0xff]
  %v3479 = vld [vmem:[%s2029 + $0x15a] sm:$0xff]
  %v3480 = vld [vmem:[%s2029 + $0x16a] sm:$0xff]
  %v3481 = vld [vmem:[%s2029 + $0x172] sm:$0xff]
  %v3482 = vld [vmem:[%s2029 + $0x1b2] sm:$0xff]
  %v3483 = vld [vmem:[%s2029 + $0x1ba] sm:$0xff]
  %v3484 = vld [vmem:[%s2029 + $0x1ca] sm:$0xff]
  %v3485 = vld [vmem:[%s2029 + $0x1d2] sm:$0xff]
  %v3486 = vld [vmem:[%s2029 + $0x1e2] sm:$0xff]
  %v3487 = vld [vmem:[%s2029 + $0x1ea] sm:$0xff]
  %v3488 = vld [vmem:[%s2029 + $0x1fa] sm:$0xff]
  %v3489 = vld [vmem:[%s2029 + $0x202] sm:$0xff]
  %v3490 = vld [vmem:[%s2029 + $0x212] sm:$0xff]
  %v3491 = vld [vmem:[%s2029 + $0x21a] sm:$0xff]
  %v3492 = vld [vmem:[%s2029 + $0x22a] sm:$0xff]
  %v3493 = vld [vmem:[%s2029 + $0x232] sm:$0xff]
  %v3494 = vld [vmem:[%s2029 + $0x242] sm:$0xff]
  %v3495 = vld [vmem:[%s2029 + $0x24a] sm:$0xff]
  %v3496 = vld [vmem:[%s2029 + $0x25a] sm:$0xff]
  %v3497 = vld [vmem:[%s2029 + $0x262] sm:$0xff]
  %v3498 = vld [vmem:[%s2029 + $0x272] sm:$0xff]
  %v3499 = vld [vmem:[%s2029 + $0x27a] sm:$0xff]
  %v3500 = vld [vmem:[%s2029 + $0x28a] sm:$0xff]
  %v3501 = vld [vmem:[%s2029 + $0x292] sm:$0xff]
  %v3502 = vld [vmem:[%s2029 + $0x2a2] sm:$0xff]
  %v3503 = vld [vmem:[%s2029 + $0x2aa] sm:$0xff]
  %v3504 = vld [vmem:[%s2029 + $0x2ba] sm:$0xff]
  %v3505 = vld [vmem:[%s2029 + $0x2c2] sm:$0xff]
  %v3506 = vld [vmem:[%s2029 + $0x2d2] sm:$0xff]
  %v3507 = vld [vmem:[%s2029 + $0x2da] sm:$0xff]
  %v3508 = vld [vmem:[%s2029 + $0x2ea] sm:$0xff]
  %v3509 = vld [vmem:[%s2029 + $0x2f2] sm:$0xff]
  %v3510 = vld [vmem:[%s2029 + $0x302] sm:$0xff]
  %v3511 = vld [vmem:[%s2029 + $0x30a] sm:$0xff]
  %v3512 = vld [vmem:[%s2029 + $0x31a] sm:$0xff]
  %v3513 = vld [vmem:[%s2029 + $0x322] sm:$0xff]
  %s3514 = scalar_lea.vmem %s1, 20
  %v3515 = vld [vmem:[%s3514] sm:$0xf]
  %v3517 = vsel %vm157, %v3450, 0
  %v3520 = vsel %vm157, %v3451, 0
  %v3523 = vsel %vm157, %v3452, 0
  %v3526 = vsel %vm157, %v3453, 0
  %v3529 = vsel %vm157, %v3454, 0
  %v3532 = vsel %vm157, %v3455, 0
  %v3535 = vsel %vm157, %v3456, 0
  %v3538 = vsel %vm157, %v3457, 0
  %v3541 = vsel %vm157, %v3458, 0
  %v3544 = vsel %vm157, %v3459, 0
  %v3547 = vsel %vm157, %v3460, 0
  %v3550 = vsel %vm157, %v3461, 0
  %v3553 = vsel %vm157, %v3462, 0
  %v3556 = vsel %vm157, %v3463, 0
  %v3559 = vsel %vm157, %v3464, 0
  %v3562 = vsel %vm157, %v3465, 0
  %v3565 = vsel %vm157, %v3466, 0
  %v3568 = vsel %vm157, %v3467, 0
  %v3571 = vsel %vm157, %v3468, 0
  %v3574 = vsel %vm157, %v3469, 0
  %v3577 = vsel %vm157, %v3470, 0
  %v3580 = vsel %vm157, %v3471, 0
  %v3583 = vsel %vm157, %v3472, 0
  %v3586 = vsel %vm157, %v3473, 0
  %v3589 = vsel %vm157, %v3474, 0
  %v3592 = vsel %vm157, %v3475, 0
  %v3595 = vsel %vm157, %v3476, 0
  %v3598 = vsel %vm157, %v3477, 0
  %v3601 = vsel %vm157, %v3478, 0
  %v3604 = vsel %vm157, %v3479, 0
  %v3607 = vsel %vm157, %v3480, 0
  %v3610 = vsel %vm157, %v3481, 0
  %v3613 = vsel %vm157, %v3482, 0
  %v3616 = vsel %vm157, %v3483, 0
  %v3619 = vsel %vm157, %v3484, 0
  %v3622 = vsel %vm157, %v3485, 0
  %v3625 = vsel %vm157, %v3486, 0
  %v3628 = vsel %vm157, %v3487, 0
  %v3631 = vsel %vm157, %v3488, 0
  %v3634 = vsel %vm157, %v3489, 0
  %v3637 = vsel %vm157, %v3490, 0
  %v3640 = vsel %vm157, %v3491, 0
  %v3643 = vsel %vm157, %v3492, 0
  %v3646 = vsel %vm157, %v3493, 0
  %v3649 = vsel %vm157, %v3494, 0
  %v3652 = vsel %vm157, %v3495, 0
  %v3655 = vsel %vm157, %v3496, 0
  %v3658 = vsel %vm157, %v3497, 0
  %v3661 = vsel %vm157, %v3498, 0
  %v3664 = vsel %vm157, %v3499, 0
  %v3667 = vsel %vm157, %v3500, 0
  %v3670 = vsel %vm157, %v3501, 0
  %v3673 = vsel %vm157, %v3502, 0
  %v3676 = vsel %vm157, %v3503, 0
  %v3679 = vsel %vm157, %v3504, 0
  %v3682 = vsel %vm157, %v3505, 0
  %v3685 = vsel %vm157, %v3506, 0
  %v3688 = vsel %vm157, %v3507, 0
  %v3691 = vsel %vm157, %v3508, 0
  %v3694 = vsel %vm157, %v3509, 0
  %v3697 = vsel %vm157, %v3510, 0
  %v3700 = vsel %vm157, %v3511, 0
  %v3703 = vsel %vm157, %v3512, 0
  %v3706 = vsel %vm157, %v3513, 0
  %v3709 = vsel %vm350, %v3515, 0
  %3711 = vmatprep.subr.mxu0 0.0
  %3712 = vmatpush1.msra.mxu0 %v3709
  %3713 = vmatprep.subr.mxu0 0.0
  %3714 = vmatpush1.msra.mxu0 0.0
  %3715 = vmatprep.subr.mxu0 0.0
  %3716 = vmatpush1.msra.mxu0 0.0
  %3717 = vmatprep.subr.mxu0 0.0
  %3718 = vmatpush1.msra.mxu0 0.0
  %3719 = vmatprep.subr.mxu0 0.0
  %3720 = vmatpush1.msra.mxu0 0.0
  %3721 = vmatprep.subr.mxu0 0.0
  %3722 = vmatpush1.msra.mxu0 0.0
  %3723 = vmatprep.subr.mxu0 0.0
  %3724 = vmatpush1.msra.mxu0 0.0
  %3725 = vmatprep.subr.mxu0 0.0
  %3726 = vmatpush1.msra.mxu0 0.0
  %3727 = vmatprep.subr.mxu0 0.0
  %3728 = vmatpush1.msra.mxu0 0.0
  %3729 = vmatprep.subr.mxu0 0.0
  %3730 = vmatpush1.msra.mxu0 0.0
  %3731 = vmatprep.subr.mxu0 0.0
  %3732 = vmatpush1.msra.mxu0 0.0
  %3733 = vmatprep.subr.mxu0 0.0
  %3734 = vmatpush1.msra.mxu0 0.0
  %3735 = vmatprep.subr.mxu0 0.0
  %3736 = vmatpush1.msra.mxu0 0.0
  %3737 = vmatprep.subr.mxu0 0.0
  %3738 = vmatpush1.msra.mxu0 0.0
  %3739 = vmatprep.subr.mxu0 0.0
  %3740 = vmatpush1.msra.mxu0 0.0
  %3741 = vmatprep.subr.mxu0 0.0
  %3742 = vmatpush1.msra.mxu0 0.0
  %3743 = vmatprep.subr.mxu0 0.0
  %3744 = vmatpush1.msra.mxu0 0.0
  %3745 = vmatprep.subr.mxu0 0.0
  %3746 = vmatpush1.msra.mxu0 0.0
  %3747 = vmatprep.subr.mxu0 0.0
  %3748 = vmatpush1.msra.mxu0 0.0
  %3749 = vmatprep.subr.mxu0 0.0
  %3750 = vmatpush1.msra.mxu0 0.0
  %3751 = vmatprep.subr.mxu0 0.0
  %3752 = vmatpush1.msra.mxu0 0.0
  %3753 = vmatprep.subr.mxu0 0.0
  %3754 = vmatpush1.msra.mxu0 0.0
  %3755 = vmatprep.subr.mxu0 0.0
  %3756 = vmatpush1.msra.mxu0 0.0
  %3757 = vmatprep.subr.mxu0 0.0
  %3758 = vmatpush1.msra.mxu0 0.0
  %3759 = vmatprep.subr.mxu0 0.0
  %3760 = vmatpush1.msra.mxu0 0.0
  %3761 = vmatprep.subr.mxu0 0.0
  %3762 = vmatpush1.msra.mxu0 0.0
  %3763 = vmatprep.subr.mxu0 0.0
  %3764 = vmatpush1.msra.mxu0 0.0
  %3765 = vmatprep.subr.mxu0 0.0
  %3766 = vmatpush1.msra.mxu0 0.0
  %3767 = vmatprep.subr.mxu0 0.0
  %3768 = vmatpush1.msra.mxu0 0.0
  %3769 = vmatprep.subr.mxu0 0.0
  %3770 = vmatpush1.msra.mxu0 0.0
  %3771 = vmatprep.subr.mxu0 0.0
  %3772 = vmatpush1.msra.mxu0 0.0
  %3773 = vmatprep.subr.mxu0 0.0
  %3774 = vmatpush1.msra.mxu0 0.0
  %3775 = vmatprep.mubr.f32.mxu0 0.0
  %3776 = vmatmul.mubr.f32.gmra.mrb[0].mxu0 %v3517
  %v3777 = vpop.f32.mrb[0].mxu0
  %v3778 = vadd.f32 0.0, %v3777
  %v3779 = vpop.f32.mrb[0].mxu0
  %3780 = vmatprep.mubr.f32.mxu0 0.0
  %3781 = vmatmul.mubr.f32.gmra.mrb[0].mxu0 %v3520
  %v3782 = vpop.f32.mrb[0].mxu0
  %v3783 = vadd.f32 0.0, %v3782
  %v3784 = vpop.f32.mrb[0].mxu0
  %3785 = vmatprep.mubr.f32.mxu0 0.0
  %3786 = vmatmul.mubr.f32.gmra.mrb[0].mxu0 %v3523
  %v3787 = vpop.f32.mrb[0].mxu0
  %v3788 = vadd.f32 0.0, %v3787
  %v3789 = vpop.f32.mrb[0].mxu0
  %3790 = vmatprep.mubr.f32.mxu0 0.0
  %3791 = vmatmul.mubr.f32.gmra.mrb[0].mxu0 %v3526
  %v3792 = vpop.f32.mrb[0].mxu0
  %v3793 = vadd.f32 0.0, %v3792
  %v3794 = vpop.f32.mrb[0].mxu0
  %3795 = vmatprep.mubr.f32.mxu0 0.0
  %3796 = vmatmul.mubr.f32.gmra.mrb[0].mxu0 %v3529
  %v3797 = vpop.f32.mrb[0].mxu0
  %v3798 = vadd.f32 0.0, %v3797
  %v3799 = vpop.f32.mrb[0].mxu0
  %3800 = vmatprep.mubr.f32.mxu0 0.0
  %3801 = vmatmul.mubr.f32.gmra.mrb[0].mxu0 %v3532
  %v3802 = vpop.f32.mrb[0].mxu0
  %v3803 = vadd.f32 0.0, %v3802
  %v3804 = vpop.f32.mrb[0].mxu0
  %3805 = vmatprep.mubr.f32.mxu0 0.0
  %3806 = vmatmul.mubr.f32.gmra.mrb[0].mxu0 %v3535
  %v3807 = vpop.f32.mrb[0].mxu0
  %v3808 = vadd.f32 0.0, %v3807
  %v3809 = vpop.f32.mrb[0].mxu0
  %3810 = vmatprep.mubr.f32.mxu0 0.0
  %3811 = vmatmul.mubr.f32.gmra.mrb[0].mxu0 %v3538
  %v3812 = vpop.f32.mrb[0].mxu0
  %v3813 = vadd.f32 0.0, %v3812
  %v3814 = vpop.f32.mrb[0].mxu0
  %3815 = vmatprep.mubr.f32.mxu0 0.0
  %3816 = vmatmul.mubr.f32.gmra.mrb[0].mxu0 %v3541
  %v3817 = vpop.f32.mrb[0].mxu0
  %v3818 = vadd.f32 0.0, %v3817
  %v3819 = vpop.f32.mrb[0].mxu0
  %3820 = vmatprep.mubr.f32.mxu0 0.0
  %3821 = vmatmul.mubr.f32.gmra.mrb[0].mxu0 %v3544
  %v3822 = vpop.f32.mrb[0].mxu0
  %v3823 = vadd.f32 0.0, %v3822
  %v3824 = vpop.f32.mrb[0].mxu0
  %3825 = vmatprep.mubr.f32.mxu0 0.0
  %3826 = vmatmul.mubr.f32.gmra.mrb[0].mxu0 %v3547
  %v3827 = vpop.f32.mrb[0].mxu0
  %v3828 = vadd.f32 0.0, %v3827
  %v3829 = vpop.f32.mrb[0].mxu0
  %3830 = vmatprep.mubr.f32.mxu0 0.0
  %3831 = vmatmul.mubr.f32.gmra.mrb[0].mxu0 %v3550
  %v3832 = vpop.f32.mrb[0].mxu0
  %v3833 = vadd.f32 0.0, %v3832
  %v3834 = vpop.f32.mrb[0].mxu0
  %3835 = vmatprep.mubr.f32.mxu0 0.0
  %3836 = vmatmul.mubr.f32.gmra.mrb[0].mxu0 %v3553
  %v3837 = vpop.f32.mrb[0].mxu0
  %v3838 = vadd.f32 0.0, %v3837
  %v3839 = vpop.f32.mrb[0].mxu0
  %3840 = vmatprep.mubr.f32.mxu0 0.0
  %3841 = vmatmul.mubr.f32.gmra.mrb[0].mxu0 %v3556
  %v3842 = vpop.f32.mrb[0].mxu0
  %v3843 = vadd.f32 0.0, %v3842
  %v3844 = vpop.f32.mrb[0].mxu0
  %3845 = vmatprep.mubr.f32.mxu0 0.0
  %3846 = vmatmul.mubr.f32.gmra.mrb[0].mxu0 %v3559
  %v3847 = vpop.f32.mrb[0].mxu0
  %v3848 = vadd.f32 0.0, %v3847
  %v3849 = vpop.f32.mrb[0].mxu0
  %3850 = vmatprep.mubr.f32.mxu0 0.0
  %3851 = vmatmul.mubr.f32.gmra.mrb[0].mxu0 %v3562
  %v3852 = vpop.f32.mrb[0].mxu0
  %v3853 = vadd.f32 0.0, %v3852
  %v3854 = vpop.f32.mrb[0].mxu0
  %3855 = vmatprep.mubr.f32.mxu0 0.0
  %3856 = vmatmul.mubr.f32.gmra.mrb[0].mxu0 %v3565
  %v3857 = vpop.f32.mrb[0].mxu0
  %v3858 = vadd.f32 0.0, %v3857
  %v3859 = vpop.f32.mrb[0].mxu0
  %3860 = vmatprep.mubr.f32.mxu0 0.0
  %3861 = vmatmul.mubr.f32.gmra.mrb[0].mxu0 %v3568
  %v3862 = vpop.f32.mrb[0].mxu0
  %v3863 = vadd.f32 0.0, %v3862
  %v3864 = vpop.f32.mrb[0].mxu0
  %3865 = vmatprep.mubr.f32.mxu0 0.0
  %3866 = vmatmul.mubr.f32.gmra.mrb[0].mxu0 %v3571
  %v3867 = vpop.f32.mrb[0].mxu0
  %v3868 = vadd.f32 0.0, %v3867
  %v3869 = vpop.f32.mrb[0].mxu0
  %3870 = vmatprep.mubr.f32.mxu0 0.0
  %3871 = vmatmul.mubr.f32.gmra.mrb[0].mxu0 %v3574
  %v3872 = vpop.f32.mrb[0].mxu0
  %v3873 = vadd.f32 0.0, %v3872
  %v3874 = vpop.f32.mrb[0].mxu0
  %3875 = vmatprep.mubr.f32.mxu0 0.0
  %3876 = vmatmul.mubr.f32.gmra.mrb[0].mxu0 %v3577
  %v3877 = vpop.f32.mrb[0].mxu0
  %v3878 = vadd.f32 0.0, %v3877
  %v3879 = vpop.f32.mrb[0].mxu0
  %3880 = vmatprep.mubr.f32.mxu0 0.0
  %3881 = vmatmul.mubr.f32.gmra.mrb[0].mxu0 %v3580
  %v3882 = vpop.f32.mrb[0].mxu0
  %v3883 = vadd.f32 0.0, %v3882
  %v3884 = vpop.f32.mrb[0].mxu0
  %3885 = vmatprep.mubr.f32.mxu0 0.0
  %3886 = vmatmul.mubr.f32.gmra.mrb[0].mxu0 %v3583
  %v3887 = vpop.f32.mrb[0].mxu0
  %v3888 = vadd.f32 0.0, %v3887
  %v3889 = vpop.f32.mrb[0].mxu0
  %3890 = vmatprep.mubr.f32.mxu0 0.0
  %3891 = vmatmul.mubr.f32.gmra.mrb[0].mxu0 %v3586
  %v3892 = vpop.f32.mrb[0].mxu0
  %v3893 = vadd.f32 0.0, %v3892
  %v3894 = vpop.f32.mrb[0].mxu0
  %3895 = vmatprep.mubr.f32.mxu0 0.0
  %3896 = vmatmul.mubr.f32.gmra.mrb[0].mxu0 %v3589
  %v3897 = vpop.f32.mrb[0].mxu0
  %v3898 = vadd.f32 0.0, %v3897
  %v3899 = vpop.f32.mrb[0].mxu0
  %3900 = vmatprep.mubr.f32.mxu0 0.0
  %3901 = vmatmul.mubr.f32.gmra.mrb[0].mxu0 %v3592
  %v3902 = vpop.f32.mrb[0].mxu0
  %v3903 = vadd.f32 0.0, %v3902
  %v3904 = vpop.f32.mrb[0].mxu0
  %3905 = vmatprep.mubr.f32.mxu0 0.0
  %3906 = vmatmul.mubr.f32.gmra.mrb[0].mxu0 %v3595
  %v3907 = vpop.f32.mrb[0].mxu0
  %v3908 = vadd.f32 0.0, %v3907
  %v3909 = vpop.f32.mrb[0].mxu0
  %3910 = vmatprep.mubr.f32.mxu0 0.0
  %3911 = vmatmul.mubr.f32.gmra.mrb[0].mxu0 %v3598
  %v3912 = vpop.f32.mrb[0].mxu0
  %v3913 = vadd.f32 0.0, %v3912
  %v3914 = vpop.f32.mrb[0].mxu0
  %3915 = vmatprep.mubr.f32.mxu0 0.0
  %3916 = vmatmul.mubr.f32.gmra.mrb[0].mxu0 %v3601
  %v3917 = vpop.f32.mrb[0].mxu0
  %v3918 = vadd.f32 0.0, %v3917
  %v3919 = vpop.f32.mrb[0].mxu0
  %3920 = vmatprep.mubr.f32.mxu0 0.0
  %3921 = vmatmul.mubr.f32.gmra.mrb[0].mxu0 %v3604
  %v3922 = vpop.f32.mrb[0].mxu0
  %v3923 = vadd.f32 0.0, %v3922
  %v3924 = vpop.f32.mrb[0].mxu0
  %3925 = vmatprep.mubr.f32.mxu0 0.0
  %3926 = vmatmul.mubr.f32.gmra.mrb[0].mxu0 %v3607
  %v3927 = vpop.f32.mrb[0].mxu0
  %v3928 = vadd.f32 0.0, %v3927
  %v3929 = vpop.f32.mrb[0].mxu0
  %3930 = vmatprep.mubr.f32.mxu0 0.0
  %3931 = vmatmul.mubr.f32.gmra.mrb[0].mxu0 %v3610
  %v3932 = vpop.f32.mrb[0].mxu0
  %v3933 = vadd.f32 0.0, %v3932
  %v3934 = vpop.f32.mrb[0].mxu0
  %3935 = vmatprep.mubr.f32.mxu0 0.0
  %3936 = vmatmul.mubr.f32.gmra.mrb[0].mxu0 %v3613
  %v3937 = vpop.f32.mrb[0].mxu0
  %v3938 = vadd.f32 0.0, %v3937
  %v3939 = vpop.f32.mrb[0].mxu0
  %3940 = vmatprep.mubr.f32.mxu0 0.0
  %3941 = vmatmul.mubr.f32.gmra.mrb[0].mxu0 %v3616
  %v3942 = vpop.f32.mrb[0].mxu0
  %v3943 = vadd.f32 0.0, %v3942
  %v3944 = vpop.f32.mrb[0].mxu0
  %3945 = vmatprep.mubr.f32.mxu0 0.0
  %3946 = vmatmul.mubr.f32.gmra.mrb[0].mxu0 %v3619
  %v3947 = vpop.f32.mrb[0].mxu0
  %v3948 = vadd.f32 0.0, %v3947
  %v3949 = vpop.f32.mrb[0].mxu0
  %3950 = vmatprep.mubr.f32.mxu0 0.0
  %3951 = vmatmul.mubr.f32.gmra.mrb[0].mxu0 %v3622
  %v3952 = vpop.f32.mrb[0].mxu0
  %v3953 = vadd.f32 0.0, %v3952
  %v3954 = vpop.f32.mrb[0].mxu0
  %3955 = vmatprep.mubr.f32.mxu0 0.0
  %3956 = vmatmul.mubr.f32.gmra.mrb[0].mxu0 %v3625
  %v3957 = vpop.f32.mrb[0].mxu0
  %v3958 = vadd.f32 0.0, %v3957
  %v3959 = vpop.f32.mrb[0].mxu0
  %3960 = vmatprep.mubr.f32.mxu0 0.0
  %3961 = vmatmul.mubr.f32.gmra.mrb[0].mxu0 %v3628
  %v3962 = vpop.f32.mrb[0].mxu0
  %v3963 = vadd.f32 0.0, %v3962
  %v3964 = vpop.f32.mrb[0].mxu0
  %3965 = vmatprep.mubr.f32.mxu0 0.0
  %3966 = vmatmul.mubr.f32.gmra.mrb[0].mxu0 %v3631
  %v3967 = vpop.f32.mrb[0].mxu0
  %v3968 = vadd.f32 0.0, %v3967
  %v3969 = vpop.f32.mrb[0].mxu0
  %3970 = vmatprep.mubr.f32.mxu0 0.0
  %3971 = vmatmul.mubr.f32.gmra.mrb[0].mxu0 %v3634
  %v3972 = vpop.f32.mrb[0].mxu0
  %v3973 = vadd.f32 0.0, %v3972
  %v3974 = vpop.f32.mrb[0].mxu0
  %3975 = vmatprep.mubr.f32.mxu0 0.0
  %3976 = vmatmul.mubr.f32.gmra.mrb[0].mxu0 %v3637
  %v3977 = vpop.f32.mrb[0].mxu0
  %v3978 = vadd.f32 0.0, %v3977
  %v3979 = vpop.f32.mrb[0].mxu0
  %3980 = vmatprep.mubr.f32.mxu0 0.0
  %3981 = vmatmul.mubr.f32.gmra.mrb[0].mxu0 %v3640
  %v3982 = vpop.f32.mrb[0].mxu0
  %v3983 = vadd.f32 0.0, %v3982
  %v3984 = vpop.f32.mrb[0].mxu0
  %3985 = vmatprep.mubr.f32.mxu0 0.0
  %3986 = vmatmul.mubr.f32.gmra.mrb[0].mxu0 %v3643
  %v3987 = vpop.f32.mrb[0].mxu0
  %v3988 = vadd.f32 0.0, %v3987
  %v3989 = vpop.f32.mrb[0].mxu0
  %3990 = vmatprep.mubr.f32.mxu0 0.0
  %3991 = vmatmul.mubr.f32.gmra.mrb[0].mxu0 %v3646
  %v3992 = vpop.f32.mrb[0].mxu0
  %v3993 = vadd.f32 0.0, %v3992
  %v3994 = vpop.f32.mrb[0].mxu0
  %3995 = vmatprep.mubr.f32.mxu0 0.0
  %3996 = vmatmul.mubr.f32.gmra.mrb[0].mxu0 %v3649
  %v3997 = vpop.f32.mrb[0].mxu0
  %v3998 = vadd.f32 0.0, %v3997
  %v3999 = vpop.f32.mrb[0].mxu0
  %4000 = vmatprep.mubr.f32.mxu0 0.0
  %4001 = vmatmul.mubr.f32.gmra.mrb[0].mxu0 %v3652
  %v4002 = vpop.f32.mrb[0].mxu0
  %v4003 = vadd.f32 0.0, %v4002
  %v4004 = vpop.f32.mrb[0].mxu0
  %4005 = vmatprep.mubr.f32.mxu0 0.0
  %4006 = vmatmul.mubr.f32.gmra.mrb[0].mxu0 %v3655
  %v4007 = vpop.f32.mrb[0].mxu0
  %v4008 = vadd.f32 0.0, %v4007
  %v4009 = vpop.f32.mrb[0].mxu0
  %4010 = vmatprep.mubr.f32.mxu0 0.0
  %4011 = vmatmul.mubr.f32.gmra.mrb[0].mxu0 %v3658
  %v4012 = vpop.f32.mrb[0].mxu0
  %v4013 = vadd.f32 0.0, %v4012
  %v4014 = vpop.f32.mrb[0].mxu0
  %4015 = vmatprep.mubr.f32.mxu0 0.0
  %4016 = vmatmul.mubr.f32.gmra.mrb[0].mxu0 %v3661
  %v4017 = vpop.f32.mrb[0].mxu0
  %v4018 = vadd.f32 0.0, %v4017
  %v4019 = vpop.f32.mrb[0].mxu0
  %4020 = vmatprep.mubr.f32.mxu0 0.0
  %4021 = vmatmul.mubr.f32.gmra.mrb[0].mxu0 %v3664
  %v4022 = vpop.f32.mrb[0].mxu0
  %v4023 = vadd.f32 0.0, %v4022
  %v4024 = vpop.f32.mrb[0].mxu0
  %4025 = vmatprep.mubr.f32.mxu0 0.0
  %4026 = vmatmul.mubr.f32.gmra.mrb[0].mxu0 %v3667
  %v4027 = vpop.f32.mrb[0].mxu0
  %v4028 = vadd.f32 0.0, %v4027
  %v4029 = vpop.f32.mrb[0].mxu0
  %4030 = vmatprep.mubr.f32.mxu0 0.0
  %4031 = vmatmul.mubr.f32.gmra.mrb[0].mxu0 %v3670
  %v4032 = vpop.f32.mrb[0].mxu0
  %v4033 = vadd.f32 0.0, %v4032
  %v4034 = vpop.f32.mrb[0].mxu0
  %4035 = vmatprep.mubr.f32.mxu0 0.0
  %4036 = vmatmul.mubr.f32.gmra.mrb[0].mxu0 %v3673
  %v4037 = vpop.f32.mrb[0].mxu0
  %v4038 = vadd.f32 0.0, %v4037
  %v4039 = vpop.f32.mrb[0].mxu0
  %4040 = vmatprep.mubr.f32.mxu0 0.0
  %4041 = vmatmul.mubr.f32.gmra.mrb[0].mxu0 %v3676
  %v4042 = vpop.f32.mrb[0].mxu0
  %v4043 = vadd.f32 0.0, %v4042
  %v4044 = vpop.f32.mrb[0].mxu0
  %4045 = vmatprep.mubr.f32.mxu0 0.0
  %4046 = vmatmul.mubr.f32.gmra.mrb[0].mxu0 %v3679
  %v4047 = vpop.f32.mrb[0].mxu0
  %v4048 = vadd.f32 0.0, %v4047
  %v4049 = vpop.f32.mrb[0].mxu0
  %4050 = vmatprep.mubr.f32.mxu0 0.0
  %4051 = vmatmul.mubr.f32.gmra.mrb[0].mxu0 %v3682
  %v4052 = vpop.f32.mrb[0].mxu0
  %v4053 = vadd.f32 0.0, %v4052
  %v4054 = vpop.f32.mrb[0].mxu0
  %4055 = vmatprep.mubr.f32.mxu0 0.0
  %4056 = vmatmul.mubr.f32.gmra.mrb[0].mxu0 %v3685
  %v4057 = vpop.f32.mrb[0].mxu0
  %v4058 = vadd.f32 0.0, %v4057
  %v4059 = vpop.f32.mrb[0].mxu0
  %4060 = vmatprep.mubr.f32.mxu0 0.0
  %4061 = vmatmul.mubr.f32.gmra.mrb[0].mxu0 %v3688
  %v4062 = vpop.f32.mrb[0].mxu0
  %v4063 = vadd.f32 0.0, %v4062
  %v4064 = vpop.f32.mrb[0].mxu0
  %4065 = vmatprep.mubr.f32.mxu0 0.0
  %4066 = vmatmul.mubr.f32.gmra.mrb[0].mxu0 %v3691
  %v4067 = vpop.f32.mrb[0].mxu0
  %v4068 = vadd.f32 0.0, %v4067
  %v4069 = vpop.f32.mrb[0].mxu0
  %4070 = vmatprep.mubr.f32.mxu0 0.0
  %4071 = vmatmul.mubr.f32.gmra.mrb[0].mxu0 %v3694
  %v4072 = vpop.f32.mrb[0].mxu0
  %v4073 = vadd.f32 0.0, %v4072
  %v4074 = vpop.f32.mrb[0].mxu0
  %4075 = vmatprep.mubr.f32.mxu0 0.0
  %4076 = vmatmul.mubr.f32.gmra.mrb[0].mxu0 %v3697
  %v4077 = vpop.f32.mrb[0].mxu0
  %v4078 = vadd.f32 0.0, %v4077
  %v4079 = vpop.f32.mrb[0].mxu0
  %4080 = vmatprep.mubr.f32.mxu0 0.0
  %4081 = vmatmul.mubr.f32.gmra.mrb[0].mxu0 %v3700
  %v4082 = vpop.f32.mrb[0].mxu0
  %v4083 = vadd.f32 0.0, %v4082
  %v4084 = vpop.f32.mrb[0].mxu0
  %4085 = vmatprep.mubr.f32.mxu0 0.0
  %4086 = vmatmul.mubr.f32.gmra.mrb[0].mxu0 %v3703
  %v4087 = vpop.f32.mrb[0].mxu0
  %v4088 = vadd.f32 0.0, %v4087
  %v4089 = vpop.f32.mrb[0].mxu0
  %4090 = vmatprep.mubr.f32.mxu0 0.0
  %4091 = vmatmul.mubr.f32.gmra.mrb[0].mxu0 %v3706
  %v4092 = vpop.f32.mrb[0].mxu0
  %v4093 = vadd.f32 0.0, %v4092
  %v4094 = vpop.f32.mrb[0].mxu0
  %4095 = vdwg.mxu0
  %v4096 = vadd.f32 %v3386, %v3778
  %v4097 = vadd.f32 %v3387, %v3783
  %v4098 = vadd.f32 %v3388, %v3788
  %v4099 = vadd.f32 %v3389, %v3793
  %v4100 = vadd.f32 %v3390, %v3798
  %v4101 = vadd.f32 %v3391, %v3803
  %v4102 = vadd.f32 %v3392, %v3808
  %v4103 = vadd.f32 %v3393, %v3813
  %v4104 = vadd.f32 %v3394, %v3818
  %v4105 = vadd.f32 %v3395, %v3823
  %v4106 = vadd.f32 %v3396, %v3828
  %v4107 = vadd.f32 %v3397, %v3833
  %v4108 = vadd.f32 %v3398, %v3838
  %v4109 = vadd.f32 %v3399, %v3843
  %v4110 = vadd.f32 %v3400, %v3848
  %v4111 = vadd.f32 %v3401, %v3853
  %v4112 = vadd.f32 %v3402, %v3858
  %v4113 = vadd.f32 %v3403, %v3863
  %v4114 = vadd.f32 %v3404, %v3868
  %v4115 = vadd.f32 %v3405, %v3873
  %v4116 = vadd.f32 %v3406, %v3878
  %v4117 = vadd.f32 %v3407, %v3883
  %v4118 = vadd.f32 %v3408, %v3888
  %v4119 = vadd.f32 %v3409, %v3893
  %v4120 = vadd.f32 %v3410, %v3898
  %v4121 = vadd.f32 %v3411, %v3903
  %v4122 = vadd.f32 %v3412, %v3908
  %v4123 = vadd.f32 %v3413, %v3913
  %v4124 = vadd.f32 %v3414, %v3918
  %v4125 = vadd.f32 %v3415, %v3923
  %v4126 = vadd.f32 %v3416, %v3928
  %v4127 = vadd.f32 %v3417, %v3933
  %v4128 = vadd.f32 %v3418, %v3938
  %v4129 = vadd.f32 %v3419, %v3943
  %v4130 = vadd.f32 %v3420, %v3948
  %v4131 = vadd.f32 %v3421, %v3953
  %v4132 = vadd.f32 %v3422, %v3958
  %v4133 = vadd.f32 %v3423, %v3963
  %v4134 = vadd.f32 %v3424, %v3968
  %v4135 = vadd.f32 %v3425, %v3973
  %v4136 = vadd.f32 %v3426, %v3978
  %v4137 = vadd.f32 %v3427, %v3983
  %v4138 = vadd.f32 %v3428, %v3988
  %v4139 = vadd.f32 %v3429, %v3993
  %v4140 = vadd.f32 %v3430, %v3998
  %v4141 = vadd.f32 %v3431, %v4003
  %v4142 = vadd.f32 %v3432, %v4008
  %v4143 = vadd.f32 %v3433, %v4013
  %v4144 = vadd.f32 %v3434, %v4018
  %v4145 = vadd.f32 %v3435, %v4023
  %v4146 = vadd.f32 %v3436, %v4028
  %v4147 = vadd.f32 %v3437, %v4033
  %v4148 = vadd.f32 %v3438, %v4038
  %v4149 = vadd.f32 %v3439, %v4043
  %v4150 = vadd.f32 %v3440, %v4048
  %v4151 = vadd.f32 %v3441, %v4053
  %v4152 = vadd.f32 %v3442, %v4058
  %v4153 = vadd.f32 %v3443, %v4063
  %v4154 = vadd.f32 %v3444, %v4068
  %v4155 = vadd.f32 %v3445, %v4073
  %v4156 = vadd.f32 %v3446, %v4078
  %v4157 = vadd.f32 %v3447, %v4083
  %v4158 = vadd.f32 %v3448, %v4088
  %v4159 = vadd.f32 %v3449, %v4093
  %s4160 = scalar_lea.vmem %s0, 48
  %v4161 = vld [vmem:[%s4160] sm:$0xff]
  %v4162 = vld [vmem:[%s4160 + $0x8] sm:$0xff]
  %v4163 = vld [vmem:[%s4160 + $0x18] sm:$0xff]
  %v4164 = vld [vmem:[%s4160 + $0x20] sm:$0xff]
  %v4165 = vld [vmem:[%s4160 + $0x30] sm:$0xff]
  %v4166 = vld [vmem:[%s4160 + $0x38] sm:$0xff]
  %v4167 = vld [vmem:[%s4160 + $0x48] sm:$0xff]
  %v4168 = vld [vmem:[%s4160 + $0x50] sm:$0xff]
  %v4169 = vld [vmem:[%s4160 + $0x60] sm:$0xff]
  %v4170 = vld [vmem:[%s4160 + $0x68] sm:$0xff]
  %v4171 = vld [vmem:[%s4160 + $0x78] sm:$0xff]
  %v4172 = vld [vmem:[%s4160 + $0x80] sm:$0xff]
  %v4173 = vld [vmem:[%s4160 + $0x90] sm:$0xff]
  %v4174 = vld [vmem:[%s4160 + $0x98] sm:$0xff]
  %v4175 = vld [vmem:[%s4160 + $0xa8] sm:$0xff]
  %v4176 = vld [vmem:[%s4160 + $0xb0] sm:$0xff]
  %v4177 = vld [vmem:[%s4160 + $0xc0] sm:$0xff]
  %v4178 = vld [vmem:[%s4160 + $0xc8] sm:$0xff]
  %v4179 = vld [vmem:[%s4160 + $0xd8] sm:$0xff]
  %v4180 = vld [vmem:[%s4160 + $0xe0] sm:$0xff]
  %v4181 = vld [vmem:[%s4160 + $0xf0] sm:$0xff]
  %v4182 = vld [vmem:[%s4160 + $0xf8] sm:$0xff]
  %v4183 = vld [vmem:[%s4160 + $0x108] sm:$0xff]
  %v4184 = vld [vmem:[%s4160 + $0x110] sm:$0xff]
  %v4185 = vld [vmem:[%s4160 + $0x120] sm:$0xff]
  %v4186 = vld [vmem:[%s4160 + $0x128] sm:$0xff]
  %v4187 = vld [vmem:[%s4160 + $0x138] sm:$0xff]
  %v4188 = vld [vmem:[%s4160 + $0x140] sm:$0xff]
  %v4189 = vld [vmem:[%s4160 + $0x150] sm:$0xff]
  %v4190 = vld [vmem:[%s4160 + $0x158] sm:$0xff]
  %v4191 = vld [vmem:[%s4160 + $0x168] sm:$0xff]
  %v4192 = vld [vmem:[%s4160 + $0x170] sm:$0xff]
  %v4193 = vld [vmem:[%s4160 + $0x1b0] sm:$0xff]
  %v4194 = vld [vmem:[%s4160 + $0x1b8] sm:$0xff]
  %v4195 = vld [vmem:[%s4160 + $0x1c8] sm:$0xff]
  %v4196 = vld [vmem:[%s4160 + $0x1d0] sm:$0xff]
  %v4197 = vld [vmem:[%s4160 + $0x1e0] sm:$0xff]
  %v4198 = vld [vmem:[%s4160 + $0x1e8] sm:$0xff]
  %v4199 = vld [vmem:[%s4160 + $0x1f8] sm:$0xff]
  %v4200 = vld [vmem:[%s4160 + $0x200] sm:$0xff]
  %v4201 = vld [vmem:[%s4160 + $0x210] sm:$0xff]
  %v4202 = vld [vmem:[%s4160 + $0x218] sm:$0xff]
  %v4203 = vld [vmem:[%s4160 + $0x228] sm:$0xff]
  %v4204 = vld [vmem:[%s4160 + $0x230] sm:$0xff]
  %v4205 = vld [vmem:[%s4160 + $0x240] sm:$0xff]
  %v4206 = vld [vmem:[%s4160 + $0x248] sm:$0xff]
  %v4207 = vld [vmem:[%s4160 + $0x258] sm:$0xff]
  %v4208 = vld [vmem:[%s4160 + $0x260] sm:$0xff]
  %v4209 = vld [vmem:[%s4160 + $0x270] sm:$0xff]
  %v4210 = vld [vmem:[%s4160 + $0x278] sm:$0xff]
  %v4211 = vld [vmem:[%s4160 + $0x288] sm:$0xff]
  %v4212 = vld [vmem:[%s4160 + $0x290] sm:$0xff]
  %v4213 = vld [vmem:[%s4160 + $0x2a0] sm:$0xff]
  %v4214 = vld [vmem:[%s4160 + $0x2a8] sm:$0xff]
  %v4215 = vld [vmem:[%s4160 + $0x2b8] sm:$0xff]
  %v4216 = vld [vmem:[%s4160 + $0x2c0] sm:$0xff]
  %v4217 = vld [vmem:[%s4160 + $0x2d0] sm:$0xff]
  %v4218 = vld [vmem:[%s4160 + $0x2d8] sm:$0xff]
  %v4219 = vld [vmem:[%s4160 + $0x2e8] sm:$0xff]
  %v4220 = vld [vmem:[%s4160 + $0x2f0] sm:$0xff]
  %v4221 = vld [vmem:[%s4160 + $0x300] sm:$0xff]
  %v4222 = vld [vmem:[%s4160 + $0x308] sm:$0xff]
  %v4223 = vld [vmem:[%s4160 + $0x318] sm:$0xff]
  %v4224 = vld [vmem:[%s4160 + $0x320] sm:$0xff]
  %s4225 = scalar_lea.vmem %s1, 24
  %v4226 = vld [vmem:[%s4225] sm:$0xf]
  %v4228 = vsel %vm157, %v4161, 0
  %v4231 = vsel %vm157, %v4162, 0
  %v4234 = vsel %vm157, %v4163, 0
  %v4237 = vsel %vm157, %v4164, 0
  %v4240 = vsel %vm157, %v4165, 0
  %v4243 = vsel %vm157, %v4166, 0
  %v4246 = vsel %vm157, %v4167, 0
  %v4249 = vsel %vm157, %v4168, 0
  %v4252 = vsel %vm157, %v4169, 0
  %v4255 = vsel %vm157, %v4170, 0
  %v4258 = vsel %vm157, %v4171, 0
  %v4261 = vsel %vm157, %v4172, 0
  %v4264 = vsel %vm157, %v4173, 0
  %v4267 = vsel %vm157, %v4174, 0
  %v4270 = vsel %vm157, %v4175, 0
  %v4273 = vsel %vm157, %v4176, 0
  %v4276 = vsel %vm157, %v4177, 0
  %v4279 = vsel %vm157, %v4178, 0
  %v4282 = vsel %vm157, %v4179, 0
  %v4285 = vsel %vm157, %v4180, 0
  %v4288 = vsel %vm157, %v4181, 0
  %v4291 = vsel %vm157, %v4182, 0
  %v4294 = vsel %vm157, %v4183, 0
  %v4297 = vsel %vm157, %v4184, 0
  %v4300 = vsel %vm157, %v4185, 0
  %v4303 = vsel %vm157, %v4186, 0
  %v4306 = vsel %vm157, %v4187, 0
  %v4309 = vsel %vm157, %v4188, 0
  %v4312 = vsel %vm157, %v4189, 0
  %v4315 = vsel %vm157, %v4190, 0
  %v4318 = vsel %vm157, %v4191, 0
  %v4321 = vsel %vm157, %v4192, 0
  %v4324 = vsel %vm157, %v4193, 0
  %v4327 = vsel %vm157, %v4194, 0
  %v4330 = vsel %vm157, %v4195, 0
  %v4333 = vsel %vm157, %v4196, 0
  %v4336 = vsel %vm157, %v4197, 0
  %v4339 = vsel %vm157, %v4198, 0
  %v4342 = vsel %vm157, %v4199, 0
  %v4345 = vsel %vm157, %v4200, 0
  %v4348 = vsel %vm157, %v4201, 0
  %v4351 = vsel %vm157, %v4202, 0
  %v4354 = vsel %vm157, %v4203, 0
  %v4357 = vsel %vm157, %v4204, 0
  %v4360 = vsel %vm157, %v4205, 0
  %v4363 = vsel %vm157, %v4206, 0
  %v4366 = vsel %vm157, %v4207, 0
  %v4369 = vsel %vm157, %v4208, 0
  %v4372 = vsel %vm157, %v4209, 0
  %v4375 = vsel %vm157, %v4210, 0
  %v4378 = vsel %vm157, %v4211, 0
  %v4381 = vsel %vm157, %v4212, 0
  %v4384 = vsel %vm157, %v4213, 0
  %v4387 = vsel %vm157, %v4214, 0
  %v4390 = vsel %vm157, %v4215, 0
  %v4393 = vsel %vm157, %v4216, 0
  %v4396 = vsel %vm157, %v4217, 0
  %v4399 = vsel %vm157, %v4218, 0
  %v4402 = vsel %vm157, %v4219, 0
  %v4405 = vsel %vm157, %v4220, 0
  %v4408 = vsel %vm157, %v4221, 0
  %v4411 = vsel %vm157, %v4222, 0
  %v4414 = vsel %vm157, %v4223, 0
  %v4417 = vsel %vm157, %v4224, 0
  %v4420 = vsel %vm350, %v4226, 0
  %4422 = vmatprep.subr.mxu0 0.0
  %4423 = vmatpush1.msra.mxu0 %v4420
  %4424 = vmatprep.subr.mxu0 0.0
  %4425 = vmatpush1.msra.mxu0 0.0
  %4426 = vmatprep.subr.mxu0 0.0
  %4427 = vmatpush1.msra.mxu0 0.0
  %4428 = vmatprep.subr.mxu0 0.0
  %4429 = vmatpush1.msra.mxu0 0.0
  %4430 = vmatprep.subr.mxu0 0.0
  %4431 = vmatpush1.msra.mxu0 0.0
  %4432 = vmatprep.subr.mxu0 0.0
  %4433 = vmatpush1.msra.mxu0 0.0
  %4434 = vmatprep.subr.mxu0 0.0
  %4435 = vmatpush1.msra.mxu0 0.0
  %4436 = vmatprep.subr.mxu0 0.0
  %4437 = vmatpush1.msra.mxu0 0.0
  %4438 = vmatprep.subr.mxu0 0.0
  %4439 = vmatpush1.msra.mxu0 0.0
  %4440 = vmatprep.subr.mxu0 0.0
  %4441 = vmatpush1.msra.mxu0 0.0
  %4442 = vmatprep.subr.mxu0 0.0
  %4443 = vmatpush1.msra.mxu0 0.0
  %4444 = vmatprep.subr.mxu0 0.0
  %4445 = vmatpush1.msra.mxu0 0.0
  %4446 = vmatprep.subr.mxu0 0.0
  %4447 = vmatpush1.msra.mxu0 0.0
  %4448 = vmatprep.subr.mxu0 0.0
  %4449 = vmatpush1.msra.mxu0 0.0
  %4450 = vmatprep.subr.mxu0 0.0
  %4451 = vmatpush1.msra.mxu0 0.0
  %4452 = vmatprep.subr.mxu0 0.0
  %4453 = vmatpush1.msra.mxu0 0.0
  %4454 = vmatprep.subr.mxu0 0.0
  %4455 = vmatpush1.msra.mxu0 0.0
  %4456 = vmatprep.subr.mxu0 0.0
  %4457 = vmatpush1.msra.mxu0 0.0
  %4458 = vmatprep.subr.mxu0 0.0
  %4459 = vmatpush1.msra.mxu0 0.0
  %4460 = vmatprep.subr.mxu0 0.0
  %4461 = vmatpush1.msra.mxu0 0.0
  %4462 = vmatprep.subr.mxu0 0.0
  %4463 = vmatpush1.msra.mxu0 0.0
  %4464 = vmatprep.subr.mxu0 0.0
  %4465 = vmatpush1.msra.mxu0 0.0
  %4466 = vmatprep.subr.mxu0 0.0
  %4467 = vmatpush1.msra.mxu0 0.0
  %4468 = vmatprep.subr.mxu0 0.0
  %4469 = vmatpush1.msra.mxu0 0.0
  %4470 = vmatprep.subr.mxu0 0.0
  %4471 = vmatpush1.msra.mxu0 0.0
  %4472 = vmatprep.subr.mxu0 0.0
  %4473 = vmatpush1.msra.mxu0 0.0
  %4474 = vmatprep.subr.mxu0 0.0
  %4475 = vmatpush1.msra.mxu0 0.0
  %4476 = vmatprep.subr.mxu0 0.0
  %4477 = vmatpush1.msra.mxu0 0.0
  %4478 = vmatprep.subr.mxu0 0.0
  %4479 = vmatpush1.msra.mxu0 0.0
  %4480 = vmatprep.subr.mxu0 0.0
  %4481 = vmatpush1.msra.mxu0 0.0
  %4482 = vmatprep.subr.mxu0 0.0
  %4483 = vmatpush1.msra.mxu0 0.0
  %4484 = vmatprep.subr.mxu0 0.0
  %4485 = vmatpush1.msra.mxu0 0.0
  %4486 = vmatprep.mubr.f32.mxu0 0.0
  %4487 = vmatmul.mubr.f32.gmra.mrb[0].mxu0 %v4228
  %v4488 = vpop.f32.mrb[0].mxu0
  %v4489 = vadd.f32 0.0, %v4488
  %v4490 = vpop.f32.mrb[0].mxu0
  %4491 = vmatprep.mubr.f32.mxu0 0.0
  %4492 = vmatmul.mubr.f32.gmra.mrb[0].mxu0 %v4231
  %v4493 = vpop.f32.mrb[0].mxu0
  %v4494 = vadd.f32 0.0, %v4493
  %v4495 = vpop.f32.mrb[0].mxu0
  %4496 = vmatprep.mubr.f32.mxu0 0.0
  %4497 = vmatmul.mubr.f32.gmra.mrb[0].mxu0 %v4234
  %v4498 = vpop.f32.mrb[0].mxu0
  %v4499 = vadd.f32 0.0, %v4498
  %v4500 = vpop.f32.mrb[0].mxu0
  %4501 = vmatprep.mubr.f32.mxu0 0.0
  %4502 = vmatmul.mubr.f32.gmra.mrb[0].mxu0 %v4237
  %v4503 = vpop.f32.mrb[0].mxu0
  %v4504 = vadd.f32 0.0, %v4503
  %v4505 = vpop.f32.mrb[0].mxu0
  %4506 = vmatprep.mubr.f32.mxu0 0.0
  %4507 = vmatmul.mubr.f32.gmra.mrb[0].mxu0 %v4240
  %v4508 = vpop.f32.mrb[0].mxu0
  %v4509 = vadd.f32 0.0, %v4508
  %v4510 = vpop.f32.mrb[0].mxu0
  %4511 = vmatprep.mubr.f32.mxu0 0.0
  %4512 = vmatmul.mubr.f32.gmra.mrb[0].mxu0 %v4243
  %v4513 = vpop.f32.mrb[0].mxu0
  %v4514 = vadd.f32 0.0, %v4513
  %v4515 = vpop.f32.mrb[0].mxu0
  %4516 = vmatprep.mubr.f32.mxu0 0.0
  %4517 = vmatmul.mubr.f32.gmra.mrb[0].mxu0 %v4246
  %v4518 = vpop.f32.mrb[0].mxu0
  %v4519 = vadd.f32 0.0, %v4518
  %v4520 = vpop.f32.mrb[0].mxu0
  %4521 = vmatprep.mubr.f32.mxu0 0.0
  %4522 = vmatmul.mubr.f32.gmra.mrb[0].mxu0 %v4249
  %v4523 = vpop.f32.mrb[0].mxu0
  %v4524 = vadd.f32 0.0, %v4523
  %v4525 = vpop.f32.mrb[0].mxu0
  %4526 = vmatprep.mubr.f32.mxu0 0.0
  %4527 = vmatmul.mubr.f32.gmra.mrb[0].mxu0 %v4252
  %v4528 = vpop.f32.mrb[0].mxu0
  %v4529 = vadd.f32 0.0, %v4528
  %v4530 = vpop.f32.mrb[0].mxu0
  %4531 = vmatprep.mubr.f32.mxu0 0.0
  %4532 = vmatmul.mubr.f32.gmra.mrb[0].mxu0 %v4255
  %v4533 = vpop.f32.mrb[0].mxu0
  %v4534 = vadd.f32 0.0, %v4533
  %v4535 = vpop.f32.mrb[0].mxu0
  %4536 = vmatprep.mubr.f32.mxu0 0.0
  %4537 = vmatmul.mubr.f32.gmra.mrb[0].mxu0 %v4258
  %v4538 = vpop.f32.mrb[0].mxu0
  %v4539 = vadd.f32 0.0, %v4538
  %v4540 = vpop.f32.mrb[0].mxu0
  %4541 = vmatprep.mubr.f32.mxu0 0.0
  %4542 = vmatmul.mubr.f32.gmra.mrb[0].mxu0 %v4261
  %v4543 = vpop.f32.mrb[0].mxu0
  %v4544 = vadd.f32 0.0, %v4543
  %v4545 = vpop.f32.mrb[0].mxu0
  %4546 = vmatprep.mubr.f32.mxu0 0.0
  %4547 = vmatmul.mubr.f32.gmra.mrb[0].mxu0 %v4264
  %v4548 = vpop.f32.mrb[0].mxu0
  %v4549 = vadd.f32 0.0, %v4548
  %v4550 = vpop.f32.mrb[0].mxu0
  %4551 = vmatprep.mubr.f32.mxu0 0.0
  %4552 = vmatmul.mubr.f32.gmra.mrb[0].mxu0 %v4267
  %v4553 = vpop.f32.mrb[0].mxu0
  %v4554 = vadd.f32 0.0, %v4553
  %v4555 = vpop.f32.mrb[0].mxu0
  %4556 = vmatprep.mubr.f32.mxu0 0.0
  %4557 = vmatmul.mubr.f32.gmra.mrb[0].mxu0 %v4270
  %v4558 = vpop.f32.mrb[0].mxu0
  %v4559 = vadd.f32 0.0, %v4558
  %v4560 = vpop.f32.mrb[0].mxu0
  %4561 = vmatprep.mubr.f32.mxu0 0.0
  %4562 = vmatmul.mubr.f32.gmra.mrb[0].mxu0 %v4273
  %v4563 = vpop.f32.mrb[0].mxu0
  %v4564 = vadd.f32 0.0, %v4563
  %v4565 = vpop.f32.mrb[0].mxu0
  %4566 = vmatprep.mubr.f32.mxu0 0.0
  %4567 = vmatmul.mubr.f32.gmra.mrb[0].mxu0 %v4276
  %v4568 = vpop.f32.mrb[0].mxu0
  %v4569 = vadd.f32 0.0, %v4568
  %v4570 = vpop.f32.mrb[0].mxu0
  %4571 = vmatprep.mubr.f32.mxu0 0.0
  %4572 = vmatmul.mubr.f32.gmra.mrb[0].mxu0 %v4279
  %v4573 = vpop.f32.mrb[0].mxu0
  %v4574 = vadd.f32 0.0, %v4573
  %v4575 = vpop.f32.mrb[0].mxu0
  %4576 = vmatprep.mubr.f32.mxu0 0.0
  %4577 = vmatmul.mubr.f32.gmra.mrb[0].mxu0 %v4282
  %v4578 = vpop.f32.mrb[0].mxu0
  %v4579 = vadd.f32 0.0, %v4578
  %v4580 = vpop.f32.mrb[0].mxu0
  %4581 = vmatprep.mubr.f32.mxu0 0.0
  %4582 = vmatmul.mubr.f32.gmra.mrb[0].mxu0 %v4285
  %v4583 = vpop.f32.mrb[0].mxu0
  %v4584 = vadd.f32 0.0, %v4583
  %v4585 = vpop.f32.mrb[0].mxu0
  %4586 = vmatprep.mubr.f32.mxu0 0.0
  %4587 = vmatmul.mubr.f32.gmra.mrb[0].mxu0 %v4288
  %v4588 = vpop.f32.mrb[0].mxu0
  %v4589 = vadd.f32 0.0, %v4588
  %v4590 = vpop.f32.mrb[0].mxu0
  %4591 = vmatprep.mubr.f32.mxu0 0.0
  %4592 = vmatmul.mubr.f32.gmra.mrb[0].mxu0 %v4291
  %v4593 = vpop.f32.mrb[0].mxu0
  %v4594 = vadd.f32 0.0, %v4593
  %v4595 = vpop.f32.mrb[0].mxu0
  %4596 = vmatprep.mubr.f32.mxu0 0.0
  %4597 = vmatmul.mubr.f32.gmra.mrb[0].mxu0 %v4294
  %v4598 = vpop.f32.mrb[0].mxu0
  %v4599 = vadd.f32 0.0, %v4598
  %v4600 = vpop.f32.mrb[0].mxu0
  %4601 = vmatprep.mubr.f32.mxu0 0.0
  %4602 = vmatmul.mubr.f32.gmra.mrb[0].mxu0 %v4297
  %v4603 = vpop.f32.mrb[0].mxu0
  %v4604 = vadd.f32 0.0, %v4603
  %v4605 = vpop.f32.mrb[0].mxu0
  %4606 = vmatprep.mubr.f32.mxu0 0.0
  %4607 = vmatmul.mubr.f32.gmra.mrb[0].mxu0 %v4300
  %v4608 = vpop.f32.mrb[0].mxu0
  %v4609 = vadd.f32 0.0, %v4608
  %v4610 = vpop.f32.mrb[0].mxu0
  %4611 = vmatprep.mubr.f32.mxu0 0.0
  %4612 = vmatmul.mubr.f32.gmra.mrb[0].mxu0 %v4303
  %v4613 = vpop.f32.mrb[0].mxu0
  %v4614 = vadd.f32 0.0, %v4613
  %v4615 = vpop.f32.mrb[0].mxu0
  %4616 = vmatprep.mubr.f32.mxu0 0.0
  %4617 = vmatmul.mubr.f32.gmra.mrb[0].mxu0 %v4306
  %v4618 = vpop.f32.mrb[0].mxu0
  %v4619 = vadd.f32 0.0, %v4618
  %v4620 = vpop.f32.mrb[0].mxu0
  %4621 = vmatprep.mubr.f32.mxu0 0.0
  %4622 = vmatmul.mubr.f32.gmra.mrb[0].mxu0 %v4309
  %v4623 = vpop.f32.mrb[0].mxu0
  %v4624 = vadd.f32 0.0, %v4623
  %v4625 = vpop.f32.mrb[0].mxu0
  %4626 = vmatprep.mubr.f32.mxu0 0.0
  %4627 = vmatmul.mubr.f32.gmra.mrb[0].mxu0 %v4312
  %v4628 = vpop.f32.mrb[0].mxu0
  %v4629 = vadd.f32 0.0, %v4628
  %v4630 = vpop.f32.mrb[0].mxu0
  %4631 = vmatprep.mubr.f32.mxu0 0.0
  %4632 = vmatmul.mubr.f32.gmra.mrb[0].mxu0 %v4315
  %v4633 = vpop.f32.mrb[0].mxu0
  %v4634 = vadd.f32 0.0, %v4633
  %v4635 = vpop.f32.mrb[0].mxu0
  %4636 = vmatprep.mubr.f32.mxu0 0.0
  %4637 = vmatmul.mubr.f32.gmra.mrb[0].mxu0 %v4318
  %v4638 = vpop.f32.mrb[0].mxu0
  %v4639 = vadd.f32 0.0, %v4638
  %v4640 = vpop.f32.mrb[0].mxu0
  %4641 = vmatprep.mubr.f32.mxu0 0.0
  %4642 = vmatmul.mubr.f32.gmra.mrb[0].mxu0 %v4321
  %v4643 = vpop.f32.mrb[0].mxu0
  %v4644 = vadd.f32 0.0, %v4643
  %v4645 = vpop.f32.mrb[0].mxu0
  %4646 = vmatprep.mubr.f32.mxu0 0.0
  %4647 = vmatmul.mubr.f32.gmra.mrb[0].mxu0 %v4324
  %v4648 = vpop.f32.mrb[0].mxu0
  %v4649 = vadd.f32 0.0, %v4648
  %v4650 = vpop.f32.mrb[0].mxu0
  %4651 = vmatprep.mubr.f32.mxu0 0.0
  %4652 = vmatmul.mubr.f32.gmra.mrb[0].mxu0 %v4327
  %v4653 = vpop.f32.mrb[0].mxu0
  %v4654 = vadd.f32 0.0, %v4653
  %v4655 = vpop.f32.mrb[0].mxu0
  %4656 = vmatprep.mubr.f32.mxu0 0.0
  %4657 = vmatmul.mubr.f32.gmra.mrb[0].mxu0 %v4330
  %v4658 = vpop.f32.mrb[0].mxu0
  %v4659 = vadd.f32 0.0, %v4658
  %v4660 = vpop.f32.mrb[0].mxu0
  %4661 = vmatprep.mubr.f32.mxu0 0.0
  %4662 = vmatmul.mubr.f32.gmra.mrb[0].mxu0 %v4333
  %v4663 = vpop.f32.mrb[0].mxu0
  %v4664 = vadd.f32 0.0, %v4663
  %v4665 = vpop.f32.mrb[0].mxu0
  %4666 = vmatprep.mubr.f32.mxu0 0.0
  %4667 = vmatmul.mubr.f32.gmra.mrb[0].mxu0 %v4336
  %v4668 = vpop.f32.mrb[0].mxu0
  %v4669 = vadd.f32 0.0, %v4668
  %v4670 = vpop.f32.mrb[0].mxu0
  %4671 = vmatprep.mubr.f32.mxu0 0.0
  %4672 = vmatmul.mubr.f32.gmra.mrb[0].mxu0 %v4339
  %v4673 = vpop.f32.mrb[0].mxu0
  %v4674 = vadd.f32 0.0, %v4673
  %v4675 = vpop.f32.mrb[0].mxu0
  %4676 = vmatprep.mubr.f32.mxu0 0.0
  %4677 = vmatmul.mubr.f32.gmra.mrb[0].mxu0 %v4342
  %v4678 = vpop.f32.mrb[0].mxu0
  %v4679 = vadd.f32 0.0, %v4678
  %v4680 = vpop.f32.mrb[0].mxu0
  %4681 = vmatprep.mubr.f32.mxu0 0.0
  %4682 = vmatmul.mubr.f32.gmra.mrb[0].mxu0 %v4345
  %v4683 = vpop.f32.mrb[0].mxu0
  %v4684 = vadd.f32 0.0, %v4683
  %v4685 = vpop.f32.mrb[0].mxu0
  %4686 = vmatprep.mubr.f32.mxu0 0.0
  %4687 = vmatmul.mubr.f32.gmra.mrb[0].mxu0 %v4348
  %v4688 = vpop.f32.mrb[0].mxu0
  %v4689 = vadd.f32 0.0, %v4688
  %v4690 = vpop.f32.mrb[0].mxu0
  %4691 = vmatprep.mubr.f32.mxu0 0.0
  %4692 = vmatmul.mubr.f32.gmra.mrb[0].mxu0 %v4351
  %v4693 = vpop.f32.mrb[0].mxu0
  %v4694 = vadd.f32 0.0, %v4693
  %v4695 = vpop.f32.mrb[0].mxu0
  %4696 = vmatprep.mubr.f32.mxu0 0.0
  %4697 = vmatmul.mubr.f32.gmra.mrb[0].mxu0 %v4354
  %v4698 = vpop.f32.mrb[0].mxu0
  %v4699 = vadd.f32 0.0, %v4698
  %v4700 = vpop.f32.mrb[0].mxu0
  %4701 = vmatprep.mubr.f32.mxu0 0.0
  %4702 = vmatmul.mubr.f32.gmra.mrb[0].mxu0 %v4357
  %v4703 = vpop.f32.mrb[0].mxu0
  %v4704 = vadd.f32 0.0, %v4703
  %v4705 = vpop.f32.mrb[0].mxu0
  %4706 = vmatprep.mubr.f32.mxu0 0.0
  %4707 = vmatmul.mubr.f32.gmra.mrb[0].mxu0 %v4360
  %v4708 = vpop.f32.mrb[0].mxu0
  %v4709 = vadd.f32 0.0, %v4708
  %v4710 = vpop.f32.mrb[0].mxu0
  %4711 = vmatprep.mubr.f32.mxu0 0.0
  %4712 = vmatmul.mubr.f32.gmra.mrb[0].mxu0 %v4363
  %v4713 = vpop.f32.mrb[0].mxu0
  %v4714 = vadd.f32 0.0, %v4713
  %v4715 = vpop.f32.mrb[0].mxu0
  %4716 = vmatprep.mubr.f32.mxu0 0.0
  %4717 = vmatmul.mubr.f32.gmra.mrb[0].mxu0 %v4366
  %v4718 = vpop.f32.mrb[0].mxu0
  %v4719 = vadd.f32 0.0, %v4718
  %v4720 = vpop.f32.mrb[0].mxu0
  %4721 = vmatprep.mubr.f32.mxu0 0.0
  %4722 = vmatmul.mubr.f32.gmra.mrb[0].mxu0 %v4369
  %v4723 = vpop.f32.mrb[0].mxu0
  %v4724 = vadd.f32 0.0, %v4723
  %v4725 = vpop.f32.mrb[0].mxu0
  %4726 = vmatprep.mubr.f32.mxu0 0.0
  %4727 = vmatmul.mubr.f32.gmra.mrb[0].mxu0 %v4372
  %v4728 = vpop.f32.mrb[0].mxu0
  %v4729 = vadd.f32 0.0, %v4728
  %v4730 = vpop.f32.mrb[0].mxu0
  %4731 = vmatprep.mubr.f32.mxu0 0.0
  %4732 = vmatmul.mubr.f32.gmra.mrb[0].mxu0 %v4375
  %v4733 = vpop.f32.mrb[0].mxu0
  %v4734 = vadd.f32 0.0, %v4733
  %v4735 = vpop.f32.mrb[0].mxu0
  %4736 = vmatprep.mubr.f32.mxu0 0.0
  %4737 = vmatmul.mubr.f32.gmra.mrb[0].mxu0 %v4378
  %v4738 = vpop.f32.mrb[0].mxu0
  %v4739 = vadd.f32 0.0, %v4738
  %v4740 = vpop.f32.mrb[0].mxu0
  %4741 = vmatprep.mubr.f32.mxu0 0.0
  %4742 = vmatmul.mubr.f32.gmra.mrb[0].mxu0 %v4381
  %v4743 = vpop.f32.mrb[0].mxu0
  %v4744 = vadd.f32 0.0, %v4743
  %v4745 = vpop.f32.mrb[0].mxu0
  %4746 = vmatprep.mubr.f32.mxu0 0.0
  %4747 = vmatmul.mubr.f32.gmra.mrb[0].mxu0 %v4384
  %v4748 = vpop.f32.mrb[0].mxu0
  %v4749 = vadd.f32 0.0, %v4748
  %v4750 = vpop.f32.mrb[0].mxu0
  %4751 = vmatprep.mubr.f32.mxu0 0.0
  %4752 = vmatmul.mubr.f32.gmra.mrb[0].mxu0 %v4387
  %v4753 = vpop.f32.mrb[0].mxu0
  %v4754 = vadd.f32 0.0, %v4753
  %v4755 = vpop.f32.mrb[0].mxu0
  %4756 = vmatprep.mubr.f32.mxu0 0.0
  %4757 = vmatmul.mubr.f32.gmra.mrb[0].mxu0 %v4390
  %v4758 = vpop.f32.mrb[0].mxu0
  %v4759 = vadd.f32 0.0, %v4758
  %v4760 = vpop.f32.mrb[0].mxu0
  %4761 = vmatprep.mubr.f32.mxu0 0.0
  %4762 = vmatmul.mubr.f32.gmra.mrb[0].mxu0 %v4393
  %v4763 = vpop.f32.mrb[0].mxu0
  %v4764 = vadd.f32 0.0, %v4763
  %v4765 = vpop.f32.mrb[0].mxu0
  %4766 = vmatprep.mubr.f32.mxu0 0.0
  %4767 = vmatmul.mubr.f32.gmra.mrb[0].mxu0 %v4396
  %v4768 = vpop.f32.mrb[0].mxu0
  %v4769 = vadd.f32 0.0, %v4768
  %v4770 = vpop.f32.mrb[0].mxu0
  %4771 = vmatprep.mubr.f32.mxu0 0.0
  %4772 = vmatmul.mubr.f32.gmra.mrb[0].mxu0 %v4399
  %v4773 = vpop.f32.mrb[0].mxu0
  %v4774 = vadd.f32 0.0, %v4773
  %v4775 = vpop.f32.mrb[0].mxu0
  %4776 = vmatprep.mubr.f32.mxu0 0.0
  %4777 = vmatmul.mubr.f32.gmra.mrb[0].mxu0 %v4402
  %v4778 = vpop.f32.mrb[0].mxu0
  %v4779 = vadd.f32 0.0, %v4778
  %v4780 = vpop.f32.mrb[0].mxu0
  %4781 = vmatprep.mubr.f32.mxu0 0.0
  %4782 = vmatmul.mubr.f32.gmra.mrb[0].mxu0 %v4405
  %v4783 = vpop.f32.mrb[0].mxu0
  %v4784 = vadd.f32 0.0, %v4783
  %v4785 = vpop.f32.mrb[0].mxu0
  %4786 = vmatprep.mubr.f32.mxu0 0.0
  %4787 = vmatmul.mubr.f32.gmra.mrb[0].mxu0 %v4408
  %v4788 = vpop.f32.mrb[0].mxu0
  %v4789 = vadd.f32 0.0, %v4788
  %v4790 = vpop.f32.mrb[0].mxu0
  %4791 = vmatprep.mubr.f32.mxu0 0.0
  %4792 = vmatmul.mubr.f32.gmra.mrb[0].mxu0 %v4411
  %v4793 = vpop.f32.mrb[0].mxu0
  %v4794 = vadd.f32 0.0, %v4793
  %v4795 = vpop.f32.mrb[0].mxu0
  %4796 = vmatprep.mubr.f32.mxu0 0.0
  %4797 = vmatmul.mubr.f32.gmra.mrb[0].mxu0 %v4414
  %v4798 = vpop.f32.mrb[0].mxu0
  %v4799 = vadd.f32 0.0, %v4798
  %v4800 = vpop.f32.mrb[0].mxu0
  %4801 = vmatprep.mubr.f32.mxu0 0.0
  %4802 = vmatmul.mubr.f32.gmra.mrb[0].mxu0 %v4417
  %v4803 = vpop.f32.mrb[0].mxu0
  %v4804 = vadd.f32 0.0, %v4803
  %v4805 = vpop.f32.mrb[0].mxu0
  %4806 = vdwg.mxu0
  %v4807 = vadd.f32 %v4096, %v4489
  %v4808 = vadd.f32 %v4097, %v4494
  %v4809 = vadd.f32 %v4098, %v4499
  %v4810 = vadd.f32 %v4099, %v4504
  %v4811 = vadd.f32 %v4100, %v4509
  %v4812 = vadd.f32 %v4101, %v4514
  %v4813 = vadd.f32 %v4102, %v4519
  %v4814 = vadd.f32 %v4103, %v4524
  %v4815 = vadd.f32 %v4104, %v4529
  %v4816 = vadd.f32 %v4105, %v4534
  %v4817 = vadd.f32 %v4106, %v4539
  %v4818 = vadd.f32 %v4107, %v4544
  %v4819 = vadd.f32 %v4108, %v4549
  %v4820 = vadd.f32 %v4109, %v4554
  %v4821 = vadd.f32 %v4110, %v4559
  %v4822 = vadd.f32 %v4111, %v4564
  %v4823 = vadd.f32 %v4112, %v4569
  %v4824 = vadd.f32 %v4113, %v4574
  %v4825 = vadd.f32 %v4114, %v4579
  %v4826 = vadd.f32 %v4115, %v4584
  %v4827 = vadd.f32 %v4116, %v4589
  %v4828 = vadd.f32 %v4117, %v4594
  %v4829 = vadd.f32 %v4118, %v4599
  %v4830 = vadd.f32 %v4119, %v4604
  %v4831 = vadd.f32 %v4120, %v4609
  %v4832 = vadd.f32 %v4121, %v4614
  %v4833 = vadd.f32 %v4122, %v4619
  %v4834 = vadd.f32 %v4123, %v4624
  %v4835 = vadd.f32 %v4124, %v4629
  %v4836 = vadd.f32 %v4125, %v4634
  %v4837 = vadd.f32 %v4126, %v4639
  %v4838 = vadd.f32 %v4127, %v4644
  %v4839 = vadd.f32 %v4128, %v4649
  %v4840 = vadd.f32 %v4129, %v4654
  %v4841 = vadd.f32 %v4130, %v4659
  %v4842 = vadd.f32 %v4131, %v4664
  %v4843 = vadd.f32 %v4132, %v4669
  %v4844 = vadd.f32 %v4133, %v4674
  %v4845 = vadd.f32 %v4134, %v4679
  %v4846 = vadd.f32 %v4135, %v4684
  %v4847 = vadd.f32 %v4136, %v4689
  %v4848 = vadd.f32 %v4137, %v4694
  %v4849 = vadd.f32 %v4138, %v4699
  %v4850 = vadd.f32 %v4139, %v4704
  %v4851 = vadd.f32 %v4140, %v4709
  %v4852 = vadd.f32 %v4141, %v4714
  %v4853 = vadd.f32 %v4142, %v4719
  %v4854 = vadd.f32 %v4143, %v4724
  %v4855 = vadd.f32 %v4144, %v4729
  %v4856 = vadd.f32 %v4145, %v4734
  %v4857 = vadd.f32 %v4146, %v4739
  %v4858 = vadd.f32 %v4147, %v4744
  %v4859 = vadd.f32 %v4148, %v4749
  %v4860 = vadd.f32 %v4149, %v4754
  %v4861 = vadd.f32 %v4150, %v4759
  %v4862 = vadd.f32 %v4151, %v4764
  %v4863 = vadd.f32 %v4152, %v4769
  %v4864 = vadd.f32 %v4153, %v4774
  %v4865 = vadd.f32 %v4154, %v4779
  %v4866 = vadd.f32 %v4155, %v4784
  %v4867 = vadd.f32 %v4156, %v4789
  %v4868 = vadd.f32 %v4157, %v4794
  %v4869 = vadd.f32 %v4158, %v4799
  %v4870 = vadd.f32 %v4159, %v4804
  %v4871 = vld [vmem:[%s4160 + $0x1] sm:$0xff]
  %v4872 = vld [vmem:[%s4160 + $0x9] sm:$0xff]
  %v4873 = vld [vmem:[%s4160 + $0x19] sm:$0xff]
  %v4874 = vld [vmem:[%s4160 + $0x21] sm:$0xff]
  %v4875 = vld [vmem:[%s4160 + $0x31] sm:$0xff]
  %v4876 = vld [vmem:[%s4160 + $0x39] sm:$0xff]
  %v4877 = vld [vmem:[%s4160 + $0x49] sm:$0xff]
  %v4878 = vld [vmem:[%s4160 + $0x51] sm:$0xff]
  %v4879 = vld [vmem:[%s4160 + $0x61] sm:$0xff]
  %v4880 = vld [vmem:[%s4160 + $0x69] sm:$0xff]
  %v4881 = vld [vmem:[%s4160 + $0x79] sm:$0xff]
  %v4882 = vld [vmem:[%s4160 + $0x81] sm:$0xff]
  %v4883 = vld [vmem:[%s4160 + $0x91] sm:$0xff]
  %v4884 = vld [vmem:[%s4160 + $0x99] sm:$0xff]
  %v4885 = vld [vmem:[%s4160 + $0xa9] sm:$0xff]
  %v4886 = vld [vmem:[%s4160 + $0xb1] sm:$0xff]
  %v4887 = vld [vmem:[%s4160 + $0xc1] sm:$0xff]
  %v4888 = vld [vmem:[%s4160 + $0xc9] sm:$0xff]
  %v4889 = vld [vmem:[%s4160 + $0xd9] sm:$0xff]
  %v4890 = vld [vmem:[%s4160 + $0xe1] sm:$0xff]
  %v4891 = vld [vmem:[%s4160 + $0xf1] sm:$0xff]
  %v4892 = vld [vmem:[%s4160 + $0xf9] sm:$0xff]
  %v4893 = vld [vmem:[%s4160 + $0x109] sm:$0xff]
  %v4894 = vld [vmem:[%s4160 + $0x111] sm:$0xff]
  %v4895 = vld [vmem:[%s4160 + $0x121] sm:$0xff]
  %v4896 = vld [vmem:[%s4160 + $0x129] sm:$0xff]
  %v4897 = vld [vmem:[%s4160 + $0x139] sm:$0xff]
  %v4898 = vld [vmem:[%s4160 + $0x141] sm:$0xff]
  %v4899 = vld [vmem:[%s4160 + $0x151] sm:$0xff]
  %v4900 = vld [vmem:[%s4160 + $0x159] sm:$0xff]
  %v4901 = vld [vmem:[%s4160 + $0x169] sm:$0xff]
  %v4902 = vld [vmem:[%s4160 + $0x171] sm:$0xff]
  %v4903 = vld [vmem:[%s4160 + $0x1b1] sm:$0xff]
  %v4904 = vld [vmem:[%s4160 + $0x1b9] sm:$0xff]
  %v4905 = vld [vmem:[%s4160 + $0x1c9] sm:$0xff]
  %v4906 = vld [vmem:[%s4160 + $0x1d1] sm:$0xff]
  %v4907 = vld [vmem:[%s4160 + $0x1e1] sm:$0xff]
  %v4908 = vld [vmem:[%s4160 + $0x1e9] sm:$0xff]
  %v4909 = vld [vmem:[%s4160 + $0x1f9] sm:$0xff]
  %v4910 = vld [vmem:[%s4160 + $0x201] sm:$0xff]
  %v4911 = vld [vmem:[%s4160 + $0x211] sm:$0xff]
  %v4912 = vld [vmem:[%s4160 + $0x219] sm:$0xff]
  %v4913 = vld [vmem:[%s4160 + $0x229] sm:$0xff]
  %v4914 = vld [vmem:[%s4160 + $0x231] sm:$0xff]
  %v4915 = vld [vmem:[%s4160 + $0x241] sm:$0xff]
  %v4916 = vld [vmem:[%s4160 + $0x249] sm:$0xff]
  %v4917 = vld [vmem:[%s4160 + $0x259] sm:$0xff]
  %v4918 = vld [vmem:[%s4160 + $0x261] sm:$0xff]
  %v4919 = vld [vmem:[%s4160 + $0x271] sm:$0xff]
  %v4920 = vld [vmem:[%s4160 + $0x279] sm:$0xff]
  %v4921 = vld [vmem:[%s4160 + $0x289] sm:$0xff]
  %v4922 = vld [vmem:[%s4160 + $0x291] sm:$0xff]
  %v4923 = vld [vmem:[%s4160 + $0x2a1] sm:$0xff]
  %v4924 = vld [vmem:[%s4160 + $0x2a9] sm:$0xff]
  %v4925 = vld [vmem:[%s4160 + $0x2b9] sm:$0xff]
  %v4926 = vld [vmem:[%s4160 + $0x2c1] sm:$0xff]
  %v4927 = vld [vmem:[%s4160 + $0x2d1] sm:$0xff]
  %v4928 = vld [vmem:[%s4160 + $0x2d9] sm:$0xff]
  %v4929 = vld [vmem:[%s4160 + $0x2e9] sm:$0xff]
  %v4930 = vld [vmem:[%s4160 + $0x2f1] sm:$0xff]
  %v4931 = vld [vmem:[%s4160 + $0x301] sm:$0xff]
  %v4932 = vld [vmem:[%s4160 + $0x309] sm:$0xff]
  %v4933 = vld [vmem:[%s4160 + $0x319] sm:$0xff]
  %v4934 = vld [vmem:[%s4160 + $0x321] sm:$0xff]
  %s4935 = scalar_lea.vmem %s1, 28
  %v4936 = vld [vmem:[%s4935] sm:$0xf]
  %v4938 = vsel %vm157, %v4871, 0
  %v4941 = vsel %vm157, %v4872, 0
  %v4944 = vsel %vm157, %v4873, 0
  %v4947 = vsel %vm157, %v4874, 0
  %v4950 = vsel %vm157, %v4875, 0
  %v4953 = vsel %vm157, %v4876, 0
  %v4956 = vsel %vm157, %v4877, 0
  %v4959 = vsel %vm157, %v4878, 0
  %v4962 = vsel %vm157, %v4879, 0
  %v4965 = vsel %vm157, %v4880, 0
  %v4968 = vsel %vm157, %v4881, 0
  %v4971 = vsel %vm157, %v4882, 0
  %v4974 = vsel %vm157, %v4883, 0
  %v4977 = vsel %vm157, %v4884, 0
  %v4980 = vsel %vm157, %v4885, 0
  %v4983 = vsel %vm157, %v4886, 0
  %v4986 = vsel %vm157, %v4887, 0
  %v4989 = vsel %vm157, %v4888, 0
  %v4992 = vsel %vm157, %v4889, 0
  %v4995 = vsel %vm157, %v4890, 0
  %v4998 = vsel %vm157, %v4891, 0
  %v5001 = vsel %vm157, %v4892, 0
  %v5004 = vsel %vm157, %v4893, 0
  %v5007 = vsel %vm157, %v4894, 0
  %v5010 = vsel %vm157, %v4895, 0
  %v5013 = vsel %vm157, %v4896, 0
  %v5016 = vsel %vm157, %v4897, 0
  %v5019 = vsel %vm157, %v4898, 0
  %v5022 = vsel %vm157, %v4899, 0
  %v5025 = vsel %vm157, %v4900, 0
  %v5028 = vsel %vm157, %v4901, 0
  %v5031 = vsel %vm157, %v4902, 0
  %v5034 = vsel %vm157, %v4903, 0
  %v5037 = vsel %vm157, %v4904, 0
  %v5040 = vsel %vm157, %v4905, 0
  %v5043 = vsel %vm157, %v4906, 0
  %v5046 = vsel %vm157, %v4907, 0
  %v5049 = vsel %vm157, %v4908, 0
  %v5052 = vsel %vm157, %v4909, 0
  %v5055 = vsel %vm157, %v4910, 0
  %v5058 = vsel %vm157, %v4911, 0
  %v5061 = vsel %vm157, %v4912, 0
  %v5064 = vsel %vm157, %v4913, 0
  %v5067 = vsel %vm157, %v4914, 0
  %v5070 = vsel %vm157, %v4915, 0
  %v5073 = vsel %vm157, %v4916, 0
  %v5076 = vsel %vm157, %v4917, 0
  %v5079 = vsel %vm157, %v4918, 0
  %v5082 = vsel %vm157, %v4919, 0
  %v5085 = vsel %vm157, %v4920, 0
  %v5088 = vsel %vm157, %v4921, 0
  %v5091 = vsel %vm157, %v4922, 0
  %v5094 = vsel %vm157, %v4923, 0
  %v5097 = vsel %vm157, %v4924, 0
  %v5100 = vsel %vm157, %v4925, 0
  %v5103 = vsel %vm157, %v4926, 0
  %v5106 = vsel %vm157, %v4927, 0
  %v5109 = vsel %vm157, %v4928, 0
  %v5112 = vsel %vm157, %v4929, 0
  %v5115 = vsel %vm157, %v4930, 0
  %v5118 = vsel %vm157, %v4931, 0
  %v5121 = vsel %vm157, %v4932, 0
  %v5124 = vsel %vm157, %v4933, 0
  %v5127 = vsel %vm157, %v4934, 0
  %v5130 = vsel %vm350, %v4936, 0
  %5132 = vmatprep.subr.mxu0 0.0
  %5133 = vmatpush1.msra.mxu0 %v5130
  %5134 = vmatprep.subr.mxu0 0.0
  %5135 = vmatpush1.msra.mxu0 0.0
  %5136 = vmatprep.subr.mxu0 0.0
  %5137 = vmatpush1.msra.mxu0 0.0
  %5138 = vmatprep.subr.mxu0 0.0
  %5139 = vmatpush1.msra.mxu0 0.0
  %5140 = vmatprep.subr.mxu0 0.0
  %5141 = vmatpush1.msra.mxu0 0.0
  %5142 = vmatprep.subr.mxu0 0.0
  %5143 = vmatpush1.msra.mxu0 0.0
  %5144 = vmatprep.subr.mxu0 0.0
  %5145 = vmatpush1.msra.mxu0 0.0
  %5146 = vmatprep.subr.mxu0 0.0
  %5147 = vmatpush1.msra.mxu0 0.0
  %5148 = vmatprep.subr.mxu0 0.0
  %5149 = vmatpush1.msra.mxu0 0.0
  %5150 = vmatprep.subr.mxu0 0.0
  %5151 = vmatpush1.msra.mxu0 0.0
  %5152 = vmatprep.subr.mxu0 0.0
  %5153 = vmatpush1.msra.mxu0 0.0
  %5154 = vmatprep.subr.mxu0 0.0
  %5155 = vmatpush1.msra.mxu0 0.0
  %5156 = vmatprep.subr.mxu0 0.0
  %5157 = vmatpush1.msra.mxu0 0.0
  %5158 = vmatprep.subr.mxu0 0.0
  %5159 = vmatpush1.msra.mxu0 0.0
  %5160 = vmatprep.subr.mxu0 0.0
  %5161 = vmatpush1.msra.mxu0 0.0
  %5162 = vmatprep.subr.mxu0 0.0
  %5163 = vmatpush1.msra.mxu0 0.0
  %5164 = vmatprep.subr.mxu0 0.0
  %5165 = vmatpush1.msra.mxu0 0.0
  %5166 = vmatprep.subr.mxu0 0.0
  %5167 = vmatpush1.msra.mxu0 0.0
  %5168 = vmatprep.subr.mxu0 0.0
  %5169 = vmatpush1.msra.mxu0 0.0
  %5170 = vmatprep.subr.mxu0 0.0
  %5171 = vmatpush1.msra.mxu0 0.0
  %5172 = vmatprep.subr.mxu0 0.0
  %5173 = vmatpush1.msra.mxu0 0.0
  %5174 = vmatprep.subr.mxu0 0.0
  %5175 = vmatpush1.msra.mxu0 0.0
  %5176 = vmatprep.subr.mxu0 0.0
  %5177 = vmatpush1.msra.mxu0 0.0
  %5178 = vmatprep.subr.mxu0 0.0
  %5179 = vmatpush1.msra.mxu0 0.0
  %5180 = vmatprep.subr.mxu0 0.0
  %5181 = vmatpush1.msra.mxu0 0.0
  %5182 = vmatprep.subr.mxu0 0.0
  %5183 = vmatpush1.msra.mxu0 0.0
  %5184 = vmatprep.subr.mxu0 0.0
  %5185 = vmatpush1.msra.mxu0 0.0
  %5186 = vmatprep.subr.mxu0 0.0
  %5187 = vmatpush1.msra.mxu0 0.0
  %5188 = vmatprep.subr.mxu0 0.0
  %5189 = vmatpush1.msra.mxu0 0.0
  %5190 = vmatprep.subr.mxu0 0.0
  %5191 = vmatpush1.msra.mxu0 0.0
  %5192 = vmatprep.subr.mxu0 0.0
  %5193 = vmatpush1.msra.mxu0 0.0
  %5194 = vmatprep.subr.mxu0 0.0
  %5195 = vmatpush1.msra.mxu0 0.0
  %5196 = vmatprep.mubr.f32.mxu0 0.0
  %5197 = vmatmul.mubr.f32.gmra.mrb[0].mxu0 %v4938
  %v5198 = vpop.f32.mrb[0].mxu0
  %v5199 = vadd.f32 0.0, %v5198
  %v5200 = vpop.f32.mrb[0].mxu0
  %5201 = vmatprep.mubr.f32.mxu0 0.0
  %5202 = vmatmul.mubr.f32.gmra.mrb[0].mxu0 %v4941
  %v5203 = vpop.f32.mrb[0].mxu0
  %v5204 = vadd.f32 0.0, %v5203
  %v5205 = vpop.f32.mrb[0].mxu0
  %5206 = vmatprep.mubr.f32.mxu0 0.0
  %5207 = vmatmul.mubr.f32.gmra.mrb[0].mxu0 %v4944
  %v5208 = vpop.f32.mrb[0].mxu0
  %v5209 = vadd.f32 0.0, %v5208
  %v5210 = vpop.f32.mrb[0].mxu0
  %5211 = vmatprep.mubr.f32.mxu0 0.0
  %5212 = vmatmul.mubr.f32.gmra.mrb[0].mxu0 %v4947
  %v5213 = vpop.f32.mrb[0].mxu0
  %v5214 = vadd.f32 0.0, %v5213
  %v5215 = vpop.f32.mrb[0].mxu0
  %5216 = vmatprep.mubr.f32.mxu0 0.0
  %5217 = vmatmul.mubr.f32.gmra.mrb[0].mxu0 %v4950
  %v5218 = vpop.f32.mrb[0].mxu0
  %v5219 = vadd.f32 0.0, %v5218
  %v5220 = vpop.f32.mrb[0].mxu0
  %5221 = vmatprep.mubr.f32.mxu0 0.0
  %5222 = vmatmul.mubr.f32.gmra.mrb[0].mxu0 %v4953
  %v5223 = vpop.f32.mrb[0].mxu0
  %v5224 = vadd.f32 0.0, %v5223
  %v5225 = vpop.f32.mrb[0].mxu0
  %5226 = vmatprep.mubr.f32.mxu0 0.0
  %5227 = vmatmul.mubr.f32.gmra.mrb[0].mxu0 %v4956
  %v5228 = vpop.f32.mrb[0].mxu0
  %v5229 = vadd.f32 0.0, %v5228
  %v5230 = vpop.f32.mrb[0].mxu0
  %5231 = vmatprep.mubr.f32.mxu0 0.0
  %5232 = vmatmul.mubr.f32.gmra.mrb[0].mxu0 %v4959
  %v5233 = vpop.f32.mrb[0].mxu0
  %v5234 = vadd.f32 0.0, %v5233
  %v5235 = vpop.f32.mrb[0].mxu0
  %5236 = vmatprep.mubr.f32.mxu0 0.0
  %5237 = vmatmul.mubr.f32.gmra.mrb[0].mxu0 %v4962
  %v5238 = vpop.f32.mrb[0].mxu0
  %v5239 = vadd.f32 0.0, %v5238
  %v5240 = vpop.f32.mrb[0].mxu0
  %5241 = vmatprep.mubr.f32.mxu0 0.0
  %5242 = vmatmul.mubr.f32.gmra.mrb[0].mxu0 %v4965
  %v5243 = vpop.f32.mrb[0].mxu0
  %v5244 = vadd.f32 0.0, %v5243
  %v5245 = vpop.f32.mrb[0].mxu0
  %5246 = vmatprep.mubr.f32.mxu0 0.0
  %5247 = vmatmul.mubr.f32.gmra.mrb[0].mxu0 %v4968
  %v5248 = vpop.f32.mrb[0].mxu0
  %v5249 = vadd.f32 0.0, %v5248
  %v5250 = vpop.f32.mrb[0].mxu0
  %5251 = vmatprep.mubr.f32.mxu0 0.0
  %5252 = vmatmul.mubr.f32.gmra.mrb[0].mxu0 %v4971
  %v5253 = vpop.f32.mrb[0].mxu0
  %v5254 = vadd.f32 0.0, %v5253
  %v5255 = vpop.f32.mrb[0].mxu0
  %5256 = vmatprep.mubr.f32.mxu0 0.0
  %5257 = vmatmul.mubr.f32.gmra.mrb[0].mxu0 %v4974
  %v5258 = vpop.f32.mrb[0].mxu0
  %v5259 = vadd.f32 0.0, %v5258
  %v5260 = vpop.f32.mrb[0].mxu0
  %5261 = vmatprep.mubr.f32.mxu0 0.0
  %5262 = vmatmul.mubr.f32.gmra.mrb[0].mxu0 %v4977
  %v5263 = vpop.f32.mrb[0].mxu0
  %v5264 = vadd.f32 0.0, %v5263
  %v5265 = vpop.f32.mrb[0].mxu0
  %5266 = vmatprep.mubr.f32.mxu0 0.0
  %5267 = vmatmul.mubr.f32.gmra.mrb[0].mxu0 %v4980
  %v5268 = vpop.f32.mrb[0].mxu0
  %v5269 = vadd.f32 0.0, %v5268
  %v5270 = vpop.f32.mrb[0].mxu0
  %5271 = vmatprep.mubr.f32.mxu0 0.0
  %5272 = vmatmul.mubr.f32.gmra.mrb[0].mxu0 %v4983
  %v5273 = vpop.f32.mrb[0].mxu0
  %v5274 = vadd.f32 0.0, %v5273
  %v5275 = vpop.f32.mrb[0].mxu0
  %5276 = vmatprep.mubr.f32.mxu0 0.0
  %5277 = vmatmul.mubr.f32.gmra.mrb[0].mxu0 %v4986
  %v5278 = vpop.f32.mrb[0].mxu0
  %v5279 = vadd.f32 0.0, %v5278
  %v5280 = vpop.f32.mrb[0].mxu0
  %5281 = vmatprep.mubr.f32.mxu0 0.0
  %5282 = vmatmul.mubr.f32.gmra.mrb[0].mxu0 %v4989
  %v5283 = vpop.f32.mrb[0].mxu0
  %v5284 = vadd.f32 0.0, %v5283
  %v5285 = vpop.f32.mrb[0].mxu0
  %5286 = vmatprep.mubr.f32.mxu0 0.0
  %5287 = vmatmul.mubr.f32.gmra.mrb[0].mxu0 %v4992
  %v5288 = vpop.f32.mrb[0].mxu0
  %v5289 = vadd.f32 0.0, %v5288
  %v5290 = vpop.f32.mrb[0].mxu0
  %5291 = vmatprep.mubr.f32.mxu0 0.0
  %5292 = vmatmul.mubr.f32.gmra.mrb[0].mxu0 %v4995
  %v5293 = vpop.f32.mrb[0].mxu0
  %v5294 = vadd.f32 0.0, %v5293
  %v5295 = vpop.f32.mrb[0].mxu0
  %5296 = vmatprep.mubr.f32.mxu0 0.0
  %5297 = vmatmul.mubr.f32.gmra.mrb[0].mxu0 %v4998
  %v5298 = vpop.f32.mrb[0].mxu0
  %v5299 = vadd.f32 0.0, %v5298
  %v5300 = vpop.f32.mrb[0].mxu0
  %5301 = vmatprep.mubr.f32.mxu0 0.0
  %5302 = vmatmul.mubr.f32.gmra.mrb[0].mxu0 %v5001
  %v5303 = vpop.f32.mrb[0].mxu0
  %v5304 = vadd.f32 0.0, %v5303
  %v5305 = vpop.f32.mrb[0].mxu0
  %5306 = vmatprep.mubr.f32.mxu0 0.0
  %5307 = vmatmul.mubr.f32.gmra.mrb[0].mxu0 %v5004
  %v5308 = vpop.f32.mrb[0].mxu0
  %v5309 = vadd.f32 0.0, %v5308
  %v5310 = vpop.f32.mrb[0].mxu0
  %5311 = vmatprep.mubr.f32.mxu0 0.0
  %5312 = vmatmul.mubr.f32.gmra.mrb[0].mxu0 %v5007
  %v5313 = vpop.f32.mrb[0].mxu0
  %v5314 = vadd.f32 0.0, %v5313
  %v5315 = vpop.f32.mrb[0].mxu0
  %5316 = vmatprep.mubr.f32.mxu0 0.0
  %5317 = vmatmul.mubr.f32.gmra.mrb[0].mxu0 %v5010
  %v5318 = vpop.f32.mrb[0].mxu0
  %v5319 = vadd.f32 0.0, %v5318
  %v5320 = vpop.f32.mrb[0].mxu0
  %5321 = vmatprep.mubr.f32.mxu0 0.0
  %5322 = vmatmul.mubr.f32.gmra.mrb[0].mxu0 %v5013
  %v5323 = vpop.f32.mrb[0].mxu0
  %v5324 = vadd.f32 0.0, %v5323
  %v5325 = vpop.f32.mrb[0].mxu0
  %5326 = vmatprep.mubr.f32.mxu0 0.0
  %5327 = vmatmul.mubr.f32.gmra.mrb[0].mxu0 %v5016
  %v5328 = vpop.f32.mrb[0].mxu0
  %v5329 = vadd.f32 0.0, %v5328
  %v5330 = vpop.f32.mrb[0].mxu0
  %5331 = vmatprep.mubr.f32.mxu0 0.0
  %5332 = vmatmul.mubr.f32.gmra.mrb[0].mxu0 %v5019
  %v5333 = vpop.f32.mrb[0].mxu0
  %v5334 = vadd.f32 0.0, %v5333
  %v5335 = vpop.f32.mrb[0].mxu0
  %5336 = vmatprep.mubr.f32.mxu0 0.0
  %5337 = vmatmul.mubr.f32.gmra.mrb[0].mxu0 %v5022
  %v5338 = vpop.f32.mrb[0].mxu0
  %v5339 = vadd.f32 0.0, %v5338
  %v5340 = vpop.f32.mrb[0].mxu0
  %5341 = vmatprep.mubr.f32.mxu0 0.0
  %5342 = vmatmul.mubr.f32.gmra.mrb[0].mxu0 %v5025
  %v5343 = vpop.f32.mrb[0].mxu0
  %v5344 = vadd.f32 0.0, %v5343
  %v5345 = vpop.f32.mrb[0].mxu0
  %5346 = vmatprep.mubr.f32.mxu0 0.0
  %5347 = vmatmul.mubr.f32.gmra.mrb[0].mxu0 %v5028
  %v5348 = vpop.f32.mrb[0].mxu0
  %v5349 = vadd.f32 0.0, %v5348
  %v5350 = vpop.f32.mrb[0].mxu0
  %5351 = vmatprep.mubr.f32.mxu0 0.0
  %5352 = vmatmul.mubr.f32.gmra.mrb[0].mxu0 %v5031
  %v5353 = vpop.f32.mrb[0].mxu0
  %v5354 = vadd.f32 0.0, %v5353
  %v5355 = vpop.f32.mrb[0].mxu0
  %5356 = vmatprep.mubr.f32.mxu0 0.0
  %5357 = vmatmul.mubr.f32.gmra.mrb[0].mxu0 %v5034
  %v5358 = vpop.f32.mrb[0].mxu0
  %v5359 = vadd.f32 0.0, %v5358
  %v5360 = vpop.f32.mrb[0].mxu0
  %5361 = vmatprep.mubr.f32.mxu0 0.0
  %5362 = vmatmul.mubr.f32.gmra.mrb[0].mxu0 %v5037
  %v5363 = vpop.f32.mrb[0].mxu0
  %v5364 = vadd.f32 0.0, %v5363
  %v5365 = vpop.f32.mrb[0].mxu0
  %5366 = vmatprep.mubr.f32.mxu0 0.0
  %5367 = vmatmul.mubr.f32.gmra.mrb[0].mxu0 %v5040
  %v5368 = vpop.f32.mrb[0].mxu0
  %v5369 = vadd.f32 0.0, %v5368
  %v5370 = vpop.f32.mrb[0].mxu0
  %5371 = vmatprep.mubr.f32.mxu0 0.0
  %5372 = vmatmul.mubr.f32.gmra.mrb[0].mxu0 %v5043
  %v5373 = vpop.f32.mrb[0].mxu0
  %v5374 = vadd.f32 0.0, %v5373
  %v5375 = vpop.f32.mrb[0].mxu0
  %5376 = vmatprep.mubr.f32.mxu0 0.0
  %5377 = vmatmul.mubr.f32.gmra.mrb[0].mxu0 %v5046
  %v5378 = vpop.f32.mrb[0].mxu0
  %v5379 = vadd.f32 0.0, %v5378
  %v5380 = vpop.f32.mrb[0].mxu0
  %5381 = vmatprep.mubr.f32.mxu0 0.0
  %5382 = vmatmul.mubr.f32.gmra.mrb[0].mxu0 %v5049
  %v5383 = vpop.f32.mrb[0].mxu0
  %v5384 = vadd.f32 0.0, %v5383
  %v5385 = vpop.f32.mrb[0].mxu0
  %5386 = vmatprep.mubr.f32.mxu0 0.0
  %5387 = vmatmul.mubr.f32.gmra.mrb[0].mxu0 %v5052
  %v5388 = vpop.f32.mrb[0].mxu0
  %v5389 = vadd.f32 0.0, %v5388
  %v5390 = vpop.f32.mrb[0].mxu0
  %5391 = vmatprep.mubr.f32.mxu0 0.0
  %5392 = vmatmul.mubr.f32.gmra.mrb[0].mxu0 %v5055
  %v5393 = vpop.f32.mrb[0].mxu0
  %v5394 = vadd.f32 0.0, %v5393
  %v5395 = vpop.f32.mrb[0].mxu0
  %5396 = vmatprep.mubr.f32.mxu0 0.0
  %5397 = vmatmul.mubr.f32.gmra.mrb[0].mxu0 %v5058
  %v5398 = vpop.f32.mrb[0].mxu0
  %v5399 = vadd.f32 0.0, %v5398
  %v5400 = vpop.f32.mrb[0].mxu0
  %5401 = vmatprep.mubr.f32.mxu0 0.0
  %5402 = vmatmul.mubr.f32.gmra.mrb[0].mxu0 %v5061
  %v5403 = vpop.f32.mrb[0].mxu0
  %v5404 = vadd.f32 0.0, %v5403
  %v5405 = vpop.f32.mrb[0].mxu0
  %5406 = vmatprep.mubr.f32.mxu0 0.0
  %5407 = vmatmul.mubr.f32.gmra.mrb[0].mxu0 %v5064
  %v5408 = vpop.f32.mrb[0].mxu0
  %v5409 = vadd.f32 0.0, %v5408
  %v5410 = vpop.f32.mrb[0].mxu0
  %5411 = vmatprep.mubr.f32.mxu0 0.0
  %5412 = vmatmul.mubr.f32.gmra.mrb[0].mxu0 %v5067
  %v5413 = vpop.f32.mrb[0].mxu0
  %v5414 = vadd.f32 0.0, %v5413
  %v5415 = vpop.f32.mrb[0].mxu0
  %5416 = vmatprep.mubr.f32.mxu0 0.0
  %5417 = vmatmul.mubr.f32.gmra.mrb[0].mxu0 %v5070
  %v5418 = vpop.f32.mrb[0].mxu0
  %v5419 = vadd.f32 0.0, %v5418
  %v5420 = vpop.f32.mrb[0].mxu0
  %5421 = vmatprep.mubr.f32.mxu0 0.0
  %5422 = vmatmul.mubr.f32.gmra.mrb[0].mxu0 %v5073
  %v5423 = vpop.f32.mrb[0].mxu0
  %v5424 = vadd.f32 0.0, %v5423
  %v5425 = vpop.f32.mrb[0].mxu0
  %5426 = vmatprep.mubr.f32.mxu0 0.0
  %5427 = vmatmul.mubr.f32.gmra.mrb[0].mxu0 %v5076
  %v5428 = vpop.f32.mrb[0].mxu0
  %v5429 = vadd.f32 0.0, %v5428
  %v5430 = vpop.f32.mrb[0].mxu0
  %5431 = vmatprep.mubr.f32.mxu0 0.0
  %5432 = vmatmul.mubr.f32.gmra.mrb[0].mxu0 %v5079
  %v5433 = vpop.f32.mrb[0].mxu0
  %v5434 = vadd.f32 0.0, %v5433
  %v5435 = vpop.f32.mrb[0].mxu0
  %5436 = vmatprep.mubr.f32.mxu0 0.0
  %5437 = vmatmul.mubr.f32.gmra.mrb[0].mxu0 %v5082
  %v5438 = vpop.f32.mrb[0].mxu0
  %v5439 = vadd.f32 0.0, %v5438
  %v5440 = vpop.f32.mrb[0].mxu0
  %5441 = vmatprep.mubr.f32.mxu0 0.0
  %5442 = vmatmul.mubr.f32.gmra.mrb[0].mxu0 %v5085
  %v5443 = vpop.f32.mrb[0].mxu0
  %v5444 = vadd.f32 0.0, %v5443
  %v5445 = vpop.f32.mrb[0].mxu0
  %5446 = vmatprep.mubr.f32.mxu0 0.0
  %5447 = vmatmul.mubr.f32.gmra.mrb[0].mxu0 %v5088
  %v5448 = vpop.f32.mrb[0].mxu0
  %v5449 = vadd.f32 0.0, %v5448
  %v5450 = vpop.f32.mrb[0].mxu0
  %5451 = vmatprep.mubr.f32.mxu0 0.0
  %5452 = vmatmul.mubr.f32.gmra.mrb[0].mxu0 %v5091
  %v5453 = vpop.f32.mrb[0].mxu0
  %v5454 = vadd.f32 0.0, %v5453
  %v5455 = vpop.f32.mrb[0].mxu0
  %5456 = vmatprep.mubr.f32.mxu0 0.0
  %5457 = vmatmul.mubr.f32.gmra.mrb[0].mxu0 %v5094
  %v5458 = vpop.f32.mrb[0].mxu0
  %v5459 = vadd.f32 0.0, %v5458
  %v5460 = vpop.f32.mrb[0].mxu0
  %5461 = vmatprep.mubr.f32.mxu0 0.0
  %5462 = vmatmul.mubr.f32.gmra.mrb[0].mxu0 %v5097
  %v5463 = vpop.f32.mrb[0].mxu0
  %v5464 = vadd.f32 0.0, %v5463
  %v5465 = vpop.f32.mrb[0].mxu0
  %5466 = vmatprep.mubr.f32.mxu0 0.0
  %5467 = vmatmul.mubr.f32.gmra.mrb[0].mxu0 %v5100
  %v5468 = vpop.f32.mrb[0].mxu0
  %v5469 = vadd.f32 0.0, %v5468
  %v5470 = vpop.f32.mrb[0].mxu0
  %5471 = vmatprep.mubr.f32.mxu0 0.0
  %5472 = vmatmul.mubr.f32.gmra.mrb[0].mxu0 %v5103
  %v5473 = vpop.f32.mrb[0].mxu0
  %v5474 = vadd.f32 0.0, %v5473
  %v5475 = vpop.f32.mrb[0].mxu0
  %5476 = vmatprep.mubr.f32.mxu0 0.0
  %5477 = vmatmul.mubr.f32.gmra.mrb[0].mxu0 %v5106
  %v5478 = vpop.f32.mrb[0].mxu0
  %v5479 = vadd.f32 0.0, %v5478
  %v5480 = vpop.f32.mrb[0].mxu0
  %5481 = vmatprep.mubr.f32.mxu0 0.0
  %5482 = vmatmul.mubr.f32.gmra.mrb[0].mxu0 %v5109
  %v5483 = vpop.f32.mrb[0].mxu0
  %v5484 = vadd.f32 0.0, %v5483
  %v5485 = vpop.f32.mrb[0].mxu0
  %5486 = vmatprep.mubr.f32.mxu0 0.0
  %5487 = vmatmul.mubr.f32.gmra.mrb[0].mxu0 %v5112
  %v5488 = vpop.f32.mrb[0].mxu0
  %v5489 = vadd.f32 0.0, %v5488
  %v5490 = vpop.f32.mrb[0].mxu0
  %5491 = vmatprep.mubr.f32.mxu0 0.0
  %5492 = vmatmul.mubr.f32.gmra.mrb[0].mxu0 %v5115
  %v5493 = vpop.f32.mrb[0].mxu0
  %v5494 = vadd.f32 0.0, %v5493
  %v5495 = vpop.f32.mrb[0].mxu0
  %5496 = vmatprep.mubr.f32.mxu0 0.0
  %5497 = vmatmul.mubr.f32.gmra.mrb[0].mxu0 %v5118
  %v5498 = vpop.f32.mrb[0].mxu0
  %v5499 = vadd.f32 0.0, %v5498
  %v5500 = vpop.f32.mrb[0].mxu0
  %5501 = vmatprep.mubr.f32.mxu0 0.0
  %5502 = vmatmul.mubr.f32.gmra.mrb[0].mxu0 %v5121
  %v5503 = vpop.f32.mrb[0].mxu0
  %v5504 = vadd.f32 0.0, %v5503
  %v5505 = vpop.f32.mrb[0].mxu0
  %5506 = vmatprep.mubr.f32.mxu0 0.0
  %5507 = vmatmul.mubr.f32.gmra.mrb[0].mxu0 %v5124
  %v5508 = vpop.f32.mrb[0].mxu0
  %v5509 = vadd.f32 0.0, %v5508
  %v5510 = vpop.f32.mrb[0].mxu0
  %5511 = vmatprep.mubr.f32.mxu0 0.0
  %5512 = vmatmul.mubr.f32.gmra.mrb[0].mxu0 %v5127
  %v5513 = vpop.f32.mrb[0].mxu0
  %v5514 = vadd.f32 0.0, %v5513
  %v5515 = vpop.f32.mrb[0].mxu0
  %5516 = vdwg.mxu0
  %v5517 = vadd.f32 %v4807, %v5199
  %v5518 = vadd.f32 %v4808, %v5204
  %v5519 = vadd.f32 %v4809, %v5209
  %v5520 = vadd.f32 %v4810, %v5214
  %v5521 = vadd.f32 %v4811, %v5219
  %v5522 = vadd.f32 %v4812, %v5224
  %v5523 = vadd.f32 %v4813, %v5229
  %v5524 = vadd.f32 %v4814, %v5234
  %v5525 = vadd.f32 %v4815, %v5239
  %v5526 = vadd.f32 %v4816, %v5244
  %v5527 = vadd.f32 %v4817, %v5249
  %v5528 = vadd.f32 %v4818, %v5254
  %v5529 = vadd.f32 %v4819, %v5259
  %v5530 = vadd.f32 %v4820, %v5264
  %v5531 = vadd.f32 %v4821, %v5269
  %v5532 = vadd.f32 %v4822, %v5274
  %v5533 = vadd.f32 %v4823, %v5279
  %v5534 = vadd.f32 %v4824, %v5284
  %v5535 = vadd.f32 %v4825, %v5289
  %v5536 = vadd.f32 %v4826, %v5294
  %v5537 = vadd.f32 %v4827, %v5299
  %v5538 = vadd.f32 %v4828, %v5304
  %v5539 = vadd.f32 %v4829, %v5309
  %v5540 = vadd.f32 %v4830, %v5314
  %v5541 = vadd.f32 %v4831, %v5319
  %v5542 = vadd.f32 %v4832, %v5324
  %v5543 = vadd.f32 %v4833, %v5329
  %v5544 = vadd.f32 %v4834, %v5334
  %v5545 = vadd.f32 %v4835, %v5339
  %v5546 = vadd.f32 %v4836, %v5344
  %v5547 = vadd.f32 %v4837, %v5349
  %v5548 = vadd.f32 %v4838, %v5354
  %v5549 = vadd.f32 %v4839, %v5359
  %v5550 = vadd.f32 %v4840, %v5364
  %v5551 = vadd.f32 %v4841, %v5369
  %v5552 = vadd.f32 %v4842, %v5374
  %v5553 = vadd.f32 %v4843, %v5379
  %v5554 = vadd.f32 %v4844, %v5384
  %v5555 = vadd.f32 %v4845, %v5389
  %v5556 = vadd.f32 %v4846, %v5394
  %v5557 = vadd.f32 %v4847, %v5399
  %v5558 = vadd.f32 %v4848, %v5404
  %v5559 = vadd.f32 %v4849, %v5409
  %v5560 = vadd.f32 %v4850, %v5414
  %v5561 = vadd.f32 %v4851, %v5419
  %v5562 = vadd.f32 %v4852, %v5424
  %v5563 = vadd.f32 %v4853, %v5429
  %v5564 = vadd.f32 %v4854, %v5434
  %v5565 = vadd.f32 %v4855, %v5439
  %v5566 = vadd.f32 %v4856, %v5444
  %v5567 = vadd.f32 %v4857, %v5449
  %v5568 = vadd.f32 %v4858, %v5454
  %v5569 = vadd.f32 %v4859, %v5459
  %v5570 = vadd.f32 %v4860, %v5464
  %v5571 = vadd.f32 %v4861, %v5469
  %v5572 = vadd.f32 %v4862, %v5474
  %v5573 = vadd.f32 %v4863, %v5479
  %v5574 = vadd.f32 %v4864, %v5484
  %v5575 = vadd.f32 %v4865, %v5489
  %v5576 = vadd.f32 %v4866, %v5494
  %v5577 = vadd.f32 %v4867, %v5499
  %v5578 = vadd.f32 %v4868, %v5504
  %v5579 = vadd.f32 %v4869, %v5509
  %v5580 = vadd.f32 %v4870, %v5514
  %v5581 = vld [vmem:[%s4160 + $0x2] sm:$0xff]
  %v5582 = vld [vmem:[%s4160 + $0xa] sm:$0xff]
  %v5583 = vld [vmem:[%s4160 + $0x1a] sm:$0xff]
  %v5584 = vld [vmem:[%s4160 + $0x22] sm:$0xff]
  %v5585 = vld [vmem:[%s4160 + $0x32] sm:$0xff]
  %v5586 = vld [vmem:[%s4160 + $0x3a] sm:$0xff]
  %v5587 = vld [vmem:[%s4160 + $0x4a] sm:$0xff]
  %v5588 = vld [vmem:[%s4160 + $0x52] sm:$0xff]
  %v5589 = vld [vmem:[%s4160 + $0x62] sm:$0xff]
  %v5590 = vld [vmem:[%s4160 + $0x6a] sm:$0xff]
  %v5591 = vld [vmem:[%s4160 + $0x7a] sm:$0xff]
  %v5592 = vld [vmem:[%s4160 + $0x82] sm:$0xff]
  %v5593 = vld [vmem:[%s4160 + $0x92] sm:$0xff]
  %v5594 = vld [vmem:[%s4160 + $0x9a] sm:$0xff]
  %v5595 = vld [vmem:[%s4160 + $0xaa] sm:$0xff]
  %v5596 = vld [vmem:[%s4160 + $0xb2] sm:$0xff]
  %v5597 = vld [vmem:[%s4160 + $0xc2] sm:$0xff]
  %v5598 = vld [vmem:[%s4160 + $0xca] sm:$0xff]
  %v5599 = vld [vmem:[%s4160 + $0xda] sm:$0xff]
  %v5600 = vld [vmem:[%s4160 + $0xe2] sm:$0xff]
  %v5601 = vld [vmem:[%s4160 + $0xf2] sm:$0xff]
  %v5602 = vld [vmem:[%s4160 + $0xfa] sm:$0xff]
  %v5603 = vld [vmem:[%s4160 + $0x10a] sm:$0xff]
  %v5604 = vld [vmem:[%s4160 + $0x112] sm:$0xff]
  %v5605 = vld [vmem:[%s4160 + $0x122] sm:$0xff]
  %v5606 = vld [vmem:[%s4160 + $0x12a] sm:$0xff]
  %v5607 = vld [vmem:[%s4160 + $0x13a] sm:$0xff]
  %v5608 = vld [vmem:[%s4160 + $0x142] sm:$0xff]
  %v5609 = vld [vmem:[%s4160 + $0x152] sm:$0xff]
  %v5610 = vld [vmem:[%s4160 + $0x15a] sm:$0xff]
  %v5611 = vld [vmem:[%s4160 + $0x16a] sm:$0xff]
  %v5612 = vld [vmem:[%s4160 + $0x172] sm:$0xff]
  %v5613 = vld [vmem:[%s4160 + $0x1b2] sm:$0xff]
  %v5614 = vld [vmem:[%s4160 + $0x1ba] sm:$0xff]
  %v5615 = vld [vmem:[%s4160 + $0x1ca] sm:$0xff]
  %v5616 = vld [vmem:[%s4160 + $0x1d2] sm:$0xff]
  %v5617 = vld [vmem:[%s4160 + $0x1e2] sm:$0xff]
  %v5618 = vld [vmem:[%s4160 + $0x1ea] sm:$0xff]
  %v5619 = vld [vmem:[%s4160 + $0x1fa] sm:$0xff]
  %v5620 = vld [vmem:[%s4160 + $0x202] sm:$0xff]
  %v5621 = vld [vmem:[%s4160 + $0x212] sm:$0xff]
  %v5622 = vld [vmem:[%s4160 + $0x21a] sm:$0xff]
  %v5623 = vld [vmem:[%s4160 + $0x22a] sm:$0xff]
  %v5624 = vld [vmem:[%s4160 + $0x232] sm:$0xff]
  %v5625 = vld [vmem:[%s4160 + $0x242] sm:$0xff]
  %v5626 = vld [vmem:[%s4160 + $0x24a] sm:$0xff]
  %v5627 = vld [vmem:[%s4160 + $0x25a] sm:$0xff]
  %v5628 = vld [vmem:[%s4160 + $0x262] sm:$0xff]
  %v5629 = vld [vmem:[%s4160 + $0x272] sm:$0xff]
  %v5630 = vld [vmem:[%s4160 + $0x27a] sm:$0xff]
  %v5631 = vld [vmem:[%s4160 + $0x28a] sm:$0xff]
  %v5632 = vld [vmem:[%s4160 + $0x292] sm:$0xff]
  %v5633 = vld [vmem:[%s4160 + $0x2a2] sm:$0xff]
  %v5634 = vld [vmem:[%s4160 + $0x2aa] sm:$0xff]
  %v5635 = vld [vmem:[%s4160 + $0x2ba] sm:$0xff]
  %v5636 = vld [vmem:[%s4160 + $0x2c2] sm:$0xff]
  %v5637 = vld [vmem:[%s4160 + $0x2d2] sm:$0xff]
  %v5638 = vld [vmem:[%s4160 + $0x2da] sm:$0xff]
  %v5639 = vld [vmem:[%s4160 + $0x2ea] sm:$0xff]
  %v5640 = vld [vmem:[%s4160 + $0x2f2] sm:$0xff]
  %v5641 = vld [vmem:[%s4160 + $0x302] sm:$0xff]
  %v5642 = vld [vmem:[%s4160 + $0x30a] sm:$0xff]
  %v5643 = vld [vmem:[%s4160 + $0x31a] sm:$0xff]
  %v5644 = vld [vmem:[%s4160 + $0x322] sm:$0xff]
  %s5645 = scalar_lea.vmem %s1, 32
  %v5646 = vld [vmem:[%s5645] sm:$0xf]
  %v5648 = vsel %vm157, %v5581, 0
  %v5651 = vsel %vm157, %v5582, 0
  %v5654 = vsel %vm157, %v5583, 0
  %v5657 = vsel %vm157, %v5584, 0
  %v5660 = vsel %vm157, %v5585, 0
  %v5663 = vsel %vm157, %v5586, 0
  %v5666 = vsel %vm157, %v5587, 0
  %v5669 = vsel %vm157, %v5588, 0
  %v5672 = vsel %vm157, %v5589, 0
  %v5675 = vsel %vm157, %v5590, 0
  %v5678 = vsel %vm157, %v5591, 0
  %v5681 = vsel %vm157, %v5592, 0
  %v5684 = vsel %vm157, %v5593, 0
  %v5687 = vsel %vm157, %v5594, 0
  %v5690 = vsel %vm157, %v5595, 0
  %v5693 = vsel %vm157, %v5596, 0
  %v5696 = vsel %vm157, %v5597, 0
  %v5699 = vsel %vm157, %v5598, 0
  %v5702 = vsel %vm157, %v5599, 0
  %v5705 = vsel %vm157, %v5600, 0
  %v5708 = vsel %vm157, %v5601, 0
  %v5711 = vsel %vm157, %v5602, 0
  %v5714 = vsel %vm157, %v5603, 0
  %v5717 = vsel %vm157, %v5604, 0
  %v5720 = vsel %vm157, %v5605, 0
  %v5723 = vsel %vm157, %v5606, 0
  %v5726 = vsel %vm157, %v5607, 0
  %v5729 = vsel %vm157, %v5608, 0
  %v5732 = vsel %vm157, %v5609, 0
  %v5735 = vsel %vm157, %v5610, 0
  %v5738 = vsel %vm157, %v5611, 0
  %v5741 = vsel %vm157, %v5612, 0
  %v5744 = vsel %vm157, %v5613, 0
  %v5747 = vsel %vm157, %v5614, 0
  %v5750 = vsel %vm157, %v5615, 0
  %v5753 = vsel %vm157, %v5616, 0
  %v5756 = vsel %vm157, %v5617, 0
  %v5759 = vsel %vm157, %v5618, 0
  %v5762 = vsel %vm157, %v5619, 0
  %v5765 = vsel %vm157, %v5620, 0
  %v5768 = vsel %vm157, %v5621, 0
  %v5771 = vsel %vm157, %v5622, 0
  %v5774 = vsel %vm157, %v5623, 0
  %v5777 = vsel %vm157, %v5624, 0
  %v5780 = vsel %vm157, %v5625, 0
  %v5783 = vsel %vm157, %v5626, 0
  %v5786 = vsel %vm157, %v5627, 0
  %v5789 = vsel %vm157, %v5628, 0
  %v5792 = vsel %vm157, %v5629, 0
  %v5795 = vsel %vm157, %v5630, 0
  %v5798 = vsel %vm157, %v5631, 0
  %v5801 = vsel %vm157, %v5632, 0
  %v5804 = vsel %vm157, %v5633, 0
  %v5807 = vsel %vm157, %v5634, 0
  %v5810 = vsel %vm157, %v5635, 0
  %v5813 = vsel %vm157, %v5636, 0
  %v5816 = vsel %vm157, %v5637, 0
  %v5819 = vsel %vm157, %v5638, 0
  %v5822 = vsel %vm157, %v5639, 0
  %v5825 = vsel %vm157, %v5640, 0
  %v5828 = vsel %vm157, %v5641, 0
  %v5831 = vsel %vm157, %v5642, 0
  %v5834 = vsel %vm157, %v5643, 0
  %v5837 = vsel %vm157, %v5644, 0
  %v5840 = vsel %vm350, %v5646, 0
  %5842 = vmatprep.subr.mxu0 0.0
  %5843 = vmatpush1.msra.mxu0 %v5840
  %5844 = vmatprep.subr.mxu0 0.0
  %5845 = vmatpush1.msra.mxu0 0.0
  %5846 = vmatprep.subr.mxu0 0.0
  %5847 = vmatpush1.msra.mxu0 0.0
  %5848 = vmatprep.subr.mxu0 0.0
  %5849 = vmatpush1.msra.mxu0 0.0
  %5850 = vmatprep.subr.mxu0 0.0
  %5851 = vmatpush1.msra.mxu0 0.0
  %5852 = vmatprep.subr.mxu0 0.0
  %5853 = vmatpush1.msra.mxu0 0.0
  %5854 = vmatprep.subr.mxu0 0.0
  %5855 = vmatpush1.msra.mxu0 0.0
  %5856 = vmatprep.subr.mxu0 0.0
  %5857 = vmatpush1.msra.mxu0 0.0
  %5858 = vmatprep.subr.mxu0 0.0
  %5859 = vmatpush1.msra.mxu0 0.0
  %5860 = vmatprep.subr.mxu0 0.0
  %5861 = vmatpush1.msra.mxu0 0.0
  %5862 = vmatprep.subr.mxu0 0.0
  %5863 = vmatpush1.msra.mxu0 0.0
  %5864 = vmatprep.subr.mxu0 0.0
  %5865 = vmatpush1.msra.mxu0 0.0
  %5866 = vmatprep.subr.mxu0 0.0
  %5867 = vmatpush1.msra.mxu0 0.0
  %5868 = vmatprep.subr.mxu0 0.0
  %5869 = vmatpush1.msra.mxu0 0.0
  %5870 = vmatprep.subr.mxu0 0.0
  %5871 = vmatpush1.msra.mxu0 0.0
  %5872 = vmatprep.subr.mxu0 0.0
  %5873 = vmatpush1.msra.mxu0 0.0
  %5874 = vmatprep.subr.mxu0 0.0
  %5875 = vmatpush1.msra.mxu0 0.0
  %5876 = vmatprep.subr.mxu0 0.0
  %5877 = vmatpush1.msra.mxu0 0.0
  %5878 = vmatprep.subr.mxu0 0.0
  %5879 = vmatpush1.msra.mxu0 0.0
  %5880 = vmatprep.subr.mxu0 0.0
  %5881 = vmatpush1.msra.mxu0 0.0
  %5882 = vmatprep.subr.mxu0 0.0
  %5883 = vmatpush1.msra.mxu0 0.0
  %5884 = vmatprep.subr.mxu0 0.0
  %5885 = vmatpush1.msra.mxu0 0.0
  %5886 = vmatprep.subr.mxu0 0.0
  %5887 = vmatpush1.msra.mxu0 0.0
  %5888 = vmatprep.subr.mxu0 0.0
  %5889 = vmatpush1.msra.mxu0 0.0
  %5890 = vmatprep.subr.mxu0 0.0
  %5891 = vmatpush1.msra.mxu0 0.0
  %5892 = vmatprep.subr.mxu0 0.0
  %5893 = vmatpush1.msra.mxu0 0.0
  %5894 = vmatprep.subr.mxu0 0.0
  %5895 = vmatpush1.msra.mxu0 0.0
  %5896 = vmatprep.subr.mxu0 0.0
  %5897 = vmatpush1.msra.mxu0 0.0
  %5898 = vmatprep.subr.mxu0 0.0
  %5899 = vmatpush1.msra.mxu0 0.0
  %5900 = vmatprep.subr.mxu0 0.0
  %5901 = vmatpush1.msra.mxu0 0.0
  %5902 = vmatprep.subr.mxu0 0.0
  %5903 = vmatpush1.msra.mxu0 0.0
  %5904 = vmatprep.subr.mxu0 0.0
  %5905 = vmatpush1.msra.mxu0 0.0
  %5906 = vmatprep.mubr.f32.mxu0 0.0
  %5907 = vmatmul.mubr.f32.gmra.mrb[0].mxu0 %v5648
  %v5908 = vpop.f32.mrb[0].mxu0
  %v5909 = vadd.f32 0.0, %v5908
  %v5910 = vpop.f32.mrb[0].mxu0
  %5911 = vmatprep.mubr.f32.mxu0 0.0
  %5912 = vmatmul.mubr.f32.gmra.mrb[0].mxu0 %v5651
  %v5913 = vpop.f32.mrb[0].mxu0
  %v5914 = vadd.f32 0.0, %v5913
  %v5915 = vpop.f32.mrb[0].mxu0
  %5916 = vmatprep.mubr.f32.mxu0 0.0
  %5917 = vmatmul.mubr.f32.gmra.mrb[0].mxu0 %v5654
  %v5918 = vpop.f32.mrb[0].mxu0
  %v5919 = vadd.f32 0.0, %v5918
  %v5920 = vpop.f32.mrb[0].mxu0
  %5921 = vmatprep.mubr.f32.mxu0 0.0
  %5922 = vmatmul.mubr.f32.gmra.mrb[0].mxu0 %v5657
  %v5923 = vpop.f32.mrb[0].mxu0
  %v5924 = vadd.f32 0.0, %v5923
  %v5925 = vpop.f32.mrb[0].mxu0
  %5926 = vmatprep.mubr.f32.mxu0 0.0
  %5927 = vmatmul.mubr.f32.gmra.mrb[0].mxu0 %v5660
  %v5928 = vpop.f32.mrb[0].mxu0
  %v5929 = vadd.f32 0.0, %v5928
  %v5930 = vpop.f32.mrb[0].mxu0
  %5931 = vmatprep.mubr.f32.mxu0 0.0
  %5932 = vmatmul.mubr.f32.gmra.mrb[0].mxu0 %v5663
  %v5933 = vpop.f32.mrb[0].mxu0
  %v5934 = vadd.f32 0.0, %v5933
  %v5935 = vpop.f32.mrb[0].mxu0
  %5936 = vmatprep.mubr.f32.mxu0 0.0
  %5937 = vmatmul.mubr.f32.gmra.mrb[0].mxu0 %v5666
  %v5938 = vpop.f32.mrb[0].mxu0
  %v5939 = vadd.f32 0.0, %v5938
  %v5940 = vpop.f32.mrb[0].mxu0
  %5941 = vmatprep.mubr.f32.mxu0 0.0
  %5942 = vmatmul.mubr.f32.gmra.mrb[0].mxu0 %v5669
  %v5943 = vpop.f32.mrb[0].mxu0
  %v5944 = vadd.f32 0.0, %v5943
  %v5945 = vpop.f32.mrb[0].mxu0
  %5946 = vmatprep.mubr.f32.mxu0 0.0
  %5947 = vmatmul.mubr.f32.gmra.mrb[0].mxu0 %v5672
  %v5948 = vpop.f32.mrb[0].mxu0
  %v5949 = vadd.f32 0.0, %v5948
  %v5950 = vpop.f32.mrb[0].mxu0
  %5951 = vmatprep.mubr.f32.mxu0 0.0
  %5952 = vmatmul.mubr.f32.gmra.mrb[0].mxu0 %v5675
  %v5953 = vpop.f32.mrb[0].mxu0
  %v5954 = vadd.f32 0.0, %v5953
  %v5955 = vpop.f32.mrb[0].mxu0
  %5956 = vmatprep.mubr.f32.mxu0 0.0
  %5957 = vmatmul.mubr.f32.gmra.mrb[0].mxu0 %v5678
  %v5958 = vpop.f32.mrb[0].mxu0
  %v5959 = vadd.f32 0.0, %v5958
  %v5960 = vpop.f32.mrb[0].mxu0
  %5961 = vmatprep.mubr.f32.mxu0 0.0
  %5962 = vmatmul.mubr.f32.gmra.mrb[0].mxu0 %v5681
  %v5963 = vpop.f32.mrb[0].mxu0
  %v5964 = vadd.f32 0.0, %v5963
  %v5965 = vpop.f32.mrb[0].mxu0
  %5966 = vmatprep.mubr.f32.mxu0 0.0
  %5967 = vmatmul.mubr.f32.gmra.mrb[0].mxu0 %v5684
  %v5968 = vpop.f32.mrb[0].mxu0
  %v5969 = vadd.f32 0.0, %v5968
  %v5970 = vpop.f32.mrb[0].mxu0
  %5971 = vmatprep.mubr.f32.mxu0 0.0
  %5972 = vmatmul.mubr.f32.gmra.mrb[0].mxu0 %v5687
  %v5973 = vpop.f32.mrb[0].mxu0
  %v5974 = vadd.f32 0.0, %v5973
  %v5975 = vpop.f32.mrb[0].mxu0
  %5976 = vmatprep.mubr.f32.mxu0 0.0
  %5977 = vmatmul.mubr.f32.gmra.mrb[0].mxu0 %v5690
  %v5978 = vpop.f32.mrb[0].mxu0
  %v5979 = vadd.f32 0.0, %v5978
  %v5980 = vpop.f32.mrb[0].mxu0
  %5981 = vmatprep.mubr.f32.mxu0 0.0
  %5982 = vmatmul.mubr.f32.gmra.mrb[0].mxu0 %v5693
  %v5983 = vpop.f32.mrb[0].mxu0
  %v5984 = vadd.f32 0.0, %v5983
  %v5985 = vpop.f32.mrb[0].mxu0
  %5986 = vmatprep.mubr.f32.mxu0 0.0
  %5987 = vmatmul.mubr.f32.gmra.mrb[0].mxu0 %v5696
  %v5988 = vpop.f32.mrb[0].mxu0
  %v5989 = vadd.f32 0.0, %v5988
  %v5990 = vpop.f32.mrb[0].mxu0
  %5991 = vmatprep.mubr.f32.mxu0 0.0
  %5992 = vmatmul.mubr.f32.gmra.mrb[0].mxu0 %v5699
  %v5993 = vpop.f32.mrb[0].mxu0
  %v5994 = vadd.f32 0.0, %v5993
  %v5995 = vpop.f32.mrb[0].mxu0
  %5996 = vmatprep.mubr.f32.mxu0 0.0
  %5997 = vmatmul.mubr.f32.gmra.mrb[0].mxu0 %v5702
  %v5998 = vpop.f32.mrb[0].mxu0
  %v5999 = vadd.f32 0.0, %v5998
  %v6000 = vpop.f32.mrb[0].mxu0
  %6001 = vmatprep.mubr.f32.mxu0 0.0
  %6002 = vmatmul.mubr.f32.gmra.mrb[0].mxu0 %v5705
  %v6003 = vpop.f32.mrb[0].mxu0
  %v6004 = vadd.f32 0.0, %v6003
  %v6005 = vpop.f32.mrb[0].mxu0
  %6006 = vmatprep.mubr.f32.mxu0 0.0
  %6007 = vmatmul.mubr.f32.gmra.mrb[0].mxu0 %v5708
  %v6008 = vpop.f32.mrb[0].mxu0
  %v6009 = vadd.f32 0.0, %v6008
  %v6010 = vpop.f32.mrb[0].mxu0
  %6011 = vmatprep.mubr.f32.mxu0 0.0
  %6012 = vmatmul.mubr.f32.gmra.mrb[0].mxu0 %v5711
  %v6013 = vpop.f32.mrb[0].mxu0
  %v6014 = vadd.f32 0.0, %v6013
  %v6015 = vpop.f32.mrb[0].mxu0
  %6016 = vmatprep.mubr.f32.mxu0 0.0
  %6017 = vmatmul.mubr.f32.gmra.mrb[0].mxu0 %v5714
  %v6018 = vpop.f32.mrb[0].mxu0
  %v6019 = vadd.f32 0.0, %v6018
  %v6020 = vpop.f32.mrb[0].mxu0
  %6021 = vmatprep.mubr.f32.mxu0 0.0
  %6022 = vmatmul.mubr.f32.gmra.mrb[0].mxu0 %v5717
  %v6023 = vpop.f32.mrb[0].mxu0
  %v6024 = vadd.f32 0.0, %v6023
  %v6025 = vpop.f32.mrb[0].mxu0
  %6026 = vmatprep.mubr.f32.mxu0 0.0
  %6027 = vmatmul.mubr.f32.gmra.mrb[0].mxu0 %v5720
  %v6028 = vpop.f32.mrb[0].mxu0
  %v6029 = vadd.f32 0.0, %v6028
  %v6030 = vpop.f32.mrb[0].mxu0
  %6031 = vmatprep.mubr.f32.mxu0 0.0
  %6032 = vmatmul.mubr.f32.gmra.mrb[0].mxu0 %v5723
  %v6033 = vpop.f32.mrb[0].mxu0
  %v6034 = vadd.f32 0.0, %v6033
  %v6035 = vpop.f32.mrb[0].mxu0
  %6036 = vmatprep.mubr.f32.mxu0 0.0
  %6037 = vmatmul.mubr.f32.gmra.mrb[0].mxu0 %v5726
  %v6038 = vpop.f32.mrb[0].mxu0
  %v6039 = vadd.f32 0.0, %v6038
  %v6040 = vpop.f32.mrb[0].mxu0
  %6041 = vmatprep.mubr.f32.mxu0 0.0
  %6042 = vmatmul.mubr.f32.gmra.mrb[0].mxu0 %v5729
  %v6043 = vpop.f32.mrb[0].mxu0
  %v6044 = vadd.f32 0.0, %v6043
  %v6045 = vpop.f32.mrb[0].mxu0
  %6046 = vmatprep.mubr.f32.mxu0 0.0
  %6047 = vmatmul.mubr.f32.gmra.mrb[0].mxu0 %v5732
  %v6048 = vpop.f32.mrb[0].mxu0
  %v6049 = vadd.f32 0.0, %v6048
  %v6050 = vpop.f32.mrb[0].mxu0
  %6051 = vmatprep.mubr.f32.mxu0 0.0
  %6052 = vmatmul.mubr.f32.gmra.mrb[0].mxu0 %v5735
  %v6053 = vpop.f32.mrb[0].mxu0
  %v6054 = vadd.f32 0.0, %v6053
  %v6055 = vpop.f32.mrb[0].mxu0
  %6056 = vmatprep.mubr.f32.mxu0 0.0
  %6057 = vmatmul.mubr.f32.gmra.mrb[0].mxu0 %v5738
  %v6058 = vpop.f32.mrb[0].mxu0
  %v6059 = vadd.f32 0.0, %v6058
  %v6060 = vpop.f32.mrb[0].mxu0
  %6061 = vmatprep.mubr.f32.mxu0 0.0
  %6062 = vmatmul.mubr.f32.gmra.mrb[0].mxu0 %v5741
  %v6063 = vpop.f32.mrb[0].mxu0
  %v6064 = vadd.f32 0.0, %v6063
  %v6065 = vpop.f32.mrb[0].mxu0
  %6066 = vmatprep.mubr.f32.mxu0 0.0
  %6067 = vmatmul.mubr.f32.gmra.mrb[0].mxu0 %v5744
  %v6068 = vpop.f32.mrb[0].mxu0
  %v6069 = vadd.f32 0.0, %v6068
  %v6070 = vpop.f32.mrb[0].mxu0
  %6071 = vmatprep.mubr.f32.mxu0 0.0
  %6072 = vmatmul.mubr.f32.gmra.mrb[0].mxu0 %v5747
  %v6073 = vpop.f32.mrb[0].mxu0
  %v6074 = vadd.f32 0.0, %v6073
  %v6075 = vpop.f32.mrb[0].mxu0
  %6076 = vmatprep.mubr.f32.mxu0 0.0
  %6077 = vmatmul.mubr.f32.gmra.mrb[0].mxu0 %v5750
  %v6078 = vpop.f32.mrb[0].mxu0
  %v6079 = vadd.f32 0.0, %v6078
  %v6080 = vpop.f32.mrb[0].mxu0
  %6081 = vmatprep.mubr.f32.mxu0 0.0
  %6082 = vmatmul.mubr.f32.gmra.mrb[0].mxu0 %v5753
  %v6083 = vpop.f32.mrb[0].mxu0
  %v6084 = vadd.f32 0.0, %v6083
  %v6085 = vpop.f32.mrb[0].mxu0
  %6086 = vmatprep.mubr.f32.mxu0 0.0
  %6087 = vmatmul.mubr.f32.gmra.mrb[0].mxu0 %v5756
  %v6088 = vpop.f32.mrb[0].mxu0
  %v6089 = vadd.f32 0.0, %v6088
  %v6090 = vpop.f32.mrb[0].mxu0
  %6091 = vmatprep.mubr.f32.mxu0 0.0
  %6092 = vmatmul.mubr.f32.gmra.mrb[0].mxu0 %v5759
  %v6093 = vpop.f32.mrb[0].mxu0
  %v6094 = vadd.f32 0.0, %v6093
  %v6095 = vpop.f32.mrb[0].mxu0
  %6096 = vmatprep.mubr.f32.mxu0 0.0
  %6097 = vmatmul.mubr.f32.gmra.mrb[0].mxu0 %v5762
  %v6098 = vpop.f32.mrb[0].mxu0
  %v6099 = vadd.f32 0.0, %v6098
  %v6100 = vpop.f32.mrb[0].mxu0
  %6101 = vmatprep.mubr.f32.mxu0 0.0
  %6102 = vmatmul.mubr.f32.gmra.mrb[0].mxu0 %v5765
  %v6103 = vpop.f32.mrb[0].mxu0
  %v6104 = vadd.f32 0.0, %v6103
  %v6105 = vpop.f32.mrb[0].mxu0
  %6106 = vmatprep.mubr.f32.mxu0 0.0
  %6107 = vmatmul.mubr.f32.gmra.mrb[0].mxu0 %v5768
  %v6108 = vpop.f32.mrb[0].mxu0
  %v6109 = vadd.f32 0.0, %v6108
  %v6110 = vpop.f32.mrb[0].mxu0
  %6111 = vmatprep.mubr.f32.mxu0 0.0
  %6112 = vmatmul.mubr.f32.gmra.mrb[0].mxu0 %v5771
  %v6113 = vpop.f32.mrb[0].mxu0
  %v6114 = vadd.f32 0.0, %v6113
  %v6115 = vpop.f32.mrb[0].mxu0
  %6116 = vmatprep.mubr.f32.mxu0 0.0
  %6117 = vmatmul.mubr.f32.gmra.mrb[0].mxu0 %v5774
  %v6118 = vpop.f32.mrb[0].mxu0
  %v6119 = vadd.f32 0.0, %v6118
  %v6120 = vpop.f32.mrb[0].mxu0
  %6121 = vmatprep.mubr.f32.mxu0 0.0
  %6122 = vmatmul.mubr.f32.gmra.mrb[0].mxu0 %v5777
  %v6123 = vpop.f32.mrb[0].mxu0
  %v6124 = vadd.f32 0.0, %v6123
  %v6125 = vpop.f32.mrb[0].mxu0
  %6126 = vmatprep.mubr.f32.mxu0 0.0
  %6127 = vmatmul.mubr.f32.gmra.mrb[0].mxu0 %v5780
  %v6128 = vpop.f32.mrb[0].mxu0
  %v6129 = vadd.f32 0.0, %v6128
  %v6130 = vpop.f32.mrb[0].mxu0
  %6131 = vmatprep.mubr.f32.mxu0 0.0
  %6132 = vmatmul.mubr.f32.gmra.mrb[0].mxu0 %v5783
  %v6133 = vpop.f32.mrb[0].mxu0
  %v6134 = vadd.f32 0.0, %v6133
  %v6135 = vpop.f32.mrb[0].mxu0
  %6136 = vmatprep.mubr.f32.mxu0 0.0
  %6137 = vmatmul.mubr.f32.gmra.mrb[0].mxu0 %v5786
  %v6138 = vpop.f32.mrb[0].mxu0
  %v6139 = vadd.f32 0.0, %v6138
  %v6140 = vpop.f32.mrb[0].mxu0
  %6141 = vmatprep.mubr.f32.mxu0 0.0
  %6142 = vmatmul.mubr.f32.gmra.mrb[0].mxu0 %v5789
  %v6143 = vpop.f32.mrb[0].mxu0
  %v6144 = vadd.f32 0.0, %v6143
  %v6145 = vpop.f32.mrb[0].mxu0
  %6146 = vmatprep.mubr.f32.mxu0 0.0
  %6147 = vmatmul.mubr.f32.gmra.mrb[0].mxu0 %v5792
  %v6148 = vpop.f32.mrb[0].mxu0
  %v6149 = vadd.f32 0.0, %v6148
  %v6150 = vpop.f32.mrb[0].mxu0
  %6151 = vmatprep.mubr.f32.mxu0 0.0
  %6152 = vmatmul.mubr.f32.gmra.mrb[0].mxu0 %v5795
  %v6153 = vpop.f32.mrb[0].mxu0
  %v6154 = vadd.f32 0.0, %v6153
  %v6155 = vpop.f32.mrb[0].mxu0
  %6156 = vmatprep.mubr.f32.mxu0 0.0
  %6157 = vmatmul.mubr.f32.gmra.mrb[0].mxu0 %v5798
  %v6158 = vpop.f32.mrb[0].mxu0
  %v6159 = vadd.f32 0.0, %v6158
  %v6160 = vpop.f32.mrb[0].mxu0
  %6161 = vmatprep.mubr.f32.mxu0 0.0
  %6162 = vmatmul.mubr.f32.gmra.mrb[0].mxu0 %v5801
  %v6163 = vpop.f32.mrb[0].mxu0
  %v6164 = vadd.f32 0.0, %v6163
  %v6165 = vpop.f32.mrb[0].mxu0
  %6166 = vmatprep.mubr.f32.mxu0 0.0
  %6167 = vmatmul.mubr.f32.gmra.mrb[0].mxu0 %v5804
  %v6168 = vpop.f32.mrb[0].mxu0
  %v6169 = vadd.f32 0.0, %v6168
  %v6170 = vpop.f32.mrb[0].mxu0
  %6171 = vmatprep.mubr.f32.mxu0 0.0
  %6172 = vmatmul.mubr.f32.gmra.mrb[0].mxu0 %v5807
  %v6173 = vpop.f32.mrb[0].mxu0
  %v6174 = vadd.f32 0.0, %v6173
  %v6175 = vpop.f32.mrb[0].mxu0
  %6176 = vmatprep.mubr.f32.mxu0 0.0
  %6177 = vmatmul.mubr.f32.gmra.mrb[0].mxu0 %v5810
  %v6178 = vpop.f32.mrb[0].mxu0
  %v6179 = vadd.f32 0.0, %v6178
  %v6180 = vpop.f32.mrb[0].mxu0
  %6181 = vmatprep.mubr.f32.mxu0 0.0
  %6182 = vmatmul.mubr.f32.gmra.mrb[0].mxu0 %v5813
  %v6183 = vpop.f32.mrb[0].mxu0
  %v6184 = vadd.f32 0.0, %v6183
  %v6185 = vpop.f32.mrb[0].mxu0
  %6186 = vmatprep.mubr.f32.mxu0 0.0
  %6187 = vmatmul.mubr.f32.gmra.mrb[0].mxu0 %v5816
  %v6188 = vpop.f32.mrb[0].mxu0
  %v6189 = vadd.f32 0.0, %v6188
  %v6190 = vpop.f32.mrb[0].mxu0
  %6191 = vmatprep.mubr.f32.mxu0 0.0
  %6192 = vmatmul.mubr.f32.gmra.mrb[0].mxu0 %v5819
  %v6193 = vpop.f32.mrb[0].mxu0
  %v6194 = vadd.f32 0.0, %v6193
  %v6195 = vpop.f32.mrb[0].mxu0
  %6196 = vmatprep.mubr.f32.mxu0 0.0
  %6197 = vmatmul.mubr.f32.gmra.mrb[0].mxu0 %v5822
  %v6198 = vpop.f32.mrb[0].mxu0
  %v6199 = vadd.f32 0.0, %v6198
  %v6200 = vpop.f32.mrb[0].mxu0
  %6201 = vmatprep.mubr.f32.mxu0 0.0
  %6202 = vmatmul.mubr.f32.gmra.mrb[0].mxu0 %v5825
  %v6203 = vpop.f32.mrb[0].mxu0
  %v6204 = vadd.f32 0.0, %v6203
  %v6205 = vpop.f32.mrb[0].mxu0
  %6206 = vmatprep.mubr.f32.mxu0 0.0
  %6207 = vmatmul.mubr.f32.gmra.mrb[0].mxu0 %v5828
  %v6208 = vpop.f32.mrb[0].mxu0
  %v6209 = vadd.f32 0.0, %v6208
  %v6210 = vpop.f32.mrb[0].mxu0
  %6211 = vmatprep.mubr.f32.mxu0 0.0
  %6212 = vmatmul.mubr.f32.gmra.mrb[0].mxu0 %v5831
  %v6213 = vpop.f32.mrb[0].mxu0
  %v6214 = vadd.f32 0.0, %v6213
  %v6215 = vpop.f32.mrb[0].mxu0
  %6216 = vmatprep.mubr.f32.mxu0 0.0
  %6217 = vmatmul.mubr.f32.gmra.mrb[0].mxu0 %v5834
  %v6218 = vpop.f32.mrb[0].mxu0
  %v6219 = vadd.f32 0.0, %v6218
  %v6220 = vpop.f32.mrb[0].mxu0
  %6221 = vmatprep.mubr.f32.mxu0 0.0
  %6222 = vmatmul.mubr.f32.gmra.mrb[0].mxu0 %v5837
  %v6223 = vpop.f32.mrb[0].mxu0
  %v6224 = vadd.f32 0.0, %v6223
  %v6225 = vpop.f32.mrb[0].mxu0
  %6226 = vdwg.mxu0
  %v6227 = vadd.f32 %v5517, %v5909
  %v6228 = vadd.f32 %v5518, %v5914
  %v6229 = vadd.f32 %v5519, %v5919
  %v6230 = vadd.f32 %v5520, %v5924
  %v6231 = vadd.f32 %v5521, %v5929
  %v6232 = vadd.f32 %v5522, %v5934
  %v6233 = vadd.f32 %v5523, %v5939
  %v6234 = vadd.f32 %v5524, %v5944
  %v6235 = vadd.f32 %v5525, %v5949
  %v6236 = vadd.f32 %v5526, %v5954
  %v6237 = vadd.f32 %v5527, %v5959
  %v6238 = vadd.f32 %v5528, %v5964
  %v6239 = vadd.f32 %v5529, %v5969
  %v6240 = vadd.f32 %v5530, %v5974
  %v6241 = vadd.f32 %v5531, %v5979
  %v6242 = vadd.f32 %v5532, %v5984
  %v6243 = vadd.f32 %v5533, %v5989
  %v6244 = vadd.f32 %v5534, %v5994
  %v6245 = vadd.f32 %v5535, %v5999
  %v6246 = vadd.f32 %v5536, %v6004
  %v6247 = vadd.f32 %v5537, %v6009
  %v6248 = vadd.f32 %v5538, %v6014
  %v6249 = vadd.f32 %v5539, %v6019
  %v6250 = vadd.f32 %v5540, %v6024
  %v6251 = vadd.f32 %v5541, %v6029
  %v6252 = vadd.f32 %v5542, %v6034
  %v6253 = vadd.f32 %v5543, %v6039
  %v6254 = vadd.f32 %v5544, %v6044
  %v6255 = vadd.f32 %v5545, %v6049
  %v6256 = vadd.f32 %v5546, %v6054
  %v6257 = vadd.f32 %v5547, %v6059
  %v6258 = vadd.f32 %v5548, %v6064
  %v6259 = vadd.f32 %v5549, %v6069
  %v6260 = vadd.f32 %v5550, %v6074
  %v6261 = vadd.f32 %v5551, %v6079
  %v6262 = vadd.f32 %v5552, %v6084
  %v6263 = vadd.f32 %v5553, %v6089
  %v6264 = vadd.f32 %v5554, %v6094
  %v6265 = vadd.f32 %v5555, %v6099
  %v6266 = vadd.f32 %v5556, %v6104
  %v6267 = vadd.f32 %v5557, %v6109
  %v6268 = vadd.f32 %v5558, %v6114
  %v6269 = vadd.f32 %v5559, %v6119
  %v6270 = vadd.f32 %v5560, %v6124
  %v6271 = vadd.f32 %v5561, %v6129
  %v6272 = vadd.f32 %v5562, %v6134
  %v6273 = vadd.f32 %v5563, %v6139
  %v6274 = vadd.f32 %v5564, %v6144
  %v6275 = vadd.f32 %v5565, %v6149
  %v6276 = vadd.f32 %v5566, %v6154
  %v6277 = vadd.f32 %v5567, %v6159
  %v6278 = vadd.f32 %v5568, %v6164
  %v6279 = vadd.f32 %v5569, %v6169
  %v6280 = vadd.f32 %v5570, %v6174
  %v6281 = vadd.f32 %v5571, %v6179
  %v6282 = vadd.f32 %v5572, %v6184
  %v6283 = vadd.f32 %v5573, %v6189
  %v6284 = vadd.f32 %v5574, %v6194
  %v6285 = vadd.f32 %v5575, %v6199
  %v6286 = vadd.f32 %v5576, %v6204
  %v6287 = vadd.f32 %v5577, %v6209
  %v6288 = vadd.f32 %v5578, %v6214
  %v6289 = vadd.f32 %v5579, %v6219
  %v6290 = vadd.f32 %v5580, %v6224
  %v6291 = vld [vmem:[%s2] sm:$0x1]
  %v6292 = vld [vmem:[%s3] sm:$0x1]
  %6293 = vmatprep.subr.mxu0 0.0
  %6294 = vmatpush1.msra.mxu0 %v6227
  %6295 = vmatprep.subr.mxu0 0.0
  %6296 = vmatpush1.msra.mxu0 %v6228
  %6297 = vmatprep.subr.mxu0 0.0
  %6298 = vmatpush1.msra.mxu0 %v6229
  %6299 = vmatprep.subr.mxu0 0.0
  %6300 = vmatpush1.msra.mxu0 %v6230
  %6301 = vmatprep.subr.mxu0 0.0
  %6302 = vmatpush1.msra.mxu0 %v6231
  %6303 = vmatprep.subr.mxu0 0.0
  %6304 = vmatpush1.msra.mxu0 %v6232
  %6305 = vmatprep.subr.mxu0 0.0
  %6306 = vmatpush1.msra.mxu0 %v6233
  %6307 = vmatprep.subr.mxu0 0.0
  %6308 = vmatpush1.msra.mxu0 %v6234
  %6309 = vmatprep.subr.mxu0 0.0
  %6310 = vmatpush1.msra.mxu0 %v6235
  %6311 = vmatprep.subr.mxu0 0.0
  %6312 = vmatpush1.msra.mxu0 %v6236
  %6313 = vmatprep.subr.mxu0 0.0
  %6314 = vmatpush1.msra.mxu0 %v6237
  %6315 = vmatprep.subr.mxu0 0.0
  %6316 = vmatpush1.msra.mxu0 %v6238
  %6317 = vmatprep.subr.mxu0 0.0
  %6318 = vmatpush1.msra.mxu0 %v6239
  %6319 = vmatprep.subr.mxu0 0.0
  %6320 = vmatpush1.msra.mxu0 %v6240
  %6321 = vmatprep.subr.mxu0 0.0
  %6322 = vmatpush1.msra.mxu0 %v6241
  %6323 = vmatprep.subr.mxu0 0.0
  %6324 = vmatpush1.msra.mxu0 %v6242
  %6325 = vmatprep.subr.mxu0 0.0
  %6326 = vmatpush1.msra.mxu0 %v6243
  %6327 = vmatprep.subr.mxu0 0.0
  %6328 = vmatpush1.msra.mxu0 %v6244
  %6329 = vmatprep.subr.mxu0 0.0
  %6330 = vmatpush1.msra.mxu0 %v6245
  %6331 = vmatprep.subr.mxu0 0.0
  %6332 = vmatpush1.msra.mxu0 %v6246
  %6333 = vmatprep.subr.mxu0 0.0
  %6334 = vmatpush1.msra.mxu0 %v6247
  %6335 = vmatprep.subr.mxu0 0.0
  %6336 = vmatpush1.msra.mxu0 %v6248
  %6337 = vmatprep.subr.mxu0 0.0
  %6338 = vmatpush1.msra.mxu0 %v6249
  %6339 = vmatprep.subr.mxu0 0.0
  %6340 = vmatpush1.msra.mxu0 %v6250
  %6341 = vmatprep.subr.mxu0 0.0
  %6342 = vmatpush1.msra.mxu0 %v6251
  %6343 = vmatprep.subr.mxu0 0.0
  %6344 = vmatpush1.msra.mxu0 %v6252
  %6345 = vmatprep.subr.mxu0 0.0
  %6346 = vmatpush1.msra.mxu0 %v6253
  %6347 = vmatprep.subr.mxu0 0.0
  %6348 = vmatpush1.msra.mxu0 %v6254
  %6349 = vmatprep.subr.mxu0 0.0
  %6350 = vmatpush1.msra.mxu0 %v6255
  %6351 = vmatprep.subr.mxu0 0.0
  %6352 = vmatpush1.msra.mxu0 %v6256
  %6353 = vmatprep.subr.mxu0 0.0
  %6354 = vmatpush1.msra.mxu0 %v6257
  %6355 = vmatprep.subr.mxu0 0.0
  %6356 = vmatpush1.msra.mxu0 %v6258
  %6357 = vmatprep.mubr.f32.mxu0 1.0
  %6358 = vmatmul.mubr.f32.gmra.mrb[0].mxu0 1.0
  %v6359 = vpop.f32.mrb[0].mxu0
  %v6360 = vadd.f32 0.0, %v6359
  %v6361 = vpop.f32.mrb[0].mxu0
  %6362 = vdwg.mxu0
  %6363 = vmatprep.subr.mxu0 0.0
  %6364 = vmatpush1.msra.mxu0 %v6259
  %6365 = vmatprep.subr.mxu0 0.0
  %6366 = vmatpush1.msra.mxu0 %v6260
  %6367 = vmatprep.subr.mxu0 0.0
  %6368 = vmatpush1.msra.mxu0 %v6261
  %6369 = vmatprep.subr.mxu0 0.0
  %6370 = vmatpush1.msra.mxu0 %v6262
  %6371 = vmatprep.subr.mxu0 0.0
  %6372 = vmatpush1.msra.mxu0 %v6263
  %6373 = vmatprep.subr.mxu0 0.0
  %6374 = vmatpush1.msra.mxu0 %v6264
  %6375 = vmatprep.subr.mxu0 0.0
  %6376 = vmatpush1.msra.mxu0 %v6265
  %6377 = vmatprep.subr.mxu0 0.0
  %6378 = vmatpush1.msra.mxu0 %v6266
  %6379 = vmatprep.subr.mxu0 0.0
  %6380 = vmatpush1.msra.mxu0 %v6267
  %6381 = vmatprep.subr.mxu0 0.0
  %6382 = vmatpush1.msra.mxu0 %v6268
  %6383 = vmatprep.subr.mxu0 0.0
  %6384 = vmatpush1.msra.mxu0 %v6269
  %6385 = vmatprep.subr.mxu0 0.0
  %6386 = vmatpush1.msra.mxu0 %v6270
  %6387 = vmatprep.subr.mxu0 0.0
  %6388 = vmatpush1.msra.mxu0 %v6271
  %6389 = vmatprep.subr.mxu0 0.0
  %6390 = vmatpush1.msra.mxu0 %v6272
  %6391 = vmatprep.subr.mxu0 0.0
  %6392 = vmatpush1.msra.mxu0 %v6273
  %6393 = vmatprep.subr.mxu0 0.0
  %6394 = vmatpush1.msra.mxu0 %v6274
  %6395 = vmatprep.subr.mxu0 0.0
  %6396 = vmatpush1.msra.mxu0 %v6275
  %6397 = vmatprep.subr.mxu0 0.0
  %6398 = vmatpush1.msra.mxu0 %v6276
  %6399 = vmatprep.subr.mxu0 0.0
  %6400 = vmatpush1.msra.mxu0 %v6277
  %6401 = vmatprep.subr.mxu0 0.0
  %6402 = vmatpush1.msra.mxu0 %v6278
  %6403 = vmatprep.subr.mxu0 0.0
  %6404 = vmatpush1.msra.mxu0 %v6279
  %6405 = vmatprep.subr.mxu0 0.0
  %6406 = vmatpush1.msra.mxu0 %v6280
  %6407 = vmatprep.subr.mxu0 0.0
  %6408 = vmatpush1.msra.mxu0 %v6281
  %6409 = vmatprep.subr.mxu0 0.0
  %6410 = vmatpush1.msra.mxu0 %v6282
  %6411 = vmatprep.subr.mxu0 0.0
  %6412 = vmatpush1.msra.mxu0 %v6283
  %6413 = vmatprep.subr.mxu0 0.0
  %6414 = vmatpush1.msra.mxu0 %v6284
  %6415 = vmatprep.subr.mxu0 0.0
  %6416 = vmatpush1.msra.mxu0 %v6285
  %6417 = vmatprep.subr.mxu0 0.0
  %6418 = vmatpush1.msra.mxu0 %v6286
  %6419 = vmatprep.subr.mxu0 0.0
  %6420 = vmatpush1.msra.mxu0 %v6287
  %6421 = vmatprep.subr.mxu0 0.0
  %6422 = vmatpush1.msra.mxu0 %v6288
  %6423 = vmatprep.subr.mxu0 0.0
  %6424 = vmatpush1.msra.mxu0 %v6289
  %6425 = vmatprep.subr.mxu0 0.0
  %6426 = vmatpush1.msra.mxu0 %v6290
  %6427 = vmatprep.mubr.f32.mxu0 1.0
  %6428 = vmatmul.mubr.f32.gmra.mrb[0].mxu0 1.0
  %v6429 = vpop.f32.mrb[0].mxu0
  %v6430 = vadd.f32 %v6360, %v6429
  %v6431 = vpop.f32.mrb[0].mxu0
  %6432 = vdwg.mxu0
  %v6433 = vmul.f32 %v6227, %v6227
  %v6434 = vmul.f32 %v6228, %v6228
  %v6435 = vmul.f32 %v6229, %v6229
  %v6436 = vmul.f32 %v6230, %v6230
  %v6437 = vmul.f32 %v6231, %v6231
  %v6438 = vmul.f32 %v6232, %v6232
  %v6439 = vmul.f32 %v6233, %v6233
  %v6440 = vmul.f32 %v6234, %v6234
  %v6441 = vmul.f32 %v6235, %v6235
  %v6442 = vmul.f32 %v6236, %v6236
  %v6443 = vmul.f32 %v6237, %v6237
  %v6444 = vmul.f32 %v6238, %v6238
  %v6445 = vmul.f32 %v6239, %v6239
  %v6446 = vmul.f32 %v6240, %v6240
  %v6447 = vmul.f32 %v6241, %v6241
  %v6448 = vmul.f32 %v6242, %v6242
  %v6449 = vmul.f32 %v6243, %v6243
  %v6450 = vmul.f32 %v6244, %v6244
  %v6451 = vmul.f32 %v6245, %v6245
  %v6452 = vmul.f32 %v6246, %v6246
  %v6453 = vmul.f32 %v6247, %v6247
  %v6454 = vmul.f32 %v6248, %v6248
  %v6455 = vmul.f32 %v6249, %v6249
  %v6456 = vmul.f32 %v6250, %v6250
  %v6457 = vmul.f32 %v6251, %v6251
  %v6458 = vmul.f32 %v6252, %v6252
  %v6459 = vmul.f32 %v6253, %v6253
  %v6460 = vmul.f32 %v6254, %v6254
  %v6461 = vmul.f32 %v6255, %v6255
  %v6462 = vmul.f32 %v6256, %v6256
  %v6463 = vmul.f32 %v6257, %v6257
  %v6464 = vmul.f32 %v6258, %v6258
  %v6465 = vmul.f32 %v6259, %v6259
  %v6466 = vmul.f32 %v6260, %v6260
  %v6467 = vmul.f32 %v6261, %v6261
  %v6468 = vmul.f32 %v6262, %v6262
  %v6469 = vmul.f32 %v6263, %v6263
  %v6470 = vmul.f32 %v6264, %v6264
  %v6471 = vmul.f32 %v6265, %v6265
  %v6472 = vmul.f32 %v6266, %v6266
  %v6473 = vmul.f32 %v6267, %v6267
  %v6474 = vmul.f32 %v6268, %v6268
  %v6475 = vmul.f32 %v6269, %v6269
  %v6476 = vmul.f32 %v6270, %v6270
  %v6477 = vmul.f32 %v6271, %v6271
  %v6478 = vmul.f32 %v6272, %v6272
  %v6479 = vmul.f32 %v6273, %v6273
  %v6480 = vmul.f32 %v6274, %v6274
  %v6481 = vmul.f32 %v6275, %v6275
  %v6482 = vmul.f32 %v6276, %v6276
  %v6483 = vmul.f32 %v6277, %v6277
  %v6484 = vmul.f32 %v6278, %v6278
  %v6485 = vmul.f32 %v6279, %v6279
  %v6486 = vmul.f32 %v6280, %v6280
  %v6487 = vmul.f32 %v6281, %v6281
  %v6488 = vmul.f32 %v6282, %v6282
  %v6489 = vmul.f32 %v6283, %v6283
  %v6490 = vmul.f32 %v6284, %v6284
  %v6491 = vmul.f32 %v6285, %v6285
  %v6492 = vmul.f32 %v6286, %v6286
  %v6493 = vmul.f32 %v6287, %v6287
  %v6494 = vmul.f32 %v6288, %v6288
  %v6495 = vmul.f32 %v6289, %v6289
  %v6496 = vmul.f32 %v6290, %v6290
  %6497 = vmatprep.subr.mxu0 0.0
  %6498 = vmatpush1.msra.mxu0 %v6433
  %6499 = vmatprep.subr.mxu0 0.0
  %6500 = vmatpush1.msra.mxu0 %v6434
  %6501 = vmatprep.subr.mxu0 0.0
  %6502 = vmatpush1.msra.mxu0 %v6435
  %6503 = vmatprep.subr.mxu0 0.0
  %6504 = vmatpush1.msra.mxu0 %v6436
  %6505 = vmatprep.subr.mxu0 0.0
  %6506 = vmatpush1.msra.mxu0 %v6437
  %6507 = vmatprep.subr.mxu0 0.0
  %6508 = vmatpush1.msra.mxu0 %v6438
  %6509 = vmatprep.subr.mxu0 0.0
  %6510 = vmatpush1.msra.mxu0 %v6439
  %6511 = vmatprep.subr.mxu0 0.0
  %6512 = vmatpush1.msra.mxu0 %v6440
  %6513 = vmatprep.subr.mxu0 0.0
  %6514 = vmatpush1.msra.mxu0 %v6441
  %6515 = vmatprep.subr.mxu0 0.0
  %6516 = vmatpush1.msra.mxu0 %v6442
  %6517 = vmatprep.subr.mxu0 0.0
  %6518 = vmatpush1.msra.mxu0 %v6443
  %6519 = vmatprep.subr.mxu0 0.0
  %6520 = vmatpush1.msra.mxu0 %v6444
  %6521 = vmatprep.subr.mxu0 0.0
  %6522 = vmatpush1.msra.mxu0 %v6445
  %6523 = vmatprep.subr.mxu0 0.0
  %6524 = vmatpush1.msra.mxu0 %v6446
  %6525 = vmatprep.subr.mxu0 0.0
  %6526 = vmatpush1.msra.mxu0 %v6447
  %6527 = vmatprep.subr.mxu0 0.0
  %6528 = vmatpush1.msra.mxu0 %v6448
  %6529 = vmatprep.subr.mxu0 0.0
  %6530 = vmatpush1.msra.mxu0 %v6449
  %6531 = vmatprep.subr.mxu0 0.0
  %6532 = vmatpush1.msra.mxu0 %v6450
  %6533 = vmatprep.subr.mxu0 0.0
  %6534 = vmatpush1.msra.mxu0 %v6451
  %6535 = vmatprep.subr.mxu0 0.0
  %6536 = vmatpush1.msra.mxu0 %v6452
  %6537 = vmatprep.subr.mxu0 0.0
  %6538 = vmatpush1.msra.mxu0 %v6453
  %6539 = vmatprep.subr.mxu0 0.0
  %6540 = vmatpush1.msra.mxu0 %v6454
  %6541 = vmatprep.subr.mxu0 0.0
  %6542 = vmatpush1.msra.mxu0 %v6455
  %6543 = vmatprep.subr.mxu0 0.0
  %6544 = vmatpush1.msra.mxu0 %v6456
  %6545 = vmatprep.subr.mxu0 0.0
  %6546 = vmatpush1.msra.mxu0 %v6457
  %6547 = vmatprep.subr.mxu0 0.0
  %6548 = vmatpush1.msra.mxu0 %v6458
  %6549 = vmatprep.subr.mxu0 0.0
  %6550 = vmatpush1.msra.mxu0 %v6459
  %6551 = vmatprep.subr.mxu0 0.0
  %6552 = vmatpush1.msra.mxu0 %v6460
  %6553 = vmatprep.subr.mxu0 0.0
  %6554 = vmatpush1.msra.mxu0 %v6461
  %6555 = vmatprep.subr.mxu0 0.0
  %6556 = vmatpush1.msra.mxu0 %v6462
  %6557 = vmatprep.subr.mxu0 0.0
  %6558 = vmatpush1.msra.mxu0 %v6463
  %6559 = vmatprep.subr.mxu0 0.0
  %6560 = vmatpush1.msra.mxu0 %v6464
  %6561 = vmatprep.mubr.f32.mxu0 1.0
  %6562 = vmatmul.mubr.f32.gmra.mrb[0].mxu0 1.0
  %v6563 = vpop.f32.mrb[0].mxu0
  %v6564 = vadd.f32 0.0, %v6563
  %v6565 = vpop.f32.mrb[0].mxu0
  %6566 = vdwg.mxu0
  %6567 = vmatprep.subr.mxu0 0.0
  %6568 = vmatpush1.msra.mxu0 %v6465
  %6569 = vmatprep.subr.mxu0 0.0
  %6570 = vmatpush1.msra.mxu0 %v6466
  %6571 = vmatprep.subr.mxu0 0.0
  %6572 = vmatpush1.msra.mxu0 %v6467
  %6573 = vmatprep.subr.mxu0 0.0
  %6574 = vmatpush1.msra.mxu0 %v6468
  %6575 = vmatprep.subr.mxu0 0.0
  %6576 = vmatpush1.msra.mxu0 %v6469
  %6577 = vmatprep.subr.mxu0 0.0
  %6578 = vmatpush1.msra.mxu0 %v6470
  %6579 = vmatprep.subr.mxu0 0.0
  %6580 = vmatpush1.msra.mxu0 %v6471
  %6581 = vmatprep.subr.mxu0 0.0
  %6582 = vmatpush1.msra.mxu0 %v6472
  %6583 = vmatprep.subr.mxu0 0.0
  %6584 = vmatpush1.msra.mxu0 %v6473
  %6585 = vmatprep.subr.mxu0 0.0
  %6586 = vmatpush1.msra.mxu0 %v6474
  %6587 = vmatprep.subr.mxu0 0.0
  %6588 = vmatpush1.msra.mxu0 %v6475
  %6589 = vmatprep.subr.mxu0 0.0
  %6590 = vmatpush1.msra.mxu0 %v6476
  %6591 = vmatprep.subr.mxu0 0.0
  %6592 = vmatpush1.msra.mxu0 %v6477
  %6593 = vmatprep.subr.mxu0 0.0
  %6594 = vmatpush1.msra.mxu0 %v6478
  %6595 = vmatprep.subr.mxu0 0.0
  %6596 = vmatpush1.msra.mxu0 %v6479
  %6597 = vmatprep.subr.mxu0 0.0
  %6598 = vmatpush1.msra.mxu0 %v6480
  %6599 = vmatprep.subr.mxu0 0.0
  %6600 = vmatpush1.msra.mxu0 %v6481
  %6601 = vmatprep.subr.mxu0 0.0
  %6602 = vmatpush1.msra.mxu0 %v6482
  %6603 = vmatprep.subr.mxu0 0.0
  %6604 = vmatpush1.msra.mxu0 %v6483
  %6605 = vmatprep.subr.mxu0 0.0
  %6606 = vmatpush1.msra.mxu0 %v6484
  %6607 = vmatprep.subr.mxu0 0.0
  %6608 = vmatpush1.msra.mxu0 %v6485
  %6609 = vmatprep.subr.mxu0 0.0
  %6610 = vmatpush1.msra.mxu0 %v6486
  %6611 = vmatprep.subr.mxu0 0.0
  %6612 = vmatpush1.msra.mxu0 %v6487
  %6613 = vmatprep.subr.mxu0 0.0
  %6614 = vmatpush1.msra.mxu0 %v6488
  %6615 = vmatprep.subr.mxu0 0.0
  %6616 = vmatpush1.msra.mxu0 %v6489
  %6617 = vmatprep.subr.mxu0 0.0
  %6618 = vmatpush1.msra.mxu0 %v6490
  %6619 = vmatprep.subr.mxu0 0.0
  %6620 = vmatpush1.msra.mxu0 %v6491
  %6621 = vmatprep.subr.mxu0 0.0
  %6622 = vmatpush1.msra.mxu0 %v6492
  %6623 = vmatprep.subr.mxu0 0.0
  %6624 = vmatpush1.msra.mxu0 %v6493
  %6625 = vmatprep.subr.mxu0 0.0
  %6626 = vmatpush1.msra.mxu0 %v6494
  %6627 = vmatprep.subr.mxu0 0.0
  %6628 = vmatpush1.msra.mxu0 %v6495
  %6629 = vmatprep.subr.mxu0 0.0
  %6630 = vmatpush1.msra.mxu0 %v6496
  %6631 = vmatprep.mubr.f32.mxu0 1.0
  %6632 = vmatmul.mubr.f32.gmra.mrb[0].mxu0 1.0
  %v6633 = vpop.f32.mrb[0].mxu0
  %v6634 = vadd.f32 %v6564, %v6633
  %v6635 = vpop.f32.mrb[0].mxu0
  %6636 = vdwg.mxu0
  %v6637 = vmul.f32 %v6430, 0.001953125
  %v6638 = vmul.f32 %v6634, 0.001953125
  %v6639 = vmul.f32 %v6637, %v6637
  %v6640 = vsub.f32 %v6638, %v6639
  %v6641 = vmax.f32 %v6640, 0.0
  %v6642 = vadd.f32 %v6641, 1e-05
  %v6643 = vrsqrt.pop %v6642
  %v6644 = vmul.f32 %v6291, %v6643
  %v6645 = vmul.f32 %v6637, %v6644
  %v6646 = vsub.f32 %v6292, %v6645
  %v6648 = vlaneseq
  %v6649 = vshrl.u32 %v6648, 7
  %v6650 = vsub.s32 0, %v6649
  %v6651 = vrot.slane %v6644, %v6650
  %v6653 = vmul.f32 %v6227, %v6651
  %v6654 = vmul.f32 %v6228, %v6651
  %v6655 = vmul.f32 %v6229, %v6651
  %v6656 = vmul.f32 %v6230, %v6651
  %v6657 = vmul.f32 %v6231, %v6651
  %v6658 = vmul.f32 %v6232, %v6651
  %v6659 = vmul.f32 %v6233, %v6651
  %v6660 = vmul.f32 %v6234, %v6651
  %v6661 = vmul.f32 %v6235, %v6651
  %v6662 = vmul.f32 %v6236, %v6651
  %v6663 = vmul.f32 %v6237, %v6651
  %v6664 = vmul.f32 %v6238, %v6651
  %v6665 = vmul.f32 %v6239, %v6651
  %v6666 = vmul.f32 %v6240, %v6651
  %v6667 = vmul.f32 %v6241, %v6651
  %v6668 = vmul.f32 %v6242, %v6651
  %v6669 = vmul.f32 %v6243, %v6651
  %v6670 = vmul.f32 %v6244, %v6651
  %v6671 = vmul.f32 %v6245, %v6651
  %v6672 = vmul.f32 %v6246, %v6651
  %v6673 = vmul.f32 %v6247, %v6651
  %v6674 = vmul.f32 %v6248, %v6651
  %v6675 = vmul.f32 %v6249, %v6651
  %v6676 = vmul.f32 %v6250, %v6651
  %v6677 = vmul.f32 %v6251, %v6651
  %v6678 = vmul.f32 %v6252, %v6651
  %v6679 = vmul.f32 %v6253, %v6651
  %v6680 = vmul.f32 %v6254, %v6651
  %v6681 = vmul.f32 %v6255, %v6651
  %v6682 = vmul.f32 %v6256, %v6651
  %v6683 = vmul.f32 %v6257, %v6651
  %v6684 = vmul.f32 %v6258, %v6651
  %v6685 = vmul.f32 %v6259, %v6651
  %v6686 = vmul.f32 %v6260, %v6651
  %v6687 = vmul.f32 %v6261, %v6651
  %v6688 = vmul.f32 %v6262, %v6651
  %v6689 = vmul.f32 %v6263, %v6651
  %v6690 = vmul.f32 %v6264, %v6651
  %v6691 = vmul.f32 %v6265, %v6651
  %v6692 = vmul.f32 %v6266, %v6651
  %v6693 = vmul.f32 %v6267, %v6651
  %v6694 = vmul.f32 %v6268, %v6651
  %v6695 = vmul.f32 %v6269, %v6651
  %v6696 = vmul.f32 %v6270, %v6651
  %v6697 = vmul.f32 %v6271, %v6651
  %v6698 = vmul.f32 %v6272, %v6651
  %v6699 = vmul.f32 %v6273, %v6651
  %v6700 = vmul.f32 %v6274, %v6651
  %v6701 = vmul.f32 %v6275, %v6651
  %v6702 = vmul.f32 %v6276, %v6651
  %v6703 = vmul.f32 %v6277, %v6651
  %v6704 = vmul.f32 %v6278, %v6651
  %v6705 = vmul.f32 %v6279, %v6651
  %v6706 = vmul.f32 %v6280, %v6651
  %v6707 = vmul.f32 %v6281, %v6651
  %v6708 = vmul.f32 %v6282, %v6651
  %v6709 = vmul.f32 %v6283, %v6651
  %v6710 = vmul.f32 %v6284, %v6651
  %v6711 = vmul.f32 %v6285, %v6651
  %v6712 = vmul.f32 %v6286, %v6651
  %v6713 = vmul.f32 %v6287, %v6651
  %v6714 = vmul.f32 %v6288, %v6651
  %v6715 = vmul.f32 %v6289, %v6651
  %v6716 = vmul.f32 %v6290, %v6651
  %v6718 = vlaneseq
  %v6719 = vshrl.u32 %v6718, 7
  %v6720 = vsub.s32 0, %v6719
  %v6721 = vrot.slane %v6646, %v6720
  %v6723 = vadd.f32 %v6653, %v6721
  %v6724 = vadd.f32 %v6654, %v6721
  %v6725 = vadd.f32 %v6655, %v6721
  %v6726 = vadd.f32 %v6656, %v6721
  %v6727 = vadd.f32 %v6657, %v6721
  %v6728 = vadd.f32 %v6658, %v6721
  %v6729 = vadd.f32 %v6659, %v6721
  %v6730 = vadd.f32 %v6660, %v6721
  %v6731 = vadd.f32 %v6661, %v6721
  %v6732 = vadd.f32 %v6662, %v6721
  %v6733 = vadd.f32 %v6663, %v6721
  %v6734 = vadd.f32 %v6664, %v6721
  %v6735 = vadd.f32 %v6665, %v6721
  %v6736 = vadd.f32 %v6666, %v6721
  %v6737 = vadd.f32 %v6667, %v6721
  %v6738 = vadd.f32 %v6668, %v6721
  %v6739 = vadd.f32 %v6669, %v6721
  %v6740 = vadd.f32 %v6670, %v6721
  %v6741 = vadd.f32 %v6671, %v6721
  %v6742 = vadd.f32 %v6672, %v6721
  %v6743 = vadd.f32 %v6673, %v6721
  %v6744 = vadd.f32 %v6674, %v6721
  %v6745 = vadd.f32 %v6675, %v6721
  %v6746 = vadd.f32 %v6676, %v6721
  %v6747 = vadd.f32 %v6677, %v6721
  %v6748 = vadd.f32 %v6678, %v6721
  %v6749 = vadd.f32 %v6679, %v6721
  %v6750 = vadd.f32 %v6680, %v6721
  %v6751 = vadd.f32 %v6681, %v6721
  %v6752 = vadd.f32 %v6682, %v6721
  %v6753 = vadd.f32 %v6683, %v6721
  %v6754 = vadd.f32 %v6684, %v6721
  %v6755 = vadd.f32 %v6685, %v6721
  %v6756 = vadd.f32 %v6686, %v6721
  %v6757 = vadd.f32 %v6687, %v6721
  %v6758 = vadd.f32 %v6688, %v6721
  %v6759 = vadd.f32 %v6689, %v6721
  %v6760 = vadd.f32 %v6690, %v6721
  %v6761 = vadd.f32 %v6691, %v6721
  %v6762 = vadd.f32 %v6692, %v6721
  %v6763 = vadd.f32 %v6693, %v6721
  %v6764 = vadd.f32 %v6694, %v6721
  %v6765 = vadd.f32 %v6695, %v6721
  %v6766 = vadd.f32 %v6696, %v6721
  %v6767 = vadd.f32 %v6697, %v6721
  %v6768 = vadd.f32 %v6698, %v6721
  %v6769 = vadd.f32 %v6699, %v6721
  %v6770 = vadd.f32 %v6700, %v6721
  %v6771 = vadd.f32 %v6701, %v6721
  %v6772 = vadd.f32 %v6702, %v6721
  %v6773 = vadd.f32 %v6703, %v6721
  %v6774 = vadd.f32 %v6704, %v6721
  %v6775 = vadd.f32 %v6705, %v6721
  %v6776 = vadd.f32 %v6706, %v6721
  %v6777 = vadd.f32 %v6707, %v6721
  %v6778 = vadd.f32 %v6708, %v6721
  %v6779 = vadd.f32 %v6709, %v6721
  %v6780 = vadd.f32 %v6710, %v6721
  %v6781 = vadd.f32 %v6711, %v6721
  %v6782 = vadd.f32 %v6712, %v6721
  %v6783 = vadd.f32 %v6713, %v6721
  %v6784 = vadd.f32 %v6714, %v6721
  %v6785 = vadd.f32 %v6715, %v6721
  %v6786 = vadd.f32 %v6716, %v6721
  %v6787 = vmax.f32 %v6723, 0.0
  %v6788 = vmax.f32 %v6724, 0.0
  %v6789 = vmax.f32 %v6725, 0.0
  %v6790 = vmax.f32 %v6726, 0.0
  %v6791 = vmax.f32 %v6727, 0.0
  %v6792 = vmax.f32 %v6728, 0.0
  %v6793 = vmax.f32 %v6729, 0.0
  %v6794 = vmax.f32 %v6730, 0.0
  %v6795 = vmax.f32 %v6731, 0.0
  %v6796 = vmax.f32 %v6732, 0.0
  %v6797 = vmax.f32 %v6733, 0.0
  %v6798 = vmax.f32 %v6734, 0.0
  %v6799 = vmax.f32 %v6735, 0.0
  %v6800 = vmax.f32 %v6736, 0.0
  %v6801 = vmax.f32 %v6737, 0.0
  %v6802 = vmax.f32 %v6738, 0.0
  %v6803 = vmax.f32 %v6739, 0.0
  %v6804 = vmax.f32 %v6740, 0.0
  %v6805 = vmax.f32 %v6741, 0.0
  %v6806 = vmax.f32 %v6742, 0.0
  %v6807 = vmax.f32 %v6743, 0.0
  %v6808 = vmax.f32 %v6744, 0.0
  %v6809 = vmax.f32 %v6745, 0.0
  %v6810 = vmax.f32 %v6746, 0.0
  %v6811 = vmax.f32 %v6747, 0.0
  %v6812 = vmax.f32 %v6748, 0.0
  %v6813 = vmax.f32 %v6749, 0.0
  %v6814 = vmax.f32 %v6750, 0.0
  %v6815 = vmax.f32 %v6751, 0.0
  %v6816 = vmax.f32 %v6752, 0.0
  %v6817 = vmax.f32 %v6753, 0.0
  %v6818 = vmax.f32 %v6754, 0.0
  %v6819 = vmax.f32 %v6755, 0.0
  %v6820 = vmax.f32 %v6756, 0.0
  %v6821 = vmax.f32 %v6757, 0.0
  %v6822 = vmax.f32 %v6758, 0.0
  %v6823 = vmax.f32 %v6759, 0.0
  %v6824 = vmax.f32 %v6760, 0.0
  %v6825 = vmax.f32 %v6761, 0.0
  %v6826 = vmax.f32 %v6762, 0.0
  %v6827 = vmax.f32 %v6763, 0.0
  %v6828 = vmax.f32 %v6764, 0.0
  %v6829 = vmax.f32 %v6765, 0.0
  %v6830 = vmax.f32 %v6766, 0.0
  %v6831 = vmax.f32 %v6767, 0.0
  %v6832 = vmax.f32 %v6768, 0.0
  %v6833 = vmax.f32 %v6769, 0.0
  %v6834 = vmax.f32 %v6770, 0.0
  %v6835 = vmax.f32 %v6771, 0.0
  %v6836 = vmax.f32 %v6772, 0.0
  %v6837 = vmax.f32 %v6773, 0.0
  %v6838 = vmax.f32 %v6774, 0.0
  %v6839 = vmax.f32 %v6775, 0.0
  %v6840 = vmax.f32 %v6776, 0.0
  %v6841 = vmax.f32 %v6777, 0.0
  %v6842 = vmax.f32 %v6778, 0.0
  %v6843 = vmax.f32 %v6779, 0.0
  %v6844 = vmax.f32 %v6780, 0.0
  %v6845 = vmax.f32 %v6781, 0.0
  %v6846 = vmax.f32 %v6782, 0.0
  %v6847 = vmax.f32 %v6783, 0.0
  %v6848 = vmax.f32 %v6784, 0.0
  %v6849 = vmax.f32 %v6785, 0.0
  %v6850 = vmax.f32 %v6786, 0.0
  %6851 = vst [vmem:[#allocation2] sm:$0xff] 0.0
  %6852 = vst [vmem:[#allocation2 + $0x8] sm:$0xff] 0.0
  %6853 = vst [vmem:[#allocation2 + $0x10] sm:$0x3] 0.0
  %6854 = vst [vmem:[#allocation2 + $0x1b0] sm:$0xff] 0.0
  %6855 = vst [vmem:[#allocation2 + $0x1b8] sm:$0xff] 0.0
  %6856 = vst [vmem:[#allocation2 + $0x1c0] sm:$0x3] 0.0
  %s6857 = scalar_lea.vmem [#allocation2], 408
  %6858 = vst [vmem:[%s6857] sm:$0xff] 0.0
  %6859 = vst [vmem:[%s6857 + $0x8] sm:$0xff] 0.0
  %6860 = vst [vmem:[%s6857 + $0x10] sm:$0x3] 0.0
  %6861 = vst [vmem:[%s6857 + $0x1b0] sm:$0xff] 0.0
  %6862 = vst [vmem:[%s6857 + $0x1b8] sm:$0xff] 0.0
  %6863 = vst [vmem:[%s6857 + $0x1c0] sm:$0x3] 0.0
  %s6864 = scalar_lea.vmem [#allocation2], 24
  %6865 = vst [vmem:[%s6864] sm:$0x1] 0.0
  %6866 = vst [vmem:[%s6864 + $0x18] sm:$0x1] 0.0
  %6867 = vst [vmem:[%s6864 + $0x30] sm:$0x1] 0.0
  %6868 = vst [vmem:[%s6864 + $0x48] sm:$0x1] 0.0
  %6869 = vst [vmem:[%s6864 + $0x60] sm:$0x1] 0.0
  %6870 = vst [vmem:[%s6864 + $0x78] sm:$0x1] 0.0
  %6871 = vst [vmem:[%s6864 + $0x90] sm:$0x1] 0.0
  %6872 = vst [vmem:[%s6864 + $0xa8] sm:$0x1] 0.0
  %6873 = vst [vmem:[%s6864 + $0xc0] sm:$0x1] 0.0
  %6874 = vst [vmem:[%s6864 + $0xd8] sm:$0x1] 0.0
  %6875 = vst [vmem:[%s6864 + $0xf0] sm:$0x1] 0.0
  %6876 = vst [vmem:[%s6864 + $0x108] sm:$0x1] 0.0
  %6877 = vst [vmem:[%s6864 + $0x120] sm:$0x1] 0.0
  %6878 = vst [vmem:[%s6864 + $0x138] sm:$0x1] 0.0
  %6879 = vst [vmem:[%s6864 + $0x150] sm:$0x1] 0.0
  %6880 = vst [vmem:[%s6864 + $0x168] sm:$0x1] 0.0
  %6881 = vst [vmem:[%s6864 + $0x1b0] sm:$0x1] 0.0
  %6882 = vst [vmem:[%s6864 + $0x1c8] sm:$0x1] 0.0
  %6883 = vst [vmem:[%s6864 + $0x1e0] sm:$0x1] 0.0
  %6884 = vst [vmem:[%s6864 + $0x1f8] sm:$0x1] 0.0
  %6885 = vst [vmem:[%s6864 + $0x210] sm:$0x1] 0.0
  %6886 = vst [vmem:[%s6864 + $0x228] sm:$0x1] 0.0
  %6887 = vst [vmem:[%s6864 + $0x240] sm:$0x1] 0.0
  %6888 = vst [vmem:[%s6864 + $0x258] sm:$0x1] 0.0
  %6889 = vst [vmem:[%s6864 + $0x270] sm:$0x1] 0.0
  %6890 = vst [vmem:[%s6864 + $0x288] sm:$0x1] 0.0
  %6891 = vst [vmem:[%s6864 + $0x2a0] sm:$0x1] 0.0
  %6892 = vst [vmem:[%s6864 + $0x2b8] sm:$0x1] 0.0
  %6893 = vst [vmem:[%s6864 + $0x2d0] sm:$0x1] 0.0
  %6894 = vst [vmem:[%s6864 + $0x2e8] sm:$0x1] 0.0
  %6895 = vst [vmem:[%s6864 + $0x300] sm:$0x1] 0.0
  %6896 = vst [vmem:[%s6864 + $0x318] sm:$0x1] 0.0
  %6897 = vst [vmem:[%s6864 + $0x11] sm:$0x1] 0.0
  %6898 = vst [vmem:[%s6864 + $0x29] sm:$0x1] 0.0
  %6899 = vst [vmem:[%s6864 + $0x41] sm:$0x1] 0.0
  %6900 = vst [vmem:[%s6864 + $0x59] sm:$0x1] 0.0
  %6901 = vst [vmem:[%s6864 + $0x71] sm:$0x1] 0.0
  %6902 = vst [vmem:[%s6864 + $0x89] sm:$0x1] 0.0
  %6903 = vst [vmem:[%s6864 + $0xa1] sm:$0x1] 0.0
  %6904 = vst [vmem:[%s6864 + $0xb9] sm:$0x1] 0.0
  %6905 = vst [vmem:[%s6864 + $0xd1] sm:$0x1] 0.0
  %6906 = vst [vmem:[%s6864 + $0xe9] sm:$0x1] 0.0
  %6907 = vst [vmem:[%s6864 + $0x101] sm:$0x1] 0.0
  %6908 = vst [vmem:[%s6864 + $0x119] sm:$0x1] 0.0
  %6909 = vst [vmem:[%s6864 + $0x131] sm:$0x1] 0.0
  %6910 = vst [vmem:[%s6864 + $0x149] sm:$0x1] 0.0
  %6911 = vst [vmem:[%s6864 + $0x161] sm:$0x1] 0.0
  %6912 = vst [vmem:[%s6864 + $0x179] sm:$0x1] 0.0
  %6913 = vst [vmem:[%s6864 + $0x1c1] sm:$0x1] 0.0
  %6914 = vst [vmem:[%s6864 + $0x1d9] sm:$0x1] 0.0
  %6915 = vst [vmem:[%s6864 + $0x1f1] sm:$0x1] 0.0
  %6916 = vst [vmem:[%s6864 + $0x209] sm:$0x1] 0.0
  %6917 = vst [vmem:[%s6864 + $0x221] sm:$0x1] 0.0
  %6918 = vst [vmem:[%s6864 + $0x239] sm:$0x1] 0.0
  %6919 = vst [vmem:[%s6864 + $0x251] sm:$0x1] 0.0
  %6920 = vst [vmem:[%s6864 + $0x269] sm:$0x1] 0.0
  %6921 = vst [vmem:[%s6864 + $0x281] sm:$0x1] 0.0
  %6922 = vst [vmem:[%s6864 + $0x299] sm:$0x1] 0.0
  %6923 = vst [vmem:[%s6864 + $0x2b1] sm:$0x1] 0.0
  %6924 = vst [vmem:[%s6864 + $0x2c9] sm:$0x1] 0.0
  %6925 = vst [vmem:[%s6864 + $0x2e1] sm:$0x1] 0.0
  %6926 = vst [vmem:[%s6864 + $0x2f9] sm:$0x1] 0.0
  %6927 = vst [vmem:[%s6864 + $0x311] sm:$0x1] 0.0
  %6928 = vst [vmem:[%s6864 + $0x329] sm:$0x1] 0.0
  %6929 = vst [vmem:[%s6864 + $0x1] sm:$0xff] %v6787
  %6930 = vst [vmem:[%s6864 + $0x9] sm:$0xff] %v6788
  %6931 = vst [vmem:[%s6864 + $0x19] sm:$0xff] %v6789
  %6932 = vst [vmem:[%s6864 + $0x21] sm:$0xff] %v6790
  %6933 = vst [vmem:[%s6864 + $0x31] sm:$0xff] %v6791
  %6934 = vst [vmem:[%s6864 + $0x39] sm:$0xff] %v6792
  %6935 = vst [vmem:[%s6864 + $0x49] sm:$0xff] %v6793
  %6936 = vst [vmem:[%s6864 + $0x51] sm:$0xff] %v6794
  %6937 = vst [vmem:[%s6864 + $0x61] sm:$0xff] %v6795
  %6938 = vst [vmem:[%s6864 + $0x69] sm:$0xff] %v6796
  %6939 = vst [vmem:[%s6864 + $0x79] sm:$0xff] %v6797
  %6940 = vst [vmem:[%s6864 + $0x81] sm:$0xff] %v6798
  %6941 = vst [vmem:[%s6864 + $0x91] sm:$0xff] %v6799
  %6942 = vst [vmem:[%s6864 + $0x99] sm:$0xff] %v6800
  %6943 = vst [vmem:[%s6864 + $0xa9] sm:$0xff] %v6801
  %6944 = vst [vmem:[%s6864 + $0xb1] sm:$0xff] %v6802
  %6945 = vst [vmem:[%s6864 + $0xc1] sm:$0xff] %v6803
  %6946 = vst [vmem:[%s6864 + $0xc9] sm:$0xff] %v6804
  %6947 = vst [vmem:[%s6864 + $0xd9] sm:$0xff] %v6805
  %6948 = vst [vmem:[%s6864 + $0xe1] sm:$0xff] %v6806
  %6949 = vst [vmem:[%s6864 + $0xf1] sm:$0xff] %v6807
  %6950 = vst [vmem:[%s6864 + $0xf9] sm:$0xff] %v6808
  %6951 = vst [vmem:[%s6864 + $0x109] sm:$0xff] %v6809
  %6952 = vst [vmem:[%s6864 + $0x111] sm:$0xff] %v6810
  %6953 = vst [vmem:[%s6864 + $0x121] sm:$0xff] %v6811
  %6954 = vst [vmem:[%s6864 + $0x129] sm:$0xff] %v6812
  %6955 = vst [vmem:[%s6864 + $0x139] sm:$0xff] %v6813
  %6956 = vst [vmem:[%s6864 + $0x141] sm:$0xff] %v6814
  %6957 = vst [vmem:[%s6864 + $0x151] sm:$0xff] %v6815
  %6958 = vst [vmem:[%s6864 + $0x159] sm:$0xff] %v6816
  %6959 = vst [vmem:[%s6864 + $0x169] sm:$0xff] %v6817
  %6960 = vst [vmem:[%s6864 + $0x171] sm:$0xff] %v6818
  %6961 = vst [vmem:[%s6864 + $0x1b1] sm:$0xff] %v6819
  %6962 = vst [vmem:[%s6864 + $0x1b9] sm:$0xff] %v6820
  %6963 = vst [vmem:[%s6864 + $0x1c9] sm:$0xff] %v6821
  %6964 = vst [vmem:[%s6864 + $0x1d1] sm:$0xff] %v6822
  %6965 = vst [vmem:[%s6864 + $0x1e1] sm:$0xff] %v6823
  %6966 = vst [vmem:[%s6864 + $0x1e9] sm:$0xff] %v6824
  %6967 = vst [vmem:[%s6864 + $0x1f9] sm:$0xff] %v6825
  %6968 = vst [vmem:[%s6864 + $0x201] sm:$0xff] %v6826
  %6969 = vst [vmem:[%s6864 + $0x211] sm:$0xff] %v6827
  %6970 = vst [vmem:[%s6864 + $0x219] sm:$0xff] %v6828
  %6971 = vst [vmem:[%s6864 + $0x229] sm:$0xff] %v6829
  %6972 = vst [vmem:[%s6864 + $0x231] sm:$0xff] %v6830
  %6973 = vst [vmem:[%s6864 + $0x241] sm:$0xff] %v6831
  %6974 = vst [vmem:[%s6864 + $0x249] sm:$0xff] %v6832
  %6975 = vst [vmem:[%s6864 + $0x259] sm:$0xff] %v6833
  %6976 = vst [vmem:[%s6864 + $0x261] sm:$0xff] %v6834
  %6977 = vst [vmem:[%s6864 + $0x271] sm:$0xff] %v6835
  %6978 = vst [vmem:[%s6864 + $0x279] sm:$0xff] %v6836
  %6979 = vst [vmem:[%s6864 + $0x289] sm:$0xff] %v6837
  %6980 = vst [vmem:[%s6864 + $0x291] sm:$0xff] %v6838
  %6981 = vst [vmem:[%s6864 + $0x2a1] sm:$0xff] %v6839
  %6982 = vst [vmem:[%s6864 + $0x2a9] sm:$0xff] %v6840
  %6983 = vst [vmem:[%s6864 + $0x2b9] sm:$0xff] %v6841
  %6984 = vst [vmem:[%s6864 + $0x2c1] sm:$0xff] %v6842
  %6985 = vst [vmem:[%s6864 + $0x2d1] sm:$0xff] %v6843
  %6986 = vst [vmem:[%s6864 + $0x2d9] sm:$0xff] %v6844
  %6987 = vst [vmem:[%s6864 + $0x2e9] sm:$0xff] %v6845
  %6988 = vst [vmem:[%s6864 + $0x2f1] sm:$0xff] %v6846
  %6989 = vst [vmem:[%s6864 + $0x301] sm:$0xff] %v6847
  %6990 = vst [vmem:[%s6864 + $0x309] sm:$0xff] %v6848
  %6991 = vst [vmem:[%s6864 + $0x319] sm:$0xff] %v6849
  %6992 = vst [vmem:[%s6864 + $0x321] sm:$0xff] %v6850
  %v6993 = vld [vmem:[#allocation2] sm:$0xff]
  %v6994 = vld [vmem:[#allocation2 + $0x8] sm:$0xff]
  %v6995 = vld [vmem:[#allocation2 + $0x18] sm:$0xff]
  %v6996 = vld [vmem:[#allocation2 + $0x20] sm:$0xff]
  %v6997 = vld [vmem:[#allocation2 + $0x30] sm:$0xff]
  %v6998 = vld [vmem:[#allocation2 + $0x38] sm:$0xff]
  %v6999 = vld [vmem:[#allocation2 + $0x48] sm:$0xff]
  %v7000 = vld [vmem:[#allocation2 + $0x50] sm:$0xff]
  %v7001 = vld [vmem:[#allocation2 + $0x60] sm:$0xff]
  %v7002 = vld [vmem:[#allocation2 + $0x68] sm:$0xff]
  %v7003 = vld [vmem:[#allocation2 + $0x78] sm:$0xff]
  %v7004 = vld [vmem:[#allocation2 + $0x80] sm:$0xff]
  %v7005 = vld [vmem:[#allocation2 + $0x90] sm:$0xff]
  %v7006 = vld [vmem:[#allocation2 + $0x98] sm:$0xff]
  %v7007 = vld [vmem:[#allocation2 + $0xa8] sm:$0xff]
  %v7008 = vld [vmem:[#allocation2 + $0xb0] sm:$0xff]
  %v7009 = vld [vmem:[#allocation2 + $0xc0] sm:$0xff]
  %v7010 = vld [vmem:[#allocation2 + $0xc8] sm:$0xff]
  %v7011 = vld [vmem:[#allocation2 + $0xd8] sm:$0xff]
  %v7012 = vld [vmem:[#allocation2 + $0xe0] sm:$0xff]
  %v7013 = vld [vmem:[#allocation2 + $0xf0] sm:$0xff]
  %v7014 = vld [vmem:[#allocation2 + $0xf8] sm:$0xff]
  %v7015 = vld [vmem:[#allocation2 + $0x108] sm:$0xff]
  %v7016 = vld [vmem:[#allocation2 + $0x110] sm:$0xff]
  %v7017 = vld [vmem:[#allocation2 + $0x120] sm:$0xff]
  %v7018 = vld [vmem:[#allocation2 + $0x128] sm:$0xff]
  %v7019 = vld [vmem:[#allocation2 + $0x138] sm:$0xff]
  %v7020 = vld [vmem:[#allocation2 + $0x140] sm:$0xff]
  %v7021 = vld [vmem:[#allocation2 + $0x150] sm:$0xff]
  %v7022 = vld [vmem:[#allocation2 + $0x158] sm:$0xff]
  %v7023 = vld [vmem:[#allocation2 + $0x168] sm:$0xff]
  %v7024 = vld [vmem:[#allocation2 + $0x170] sm:$0xff]
  %v7025 = vld [vmem:[#allocation2 + $0x1b0] sm:$0xff]
  %v7026 = vld [vmem:[#allocation2 + $0x1b8] sm:$0xff]
  %v7027 = vld [vmem:[#allocation2 + $0x1c8] sm:$0xff]
  %v7028 = vld [vmem:[#allocation2 + $0x1d0] sm:$0xff]
  %v7029 = vld [vmem:[#allocation2 + $0x1e0] sm:$0xff]
  %v7030 = vld [vmem:[#allocation2 + $0x1e8] sm:$0xff]
  %v7031 = vld [vmem:[#allocation2 + $0x1f8] sm:$0xff]
  %v7032 = vld [vmem:[#allocation2 + $0x200] sm:$0xff]
  %v7033 = vld [vmem:[#allocation2 + $0x210] sm:$0xff]
  %v7034 = vld [vmem:[#allocation2 + $0x218] sm:$0xff]
  %v7035 = vld [vmem:[#allocation2 + $0x228] sm:$0xff]
  %v7036 = vld [vmem:[#allocation2 + $0x230] sm:$0xff]
  %v7037 = vld [vmem:[#allocation2 + $0x240] sm:$0xff]
  %v7038 = vld [vmem:[#allocation2 + $0x248] sm:$0xff]
  %v7039 = vld [vmem:[#allocation2 + $0x258] sm:$0xff]
  %v7040 = vld [vmem:[#allocation2 + $0x260] sm:$0xff]
  %v7041 = vld [vmem:[#allocation2 + $0x270] sm:$0xff]
  %v7042 = vld [vmem:[#allocation2 + $0x278] sm:$0xff]
  %v7043 = vld [vmem:[#allocation2 + $0x288] sm:$0xff]
  %v7044 = vld [vmem:[#allocation2 + $0x290] sm:$0xff]
  %v7045 = vld [vmem:[#allocation2 + $0x2a0] sm:$0xff]
  %v7046 = vld [vmem:[#allocation2 + $0x2a8] sm:$0xff]
  %v7047 = vld [vmem:[#allocation2 + $0x2b8] sm:$0xff]
  %v7048 = vld [vmem:[#allocation2 + $0x2c0] sm:$0xff]
  %v7049 = vld [vmem:[#allocation2 + $0x2d0] sm:$0xff]
  %v7050 = vld [vmem:[#allocation2 + $0x2d8] sm:$0xff]
  %v7051 = vld [vmem:[#allocation2 + $0x2e8] sm:$0xff]
  %v7052 = vld [vmem:[#allocation2 + $0x2f0] sm:$0xff]
  %v7053 = vld [vmem:[#allocation2 + $0x300] sm:$0xff]
  %v7054 = vld [vmem:[#allocation2 + $0x308] sm:$0xff]
  %v7055 = vld [vmem:[#allocation2 + $0x318] sm:$0xff]
  %v7056 = vld [vmem:[#allocation2 + $0x320] sm:$0xff]
  %v7057 = vld [vmem:[%s4] sm:$0xff]
  %v7058 = vld [vmem:[%s4 + $0x8] sm:$0xff]
  %v7059 = vld [vmem:[%s4 + $0x10] sm:$0xff]
  %v7060 = vld [vmem:[%s4 + $0x18] sm:$0xff]
  %v7061 = vld [vmem:[%s4 + $0x20] sm:$0xff]
  %v7062 = vld [vmem:[%s4 + $0x28] sm:$0xff]
  %v7063 = vld [vmem:[%s4 + $0x30] sm:$0xff]
  %v7064 = vld [vmem:[%s4 + $0x38] sm:$0xff]
  %v7065 = vld [vmem:[%s4 + $0x40] sm:$0xff]
  %v7066 = vld [vmem:[%s4 + $0x48] sm:$0xff]
  %v7067 = vld [vmem:[%s4 + $0x50] sm:$0xff]
  %v7068 = vld [vmem:[%s4 + $0x58] sm:$0xff]
  %v7069 = vld [vmem:[%s4 + $0x60] sm:$0xff]
  %v7070 = vld [vmem:[%s4 + $0x68] sm:$0xff]
  %v7071 = vld [vmem:[%s4 + $0x70] sm:$0xff]
  %v7072 = vld [vmem:[%s4 + $0x78] sm:$0xff]
  %v7073 = vld [vmem:[#allocation2 + $0x1] sm:$0xff]
  %v7074 = vld [vmem:[#allocation2 + $0x9] sm:$0xff]
  %v7075 = vld [vmem:[#allocation2 + $0x19] sm:$0xff]
  %v7076 = vld [vmem:[#allocation2 + $0x21] sm:$0xff]
  %v7077 = vld [vmem:[#allocation2 + $0x31] sm:$0xff]
  %v7078 = vld [vmem:[#allocation2 + $0x39] sm:$0xff]
  %v7079 = vld [vmem:[#allocation2 + $0x49] sm:$0xff]
  %v7080 = vld [vmem:[#allocation2 + $0x51] sm:$0xff]
  %v7081 = vld [vmem:[#allocation2 + $0x61] sm:$0xff]
  %v7082 = vld [vmem:[#allocation2 + $0x69] sm:$0xff]
  %v7083 = vld [vmem:[#allocation2 + $0x79] sm:$0xff]
  %v7084 = vld [vmem:[#allocation2 + $0x81] sm:$0xff]
  %v7085 = vld [vmem:[#allocation2 + $0x91] sm:$0xff]
  %v7086 = vld [vmem:[#allocation2 + $0x99] sm:$0xff]
  %v7087 = vld [vmem:[#allocation2 + $0xa9] sm:$0xff]
  %v7088 = vld [vmem:[#allocation2 + $0xb1] sm:$0xff]
  %v7089 = vld [vmem:[#allocation2 + $0xc1] sm:$0xff]
  %v7090 = vld [vmem:[#allocation2 + $0xc9] sm:$0xff]
  %v7091 = vld [vmem:[#allocation2 + $0xd9] sm:$0xff]
  %v7092 = vld [vmem:[#allocation2 + $0xe1] sm:$0xff]
  %v7093 = vld [vmem:[#allocation2 + $0xf1] sm:$0xff]
  %v7094 = vld [vmem:[#allocation2 + $0xf9] sm:$0xff]
  %v7095 = vld [vmem:[#allocation2 + $0x109] sm:$0xff]
  %v7096 = vld [vmem:[#allocation2 + $0x111] sm:$0xff]
  %v7097 = vld [vmem:[#allocation2 + $0x121] sm:$0xff]
  %v7098 = vld [vmem:[#allocation2 + $0x129] sm:$0xff]
  %v7099 = vld [vmem:[#allocation2 + $0x139] sm:$0xff]
  %v7100 = vld [vmem:[#allocation2 + $0x141] sm:$0xff]
  %v7101 = vld [vmem:[#allocation2 + $0x151] sm:$0xff]
  %v7102 = vld [vmem:[#allocation2 + $0x159] sm:$0xff]
  %v7103 = vld [vmem:[#allocation2 + $0x169] sm:$0xff]
  %v7104 = vld [vmem:[#allocation2 + $0x171] sm:$0xff]
  %v7105 = vld [vmem:[#allocation2 + $0x1b1] sm:$0xff]
  %v7106 = vld [vmem:[#allocation2 + $0x1b9] sm:$0xff]
  %v7107 = vld [vmem:[#allocation2 + $0x1c9] sm:$0xff]
  %v7108 = vld [vmem:[#allocation2 + $0x1d1] sm:$0xff]
  %v7109 = vld [vmem:[#allocation2 + $0x1e1] sm:$0xff]
  %v7110 = vld [vmem:[#allocation2 + $0x1e9] sm:$0xff]
  %v7111 = vld [vmem:[#allocation2 + $0x1f9] sm:$0xff]
  %v7112 = vld [vmem:[#allocation2 + $0x201] sm:$0xff]
  %v7113 = vld [vmem:[#allocation2 + $0x211] sm:$0xff]
  %v7114 = vld [vmem:[#allocation2 + $0x219] sm:$0xff]
  %v7115 = vld [vmem:[#allocation2 + $0x229] sm:$0xff]
  %v7116 = vld [vmem:[#allocation2 + $0x231] sm:$0xff]
  %v7117 = vld [vmem:[#allocation2 + $0x241] sm:$0xff]
  %v7118 = vld [vmem:[#allocation2 + $0x249] sm:$0xff]
  %v7119 = vld [vmem:[#allocation2 + $0x259] sm:$0xff]
  %v7120 = vld [vmem:[#allocation2 + $0x261] sm:$0xff]
  %v7121 = vld [vmem:[#allocation2 + $0x271] sm:$0xff]
  %v7122 = vld [vmem:[#allocation2 + $0x279] sm:$0xff]
  %v7123 = vld [vmem:[#allocation2 + $0x289] sm:$0xff]
  %v7124 = vld [vmem:[#allocation2 + $0x291] sm:$0xff]
  %v7125 = vld [vmem:[#allocation2 + $0x2a1] sm:$0xff]
  %v7126 = vld [vmem:[#allocation2 + $0x2a9] sm:$0xff]
  %v7127 = vld [vmem:[#allocation2 + $0x2b9] sm:$0xff]
  %v7128 = vld [vmem:[#allocation2 + $0x2c1] sm:$0xff]
  %v7129 = vld [vmem:[#allocation2 + $0x2d1] sm:$0xff]
  %v7130 = vld [vmem:[#allocation2 + $0x2d9] sm:$0xff]
  %v7131 = vld [vmem:[#allocation2 + $0x2e9] sm:$0xff]
  %v7132 = vld [vmem:[#allocation2 + $0x2f1] sm:$0xff]
  %v7133 = vld [vmem:[#allocation2 + $0x301] sm:$0xff]
  %v7134 = vld [vmem:[#allocation2 + $0x309] sm:$0xff]
  %v7135 = vld [vmem:[#allocation2 + $0x319] sm:$0xff]
  %v7136 = vld [vmem:[#allocation2 + $0x321] sm:$0xff]
  %s7137 = scalar_lea.vmem %s4, 128
  %v7138 = vld [vmem:[%s7137] sm:$0xff]
  %v7139 = vld [vmem:[%s7137 + $0x8] sm:$0xff]
  %v7140 = vld [vmem:[%s7137 + $0x10] sm:$0xff]
  %v7141 = vld [vmem:[%s7137 + $0x18] sm:$0xff]
  %v7142 = vld [vmem:[%s7137 + $0x20] sm:$0xff]
  %v7143 = vld [vmem:[%s7137 + $0x28] sm:$0xff]
  %v7144 = vld [vmem:[%s7137 + $0x30] sm:$0xff]
  %v7145 = vld [vmem:[%s7137 + $0x38] sm:$0xff]
  %v7146 = vld [vmem:[%s7137 + $0x40] sm:$0xff]
  %v7147 = vld [vmem:[%s7137 + $0x48] sm:$0xff]
  %v7148 = vld [vmem:[%s7137 + $0x50] sm:$0xff]
  %v7149 = vld [vmem:[%s7137 + $0x58] sm:$0xff]
  %v7150 = vld [vmem:[%s7137 + $0x60] sm:$0xff]
  %v7151 = vld [vmem:[%s7137 + $0x68] sm:$0xff]
  %v7152 = vld [vmem:[%s7137 + $0x70] sm:$0xff]
  %v7153 = vld [vmem:[%s7137 + $0x78] sm:$0xff]
  %7154 = vmatprep.subr.mxu0 0.0
  %7155 = vmatpush1.msra.mxu0 %v7138
  %7156 = vmatprep.subr.mxu0 0.0
  %7157 = vmatpush1.msra.mxu0 %v7139
  %7158 = vmatprep.subr.mxu0 0.0
  %7159 = vmatpush1.msra.mxu0 %v7140
  %7160 = vmatprep.subr.mxu0 0.0
  %7161 = vmatpush1.msra.mxu0 %v7141
  %7162 = vmatprep.subr.mxu0 0.0
  %7163 = vmatpush1.msra.mxu0 %v7142
  %7164 = vmatprep.subr.mxu0 0.0
  %7165 = vmatpush1.msra.mxu0 %v7143
  %7166 = vmatprep.subr.mxu0 0.0
  %7167 = vmatpush1.msra.mxu0 %v7144
  %7168 = vmatprep.subr.mxu0 0.0
  %7169 = vmatpush1.msra.mxu0 %v7145
  %7170 = vmatprep.subr.mxu0 0.0
  %7171 = vmatpush1.msra.mxu0 %v7146
  %7172 = vmatprep.subr.mxu0 0.0
  %7173 = vmatpush1.msra.mxu0 %v7147
  %7174 = vmatprep.subr.mxu0 0.0
  %7175 = vmatpush1.msra.mxu0 %v7148
  %7176 = vmatprep.subr.mxu0 0.0
  %7177 = vmatpush1.msra.mxu0 %v7149
  %7178 = vmatprep.subr.mxu0 0.0
  %7179 = vmatpush1.msra.mxu0 %v7150
  %7180 = vmatprep.subr.mxu0 0.0
  %7181 = vmatpush1.msra.mxu0 %v7151
  %7182 = vmatprep.subr.mxu0 0.0
  %7183 = vmatpush1.msra.mxu0 %v7152
  %7184 = vmatprep.subr.mxu0 0.0
  %7185 = vmatpush1.msra.mxu0 %v7153
  %7186 = vmatprep.subr.mxu0 0.0
  %7187 = vmatpush1.msra.mxu0 0.0
  %7188 = vmatprep.subr.mxu0 0.0
  %7189 = vmatpush1.msra.mxu0 0.0
  %7190 = vmatprep.subr.mxu0 0.0
  %7191 = vmatpush1.msra.mxu0 0.0
  %7192 = vmatprep.subr.mxu0 0.0
  %7193 = vmatpush1.msra.mxu0 0.0
  %7194 = vmatprep.subr.mxu0 0.0
  %7195 = vmatpush1.msra.mxu0 0.0
  %7196 = vmatprep.subr.mxu0 0.0
  %7197 = vmatpush1.msra.mxu0 0.0
  %7198 = vmatprep.subr.mxu0 0.0
  %7199 = vmatpush1.msra.mxu0 0.0
  %7200 = vmatprep.subr.mxu0 0.0
  %7201 = vmatpush1.msra.mxu0 0.0
  %7202 = vmatprep.subr.mxu0 0.0
  %7203 = vmatpush1.msra.mxu0 0.0
  %7204 = vmatprep.subr.mxu0 0.0
  %7205 = vmatpush1.msra.mxu0 0.0
  %7206 = vmatprep.subr.mxu0 0.0
  %7207 = vmatpush1.msra.mxu0 0.0
  %7208 = vmatprep.subr.mxu0 0.0
  %7209 = vmatpush1.msra.mxu0 0.0
  %7210 = vmatprep.subr.mxu0 0.0
  %7211 = vmatpush1.msra.mxu0 0.0
  %7212 = vmatprep.subr.mxu0 0.0
  %7213 = vmatpush1.msra.mxu0 0.0
  %7214 = vmatprep.subr.mxu0 0.0
  %7215 = vmatpush1.msra.mxu0 0.0
  %7216 = vmatprep.subr.mxu0 0.0
  %7217 = vmatpush1.msra.mxu0 0.0
  %7218 = vmatprep.mubr.f32.mxu0 0.0
  %7219 = vmatmul.mubr.f32.gmra.mrb[0].mxu0 %v7073
  %v7220 = vpop.f32.mrb[0].mxu0
  %v7221 = vadd.f32 0.0, %v7220
  %v7222 = vpop.f32.mrb[0].mxu0
  %7223 = vmatprep.mubr.f32.mxu0 0.0
  %7224 = vmatmul.mubr.f32.gmra.mrb[0].mxu0 %v7074
  %v7225 = vpop.f32.mrb[0].mxu0
  %v7226 = vadd.f32 0.0, %v7225
  %v7227 = vpop.f32.mrb[0].mxu0
  %7228 = vmatprep.mubr.f32.mxu0 0.0
  %7229 = vmatmul.mubr.f32.gmra.mrb[0].mxu0 %v7075
  %v7230 = vpop.f32.mrb[0].mxu0
  %v7231 = vadd.f32 0.0, %v7230
  %v7232 = vpop.f32.mrb[0].mxu0
  %7233 = vmatprep.mubr.f32.mxu0 0.0
  %7234 = vmatmul.mubr.f32.gmra.mrb[0].mxu0 %v7076
  %v7235 = vpop.f32.mrb[0].mxu0
  %v7236 = vadd.f32 0.0, %v7235
  %v7237 = vpop.f32.mrb[0].mxu0
  %7238 = vmatprep.mubr.f32.mxu0 0.0
  %7239 = vmatmul.mubr.f32.gmra.mrb[0].mxu0 %v7077
  %v7240 = vpop.f32.mrb[0].mxu0
  %v7241 = vadd.f32 0.0, %v7240
  %v7242 = vpop.f32.mrb[0].mxu0
  %7243 = vmatprep.mubr.f32.mxu0 0.0
  %7244 = vmatmul.mubr.f32.gmra.mrb[0].mxu0 %v7078
  %v7245 = vpop.f32.mrb[0].mxu0
  %v7246 = vadd.f32 0.0, %v7245
  %v7247 = vpop.f32.mrb[0].mxu0
  %7248 = vmatprep.mubr.f32.mxu0 0.0
  %7249 = vmatmul.mubr.f32.gmra.mrb[0].mxu0 %v7079
  %v7250 = vpop.f32.mrb[0].mxu0
  %v7251 = vadd.f32 0.0, %v7250
  %v7252 = vpop.f32.mrb[0].mxu0
  %7253 = vmatprep.mubr.f32.mxu0 0.0
  %7254 = vmatmul.mubr.f32.gmra.mrb[0].mxu0 %v7080
  %v7255 = vpop.f32.mrb[0].mxu0
  %v7256 = vadd.f32 0.0, %v7255
  %v7257 = vpop.f32.mrb[0].mxu0
  %7258 = vmatprep.mubr.f32.mxu0 0.0
  %7259 = vmatmul.mubr.f32.gmra.mrb[0].mxu0 %v7081
  %v7260 = vpop.f32.mrb[0].mxu0
  %v7261 = vadd.f32 0.0, %v7260
  %v7262 = vpop.f32.mrb[0].mxu0
  %7263 = vmatprep.mubr.f32.mxu0 0.0
  %7264 = vmatmul.mubr.f32.gmra.mrb[0].mxu0 %v7082
  %v7265 = vpop.f32.mrb[0].mxu0
  %v7266 = vadd.f32 0.0, %v7265
  %v7267 = vpop.f32.mrb[0].mxu0
  %7268 = vmatprep.mubr.f32.mxu0 0.0
  %7269 = vmatmul.mubr.f32.gmra.mrb[0].mxu0 %v7083
  %v7270 = vpop.f32.mrb[0].mxu0
  %v7271 = vadd.f32 0.0, %v7270
  %v7272 = vpop.f32.mrb[0].mxu0
  %7273 = vmatprep.mubr.f32.mxu0 0.0
  %7274 = vmatmul.mubr.f32.gmra.mrb[0].mxu0 %v7084
  %v7275 = vpop.f32.mrb[0].mxu0
  %v7276 = vadd.f32 0.0, %v7275
  %v7277 = vpop.f32.mrb[0].mxu0
  %7278 = vmatprep.mubr.f32.mxu0 0.0
  %7279 = vmatmul.mubr.f32.gmra.mrb[0].mxu0 %v7085
  %v7280 = vpop.f32.mrb[0].mxu0
  %v7281 = vadd.f32 0.0, %v7280
  %v7282 = vpop.f32.mrb[0].mxu0
  %7283 = vmatprep.mubr.f32.mxu0 0.0
  %7284 = vmatmul.mubr.f32.gmra.mrb[0].mxu0 %v7086
  %v7285 = vpop.f32.mrb[0].mxu0
  %v7286 = vadd.f32 0.0, %v7285
  %v7287 = vpop.f32.mrb[0].mxu0
  %7288 = vmatprep.mubr.f32.mxu0 0.0
  %7289 = vmatmul.mubr.f32.gmra.mrb[0].mxu0 %v7087
  %v7290 = vpop.f32.mrb[0].mxu0
  %v7291 = vadd.f32 0.0, %v7290
  %v7292 = vpop.f32.mrb[0].mxu0
  %7293 = vmatprep.mubr.f32.mxu0 0.0
  %7294 = vmatmul.mubr.f32.gmra.mrb[0].mxu0 %v7088
  %v7295 = vpop.f32.mrb[0].mxu0
  %v7296 = vadd.f32 0.0, %v7295
  %v7297 = vpop.f32.mrb[0].mxu0
  %7298 = vmatprep.mubr.f32.mxu0 0.0
  %7299 = vmatmul.mubr.f32.gmra.mrb[0].mxu0 %v7089
  %v7300 = vpop.f32.mrb[0].mxu0
  %v7301 = vadd.f32 0.0, %v7300
  %v7302 = vpop.f32.mrb[0].mxu0
  %7303 = vmatprep.mubr.f32.mxu0 0.0
  %7304 = vmatmul.mubr.f32.gmra.mrb[0].mxu0 %v7090
  %v7305 = vpop.f32.mrb[0].mxu0
  %v7306 = vadd.f32 0.0, %v7305
  %v7307 = vpop.f32.mrb[0].mxu0
  %7308 = vmatprep.mubr.f32.mxu0 0.0
  %7309 = vmatmul.mubr.f32.gmra.mrb[0].mxu0 %v7091
  %v7310 = vpop.f32.mrb[0].mxu0
  %v7311 = vadd.f32 0.0, %v7310
  %v7312 = vpop.f32.mrb[0].mxu0
  %7313 = vmatprep.mubr.f32.mxu0 0.0
  %7314 = vmatmul.mubr.f32.gmra.mrb[0].mxu0 %v7092
  %v7315 = vpop.f32.mrb[0].mxu0
  %v7316 = vadd.f32 0.0, %v7315
  %v7317 = vpop.f32.mrb[0].mxu0
  %7318 = vmatprep.mubr.f32.mxu0 0.0
  %7319 = vmatmul.mubr.f32.gmra.mrb[0].mxu0 %v7093
  %v7320 = vpop.f32.mrb[0].mxu0
  %v7321 = vadd.f32 0.0, %v7320
  %v7322 = vpop.f32.mrb[0].mxu0
  %7323 = vmatprep.mubr.f32.mxu0 0.0
  %7324 = vmatmul.mubr.f32.gmra.mrb[0].mxu0 %v7094
  %v7325 = vpop.f32.mrb[0].mxu0
  %v7326 = vadd.f32 0.0, %v7325
  %v7327 = vpop.f32.mrb[0].mxu0
  %7328 = vmatprep.mubr.f32.mxu0 0.0
  %7329 = vmatmul.mubr.f32.gmra.mrb[0].mxu0 %v7095
  %v7330 = vpop.f32.mrb[0].mxu0
  %v7331 = vadd.f32 0.0, %v7330
  %v7332 = vpop.f32.mrb[0].mxu0
  %7333 = vmatprep.mubr.f32.mxu0 0.0
  %7334 = vmatmul.mubr.f32.gmra.mrb[0].mxu0 %v7096
  %v7335 = vpop.f32.mrb[0].mxu0
  %v7336 = vadd.f32 0.0, %v7335
  %v7337 = vpop.f32.mrb[0].mxu0
  %7338 = vmatprep.mubr.f32.mxu0 0.0
  %7339 = vmatmul.mubr.f32.gmra.mrb[0].mxu0 %v7097
  %v7340 = vpop.f32.mrb[0].mxu0
  %v7341 = vadd.f32 0.0, %v7340
  %v7342 = vpop.f32.mrb[0].mxu0
  %7343 = vmatprep.mubr.f32.mxu0 0.0
  %7344 = vmatmul.mubr.f32.gmra.mrb[0].mxu0 %v7098
  %v7345 = vpop.f32.mrb[0].mxu0
  %v7346 = vadd.f32 0.0, %v7345
  %v7347 = vpop.f32.mrb[0].mxu0
  %7348 = vmatprep.mubr.f32.mxu0 0.0
  %7349 = vmatmul.mubr.f32.gmra.mrb[0].mxu0 %v7099
  %v7350 = vpop.f32.mrb[0].mxu0
  %v7351 = vadd.f32 0.0, %v7350
  %v7352 = vpop.f32.mrb[0].mxu0
  %7353 = vmatprep.mubr.f32.mxu0 0.0
  %7354 = vmatmul.mubr.f32.gmra.mrb[0].mxu0 %v7100
  %v7355 = vpop.f32.mrb[0].mxu0
  %v7356 = vadd.f32 0.0, %v7355
  %v7357 = vpop.f32.mrb[0].mxu0
  %7358 = vmatprep.mubr.f32.mxu0 0.0
  %7359 = vmatmul.mubr.f32.gmra.mrb[0].mxu0 %v7101
  %v7360 = vpop.f32.mrb[0].mxu0
  %v7361 = vadd.f32 0.0, %v7360
  %v7362 = vpop.f32.mrb[0].mxu0
  %7363 = vmatprep.mubr.f32.mxu0 0.0
  %7364 = vmatmul.mubr.f32.gmra.mrb[0].mxu0 %v7102
  %v7365 = vpop.f32.mrb[0].mxu0
  %v7366 = vadd.f32 0.0, %v7365
  %v7367 = vpop.f32.mrb[0].mxu0
  %7368 = vmatprep.mubr.f32.mxu0 0.0
  %7369 = vmatmul.mubr.f32.gmra.mrb[0].mxu0 %v7103
  %v7370 = vpop.f32.mrb[0].mxu0
  %v7371 = vadd.f32 0.0, %v7370
  %v7372 = vpop.f32.mrb[0].mxu0
  %7373 = vmatprep.mubr.f32.mxu0 0.0
  %7374 = vmatmul.mubr.f32.gmra.mrb[0].mxu0 %v7104
  %v7375 = vpop.f32.mrb[0].mxu0
  %v7376 = vadd.f32 0.0, %v7375
  %v7377 = vpop.f32.mrb[0].mxu0
  %7378 = vmatprep.mubr.f32.mxu0 0.0
  %7379 = vmatmul.mubr.f32.gmra.mrb[0].mxu0 %v7105
  %v7380 = vpop.f32.mrb[0].mxu0
  %v7381 = vadd.f32 0.0, %v7380
  %v7382 = vpop.f32.mrb[0].mxu0
  %7383 = vmatprep.mubr.f32.mxu0 0.0
  %7384 = vmatmul.mubr.f32.gmra.mrb[0].mxu0 %v7106
  %v7385 = vpop.f32.mrb[0].mxu0
  %v7386 = vadd.f32 0.0, %v7385
  %v7387 = vpop.f32.mrb[0].mxu0
  %7388 = vmatprep.mubr.f32.mxu0 0.0
  %7389 = vmatmul.mubr.f32.gmra.mrb[0].mxu0 %v7107
  %v7390 = vpop.f32.mrb[0].mxu0
  %v7391 = vadd.f32 0.0, %v7390
  %v7392 = vpop.f32.mrb[0].mxu0
  %7393 = vmatprep.mubr.f32.mxu0 0.0
  %7394 = vmatmul.mubr.f32.gmra.mrb[0].mxu0 %v7108
  %v7395 = vpop.f32.mrb[0].mxu0
  %v7396 = vadd.f32 0.0, %v7395
  %v7397 = vpop.f32.mrb[0].mxu0
  %7398 = vmatprep.mubr.f32.mxu0 0.0
  %7399 = vmatmul.mubr.f32.gmra.mrb[0].mxu0 %v7109
  %v7400 = vpop.f32.mrb[0].mxu0
  %v7401 = vadd.f32 0.0, %v7400
  %v7402 = vpop.f32.mrb[0].mxu0
  %7403 = vmatprep.mubr.f32.mxu0 0.0
  %7404 = vmatmul.mubr.f32.gmra.mrb[0].mxu0 %v7110
  %v7405 = vpop.f32.mrb[0].mxu0
  %v7406 = vadd.f32 0.0, %v7405
  %v7407 = vpop.f32.mrb[0].mxu0
  %7408 = vmatprep.mubr.f32.mxu0 0.0
  %7409 = vmatmul.mubr.f32.gmra.mrb[0].mxu0 %v7111
  %v7410 = vpop.f32.mrb[0].mxu0
  %v7411 = vadd.f32 0.0, %v7410
  %v7412 = vpop.f32.mrb[0].mxu0
  %7413 = vmatprep.mubr.f32.mxu0 0.0
  %7414 = vmatmul.mubr.f32.gmra.mrb[0].mxu0 %v7112
  %v7415 = vpop.f32.mrb[0].mxu0
  %v7416 = vadd.f32 0.0, %v7415
  %v7417 = vpop.f32.mrb[0].mxu0
  %7418 = vmatprep.mubr.f32.mxu0 0.0
  %7419 = vmatmul.mubr.f32.gmra.mrb[0].mxu0 %v7113
  %v7420 = vpop.f32.mrb[0].mxu0
  %v7421 = vadd.f32 0.0, %v7420
  %v7422 = vpop.f32.mrb[0].mxu0
  %7423 = vmatprep.mubr.f32.mxu0 0.0
  %7424 = vmatmul.mubr.f32.gmra.mrb[0].mxu0 %v7114
  %v7425 = vpop.f32.mrb[0].mxu0
  %v7426 = vadd.f32 0.0, %v7425
  %v7427 = vpop.f32.mrb[0].mxu0
  %7428 = vmatprep.mubr.f32.mxu0 0.0
  %7429 = vmatmul.mubr.f32.gmra.mrb[0].mxu0 %v7115
  %v7430 = vpop.f32.mrb[0].mxu0
  %v7431 = vadd.f32 0.0, %v7430
  %v7432 = vpop.f32.mrb[0].mxu0
  %7433 = vmatprep.mubr.f32.mxu0 0.0
  %7434 = vmatmul.mubr.f32.gmra.mrb[0].mxu0 %v7116
  %v7435 = vpop.f32.mrb[0].mxu0
  %v7436 = vadd.f32 0.0, %v7435
  %v7437 = vpop.f32.mrb[0].mxu0
  %7438 = vmatprep.mubr.f32.mxu0 0.0
  %7439 = vmatmul.mubr.f32.gmra.mrb[0].mxu0 %v7117
  %v7440 = vpop.f32.mrb[0].mxu0
  %v7441 = vadd.f32 0.0, %v7440
  %v7442 = vpop.f32.mrb[0].mxu0
  %7443 = vmatprep.mubr.f32.mxu0 0.0
  %7444 = vmatmul.mubr.f32.gmra.mrb[0].mxu0 %v7118
  %v7445 = vpop.f32.mrb[0].mxu0
  %v7446 = vadd.f32 0.0, %v7445
  %v7447 = vpop.f32.mrb[0].mxu0
  %7448 = vmatprep.mubr.f32.mxu0 0.0
  %7449 = vmatmul.mubr.f32.gmra.mrb[0].mxu0 %v7119
  %v7450 = vpop.f32.mrb[0].mxu0
  %v7451 = vadd.f32 0.0, %v7450
  %v7452 = vpop.f32.mrb[0].mxu0
  %7453 = vmatprep.mubr.f32.mxu0 0.0
  %7454 = vmatmul.mubr.f32.gmra.mrb[0].mxu0 %v7120
  %v7455 = vpop.f32.mrb[0].mxu0
  %v7456 = vadd.f32 0.0, %v7455
  %v7457 = vpop.f32.mrb[0].mxu0
  %7458 = vmatprep.mubr.f32.mxu0 0.0
  %7459 = vmatmul.mubr.f32.gmra.mrb[0].mxu0 %v7121
  %v7460 = vpop.f32.mrb[0].mxu0
  %v7461 = vadd.f32 0.0, %v7460
  %v7462 = vpop.f32.mrb[0].mxu0
  %7463 = vmatprep.mubr.f32.mxu0 0.0
  %7464 = vmatmul.mubr.f32.gmra.mrb[0].mxu0 %v7122
  %v7465 = vpop.f32.mrb[0].mxu0
  %v7466 = vadd.f32 0.0, %v7465
  %v7467 = vpop.f32.mrb[0].mxu0
  %7468 = vmatprep.mubr.f32.mxu0 0.0
  %7469 = vmatmul.mubr.f32.gmra.mrb[0].mxu0 %v7123
  %v7470 = vpop.f32.mrb[0].mxu0
  %v7471 = vadd.f32 0.0, %v7470
  %v7472 = vpop.f32.mrb[0].mxu0
  %7473 = vmatprep.mubr.f32.mxu0 0.0
  %7474 = vmatmul.mubr.f32.gmra.mrb[0].mxu0 %v7124
  %v7475 = vpop.f32.mrb[0].mxu0
  %v7476 = vadd.f32 0.0, %v7475
  %v7477 = vpop.f32.mrb[0].mxu0
  %7478 = vmatprep.mubr.f32.mxu0 0.0
  %7479 = vmatmul.mubr.f32.gmra.mrb[0].mxu0 %v7125
  %v7480 = vpop.f32.mrb[0].mxu0
  %v7481 = vadd.f32 0.0, %v7480
  %v7482 = vpop.f32.mrb[0].mxu0
  %7483 = vmatprep.mubr.f32.mxu0 0.0
  %7484 = vmatmul.mubr.f32.gmra.mrb[0].mxu0 %v7126
  %v7485 = vpop.f32.mrb[0].mxu0
  %v7486 = vadd.f32 0.0, %v7485
  %v7487 = vpop.f32.mrb[0].mxu0
  %7488 = vmatprep.mubr.f32.mxu0 0.0
  %7489 = vmatmul.mubr.f32.gmra.mrb[0].mxu0 %v7127
  %v7490 = vpop.f32.mrb[0].mxu0
  %v7491 = vadd.f32 0.0, %v7490
  %v7492 = vpop.f32.mrb[0].mxu0
  %7493 = vmatprep.mubr.f32.mxu0 0.0
  %7494 = vmatmul.mubr.f32.gmra.mrb[0].mxu0 %v7128
  %v7495 = vpop.f32.mrb[0].mxu0
  %v7496 = vadd.f32 0.0, %v7495
  %v7497 = vpop.f32.mrb[0].mxu0
  %7498 = vmatprep.mubr.f32.mxu0 0.0
  %7499 = vmatmul.mubr.f32.gmra.mrb[0].mxu0 %v7129
  %v7500 = vpop.f32.mrb[0].mxu0
  %v7501 = vadd.f32 0.0, %v7500
  %v7502 = vpop.f32.mrb[0].mxu0
  %7503 = vmatprep.mubr.f32.mxu0 0.0
  %7504 = vmatmul.mubr.f32.gmra.mrb[0].mxu0 %v7130
  %v7505 = vpop.f32.mrb[0].mxu0
  %v7506 = vadd.f32 0.0, %v7505
  %v7507 = vpop.f32.mrb[0].mxu0
  %7508 = vmatprep.mubr.f32.mxu0 0.0
  %7509 = vmatmul.mubr.f32.gmra.mrb[0].mxu0 %v7131
  %v7510 = vpop.f32.mrb[0].mxu0
  %v7511 = vadd.f32 0.0, %v7510
  %v7512 = vpop.f32.mrb[0].mxu0
  %7513 = vmatprep.mubr.f32.mxu0 0.0
  %7514 = vmatmul.mubr.f32.gmra.mrb[0].mxu0 %v7132
  %v7515 = vpop.f32.mrb[0].mxu0
  %v7516 = vadd.f32 0.0, %v7515
  %v7517 = vpop.f32.mrb[0].mxu0
  %7518 = vmatprep.mubr.f32.mxu0 0.0
  %7519 = vmatmul.mubr.f32.gmra.mrb[0].mxu0 %v7133
  %v7520 = vpop.f32.mrb[0].mxu0
  %v7521 = vadd.f32 0.0, %v7520
  %v7522 = vpop.f32.mrb[0].mxu0
  %7523 = vmatprep.mubr.f32.mxu0 0.0
  %7524 = vmatmul.mubr.f32.gmra.mrb[0].mxu0 %v7134
  %v7525 = vpop.f32.mrb[0].mxu0
  %v7526 = vadd.f32 0.0, %v7525
  %v7527 = vpop.f32.mrb[0].mxu0
  %7528 = vmatprep.mubr.f32.mxu0 0.0
  %7529 = vmatmul.mubr.f32.gmra.mrb[0].mxu0 %v7135
  %v7530 = vpop.f32.mrb[0].mxu0
  %v7531 = vadd.f32 0.0, %v7530
  %v7532 = vpop.f32.mrb[0].mxu0
  %7533 = vmatprep.mubr.f32.mxu0 0.0
  %7534 = vmatmul.mubr.f32.gmra.mrb[0].mxu0 %v7136
  %v7535 = vpop.f32.mrb[0].mxu0
  %v7536 = vadd.f32 0.0, %v7535
  %v7537 = vpop.f32.mrb[0].mxu0
  %7538 = vdwg.mxu0
  %7539 = vmatprep.subr.mxu0 0.0
  %7540 = vmatpush1.msra.mxu0 %v7057
  %7541 = vmatprep.subr.mxu0 0.0
  %7542 = vmatpush1.msra.mxu0 %v7058
  %7543 = vmatprep.subr.mxu0 0.0
  %7544 = vmatpush1.msra.mxu0 %v7059
  %7545 = vmatprep.subr.mxu0 0.0
  %7546 = vmatpush1.msra.mxu0 %v7060
  %7547 = vmatprep.subr.mxu0 0.0
  %7548 = vmatpush1.msra.mxu0 %v7061
  %7549 = vmatprep.subr.mxu0 0.0
  %7550 = vmatpush1.msra.mxu0 %v7062
  %7551 = vmatprep.subr.mxu0 0.0
  %7552 = vmatpush1.msra.mxu0 %v7063
  %7553 = vmatprep.subr.mxu0 0.0
  %7554 = vmatpush1.msra.mxu0 %v7064
  %7555 = vmatprep.subr.mxu0 0.0
  %7556 = vmatpush1.msra.mxu0 %v7065
  %7557 = vmatprep.subr.mxu0 0.0
  %7558 = vmatpush1.msra.mxu0 %v7066
  %7559 = vmatprep.subr.mxu0 0.0
  %7560 = vmatpush1.msra.mxu0 %v7067
  %7561 = vmatprep.subr.mxu0 0.0
  %7562 = vmatpush1.msra.mxu0 %v7068
  %7563 = vmatprep.subr.mxu0 0.0
  %7564 = vmatpush1.msra.mxu0 %v7069
  %7565 = vmatprep.subr.mxu0 0.0
  %7566 = vmatpush1.msra.mxu0 %v7070
  %7567 = vmatprep.subr.mxu0 0.0
  %7568 = vmatpush1.msra.mxu0 %v7071
  %7569 = vmatprep.subr.mxu0 0.0
  %7570 = vmatpush1.msra.mxu0 %v7072
  %7571 = vmatprep.subr.mxu0 0.0
  %7572 = vmatpush1.msra.mxu0 0.0
  %7573 = vmatprep.subr.mxu0 0.0
  %7574 = vmatpush1.msra.mxu0 0.0
  %7575 = vmatprep.subr.mxu0 0.0
  %7576 = vmatpush1.msra.mxu0 0.0
  %7577 = vmatprep.subr.mxu0 0.0
  %7578 = vmatpush1.msra.mxu0 0.0
  %7579 = vmatprep.subr.mxu0 0.0
  %7580 = vmatpush1.msra.mxu0 0.0
  %7581 = vmatprep.subr.mxu0 0.0
  %7582 = vmatpush1.msra.mxu0 0.0
  %7583 = vmatprep.subr.mxu0 0.0
  %7584 = vmatpush1.msra.mxu0 0.0
  %7585 = vmatprep.subr.mxu0 0.0
  %7586 = vmatpush1.msra.mxu0 0.0
  %7587 = vmatprep.subr.mxu0 0.0
  %7588 = vmatpush1.msra.mxu0 0.0
  %7589 = vmatprep.subr.mxu0 0.0
  %7590 = vmatpush1.msra.mxu0 0.0
  %7591 = vmatprep.subr.mxu0 0.0
  %7592 = vmatpush1.msra.mxu0 0.0
  %7593 = vmatprep.subr.mxu0 0.0
  %7594 = vmatpush1.msra.mxu0 0.0
  %7595 = vmatprep.subr.mxu0 0.0
  %7596 = vmatpush1.msra.mxu0 0.0
  %7597 = vmatprep.subr.mxu0 0.0
  %7598 = vmatpush1.msra.mxu0 0.0
  %7599 = vmatprep.subr.mxu0 0.0
  %7600 = vmatpush1.msra.mxu0 0.0
  %7601 = vmatprep.subr.mxu0 0.0
  %7602 = vmatpush1.msra.mxu0 0.0
  %7603 = vmatprep.mubr.f32.mxu0 0.0
  %7604 = vmatmul.mubr.f32.gmra.mrb[0].mxu0 %v6993
  %v7605 = vpop.f32.mrb[0].mxu0
  %v7606 = vadd.f32 %v7221, %v7605
  %v7607 = vpop.f32.mrb[0].mxu0
  %7608 = vmatprep.mubr.f32.mxu0 0.0
  %7609 = vmatmul.mubr.f32.gmra.mrb[0].mxu0 %v6994
  %v7610 = vpop.f32.mrb[0].mxu0
  %v7611 = vadd.f32 %v7226, %v7610
  %v7612 = vpop.f32.mrb[0].mxu0
  %7613 = vmatprep.mubr.f32.mxu0 0.0
  %7614 = vmatmul.mubr.f32.gmra.mrb[0].mxu0 %v6995
  %v7615 = vpop.f32.mrb[0].mxu0
  %v7616 = vadd.f32 %v7231, %v7615
  %v7617 = vpop.f32.mrb[0].mxu0
  %7618 = vmatprep.mubr.f32.mxu0 0.0
  %7619 = vmatmul.mubr.f32.gmra.mrb[0].mxu0 %v6996
  %v7620 = vpop.f32.mrb[0].mxu0
  %v7621 = vadd.f32 %v7236, %v7620
  %v7622 = vpop.f32.mrb[0].mxu0
  %7623 = vmatprep.mubr.f32.mxu0 0.0
  %7624 = vmatmul.mubr.f32.gmra.mrb[0].mxu0 %v6997
  %v7625 = vpop.f32.mrb[0].mxu0
  %v7626 = vadd.f32 %v7241, %v7625
  %v7627 = vpop.f32.mrb[0].mxu0
  %7628 = vmatprep.mubr.f32.mxu0 0.0
  %7629 = vmatmul.mubr.f32.gmra.mrb[0].mxu0 %v6998
  %v7630 = vpop.f32.mrb[0].mxu0
  %v7631 = vadd.f32 %v7246, %v7630
  %v7632 = vpop.f32.mrb[0].mxu0
  %7633 = vmatprep.mubr.f32.mxu0 0.0
  %7634 = vmatmul.mubr.f32.gmra.mrb[0].mxu0 %v6999
  %v7635 = vpop.f32.mrb[0].mxu0
  %v7636 = vadd.f32 %v7251, %v7635
  %v7637 = vpop.f32.mrb[0].mxu0
  %7638 = vmatprep.mubr.f32.mxu0 0.0
  %7639 = vmatmul.mubr.f32.gmra.mrb[0].mxu0 %v7000
  %v7640 = vpop.f32.mrb[0].mxu0
  %v7641 = vadd.f32 %v7256, %v7640
  %v7642 = vpop.f32.mrb[0].mxu0
  %7643 = vmatprep.mubr.f32.mxu0 0.0
  %7644 = vmatmul.mubr.f32.gmra.mrb[0].mxu0 %v7001
  %v7645 = vpop.f32.mrb[0].mxu0
  %v7646 = vadd.f32 %v7261, %v7645
  %v7647 = vpop.f32.mrb[0].mxu0
  %7648 = vmatprep.mubr.f32.mxu0 0.0
  %7649 = vmatmul.mubr.f32.gmra.mrb[0].mxu0 %v7002
  %v7650 = vpop.f32.mrb[0].mxu0
  %v7651 = vadd.f32 %v7266, %v7650
  %v7652 = vpop.f32.mrb[0].mxu0
  %7653 = vmatprep.mubr.f32.mxu0 0.0
  %7654 = vmatmul.mubr.f32.gmra.mrb[0].mxu0 %v7003
  %v7655 = vpop.f32.mrb[0].mxu0
  %v7656 = vadd.f32 %v7271, %v7655
  %v7657 = vpop.f32.mrb[0].mxu0
  %7658 = vmatprep.mubr.f32.mxu0 0.0
  %7659 = vmatmul.mubr.f32.gmra.mrb[0].mxu0 %v7004
  %v7660 = vpop.f32.mrb[0].mxu0
  %v7661 = vadd.f32 %v7276, %v7660
  %v7662 = vpop.f32.mrb[0].mxu0
  %7663 = vmatprep.mubr.f32.mxu0 0.0
  %7664 = vmatmul.mubr.f32.gmra.mrb[0].mxu0 %v7005
  %v7665 = vpop.f32.mrb[0].mxu0
  %v7666 = vadd.f32 %v7281, %v7665
  %v7667 = vpop.f32.mrb[0].mxu0
  %7668 = vmatprep.mubr.f32.mxu0 0.0
  %7669 = vmatmul.mubr.f32.gmra.mrb[0].mxu0 %v7006
  %v7670 = vpop.f32.mrb[0].mxu0
  %v7671 = vadd.f32 %v7286, %v7670
  %v7672 = vpop.f32.mrb[0].mxu0
  %7673 = vmatprep.mubr.f32.mxu0 0.0
  %7674 = vmatmul.mubr.f32.gmra.mrb[0].mxu0 %v7007
  %v7675 = vpop.f32.mrb[0].mxu0
  %v7676 = vadd.f32 %v7291, %v7675
  %v7677 = vpop.f32.mrb[0].mxu0
  %7678 = vmatprep.mubr.f32.mxu0 0.0
  %7679 = vmatmul.mubr.f32.gmra.mrb[0].mxu0 %v7008
  %v7680 = vpop.f32.mrb[0].mxu0
  %v7681 = vadd.f32 %v7296, %v7680
  %v7682 = vpop.f32.mrb[0].mxu0
  %7683 = vmatprep.mubr.f32.mxu0 0.0
  %7684 = vmatmul.mubr.f32.gmra.mrb[0].mxu0 %v7009
  %v7685 = vpop.f32.mrb[0].mxu0
  %v7686 = vadd.f32 %v7301, %v7685
  %v7687 = vpop.f32.mrb[0].mxu0
  %7688 = vmatprep.mubr.f32.mxu0 0.0
  %7689 = vmatmul.mubr.f32.gmra.mrb[0].mxu0 %v7010
  %v7690 = vpop.f32.mrb[0].mxu0
  %v7691 = vadd.f32 %v7306, %v7690
  %v7692 = vpop.f32.mrb[0].mxu0
  %7693 = vmatprep.mubr.f32.mxu0 0.0
  %7694 = vmatmul.mubr.f32.gmra.mrb[0].mxu0 %v7011
  %v7695 = vpop.f32.mrb[0].mxu0
  %v7696 = vadd.f32 %v7311, %v7695
  %v7697 = vpop.f32.mrb[0].mxu0
  %7698 = vmatprep.mubr.f32.mxu0 0.0
  %7699 = vmatmul.mubr.f32.gmra.mrb[0].mxu0 %v7012
  %v7700 = vpop.f32.mrb[0].mxu0
  %v7701 = vadd.f32 %v7316, %v7700
  %v7702 = vpop.f32.mrb[0].mxu0
  %7703 = vmatprep.mubr.f32.mxu0 0.0
  %7704 = vmatmul.mubr.f32.gmra.mrb[0].mxu0 %v7013
  %v7705 = vpop.f32.mrb[0].mxu0
  %v7706 = vadd.f32 %v7321, %v7705
  %v7707 = vpop.f32.mrb[0].mxu0
  %7708 = vmatprep.mubr.f32.mxu0 0.0
  %7709 = vmatmul.mubr.f32.gmra.mrb[0].mxu0 %v7014
  %v7710 = vpop.f32.mrb[0].mxu0
  %v7711 = vadd.f32 %v7326, %v7710
  %v7712 = vpop.f32.mrb[0].mxu0
  %7713 = vmatprep.mubr.f32.mxu0 0.0
  %7714 = vmatmul.mubr.f32.gmra.mrb[0].mxu0 %v7015
  %v7715 = vpop.f32.mrb[0].mxu0
  %v7716 = vadd.f32 %v7331, %v7715
  %v7717 = vpop.f32.mrb[0].mxu0
  %7718 = vmatprep.mubr.f32.mxu0 0.0
  %7719 = vmatmul.mubr.f32.gmra.mrb[0].mxu0 %v7016
  %v7720 = vpop.f32.mrb[0].mxu0
  %v7721 = vadd.f32 %v7336, %v7720
  %v7722 = vpop.f32.mrb[0].mxu0
  %7723 = vmatprep.mubr.f32.mxu0 0.0
  %7724 = vmatmul.mubr.f32.gmra.mrb[0].mxu0 %v7017
  %v7725 = vpop.f32.mrb[0].mxu0
  %v7726 = vadd.f32 %v7341, %v7725
  %v7727 = vpop.f32.mrb[0].mxu0
  %7728 = vmatprep.mubr.f32.mxu0 0.0
  %7729 = vmatmul.mubr.f32.gmra.mrb[0].mxu0 %v7018
  %v7730 = vpop.f32.mrb[0].mxu0
  %v7731 = vadd.f32 %v7346, %v7730
  %v7732 = vpop.f32.mrb[0].mxu0
  %7733 = vmatprep.mubr.f32.mxu0 0.0
  %7734 = vmatmul.mubr.f32.gmra.mrb[0].mxu0 %v7019
  %v7735 = vpop.f32.mrb[0].mxu0
  %v7736 = vadd.f32 %v7351, %v7735
  %v7737 = vpop.f32.mrb[0].mxu0
  %7738 = vmatprep.mubr.f32.mxu0 0.0
  %7739 = vmatmul.mubr.f32.gmra.mrb[0].mxu0 %v7020
  %v7740 = vpop.f32.mrb[0].mxu0
  %v7741 = vadd.f32 %v7356, %v7740
  %v7742 = vpop.f32.mrb[0].mxu0
  %7743 = vmatprep.mubr.f32.mxu0 0.0
  %7744 = vmatmul.mubr.f32.gmra.mrb[0].mxu0 %v7021
  %v7745 = vpop.f32.mrb[0].mxu0
  %v7746 = vadd.f32 %v7361, %v7745
  %v7747 = vpop.f32.mrb[0].mxu0
  %7748 = vmatprep.mubr.f32.mxu0 0.0
  %7749 = vmatmul.mubr.f32.gmra.mrb[0].mxu0 %v7022
  %v7750 = vpop.f32.mrb[0].mxu0
  %v7751 = vadd.f32 %v7366, %v7750
  %v7752 = vpop.f32.mrb[0].mxu0
  %7753 = vmatprep.mubr.f32.mxu0 0.0
  %7754 = vmatmul.mubr.f32.gmra.mrb[0].mxu0 %v7023
  %v7755 = vpop.f32.mrb[0].mxu0
  %v7756 = vadd.f32 %v7371, %v7755
  %v7757 = vpop.f32.mrb[0].mxu0
  %7758 = vmatprep.mubr.f32.mxu0 0.0
  %7759 = vmatmul.mubr.f32.gmra.mrb[0].mxu0 %v7024
  %v7760 = vpop.f32.mrb[0].mxu0
  %v7761 = vadd.f32 %v7376, %v7760
  %v7762 = vpop.f32.mrb[0].mxu0
  %7763 = vmatprep.mubr.f32.mxu0 0.0
  %7764 = vmatmul.mubr.f32.gmra.mrb[0].mxu0 %v7025
  %v7765 = vpop.f32.mrb[0].mxu0
  %v7766 = vadd.f32 %v7381, %v7765
  %v7767 = vpop.f32.mrb[0].mxu0
  %7768 = vmatprep.mubr.f32.mxu0 0.0
  %7769 = vmatmul.mubr.f32.gmra.mrb[0].mxu0 %v7026
  %v7770 = vpop.f32.mrb[0].mxu0
  %v7771 = vadd.f32 %v7386, %v7770
  %v7772 = vpop.f32.mrb[0].mxu0
  %7773 = vmatprep.mubr.f32.mxu0 0.0
  %7774 = vmatmul.mubr.f32.gmra.mrb[0].mxu0 %v7027
  %v7775 = vpop.f32.mrb[0].mxu0
  %v7776 = vadd.f32 %v7391, %v7775
  %v7777 = vpop.f32.mrb[0].mxu0
  %7778 = vmatprep.mubr.f32.mxu0 0.0
  %7779 = vmatmul.mubr.f32.gmra.mrb[0].mxu0 %v7028
  %v7780 = vpop.f32.mrb[0].mxu0
  %v7781 = vadd.f32 %v7396, %v7780
  %v7782 = vpop.f32.mrb[0].mxu0
  %7783 = vmatprep.mubr.f32.mxu0 0.0
  %7784 = vmatmul.mubr.f32.gmra.mrb[0].mxu0 %v7029
  %v7785 = vpop.f32.mrb[0].mxu0
  %v7786 = vadd.f32 %v7401, %v7785
  %v7787 = vpop.f32.mrb[0].mxu0
  %7788 = vmatprep.mubr.f32.mxu0 0.0
  %7789 = vmatmul.mubr.f32.gmra.mrb[0].mxu0 %v7030
  %v7790 = vpop.f32.mrb[0].mxu0
  %v7791 = vadd.f32 %v7406, %v7790
  %v7792 = vpop.f32.mrb[0].mxu0
  %7793 = vmatprep.mubr.f32.mxu0 0.0
  %7794 = vmatmul.mubr.f32.gmra.mrb[0].mxu0 %v7031
  %v7795 = vpop.f32.mrb[0].mxu0
  %v7796 = vadd.f32 %v7411, %v7795
  %v7797 = vpop.f32.mrb[0].mxu0
  %7798 = vmatprep.mubr.f32.mxu0 0.0
  %7799 = vmatmul.mubr.f32.gmra.mrb[0].mxu0 %v7032
  %v7800 = vpop.f32.mrb[0].mxu0
  %v7801 = vadd.f32 %v7416, %v7800
  %v7802 = vpop.f32.mrb[0].mxu0
  %7803 = vmatprep.mubr.f32.mxu0 0.0
  %7804 = vmatmul.mubr.f32.gmra.mrb[0].mxu0 %v7033
  %v7805 = vpop.f32.mrb[0].mxu0
  %v7806 = vadd.f32 %v7421, %v7805
  %v7807 = vpop.f32.mrb[0].mxu0
  %7808 = vmatprep.mubr.f32.mxu0 0.0
  %7809 = vmatmul.mubr.f32.gmra.mrb[0].mxu0 %v7034
  %v7810 = vpop.f32.mrb[0].mxu0
  %v7811 = vadd.f32 %v7426, %v7810
  %v7812 = vpop.f32.mrb[0].mxu0
  %7813 = vmatprep.mubr.f32.mxu0 0.0
  %7814 = vmatmul.mubr.f32.gmra.mrb[0].mxu0 %v7035
  %v7815 = vpop.f32.mrb[0].mxu0
  %v7816 = vadd.f32 %v7431, %v7815
  %v7817 = vpop.f32.mrb[0].mxu0
  %7818 = vmatprep.mubr.f32.mxu0 0.0
  %7819 = vmatmul.mubr.f32.gmra.mrb[0].mxu0 %v7036
  %v7820 = vpop.f32.mrb[0].mxu0
  %v7821 = vadd.f32 %v7436, %v7820
  %v7822 = vpop.f32.mrb[0].mxu0
  %7823 = vmatprep.mubr.f32.mxu0 0.0
  %7824 = vmatmul.mubr.f32.gmra.mrb[0].mxu0 %v7037
  %v7825 = vpop.f32.mrb[0].mxu0
  %v7826 = vadd.f32 %v7441, %v7825
  %v7827 = vpop.f32.mrb[0].mxu0
  %7828 = vmatprep.mubr.f32.mxu0 0.0
  %7829 = vmatmul.mubr.f32.gmra.mrb[0].mxu0 %v7038
  %v7830 = vpop.f32.mrb[0].mxu0
  %v7831 = vadd.f32 %v7446, %v7830
  %v7832 = vpop.f32.mrb[0].mxu0
  %7833 = vmatprep.mubr.f32.mxu0 0.0
  %7834 = vmatmul.mubr.f32.gmra.mrb[0].mxu0 %v7039
  %v7835 = vpop.f32.mrb[0].mxu0
  %v7836 = vadd.f32 %v7451, %v7835
  %v7837 = vpop.f32.mrb[0].mxu0
  %7838 = vmatprep.mubr.f32.mxu0 0.0
  %7839 = vmatmul.mubr.f32.gmra.mrb[0].mxu0 %v7040
  %v7840 = vpop.f32.mrb[0].mxu0
  %v7841 = vadd.f32 %v7456, %v7840
  %v7842 = vpop.f32.mrb[0].mxu0
  %7843 = vmatprep.mubr.f32.mxu0 0.0
  %7844 = vmatmul.mubr.f32.gmra.mrb[0].mxu0 %v7041
  %v7845 = vpop.f32.mrb[0].mxu0
  %v7846 = vadd.f32 %v7461, %v7845
  %v7847 = vpop.f32.mrb[0].mxu0
  %7848 = vmatprep.mubr.f32.mxu0 0.0
  %7849 = vmatmul.mubr.f32.gmra.mrb[0].mxu0 %v7042
  %v7850 = vpop.f32.mrb[0].mxu0
  %v7851 = vadd.f32 %v7466, %v7850
  %v7852 = vpop.f32.mrb[0].mxu0
  %7853 = vmatprep.mubr.f32.mxu0 0.0
  %7854 = vmatmul.mubr.f32.gmra.mrb[0].mxu0 %v7043
  %v7855 = vpop.f32.mrb[0].mxu0
  %v7856 = vadd.f32 %v7471, %v7855
  %v7857 = vpop.f32.mrb[0].mxu0
  %7858 = vmatprep.mubr.f32.mxu0 0.0
  %7859 = vmatmul.mubr.f32.gmra.mrb[0].mxu0 %v7044
  %v7860 = vpop.f32.mrb[0].mxu0
  %v7861 = vadd.f32 %v7476, %v7860
  %v7862 = vpop.f32.mrb[0].mxu0
  %7863 = vmatprep.mubr.f32.mxu0 0.0
  %7864 = vmatmul.mubr.f32.gmra.mrb[0].mxu0 %v7045
  %v7865 = vpop.f32.mrb[0].mxu0
  %v7866 = vadd.f32 %v7481, %v7865
  %v7867 = vpop.f32.mrb[0].mxu0
  %7868 = vmatprep.mubr.f32.mxu0 0.0
  %7869 = vmatmul.mubr.f32.gmra.mrb[0].mxu0 %v7046
  %v7870 = vpop.f32.mrb[0].mxu0
  %v7871 = vadd.f32 %v7486, %v7870
  %v7872 = vpop.f32.mrb[0].mxu0
  %7873 = vmatprep.mubr.f32.mxu0 0.0
  %7874 = vmatmul.mubr.f32.gmra.mrb[0].mxu0 %v7047
  %v7875 = vpop.f32.mrb[0].mxu0
  %v7876 = vadd.f32 %v7491, %v7875
  %v7877 = vpop.f32.mrb[0].mxu0
  %7878 = vmatprep.mubr.f32.mxu0 0.0
  %7879 = vmatmul.mubr.f32.gmra.mrb[0].mxu0 %v7048
  %v7880 = vpop.f32.mrb[0].mxu0
  %v7881 = vadd.f32 %v7496, %v7880
  %v7882 = vpop.f32.mrb[0].mxu0
  %7883 = vmatprep.mubr.f32.mxu0 0.0
  %7884 = vmatmul.mubr.f32.gmra.mrb[0].mxu0 %v7049
  %v7885 = vpop.f32.mrb[0].mxu0
  %v7886 = vadd.f32 %v7501, %v7885
  %v7887 = vpop.f32.mrb[0].mxu0
  %7888 = vmatprep.mubr.f32.mxu0 0.0
  %7889 = vmatmul.mubr.f32.gmra.mrb[0].mxu0 %v7050
  %v7890 = vpop.f32.mrb[0].mxu0
  %v7891 = vadd.f32 %v7506, %v7890
  %v7892 = vpop.f32.mrb[0].mxu0
  %7893 = vmatprep.mubr.f32.mxu0 0.0
  %7894 = vmatmul.mubr.f32.gmra.mrb[0].mxu0 %v7051
  %v7895 = vpop.f32.mrb[0].mxu0
  %v7896 = vadd.f32 %v7511, %v7895
  %v7897 = vpop.f32.mrb[0].mxu0
  %7898 = vmatprep.mubr.f32.mxu0 0.0
  %7899 = vmatmul.mubr.f32.gmra.mrb[0].mxu0 %v7052
  %v7900 = vpop.f32.mrb[0].mxu0
  %v7901 = vadd.f32 %v7516, %v7900
  %v7902 = vpop.f32.mrb[0].mxu0
  %7903 = vmatprep.mubr.f32.mxu0 0.0
  %7904 = vmatmul.mubr.f32.gmra.mrb[0].mxu0 %v7053
  %v7905 = vpop.f32.mrb[0].mxu0
  %v7906 = vadd.f32 %v7521, %v7905
  %v7907 = vpop.f32.mrb[0].mxu0
  %7908 = vmatprep.mubr.f32.mxu0 0.0
  %7909 = vmatmul.mubr.f32.gmra.mrb[0].mxu0 %v7054
  %v7910 = vpop.f32.mrb[0].mxu0
  %v7911 = vadd.f32 %v7526, %v7910
  %v7912 = vpop.f32.mrb[0].mxu0
  %7913 = vmatprep.mubr.f32.mxu0 0.0
  %7914 = vmatmul.mubr.f32.gmra.mrb[0].mxu0 %v7055
  %v7915 = vpop.f32.mrb[0].mxu0
  %v7916 = vadd.f32 %v7531, %v7915
  %v7917 = vpop.f32.mrb[0].mxu0
  %7918 = vmatprep.mubr.f32.mxu0 0.0
  %7919 = vmatmul.mubr.f32.gmra.mrb[0].mxu0 %v7056
  %v7920 = vpop.f32.mrb[0].mxu0
  %v7921 = vadd.f32 %v7536, %v7920
  %v7922 = vpop.f32.mrb[0].mxu0
  %7923 = vdwg.mxu0
  %v7924 = vld [vmem:[#allocation2 + $0x2] sm:$0xff]
  %v7925 = vld [vmem:[#allocation2 + $0xa] sm:$0xff]
  %v7926 = vld [vmem:[#allocation2 + $0x1a] sm:$0xff]
  %v7927 = vld [vmem:[#allocation2 + $0x22] sm:$0xff]
  %v7928 = vld [vmem:[#allocation2 + $0x32] sm:$0xff]
  %v7929 = vld [vmem:[#allocation2 + $0x3a] sm:$0xff]
  %v7930 = vld [vmem:[#allocation2 + $0x4a] sm:$0xff]
  %v7931 = vld [vmem:[#allocation2 + $0x52] sm:$0xff]
  %v7932 = vld [vmem:[#allocation2 + $0x62] sm:$0xff]
  %v7933 = vld [vmem:[#allocation2 + $0x6a] sm:$0xff]
  %v7934 = vld [vmem:[#allocation2 + $0x7a] sm:$0xff]
  %v7935 = vld [vmem:[#allocation2 + $0x82] sm:$0xff]
  %v7936 = vld [vmem:[#allocation2 + $0x92] sm:$0xff]
  %v7937 = vld [vmem:[#allocation2 + $0x9a] sm:$0xff]
  %v7938 = vld [vmem:[#allocation2 + $0xaa] sm:$0xff]
  %v7939 = vld [vmem:[#allocation2 + $0xb2] sm:$0xff]
  %v7940 = vld [vmem:[#allocation2 + $0xc2] sm:$0xff]
  %v7941 = vld [vmem:[#allocation2 + $0xca] sm:$0xff]
  %v7942 = vld [vmem:[#allocation2 + $0xda] sm:$0xff]
  %v7943 = vld [vmem:[#allocation2 + $0xe2] sm:$0xff]
  %v7944 = vld [vmem:[#allocation2 + $0xf2] sm:$0xff]
  %v7945 = vld [vmem:[#allocation2 + $0xfa] sm:$0xff]
  %v7946 = vld [vmem:[#allocation2 + $0x10a] sm:$0xff]
  %v7947 = vld [vmem:[#allocation2 + $0x112] sm:$0xff]
  %v7948 = vld [vmem:[#allocation2 + $0x122] sm:$0xff]
  %v7949 = vld [vmem:[#allocation2 + $0x12a] sm:$0xff]
  %v7950 = vld [vmem:[#allocation2 + $0x13a] sm:$0xff]
  %v7951 = vld [vmem:[#allocation2 + $0x142] sm:$0xff]
  %v7952 = vld [vmem:[#allocation2 + $0x152] sm:$0xff]
  %v7953 = vld [vmem:[#allocation2 + $0x15a] sm:$0xff]
  %v7954 = vld [vmem:[#allocation2 + $0x16a] sm:$0xff]
  %v7955 = vld [vmem:[#allocation2 + $0x172] sm:$0xff]
  %v7956 = vld [vmem:[#allocation2 + $0x1b2] sm:$0xff]
  %v7957 = vld [vmem:[#allocation2 + $0x1ba] sm:$0xff]
  %v7958 = vld [vmem:[#allocation2 + $0x1ca] sm:$0xff]
  %v7959 = vld [vmem:[#allocation2 + $0x1d2] sm:$0xff]
  %v7960 = vld [vmem:[#allocation2 + $0x1e2] sm:$0xff]
  %v7961 = vld [vmem:[#allocation2 + $0x1ea] sm:$0xff]
  %v7962 = vld [vmem:[#allocation2 + $0x1fa] sm:$0xff]
  %v7963 = vld [vmem:[#allocation2 + $0x202] sm:$0xff]
  %v7964 = vld [vmem:[#allocation2 + $0x212] sm:$0xff]
  %v7965 = vld [vmem:[#allocation2 + $0x21a] sm:$0xff]
  %v7966 = vld [vmem:[#allocation2 + $0x22a] sm:$0xff]
  %v7967 = vld [vmem:[#allocation2 + $0x232] sm:$0xff]
  %v7968 = vld [vmem:[#allocation2 + $0x242] sm:$0xff]
  %v7969 = vld [vmem:[#allocation2 + $0x24a] sm:$0xff]
  %v7970 = vld [vmem:[#allocation2 + $0x25a] sm:$0xff]
  %v7971 = vld [vmem:[#allocation2 + $0x262] sm:$0xff]
  %v7972 = vld [vmem:[#allocation2 + $0x272] sm:$0xff]
  %v7973 = vld [vmem:[#allocation2 + $0x27a] sm:$0xff]
  %v7974 = vld [vmem:[#allocation2 + $0x28a] sm:$0xff]
  %v7975 = vld [vmem:[#allocation2 + $0x292] sm:$0xff]
  %v7976 = vld [vmem:[#allocation2 + $0x2a2] sm:$0xff]
  %v7977 = vld [vmem:[#allocation2 + $0x2aa] sm:$0xff]
  %v7978 = vld [vmem:[#allocation2 + $0x2ba] sm:$0xff]
  %v7979 = vld [vmem:[#allocation2 + $0x2c2] sm:$0xff]
  %v7980 = vld [vmem:[#allocation2 + $0x2d2] sm:$0xff]
  %v7981 = vld [vmem:[#allocation2 + $0x2da] sm:$0xff]
  %v7982 = vld [vmem:[#allocation2 + $0x2ea] sm:$0xff]
  %v7983 = vld [vmem:[#allocation2 + $0x2f2] sm:$0xff]
  %v7984 = vld [vmem:[#allocation2 + $0x302] sm:$0xff]
  %v7985 = vld [vmem:[#allocation2 + $0x30a] sm:$0xff]
  %v7986 = vld [vmem:[#allocation2 + $0x31a] sm:$0xff]
  %v7987 = vld [vmem:[#allocation2 + $0x322] sm:$0xff]
  %s7988 = scalar_lea.vmem %s4, 256
  %v7989 = vld [vmem:[%s7988] sm:$0xff]
  %v7990 = vld [vmem:[%s7988 + $0x8] sm:$0xff]
  %v7991 = vld [vmem:[%s7988 + $0x10] sm:$0xff]
  %v7992 = vld [vmem:[%s7988 + $0x18] sm:$0xff]
  %v7993 = vld [vmem:[%s7988 + $0x20] sm:$0xff]
  %v7994 = vld [vmem:[%s7988 + $0x28] sm:$0xff]
  %v7995 = vld [vmem:[%s7988 + $0x30] sm:$0xff]
  %v7996 = vld [vmem:[%s7988 + $0x38] sm:$0xff]
  %v7997 = vld [vmem:[%s7988 + $0x40] sm:$0xff]
  %v7998 = vld [vmem:[%s7988 + $0x48] sm:$0xff]
  %v7999 = vld [vmem:[%s7988 + $0x50] sm:$0xff]
  %v8000 = vld [vmem:[%s7988 + $0x58] sm:$0xff]
  %v8001 = vld [vmem:[%s7988 + $0x60] sm:$0xff]
  %v8002 = vld [vmem:[%s7988 + $0x68] sm:$0xff]
  %v8003 = vld [vmem:[%s7988 + $0x70] sm:$0xff]
  %v8004 = vld [vmem:[%s7988 + $0x78] sm:$0xff]
  %8005 = vmatprep.subr.mxu0 0.0
  %8006 = vmatpush1.msra.mxu0 %v7989
  %8007 = vmatprep.subr.mxu0 0.0
  %8008 = vmatpush1.msra.mxu0 %v7990
  %8009 = vmatprep.subr.mxu0 0.0
  %8010 = vmatpush1.msra.mxu0 %v7991
  %8011 = vmatprep.subr.mxu0 0.0
  %8012 = vmatpush1.msra.mxu0 %v7992
  %8013 = vmatprep.subr.mxu0 0.0
  %8014 = vmatpush1.msra.mxu0 %v7993
  %8015 = vmatprep.subr.mxu0 0.0
  %8016 = vmatpush1.msra.mxu0 %v7994
  %8017 = vmatprep.subr.mxu0 0.0
  %8018 = vmatpush1.msra.mxu0 %v7995
  %8019 = vmatprep.subr.mxu0 0.0
  %8020 = vmatpush1.msra.mxu0 %v7996
  %8021 = vmatprep.subr.mxu0 0.0
  %8022 = vmatpush1.msra.mxu0 %v7997
  %8023 = vmatprep.subr.mxu0 0.0
  %8024 = vmatpush1.msra.mxu0 %v7998
  %8025 = vmatprep.subr.mxu0 0.0
  %8026 = vmatpush1.msra.mxu0 %v7999
  %8027 = vmatprep.subr.mxu0 0.0
  %8028 = vmatpush1.msra.mxu0 %v8000
  %8029 = vmatprep.subr.mxu0 0.0
  %8030 = vmatpush1.msra.mxu0 %v8001
  %8031 = vmatprep.subr.mxu0 0.0
  %8032 = vmatpush1.msra.mxu0 %v8002
  %8033 = vmatprep.subr.mxu0 0.0
  %8034 = vmatpush1.msra.mxu0 %v8003
  %8035 = vmatprep.subr.mxu0 0.0
  %8036 = vmatpush1.msra.mxu0 %v8004
  %8037 = vmatprep.subr.mxu0 0.0
  %8038 = vmatpush1.msra.mxu0 0.0
  %8039 = vmatprep.subr.mxu0 0.0
  %8040 = vmatpush1.msra.mxu0 0.0
  %8041 = vmatprep.subr.mxu0 0.0
  %8042 = vmatpush1.msra.mxu0 0.0
  %8043 = vmatprep.subr.mxu0 0.0
  %8044 = vmatpush1.msra.mxu0 0.0
  %8045 = vmatprep.subr.mxu0 0.0
  %8046 = vmatpush1.msra.mxu0 0.0
  %8047 = vmatprep.subr.mxu0 0.0
  %8048 = vmatpush1.msra.mxu0 0.0
  %8049 = vmatprep.subr.mxu0 0.0
  %8050 = vmatpush1.msra.mxu0 0.0
  %8051 = vmatprep.subr.mxu0 0.0
  %8052 = vmatpush1.msra.mxu0 0.0
  %8053 = vmatprep.subr.mxu0 0.0
  %8054 = vmatpush1.msra.mxu0 0.0
  %8055 = vmatprep.subr.mxu0 0.0
  %8056 = vmatpush1.msra.mxu0 0.0
  %8057 = vmatprep.subr.mxu0 0.0
  %8058 = vmatpush1.msra.mxu0 0.0
  %8059 = vmatprep.subr.mxu0 0.0
  %8060 = vmatpush1.msra.mxu0 0.0
  %8061 = vmatprep.subr.mxu0 0.0
  %8062 = vmatpush1.msra.mxu0 0.0
  %8063 = vmatprep.subr.mxu0 0.0
  %8064 = vmatpush1.msra.mxu0 0.0
  %8065 = vmatprep.subr.mxu0 0.0
  %8066 = vmatpush1.msra.mxu0 0.0
  %8067 = vmatprep.subr.mxu0 0.0
  %8068 = vmatpush1.msra.mxu0 0.0
  %8069 = vmatprep.mubr.f32.mxu0 0.0
  %8070 = vmatmul.mubr.f32.gmra.mrb[0].mxu0 %v7924
  %v8071 = vpop.f32.mrb[0].mxu0
  %v8072 = vadd.f32 0.0, %v8071
  %v8073 = vpop.f32.mrb[0].mxu0
  %8074 = vmatprep.mubr.f32.mxu0 0.0
  %8075 = vmatmul.mubr.f32.gmra.mrb[0].mxu0 %v7925
  %v8076 = vpop.f32.mrb[0].mxu0
  %v8077 = vadd.f32 0.0, %v8076
  %v8078 = vpop.f32.mrb[0].mxu0
  %8079 = vmatprep.mubr.f32.mxu0 0.0
  %8080 = vmatmul.mubr.f32.gmra.mrb[0].mxu0 %v7926
  %v8081 = vpop.f32.mrb[0].mxu0
  %v8082 = vadd.f32 0.0, %v8081
  %v8083 = vpop.f32.mrb[0].mxu0
  %8084 = vmatprep.mubr.f32.mxu0 0.0
  %8085 = vmatmul.mubr.f32.gmra.mrb[0].mxu0 %v7927
  %v8086 = vpop.f32.mrb[0].mxu0
  %v8087 = vadd.f32 0.0, %v8086
  %v8088 = vpop.f32.mrb[0].mxu0
  %8089 = vmatprep.mubr.f32.mxu0 0.0
  %8090 = vmatmul.mubr.f32.gmra.mrb[0].mxu0 %v7928
  %v8091 = vpop.f32.mrb[0].mxu0
  %v8092 = vadd.f32 0.0, %v8091
  %v8093 = vpop.f32.mrb[0].mxu0
  %8094 = vmatprep.mubr.f32.mxu0 0.0
  %8095 = vmatmul.mubr.f32.gmra.mrb[0].mxu0 %v7929
  %v8096 = vpop.f32.mrb[0].mxu0
  %v8097 = vadd.f32 0.0, %v8096
  %v8098 = vpop.f32.mrb[0].mxu0
  %8099 = vmatprep.mubr.f32.mxu0 0.0
  %8100 = vmatmul.mubr.f32.gmra.mrb[0].mxu0 %v7930
  %v8101 = vpop.f32.mrb[0].mxu0
  %v8102 = vadd.f32 0.0, %v8101
  %v8103 = vpop.f32.mrb[0].mxu0
  %8104 = vmatprep.mubr.f32.mxu0 0.0
  %8105 = vmatmul.mubr.f32.gmra.mrb[0].mxu0 %v7931
  %v8106 = vpop.f32.mrb[0].mxu0
  %v8107 = vadd.f32 0.0, %v8106
  %v8108 = vpop.f32.mrb[0].mxu0
  %8109 = vmatprep.mubr.f32.mxu0 0.0
  %8110 = vmatmul.mubr.f32.gmra.mrb[0].mxu0 %v7932
  %v8111 = vpop.f32.mrb[0].mxu0
  %v8112 = vadd.f32 0.0, %v8111
  %v8113 = vpop.f32.mrb[0].mxu0
  %8114 = vmatprep.mubr.f32.mxu0 0.0
  %8115 = vmatmul.mubr.f32.gmra.mrb[0].mxu0 %v7933
  %v8116 = vpop.f32.mrb[0].mxu0
  %v8117 = vadd.f32 0.0, %v8116
  %v8118 = vpop.f32.mrb[0].mxu0
  %8119 = vmatprep.mubr.f32.mxu0 0.0
  %8120 = vmatmul.mubr.f32.gmra.mrb[0].mxu0 %v7934
  %v8121 = vpop.f32.mrb[0].mxu0
  %v8122 = vadd.f32 0.0, %v8121
  %v8123 = vpop.f32.mrb[0].mxu0
  %8124 = vmatprep.mubr.f32.mxu0 0.0
  %8125 = vmatmul.mubr.f32.gmra.mrb[0].mxu0 %v7935
  %v8126 = vpop.f32.mrb[0].mxu0
  %v8127 = vadd.f32 0.0, %v8126
  %v8128 = vpop.f32.mrb[0].mxu0
  %8129 = vmatprep.mubr.f32.mxu0 0.0
  %8130 = vmatmul.mubr.f32.gmra.mrb[0].mxu0 %v7936
  %v8131 = vpop.f32.mrb[0].mxu0
  %v8132 = vadd.f32 0.0, %v8131
  %v8133 = vpop.f32.mrb[0].mxu0
  %8134 = vmatprep.mubr.f32.mxu0 0.0
  %8135 = vmatmul.mubr.f32.gmra.mrb[0].mxu0 %v7937
  %v8136 = vpop.f32.mrb[0].mxu0
  %v8137 = vadd.f32 0.0, %v8136
  %v8138 = vpop.f32.mrb[0].mxu0
  %8139 = vmatprep.mubr.f32.mxu0 0.0
  %8140 = vmatmul.mubr.f32.gmra.mrb[0].mxu0 %v7938
  %v8141 = vpop.f32.mrb[0].mxu0
  %v8142 = vadd.f32 0.0, %v8141
  %v8143 = vpop.f32.mrb[0].mxu0
  %8144 = vmatprep.mubr.f32.mxu0 0.0
  %8145 = vmatmul.mubr.f32.gmra.mrb[0].mxu0 %v7939
  %v8146 = vpop.f32.mrb[0].mxu0
  %v8147 = vadd.f32 0.0, %v8146
  %v8148 = vpop.f32.mrb[0].mxu0
  %8149 = vmatprep.mubr.f32.mxu0 0.0
  %8150 = vmatmul.mubr.f32.gmra.mrb[0].mxu0 %v7940
  %v8151 = vpop.f32.mrb[0].mxu0
  %v8152 = vadd.f32 0.0, %v8151
  %v8153 = vpop.f32.mrb[0].mxu0
  %8154 = vmatprep.mubr.f32.mxu0 0.0
  %8155 = vmatmul.mubr.f32.gmra.mrb[0].mxu0 %v7941
  %v8156 = vpop.f32.mrb[0].mxu0
  %v8157 = vadd.f32 0.0, %v8156
  %v8158 = vpop.f32.mrb[0].mxu0
  %8159 = vmatprep.mubr.f32.mxu0 0.0
  %8160 = vmatmul.mubr.f32.gmra.mrb[0].mxu0 %v7942
  %v8161 = vpop.f32.mrb[0].mxu0
  %v8162 = vadd.f32 0.0, %v8161
  %v8163 = vpop.f32.mrb[0].mxu0
  %8164 = vmatprep.mubr.f32.mxu0 0.0
  %8165 = vmatmul.mubr.f32.gmra.mrb[0].mxu0 %v7943
  %v8166 = vpop.f32.mrb[0].mxu0
  %v8167 = vadd.f32 0.0, %v8166
  %v8168 = vpop.f32.mrb[0].mxu0
  %8169 = vmatprep.mubr.f32.mxu0 0.0
  %8170 = vmatmul.mubr.f32.gmra.mrb[0].mxu0 %v7944
  %v8171 = vpop.f32.mrb[0].mxu0
  %v8172 = vadd.f32 0.0, %v8171
  %v8173 = vpop.f32.mrb[0].mxu0
  %8174 = vmatprep.mubr.f32.mxu0 0.0
  %8175 = vmatmul.mubr.f32.gmra.mrb[0].mxu0 %v7945
  %v8176 = vpop.f32.mrb[0].mxu0
  %v8177 = vadd.f32 0.0, %v8176
  %v8178 = vpop.f32.mrb[0].mxu0
  %8179 = vmatprep.mubr.f32.mxu0 0.0
  %8180 = vmatmul.mubr.f32.gmra.mrb[0].mxu0 %v7946
  %v8181 = vpop.f32.mrb[0].mxu0
  %v8182 = vadd.f32 0.0, %v8181
  %v8183 = vpop.f32.mrb[0].mxu0
  %8184 = vmatprep.mubr.f32.mxu0 0.0
  %8185 = vmatmul.mubr.f32.gmra.mrb[0].mxu0 %v7947
  %v8186 = vpop.f32.mrb[0].mxu0
  %v8187 = vadd.f32 0.0, %v8186
  %v8188 = vpop.f32.mrb[0].mxu0
  %8189 = vmatprep.mubr.f32.mxu0 0.0
  %8190 = vmatmul.mubr.f32.gmra.mrb[0].mxu0 %v7948
  %v8191 = vpop.f32.mrb[0].mxu0
  %v8192 = vadd.f32 0.0, %v8191
  %v8193 = vpop.f32.mrb[0].mxu0
  %8194 = vmatprep.mubr.f32.mxu0 0.0
  %8195 = vmatmul.mubr.f32.gmra.mrb[0].mxu0 %v7949
  %v8196 = vpop.f32.mrb[0].mxu0
  %v8197 = vadd.f32 0.0, %v8196
  %v8198 = vpop.f32.mrb[0].mxu0
  %8199 = vmatprep.mubr.f32.mxu0 0.0
  %8200 = vmatmul.mubr.f32.gmra.mrb[0].mxu0 %v7950
  %v8201 = vpop.f32.mrb[0].mxu0
  %v8202 = vadd.f32 0.0, %v8201
  %v8203 = vpop.f32.mrb[0].mxu0
  %8204 = vmatprep.mubr.f32.mxu0 0.0
  %8205 = vmatmul.mubr.f32.gmra.mrb[0].mxu0 %v7951
  %v8206 = vpop.f32.mrb[0].mxu0
  %v8207 = vadd.f32 0.0, %v8206
  %v8208 = vpop.f32.mrb[0].mxu0
  %8209 = vmatprep.mubr.f32.mxu0 0.0
  %8210 = vmatmul.mubr.f32.gmra.mrb[0].mxu0 %v7952
  %v8211 = vpop.f32.mrb[0].mxu0
  %v8212 = vadd.f32 0.0, %v8211
  %v8213 = vpop.f32.mrb[0].mxu0
  %8214 = vmatprep.mubr.f32.mxu0 0.0
  %8215 = vmatmul.mubr.f32.gmra.mrb[0].mxu0 %v7953
  %v8216 = vpop.f32.mrb[0].mxu0
  %v8217 = vadd.f32 0.0, %v8216
  %v8218 = vpop.f32.mrb[0].mxu0
  %8219 = vmatprep.mubr.f32.mxu0 0.0
  %8220 = vmatmul.mubr.f32.gmra.mrb[0].mxu0 %v7954
  %v8221 = vpop.f32.mrb[0].mxu0
  %v8222 = vadd.f32 0.0, %v8221
  %v8223 = vpop.f32.mrb[0].mxu0
  %8224 = vmatprep.mubr.f32.mxu0 0.0
  %8225 = vmatmul.mubr.f32.gmra.mrb[0].mxu0 %v7955
  %v8226 = vpop.f32.mrb[0].mxu0
  %v8227 = vadd.f32 0.0, %v8226
  %v8228 = vpop.f32.mrb[0].mxu0
  %8229 = vmatprep.mubr.f32.mxu0 0.0
  %8230 = vmatmul.mubr.f32.gmra.mrb[0].mxu0 %v7956
  %v8231 = vpop.f32.mrb[0].mxu0
  %v8232 = vadd.f32 0.0, %v8231
  %v8233 = vpop.f32.mrb[0].mxu0
  %8234 = vmatprep.mubr.f32.mxu0 0.0
  %8235 = vmatmul.mubr.f32.gmra.mrb[0].mxu0 %v7957
  %v8236 = vpop.f32.mrb[0].mxu0
  %v8237 = vadd.f32 0.0, %v8236
  %v8238 = vpop.f32.mrb[0].mxu0
  %8239 = vmatprep.mubr.f32.mxu0 0.0
  %8240 = vmatmul.mubr.f32.gmra.mrb[0].mxu0 %v7958
  %v8241 = vpop.f32.mrb[0].mxu0
  %v8242 = vadd.f32 0.0, %v8241
  %v8243 = vpop.f32.mrb[0].mxu0
  %8244 = vmatprep.mubr.f32.mxu0 0.0
  %8245 = vmatmul.mubr.f32.gmra.mrb[0].mxu0 %v7959
  %v8246 = vpop.f32.mrb[0].mxu0
  %v8247 = vadd.f32 0.0, %v8246
  %v8248 = vpop.f32.mrb[0].mxu0
  %8249 = vmatprep.mubr.f32.mxu0 0.0
  %8250 = vmatmul.mubr.f32.gmra.mrb[0].mxu0 %v7960
  %v8251 = vpop.f32.mrb[0].mxu0
  %v8252 = vadd.f32 0.0, %v8251
  %v8253 = vpop.f32.mrb[0].mxu0
  %8254 = vmatprep.mubr.f32.mxu0 0.0
  %8255 = vmatmul.mubr.f32.gmra.mrb[0].mxu0 %v7961
  %v8256 = vpop.f32.mrb[0].mxu0
  %v8257 = vadd.f32 0.0, %v8256
  %v8258 = vpop.f32.mrb[0].mxu0
  %8259 = vmatprep.mubr.f32.mxu0 0.0
  %8260 = vmatmul.mubr.f32.gmra.mrb[0].mxu0 %v7962
  %v8261 = vpop.f32.mrb[0].mxu0
  %v8262 = vadd.f32 0.0, %v8261
  %v8263 = vpop.f32.mrb[0].mxu0
  %8264 = vmatprep.mubr.f32.mxu0 0.0
  %8265 = vmatmul.mubr.f32.gmra.mrb[0].mxu0 %v7963
  %v8266 = vpop.f32.mrb[0].mxu0
  %v8267 = vadd.f32 0.0, %v8266
  %v8268 = vpop.f32.mrb[0].mxu0
  %8269 = vmatprep.mubr.f32.mxu0 0.0
  %8270 = vmatmul.mubr.f32.gmra.mrb[0].mxu0 %v7964
  %v8271 = vpop.f32.mrb[0].mxu0
  %v8272 = vadd.f32 0.0, %v8271
  %v8273 = vpop.f32.mrb[0].mxu0
  %8274 = vmatprep.mubr.f32.mxu0 0.0
  %8275 = vmatmul.mubr.f32.gmra.mrb[0].mxu0 %v7965
  %v8276 = vpop.f32.mrb[0].mxu0
  %v8277 = vadd.f32 0.0, %v8276
  %v8278 = vpop.f32.mrb[0].mxu0
  %8279 = vmatprep.mubr.f32.mxu0 0.0
  %8280 = vmatmul.mubr.f32.gmra.mrb[0].mxu0 %v7966
  %v8281 = vpop.f32.mrb[0].mxu0
  %v8282 = vadd.f32 0.0, %v8281
  %v8283 = vpop.f32.mrb[0].mxu0
  %8284 = vmatprep.mubr.f32.mxu0 0.0
  %8285 = vmatmul.mubr.f32.gmra.mrb[0].mxu0 %v7967
  %v8286 = vpop.f32.mrb[0].mxu0
  %v8287 = vadd.f32 0.0, %v8286
  %v8288 = vpop.f32.mrb[0].mxu0
  %8289 = vmatprep.mubr.f32.mxu0 0.0
  %8290 = vmatmul.mubr.f32.gmra.mrb[0].mxu0 %v7968
  %v8291 = vpop.f32.mrb[0].mxu0
  %v8292 = vadd.f32 0.0, %v8291
  %v8293 = vpop.f32.mrb[0].mxu0
  %8294 = vmatprep.mubr.f32.mxu0 0.0
  %8295 = vmatmul.mubr.f32.gmra.mrb[0].mxu0 %v7969
  %v8296 = vpop.f32.mrb[0].mxu0
  %v8297 = vadd.f32 0.0, %v8296
  %v8298 = vpop.f32.mrb[0].mxu0
  %8299 = vmatprep.mubr.f32.mxu0 0.0
  %8300 = vmatmul.mubr.f32.gmra.mrb[0].mxu0 %v7970
  %v8301 = vpop.f32.mrb[0].mxu0
  %v8302 = vadd.f32 0.0, %v8301
  %v8303 = vpop.f32.mrb[0].mxu0
  %8304 = vmatprep.mubr.f32.mxu0 0.0
  %8305 = vmatmul.mubr.f32.gmra.mrb[0].mxu0 %v7971
  %v8306 = vpop.f32.mrb[0].mxu0
  %v8307 = vadd.f32 0.0, %v8306
  %v8308 = vpop.f32.mrb[0].mxu0
  %8309 = vmatprep.mubr.f32.mxu0 0.0
  %8310 = vmatmul.mubr.f32.gmra.mrb[0].mxu0 %v7972
  %v8311 = vpop.f32.mrb[0].mxu0
  %v8312 = vadd.f32 0.0, %v8311
  %v8313 = vpop.f32.mrb[0].mxu0
  %8314 = vmatprep.mubr.f32.mxu0 0.0
  %8315 = vmatmul.mubr.f32.gmra.mrb[0].mxu0 %v7973
  %v8316 = vpop.f32.mrb[0].mxu0
  %v8317 = vadd.f32 0.0, %v8316
  %v8318 = vpop.f32.mrb[0].mxu0
  %8319 = vmatprep.mubr.f32.mxu0 0.0
  %8320 = vmatmul.mubr.f32.gmra.mrb[0].mxu0 %v7974
  %v8321 = vpop.f32.mrb[0].mxu0
  %v8322 = vadd.f32 0.0, %v8321
  %v8323 = vpop.f32.mrb[0].mxu0
  %8324 = vmatprep.mubr.f32.mxu0 0.0
  %8325 = vmatmul.mubr.f32.gmra.mrb[0].mxu0 %v7975
  %v8326 = vpop.f32.mrb[0].mxu0
  %v8327 = vadd.f32 0.0, %v8326
  %v8328 = vpop.f32.mrb[0].mxu0
  %8329 = vmatprep.mubr.f32.mxu0 0.0
  %8330 = vmatmul.mubr.f32.gmra.mrb[0].mxu0 %v7976
  %v8331 = vpop.f32.mrb[0].mxu0
  %v8332 = vadd.f32 0.0, %v8331
  %v8333 = vpop.f32.mrb[0].mxu0
  %8334 = vmatprep.mubr.f32.mxu0 0.0
  %8335 = vmatmul.mubr.f32.gmra.mrb[0].mxu0 %v7977
  %v8336 = vpop.f32.mrb[0].mxu0
  %v8337 = vadd.f32 0.0, %v8336
  %v8338 = vpop.f32.mrb[0].mxu0
  %8339 = vmatprep.mubr.f32.mxu0 0.0
  %8340 = vmatmul.mubr.f32.gmra.mrb[0].mxu0 %v7978
  %v8341 = vpop.f32.mrb[0].mxu0
  %v8342 = vadd.f32 0.0, %v8341
  %v8343 = vpop.f32.mrb[0].mxu0
  %8344 = vmatprep.mubr.f32.mxu0 0.0
  %8345 = vmatmul.mubr.f32.gmra.mrb[0].mxu0 %v7979
  %v8346 = vpop.f32.mrb[0].mxu0
  %v8347 = vadd.f32 0.0, %v8346
  %v8348 = vpop.f32.mrb[0].mxu0
  %8349 = vmatprep.mubr.f32.mxu0 0.0
  %8350 = vmatmul.mubr.f32.gmra.mrb[0].mxu0 %v7980
  %v8351 = vpop.f32.mrb[0].mxu0
  %v8352 = vadd.f32 0.0, %v8351
  %v8353 = vpop.f32.mrb[0].mxu0
  %8354 = vmatprep.mubr.f32.mxu0 0.0
  %8355 = vmatmul.mubr.f32.gmra.mrb[0].mxu0 %v7981
  %v8356 = vpop.f32.mrb[0].mxu0
  %v8357 = vadd.f32 0.0, %v8356
  %v8358 = vpop.f32.mrb[0].mxu0
  %8359 = vmatprep.mubr.f32.mxu0 0.0
  %8360 = vmatmul.mubr.f32.gmra.mrb[0].mxu0 %v7982
  %v8361 = vpop.f32.mrb[0].mxu0
  %v8362 = vadd.f32 0.0, %v8361
  %v8363 = vpop.f32.mrb[0].mxu0
  %8364 = vmatprep.mubr.f32.mxu0 0.0
  %8365 = vmatmul.mubr.f32.gmra.mrb[0].mxu0 %v7983
  %v8366 = vpop.f32.mrb[0].mxu0
  %v8367 = vadd.f32 0.0, %v8366
  %v8368 = vpop.f32.mrb[0].mxu0
  %8369 = vmatprep.mubr.f32.mxu0 0.0
  %8370 = vmatmul.mubr.f32.gmra.mrb[0].mxu0 %v7984
  %v8371 = vpop.f32.mrb[0].mxu0
  %v8372 = vadd.f32 0.0, %v8371
  %v8373 = vpop.f32.mrb[0].mxu0
  %8374 = vmatprep.mubr.f32.mxu0 0.0
  %8375 = vmatmul.mubr.f32.gmra.mrb[0].mxu0 %v7985
  %v8376 = vpop.f32.mrb[0].mxu0
  %v8377 = vadd.f32 0.0, %v8376
  %v8378 = vpop.f32.mrb[0].mxu0
  %8379 = vmatprep.mubr.f32.mxu0 0.0
  %8380 = vmatmul.mubr.f32.gmra.mrb[0].mxu0 %v7986
  %v8381 = vpop.f32.mrb[0].mxu0
  %v8382 = vadd.f32 0.0, %v8381
  %v8383 = vpop.f32.mrb[0].mxu0
  %8384 = vmatprep.mubr.f32.mxu0 0.0
  %8385 = vmatmul.mubr.f32.gmra.mrb[0].mxu0 %v7987
  %v8386 = vpop.f32.mrb[0].mxu0
  %v8387 = vadd.f32 0.0, %v8386
  %v8388 = vpop.f32.mrb[0].mxu0
  %8389 = vdwg.mxu0
  %v8390 = vadd.f32 %v7606, %v8072
  %v8391 = vadd.f32 %v7611, %v8077
  %v8392 = vadd.f32 %v7616, %v8082
  %v8393 = vadd.f32 %v7621, %v8087
  %v8394 = vadd.f32 %v7626, %v8092
  %v8395 = vadd.f32 %v7631, %v8097
  %v8396 = vadd.f32 %v7636, %v8102
  %v8397 = vadd.f32 %v7641, %v8107
  %v8398 = vadd.f32 %v7646, %v8112
  %v8399 = vadd.f32 %v7651, %v8117
  %v8400 = vadd.f32 %v7656, %v8122
  %v8401 = vadd.f32 %v7661, %v8127
  %v8402 = vadd.f32 %v7666, %v8132
  %v8403 = vadd.f32 %v7671, %v8137
  %v8404 = vadd.f32 %v7676, %v8142
  %v8405 = vadd.f32 %v7681, %v8147
  %v8406 = vadd.f32 %v7686, %v8152
  %v8407 = vadd.f32 %v7691, %v8157
  %v8408 = vadd.f32 %v7696, %v8162
  %v8409 = vadd.f32 %v7701, %v8167
  %v8410 = vadd.f32 %v7706, %v8172
  %v8411 = vadd.f32 %v7711, %v8177
  %v8412 = vadd.f32 %v7716, %v8182
  %v8413 = vadd.f32 %v7721, %v8187
  %v8414 = vadd.f32 %v7726, %v8192
  %v8415 = vadd.f32 %v7731, %v8197
  %v8416 = vadd.f32 %v7736, %v8202
  %v8417 = vadd.f32 %v7741, %v8207
  %v8418 = vadd.f32 %v7746, %v8212
  %v8419 = vadd.f32 %v7751, %v8217
  %v8420 = vadd.f32 %v7756, %v8222
  %v8421 = vadd.f32 %v7761, %v8227
  %v8422 = vadd.f32 %v7766, %v8232
  %v8423 = vadd.f32 %v7771, %v8237
  %v8424 = vadd.f32 %v7776, %v8242
  %v8425 = vadd.f32 %v7781, %v8247
  %v8426 = vadd.f32 %v7786, %v8252
  %v8427 = vadd.f32 %v7791, %v8257
  %v8428 = vadd.f32 %v7796, %v8262
  %v8429 = vadd.f32 %v7801, %v8267
  %v8430 = vadd.f32 %v7806, %v8272
  %v8431 = vadd.f32 %v7811, %v8277
  %v8432 = vadd.f32 %v7816, %v8282
  %v8433 = vadd.f32 %v7821, %v8287
  %v8434 = vadd.f32 %v7826, %v8292
  %v8435 = vadd.f32 %v7831, %v8297
  %v8436 = vadd.f32 %v7836, %v8302
  %v8437 = vadd.f32 %v7841, %v8307
  %v8438 = vadd.f32 %v7846, %v8312
  %v8439 = vadd.f32 %v7851, %v8317
  %v8440 = vadd.f32 %v7856, %v8322
  %v8441 = vadd.f32 %v7861, %v8327
  %v8442 = vadd.f32 %v7866, %v8332
  %v8443 = vadd.f32 %v7871, %v8337
  %v8444 = vadd.f32 %v7876, %v8342
  %v8445 = vadd.f32 %v7881, %v8347
  %v8446 = vadd.f32 %v7886, %v8352
  %v8447 = vadd.f32 %v7891, %v8357
  %v8448 = vadd.f32 %v7896, %v8362
  %v8449 = vadd.f32 %v7901, %v8367
  %v8450 = vadd.f32 %v7906, %v8372
  %v8451 = vadd.f32 %v7911, %v8377
  %v8452 = vadd.f32 %v7916, %v8382
  %v8453 = vadd.f32 %v7921, %v8387
  %v8454 = vld [vmem:[%s6864] sm:$0xff]
  %v8455 = vld [vmem:[%s6864 + $0x8] sm:$0xff]
  %v8456 = vld [vmem:[%s6864 + $0x18] sm:$0xff]
  %v8457 = vld [vmem:[%s6864 + $0x20] sm:$0xff]
  %v8458 = vld [vmem:[%s6864 + $0x30] sm:$0xff]
  %v8459 = vld [vmem:[%s6864 + $0x38] sm:$0xff]
  %v8460 = vld [vmem:[%s6864 + $0x48] sm:$0xff]
  %v8461 = vld [vmem:[%s6864 + $0x50] sm:$0xff]
  %v8462 = vld [vmem:[%s6864 + $0x60] sm:$0xff]
  %v8463 = vld [vmem:[%s6864 + $0x68] sm:$0xff]
  %v8464 = vld [vmem:[%s6864 + $0x78] sm:$0xff]
  %v8465 = vld [vmem:[%s6864 + $0x80] sm:$0xff]
  %v8466 = vld [vmem:[%s6864 + $0x90] sm:$0xff]
  %v8467 = vld [vmem:[%s6864 + $0x98] sm:$0xff]
  %v8468 = vld [vmem:[%s6864 + $0xa8] sm:$0xff]
  %v8469 = vld [vmem:[%s6864 + $0xb0] sm:$0xff]
  %v8470 = vld [vmem:[%s6864 + $0xc0] sm:$0xff]
  %v8471 = vld [vmem:[%s6864 + $0xc8] sm:$0xff]
  %v8472 = vld [vmem:[%s6864 + $0xd8] sm:$0xff]
  %v8473 = vld [vmem:[%s6864 + $0xe0] sm:$0xff]
  %v8474 = vld [vmem:[%s6864 + $0xf0] sm:$0xff]
  %v8475 = vld [vmem:[%s6864 + $0xf8] sm:$0xff]
  %v8476 = vld [vmem:[%s6864 + $0x108] sm:$0xff]
  %v8477 = vld [vmem:[%s6864 + $0x110] sm:$0xff]
  %v8478 = vld [vmem:[%s6864 + $0x120] sm:$0xff]
  %v8479 = vld [vmem:[%s6864 + $0x128] sm:$0xff]
  %v8480 = vld [vmem:[%s6864 + $0x138] sm:$0xff]
  %v8481 = vld [vmem:[%s6864 + $0x140] sm:$0xff]
  %v8482 = vld [vmem:[%s6864 + $0x150] sm:$0xff]
  %v8483 = vld [vmem:[%s6864 + $0x158] sm:$0xff]
  %v8484 = vld [vmem:[%s6864 + $0x168] sm:$0xff]
  %v8485 = vld [vmem:[%s6864 + $0x170] sm:$0xff]
  %v8486 = vld [vmem:[%s6864 + $0x1b0] sm:$0xff]
  %v8487 = vld [vmem:[%s6864 + $0x1b8] sm:$0xff]
  %v8488 = vld [vmem:[%s6864 + $0x1c8] sm:$0xff]
  %v8489 = vld [vmem:[%s6864 + $0x1d0] sm:$0xff]
  %v8490 = vld [vmem:[%s6864 + $0x1e0] sm:$0xff]
  %v8491 = vld [vmem:[%s6864 + $0x1e8] sm:$0xff]
  %v8492 = vld [vmem:[%s6864 + $0x1f8] sm:$0xff]
  %v8493 = vld [vmem:[%s6864 + $0x200] sm:$0xff]
  %v8494 = vld [vmem:[%s6864 + $0x210] sm:$0xff]
  %v8495 = vld [vmem:[%s6864 + $0x218] sm:$0xff]
  %v8496 = vld [vmem:[%s6864 + $0x228] sm:$0xff]
  %v8497 = vld [vmem:[%s6864 + $0x230] sm:$0xff]
  %v8498 = vld [vmem:[%s6864 + $0x240] sm:$0xff]
  %v8499 = vld [vmem:[%s6864 + $0x248] sm:$0xff]
  %v8500 = vld [vmem:[%s6864 + $0x258] sm:$0xff]
  %v8501 = vld [vmem:[%s6864 + $0x260] sm:$0xff]
  %v8502 = vld [vmem:[%s6864 + $0x270] sm:$0xff]
  %v8503 = vld [vmem:[%s6864 + $0x278] sm:$0xff]
  %v8504 = vld [vmem:[%s6864 + $0x288] sm:$0xff]
  %v8505 = vld [vmem:[%s6864 + $0x290] sm:$0xff]
  %v8506 = vld [vmem:[%s6864 + $0x2a0] sm:$0xff]
  %v8507 = vld [vmem:[%s6864 + $0x2a8] sm:$0xff]
  %v8508 = vld [vmem:[%s6864 + $0x2b8] sm:$0xff]
  %v8509 = vld [vmem:[%s6864 + $0x2c0] sm:$0xff]
  %v8510 = vld [vmem:[%s6864 + $0x2d0] sm:$0xff]
  %v8511 = vld [vmem:[%s6864 + $0x2d8] sm:$0xff]
  %v8512 = vld [vmem:[%s6864 + $0x2e8] sm:$0xff]
  %v8513 = vld [vmem:[%s6864 + $0x2f0] sm:$0xff]
  %v8514 = vld [vmem:[%s6864 + $0x300] sm:$0xff]
  %v8515 = vld [vmem:[%s6864 + $0x308] sm:$0xff]
  %v8516 = vld [vmem:[%s6864 + $0x318] sm:$0xff]
  %v8517 = vld [vmem:[%s6864 + $0x320] sm:$0xff]
  %s8518 = scalar_lea.vmem %s4, 384
  %v8519 = vld [vmem:[%s8518] sm:$0xff]
  %v8520 = vld [vmem:[%s8518 + $0x8] sm:$0xff]
  %v8521 = vld [vmem:[%s8518 + $0x10] sm:$0xff]
  %v8522 = vld [vmem:[%s8518 + $0x18] sm:$0xff]
  %v8523 = vld [vmem:[%s8518 + $0x20] sm:$0xff]
  %v8524 = vld [vmem:[%s8518 + $0x28] sm:$0xff]
  %v8525 = vld [vmem:[%s8518 + $0x30] sm:$0xff]
  %v8526 = vld [vmem:[%s8518 + $0x38] sm:$0xff]
  %v8527 = vld [vmem:[%s8518 + $0x40] sm:$0xff]
  %v8528 = vld [vmem:[%s8518 + $0x48] sm:$0xff]
  %v8529 = vld [vmem:[%s8518 + $0x50] sm:$0xff]
  %v8530 = vld [vmem:[%s8518 + $0x58] sm:$0xff]
  %v8531 = vld [vmem:[%s8518 + $0x60] sm:$0xff]
  %v8532 = vld [vmem:[%s8518 + $0x68] sm:$0xff]
  %v8533 = vld [vmem:[%s8518 + $0x70] sm:$0xff]
  %v8534 = vld [vmem:[%s8518 + $0x78] sm:$0xff]
  %8535 = vmatprep.subr.mxu0 0.0
  %8536 = vmatpush1.msra.mxu0 %v8519
  %8537 = vmatprep.subr.mxu0 0.0
  %8538 = vmatpush1.msra.mxu0 %v8520
  %8539 = vmatprep.subr.mxu0 0.0
  %8540 = vmatpush1.msra.mxu0 %v8521
  %8541 = vmatprep.subr.mxu0 0.0
  %8542 = vmatpush1.msra.mxu0 %v8522
  %8543 = vmatprep.subr.mxu0 0.0
  %8544 = vmatpush1.msra.mxu0 %v8523
  %8545 = vmatprep.subr.mxu0 0.0
  %8546 = vmatpush1.msra.mxu0 %v8524
  %8547 = vmatprep.subr.mxu0 0.0
  %8548 = vmatpush1.msra.mxu0 %v8525
  %8549 = vmatprep.subr.mxu0 0.0
  %8550 = vmatpush1.msra.mxu0 %v8526
  %8551 = vmatprep.subr.mxu0 0.0
  %8552 = vmatpush1.msra.mxu0 %v8527
  %8553 = vmatprep.subr.mxu0 0.0
  %8554 = vmatpush1.msra.mxu0 %v8528
  %8555 = vmatprep.subr.mxu0 0.0
  %8556 = vmatpush1.msra.mxu0 %v8529
  %8557 = vmatprep.subr.mxu0 0.0
  %8558 = vmatpush1.msra.mxu0 %v8530
  %8559 = vmatprep.subr.mxu0 0.0
  %8560 = vmatpush1.msra.mxu0 %v8531
  %8561 = vmatprep.subr.mxu0 0.0
  %8562 = vmatpush1.msra.mxu0 %v8532
  %8563 = vmatprep.subr.mxu0 0.0
  %8564 = vmatpush1.msra.mxu0 %v8533
  %8565 = vmatprep.subr.mxu0 0.0
  %8566 = vmatpush1.msra.mxu0 %v8534
  %8567 = vmatprep.subr.mxu0 0.0
  %8568 = vmatpush1.msra.mxu0 0.0
  %8569 = vmatprep.subr.mxu0 0.0
  %8570 = vmatpush1.msra.mxu0 0.0
  %8571 = vmatprep.subr.mxu0 0.0
  %8572 = vmatpush1.msra.mxu0 0.0
  %8573 = vmatprep.subr.mxu0 0.0
  %8574 = vmatpush1.msra.mxu0 0.0
  %8575 = vmatprep.subr.mxu0 0.0
  %8576 = vmatpush1.msra.mxu0 0.0
  %8577 = vmatprep.subr.mxu0 0.0
  %8578 = vmatpush1.msra.mxu0 0.0
  %8579 = vmatprep.subr.mxu0 0.0
  %8580 = vmatpush1.msra.mxu0 0.0
  %8581 = vmatprep.subr.mxu0 0.0
  %8582 = vmatpush1.msra.mxu0 0.0
  %8583 = vmatprep.subr.mxu0 0.0
  %8584 = vmatpush1.msra.mxu0 0.0
  %8585 = vmatprep.subr.mxu0 0.0
  %8586 = vmatpush1.msra.mxu0 0.0
  %8587 = vmatprep.subr.mxu0 0.0
  %8588 = vmatpush1.msra.mxu0 0.0
  %8589 = vmatprep.subr.mxu0 0.0
  %8590 = vmatpush1.msra.mxu0 0.0
  %8591 = vmatprep.subr.mxu0 0.0
  %8592 = vmatpush1.msra.mxu0 0.0
  %8593 = vmatprep.subr.mxu0 0.0
  %8594 = vmatpush1.msra.mxu0 0.0
  %8595 = vmatprep.subr.mxu0 0.0
  %8596 = vmatpush1.msra.mxu0 0.0
  %8597 = vmatprep.subr.mxu0 0.0
  %8598 = vmatpush1.msra.mxu0 0.0
  %8599 = vmatprep.mubr.f32.mxu0 0.0
  %8600 = vmatmul.mubr.f32.gmra.mrb[0].mxu0 %v8454
  %v8601 = vpop.f32.mrb[0].mxu0
  %v8602 = vadd.f32 0.0, %v8601
  %v8603 = vpop.f32.mrb[0].mxu0
  %8604 = vmatprep.mubr.f32.mxu0 0.0
  %8605 = vmatmul.mubr.f32.gmra.mrb[0].mxu0 %v8455
  %v8606 = vpop.f32.mrb[0].mxu0
  %v8607 = vadd.f32 0.0, %v8606
  %v8608 = vpop.f32.mrb[0].mxu0
  %8609 = vmatprep.mubr.f32.mxu0 0.0
  %8610 = vmatmul.mubr.f32.gmra.mrb[0].mxu0 %v8456
  %v8611 = vpop.f32.mrb[0].mxu0
  %v8612 = vadd.f32 0.0, %v8611
  %v8613 = vpop.f32.mrb[0].mxu0
  %8614 = vmatprep.mubr.f32.mxu0 0.0
  %8615 = vmatmul.mubr.f32.gmra.mrb[0].mxu0 %v8457
  %v8616 = vpop.f32.mrb[0].mxu0
  %v8617 = vadd.f32 0.0, %v8616
  %v8618 = vpop.f32.mrb[0].mxu0
  %8619 = vmatprep.mubr.f32.mxu0 0.0
  %8620 = vmatmul.mubr.f32.gmra.mrb[0].mxu0 %v8458
  %v8621 = vpop.f32.mrb[0].mxu0
  %v8622 = vadd.f32 0.0, %v8621
  %v8623 = vpop.f32.mrb[0].mxu0
  %8624 = vmatprep.mubr.f32.mxu0 0.0
  %8625 = vmatmul.mubr.f32.gmra.mrb[0].mxu0 %v8459
  %v8626 = vpop.f32.mrb[0].mxu0
  %v8627 = vadd.f32 0.0, %v8626
  %v8628 = vpop.f32.mrb[0].mxu0
  %8629 = vmatprep.mubr.f32.mxu0 0.0
  %8630 = vmatmul.mubr.f32.gmra.mrb[0].mxu0 %v8460
  %v8631 = vpop.f32.mrb[0].mxu0
  %v8632 = vadd.f32 0.0, %v8631
  %v8633 = vpop.f32.mrb[0].mxu0
  %8634 = vmatprep.mubr.f32.mxu0 0.0
  %8635 = vmatmul.mubr.f32.gmra.mrb[0].mxu0 %v8461
  %v8636 = vpop.f32.mrb[0].mxu0
  %v8637 = vadd.f32 0.0, %v8636
  %v8638 = vpop.f32.mrb[0].mxu0
  %8639 = vmatprep.mubr.f32.mxu0 0.0
  %8640 = vmatmul.mubr.f32.gmra.mrb[0].mxu0 %v8462
  %v8641 = vpop.f32.mrb[0].mxu0
  %v8642 = vadd.f32 0.0, %v8641
  %v8643 = vpop.f32.mrb[0].mxu0
  %8644 = vmatprep.mubr.f32.mxu0 0.0
  %8645 = vmatmul.mubr.f32.gmra.mrb[0].mxu0 %v8463
  %v8646 = vpop.f32.mrb[0].mxu0
  %v8647 = vadd.f32 0.0, %v8646
  %v8648 = vpop.f32.mrb[0].mxu0
  %8649 = vmatprep.mubr.f32.mxu0 0.0
  %8650 = vmatmul.mubr.f32.gmra.mrb[0].mxu0 %v8464
  %v8651 = vpop.f32.mrb[0].mxu0
  %v8652 = vadd.f32 0.0, %v8651
  %v8653 = vpop.f32.mrb[0].mxu0
  %8654 = vmatprep.mubr.f32.mxu0 0.0
  %8655 = vmatmul.mubr.f32.gmra.mrb[0].mxu0 %v8465
  %v8656 = vpop.f32.mrb[0].mxu0
  %v8657 = vadd.f32 0.0, %v8656
  %v8658 = vpop.f32.mrb[0].mxu0
  %8659 = vmatprep.mubr.f32.mxu0 0.0
  %8660 = vmatmul.mubr.f32.gmra.mrb[0].mxu0 %v8466
  %v8661 = vpop.f32.mrb[0].mxu0
  %v8662 = vadd.f32 0.0, %v8661
  %v8663 = vpop.f32.mrb[0].mxu0
  %8664 = vmatprep.mubr.f32.mxu0 0.0
  %8665 = vmatmul.mubr.f32.gmra.mrb[0].mxu0 %v8467
  %v8666 = vpop.f32.mrb[0].mxu0
  %v8667 = vadd.f32 0.0, %v8666
  %v8668 = vpop.f32.mrb[0].mxu0
  %8669 = vmatprep.mubr.f32.mxu0 0.0
  %8670 = vmatmul.mubr.f32.gmra.mrb[0].mxu0 %v8468
  %v8671 = vpop.f32.mrb[0].mxu0
  %v8672 = vadd.f32 0.0, %v8671
  %v8673 = vpop.f32.mrb[0].mxu0
  %8674 = vmatprep.mubr.f32.mxu0 0.0
  %8675 = vmatmul.mubr.f32.gmra.mrb[0].mxu0 %v8469
  %v8676 = vpop.f32.mrb[0].mxu0
  %v8677 = vadd.f32 0.0, %v8676
  %v8678 = vpop.f32.mrb[0].mxu0
  %8679 = vmatprep.mubr.f32.mxu0 0.0
  %8680 = vmatmul.mubr.f32.gmra.mrb[0].mxu0 %v8470
  %v8681 = vpop.f32.mrb[0].mxu0
  %v8682 = vadd.f32 0.0, %v8681
  %v8683 = vpop.f32.mrb[0].mxu0
  %8684 = vmatprep.mubr.f32.mxu0 0.0
  %8685 = vmatmul.mubr.f32.gmra.mrb[0].mxu0 %v8471
  %v8686 = vpop.f32.mrb[0].mxu0
  %v8687 = vadd.f32 0.0, %v8686
  %v8688 = vpop.f32.mrb[0].mxu0
  %8689 = vmatprep.mubr.f32.mxu0 0.0
  %8690 = vmatmul.mubr.f32.gmra.mrb[0].mxu0 %v8472
  %v8691 = vpop.f32.mrb[0].mxu0
  %v8692 = vadd.f32 0.0, %v8691
  %v8693 = vpop.f32.mrb[0].mxu0
  %8694 = vmatprep.mubr.f32.mxu0 0.0
  %8695 = vmatmul.mubr.f32.gmra.mrb[0].mxu0 %v8473
  %v8696 = vpop.f32.mrb[0].mxu0
  %v8697 = vadd.f32 0.0, %v8696
  %v8698 = vpop.f32.mrb[0].mxu0
  %8699 = vmatprep.mubr.f32.mxu0 0.0
  %8700 = vmatmul.mubr.f32.gmra.mrb[0].mxu0 %v8474
  %v8701 = vpop.f32.mrb[0].mxu0
  %v8702 = vadd.f32 0.0, %v8701
  %v8703 = vpop.f32.mrb[0].mxu0
  %8704 = vmatprep.mubr.f32.mxu0 0.0
  %8705 = vmatmul.mubr.f32.gmra.mrb[0].mxu0 %v8475
  %v8706 = vpop.f32.mrb[0].mxu0
  %v8707 = vadd.f32 0.0, %v8706
  %v8708 = vpop.f32.mrb[0].mxu0
  %8709 = vmatprep.mubr.f32.mxu0 0.0
  %8710 = vmatmul.mubr.f32.gmra.mrb[0].mxu0 %v8476
  %v8711 = vpop.f32.mrb[0].mxu0
  %v8712 = vadd.f32 0.0, %v8711
  %v8713 = vpop.f32.mrb[0].mxu0
  %8714 = vmatprep.mubr.f32.mxu0 0.0
  %8715 = vmatmul.mubr.f32.gmra.mrb[0].mxu0 %v8477
  %v8716 = vpop.f32.mrb[0].mxu0
  %v8717 = vadd.f32 0.0, %v8716
  %v8718 = vpop.f32.mrb[0].mxu0
  %8719 = vmatprep.mubr.f32.mxu0 0.0
  %8720 = vmatmul.mubr.f32.gmra.mrb[0].mxu0 %v8478
  %v8721 = vpop.f32.mrb[0].mxu0
  %v8722 = vadd.f32 0.0, %v8721
  %v8723 = vpop.f32.mrb[0].mxu0
  %8724 = vmatprep.mubr.f32.mxu0 0.0
  %8725 = vmatmul.mubr.f32.gmra.mrb[0].mxu0 %v8479
  %v8726 = vpop.f32.mrb[0].mxu0
  %v8727 = vadd.f32 0.0, %v8726
  %v8728 = vpop.f32.mrb[0].mxu0
  %8729 = vmatprep.mubr.f32.mxu0 0.0
  %8730 = vmatmul.mubr.f32.gmra.mrb[0].mxu0 %v8480
  %v8731 = vpop.f32.mrb[0].mxu0
  %v8732 = vadd.f32 0.0, %v8731
  %v8733 = vpop.f32.mrb[0].mxu0
  %8734 = vmatprep.mubr.f32.mxu0 0.0
  %8735 = vmatmul.mubr.f32.gmra.mrb[0].mxu0 %v8481
  %v8736 = vpop.f32.mrb[0].mxu0
  %v8737 = vadd.f32 0.0, %v8736
  %v8738 = vpop.f32.mrb[0].mxu0
  %8739 = vmatprep.mubr.f32.mxu0 0.0
  %8740 = vmatmul.mubr.f32.gmra.mrb[0].mxu0 %v8482
  %v8741 = vpop.f32.mrb[0].mxu0
  %v8742 = vadd.f32 0.0, %v8741
  %v8743 = vpop.f32.mrb[0].mxu0
  %8744 = vmatprep.mubr.f32.mxu0 0.0
  %8745 = vmatmul.mubr.f32.gmra.mrb[0].mxu0 %v8483
  %v8746 = vpop.f32.mrb[0].mxu0
  %v8747 = vadd.f32 0.0, %v8746
  %v8748 = vpop.f32.mrb[0].mxu0
  %8749 = vmatprep.mubr.f32.mxu0 0.0
  %8750 = vmatmul.mubr.f32.gmra.mrb[0].mxu0 %v8484
  %v8751 = vpop.f32.mrb[0].mxu0
  %v8752 = vadd.f32 0.0, %v8751
  %v8753 = vpop.f32.mrb[0].mxu0
  %8754 = vmatprep.mubr.f32.mxu0 0.0
  %8755 = vmatmul.mubr.f32.gmra.mrb[0].mxu0 %v8485
  %v8756 = vpop.f32.mrb[0].mxu0
  %v8757 = vadd.f32 0.0, %v8756
  %v8758 = vpop.f32.mrb[0].mxu0
  %8759 = vmatprep.mubr.f32.mxu0 0.0
  %8760 = vmatmul.mubr.f32.gmra.mrb[0].mxu0 %v8486
  %v8761 = vpop.f32.mrb[0].mxu0
  %v8762 = vadd.f32 0.0, %v8761
  %v8763 = vpop.f32.mrb[0].mxu0
  %8764 = vmatprep.mubr.f32.mxu0 0.0
  %8765 = vmatmul.mubr.f32.gmra.mrb[0].mxu0 %v8487
  %v8766 = vpop.f32.mrb[0].mxu0
  %v8767 = vadd.f32 0.0, %v8766
  %v8768 = vpop.f32.mrb[0].mxu0
  %8769 = vmatprep.mubr.f32.mxu0 0.0
  %8770 = vmatmul.mubr.f32.gmra.mrb[0].mxu0 %v8488
  %v8771 = vpop.f32.mrb[0].mxu0
  %v8772 = vadd.f32 0.0, %v8771
  %v8773 = vpop.f32.mrb[0].mxu0
  %8774 = vmatprep.mubr.f32.mxu0 0.0
  %8775 = vmatmul.mubr.f32.gmra.mrb[0].mxu0 %v8489
  %v8776 = vpop.f32.mrb[0].mxu0
  %v8777 = vadd.f32 0.0, %v8776
  %v8778 = vpop.f32.mrb[0].mxu0
  %8779 = vmatprep.mubr.f32.mxu0 0.0
  %8780 = vmatmul.mubr.f32.gmra.mrb[0].mxu0 %v8490
  %v8781 = vpop.f32.mrb[0].mxu0
  %v8782 = vadd.f32 0.0, %v8781
  %v8783 = vpop.f32.mrb[0].mxu0
  %8784 = vmatprep.mubr.f32.mxu0 0.0
  %8785 = vmatmul.mubr.f32.gmra.mrb[0].mxu0 %v8491
  %v8786 = vpop.f32.mrb[0].mxu0
  %v8787 = vadd.f32 0.0, %v8786
  %v8788 = vpop.f32.mrb[0].mxu0
  %8789 = vmatprep.mubr.f32.mxu0 0.0
  %8790 = vmatmul.mubr.f32.gmra.mrb[0].mxu0 %v8492
  %v8791 = vpop.f32.mrb[0].mxu0
  %v8792 = vadd.f32 0.0, %v8791
  %v8793 = vpop.f32.mrb[0].mxu0
  %8794 = vmatprep.mubr.f32.mxu0 0.0
  %8795 = vmatmul.mubr.f32.gmra.mrb[0].mxu0 %v8493
  %v8796 = vpop.f32.mrb[0].mxu0
  %v8797 = vadd.f32 0.0, %v8796
  %v8798 = vpop.f32.mrb[0].mxu0
  %8799 = vmatprep.mubr.f32.mxu0 0.0
  %8800 = vmatmul.mubr.f32.gmra.mrb[0].mxu0 %v8494
  %v8801 = vpop.f32.mrb[0].mxu0
  %v8802 = vadd.f32 0.0, %v8801
  %v8803 = vpop.f32.mrb[0].mxu0
  %8804 = vmatprep.mubr.f32.mxu0 0.0
  %8805 = vmatmul.mubr.f32.gmra.mrb[0].mxu0 %v8495
  %v8806 = vpop.f32.mrb[0].mxu0
  %v8807 = vadd.f32 0.0, %v8806
  %v8808 = vpop.f32.mrb[0].mxu0
  %8809 = vmatprep.mubr.f32.mxu0 0.0
  %8810 = vmatmul.mubr.f32.gmra.mrb[0].mxu0 %v8496
  %v8811 = vpop.f32.mrb[0].mxu0
  %v8812 = vadd.f32 0.0, %v8811
  %v8813 = vpop.f32.mrb[0].mxu0
  %8814 = vmatprep.mubr.f32.mxu0 0.0
  %8815 = vmatmul.mubr.f32.gmra.mrb[0].mxu0 %v8497
  %v8816 = vpop.f32.mrb[0].mxu0
  %v8817 = vadd.f32 0.0, %v8816
  %v8818 = vpop.f32.mrb[0].mxu0
  %8819 = vmatprep.mubr.f32.mxu0 0.0
  %8820 = vmatmul.mubr.f32.gmra.mrb[0].mxu0 %v8498
  %v8821 = vpop.f32.mrb[0].mxu0
  %v8822 = vadd.f32 0.0, %v8821
  %v8823 = vpop.f32.mrb[0].mxu0
  %8824 = vmatprep.mubr.f32.mxu0 0.0
  %8825 = vmatmul.mubr.f32.gmra.mrb[0].mxu0 %v8499
  %v8826 = vpop.f32.mrb[0].mxu0
  %v8827 = vadd.f32 0.0, %v8826
  %v8828 = vpop.f32.mrb[0].mxu0
  %8829 = vmatprep.mubr.f32.mxu0 0.0
  %8830 = vmatmul.mubr.f32.gmra.mrb[0].mxu0 %v8500
  %v8831 = vpop.f32.mrb[0].mxu0
  %v8832 = vadd.f32 0.0, %v8831
  %v8833 = vpop.f32.mrb[0].mxu0
  %8834 = vmatprep.mubr.f32.mxu0 0.0
  %8835 = vmatmul.mubr.f32.gmra.mrb[0].mxu0 %v8501
  %v8836 = vpop.f32.mrb[0].mxu0
  %v8837 = vadd.f32 0.0, %v8836
  %v8838 = vpop.f32.mrb[0].mxu0
  %8839 = vmatprep.mubr.f32.mxu0 0.0
  %8840 = vmatmul.mubr.f32.gmra.mrb[0].mxu0 %v8502
  %v8841 = vpop.f32.mrb[0].mxu0
  %v8842 = vadd.f32 0.0, %v8841
  %v8843 = vpop.f32.mrb[0].mxu0
  %8844 = vmatprep.mubr.f32.mxu0 0.0
  %8845 = vmatmul.mubr.f32.gmra.mrb[0].mxu0 %v8503
  %v8846 = vpop.f32.mrb[0].mxu0
  %v8847 = vadd.f32 0.0, %v8846
  %v8848 = vpop.f32.mrb[0].mxu0
  %8849 = vmatprep.mubr.f32.mxu0 0.0
  %8850 = vmatmul.mubr.f32.gmra.mrb[0].mxu0 %v8504
  %v8851 = vpop.f32.mrb[0].mxu0
  %v8852 = vadd.f32 0.0, %v8851
  %v8853 = vpop.f32.mrb[0].mxu0
  %8854 = vmatprep.mubr.f32.mxu0 0.0
  %8855 = vmatmul.mubr.f32.gmra.mrb[0].mxu0 %v8505
  %v8856 = vpop.f32.mrb[0].mxu0
  %v8857 = vadd.f32 0.0, %v8856
  %v8858 = vpop.f32.mrb[0].mxu0
  %8859 = vmatprep.mubr.f32.mxu0 0.0
  %8860 = vmatmul.mubr.f32.gmra.mrb[0].mxu0 %v8506
  %v8861 = vpop.f32.mrb[0].mxu0
  %v8862 = vadd.f32 0.0, %v8861
  %v8863 = vpop.f32.mrb[0].mxu0
  %8864 = vmatprep.mubr.f32.mxu0 0.0
  %8865 = vmatmul.mubr.f32.gmra.mrb[0].mxu0 %v8507
  %v8866 = vpop.f32.mrb[0].mxu0
  %v8867 = vadd.f32 0.0, %v8866
  %v8868 = vpop.f32.mrb[0].mxu0
  %8869 = vmatprep.mubr.f32.mxu0 0.0
  %8870 = vmatmul.mubr.f32.gmra.mrb[0].mxu0 %v8508
  %v8871 = vpop.f32.mrb[0].mxu0
  %v8872 = vadd.f32 0.0, %v8871
  %v8873 = vpop.f32.mrb[0].mxu0
  %8874 = vmatprep.mubr.f32.mxu0 0.0
  %8875 = vmatmul.mubr.f32.gmra.mrb[0].mxu0 %v8509
  %v8876 = vpop.f32.mrb[0].mxu0
  %v8877 = vadd.f32 0.0, %v8876
  %v8878 = vpop.f32.mrb[0].mxu0
  %8879 = vmatprep.mubr.f32.mxu0 0.0
  %8880 = vmatmul.mubr.f32.gmra.mrb[0].mxu0 %v8510
  %v8881 = vpop.f32.mrb[0].mxu0
  %v8882 = vadd.f32 0.0, %v8881
  %v8883 = vpop.f32.mrb[0].mxu0
  %8884 = vmatprep.mubr.f32.mxu0 0.0
  %8885 = vmatmul.mubr.f32.gmra.mrb[0].mxu0 %v8511
  %v8886 = vpop.f32.mrb[0].mxu0
  %v8887 = vadd.f32 0.0, %v8886
  %v8888 = vpop.f32.mrb[0].mxu0
  %8889 = vmatprep.mubr.f32.mxu0 0.0
  %8890 = vmatmul.mubr.f32.gmra.mrb[0].mxu0 %v8512
  %v8891 = vpop.f32.mrb[0].mxu0
  %v8892 = vadd.f32 0.0, %v8891
  %v8893 = vpop.f32.mrb[0].mxu0
  %8894 = vmatprep.mubr.f32.mxu0 0.0
  %8895 = vmatmul.mubr.f32.gmra.mrb[0].mxu0 %v8513
  %v8896 = vpop.f32.mrb[0].mxu0
  %v8897 = vadd.f32 0.0, %v8896
  %v8898 = vpop.f32.mrb[0].mxu0
  %8899 = vmatprep.mubr.f32.mxu0 0.0
  %8900 = vmatmul.mubr.f32.gmra.mrb[0].mxu0 %v8514
  %v8901 = vpop.f32.mrb[0].mxu0
  %v8902 = vadd.f32 0.0, %v8901
  %v8903 = vpop.f32.mrb[0].mxu0
  %8904 = vmatprep.mubr.f32.mxu0 0.0
  %8905 = vmatmul.mubr.f32.gmra.mrb[0].mxu0 %v8515
  %v8906 = vpop.f32.mrb[0].mxu0
  %v8907 = vadd.f32 0.0, %v8906
  %v8908 = vpop.f32.mrb[0].mxu0
  %8909 = vmatprep.mubr.f32.mxu0 0.0
  %8910 = vmatmul.mubr.f32.gmra.mrb[0].mxu0 %v8516
  %v8911 = vpop.f32.mrb[0].mxu0
  %v8912 = vadd.f32 0.0, %v8911
  %v8913 = vpop.f32.mrb[0].mxu0
  %8914 = vmatprep.mubr.f32.mxu0 0.0
  %8915 = vmatmul.mubr.f32.gmra.mrb[0].mxu0 %v8517
  %v8916 = vpop.f32.mrb[0].mxu0
  %v8917 = vadd.f32 0.0, %v8916
  %v8918 = vpop.f32.mrb[0].mxu0
  %8919 = vdwg.mxu0
  %v8920 = vadd.f32 %v8390, %v8602
  %v8921 = vadd.f32 %v8391, %v8607
  %v8922 = vadd.f32 %v8392, %v8612
  %v8923 = vadd.f32 %v8393, %v8617
  %v8924 = vadd.f32 %v8394, %v8622
  %v8925 = vadd.f32 %v8395, %v8627
  %v8926 = vadd.f32 %v8396, %v8632
  %v8927 = vadd.f32 %v8397, %v8637
  %v8928 = vadd.f32 %v8398, %v8642
  %v8929 = vadd.f32 %v8399, %v8647
  %v8930 = vadd.f32 %v8400, %v8652
  %v8931 = vadd.f32 %v8401, %v8657
  %v8932 = vadd.f32 %v8402, %v8662
  %v8933 = vadd.f32 %v8403, %v8667
  %v8934 = vadd.f32 %v8404, %v8672
  %v8935 = vadd.f32 %v8405, %v8677
  %v8936 = vadd.f32 %v8406, %v8682
  %v8937 = vadd.f32 %v8407, %v8687
  %v8938 = vadd.f32 %v8408, %v8692
  %v8939 = vadd.f32 %v8409, %v8697
  %v8940 = vadd.f32 %v8410, %v8702
  %v8941 = vadd.f32 %v8411, %v8707
  %v8942 = vadd.f32 %v8412, %v8712
  %v8943 = vadd.f32 %v8413, %v8717
  %v8944 = vadd.f32 %v8414, %v8722
  %v8945 = vadd.f32 %v8415, %v8727
  %v8946 = vadd.f32 %v8416, %v8732
  %v8947 = vadd.f32 %v8417, %v8737
  %v8948 = vadd.f32 %v8418, %v8742
  %v8949 = vadd.f32 %v8419, %v8747
  %v8950 = vadd.f32 %v8420, %v8752
  %v8951 = vadd.f32 %v8421, %v8757
  %v8952 = vadd.f32 %v8422, %v8762
  %v8953 = vadd.f32 %v8423, %v8767
  %v8954 = vadd.f32 %v8424, %v8772
  %v8955 = vadd.f32 %v8425, %v8777
  %v8956 = vadd.f32 %v8426, %v8782
  %v8957 = vadd.f32 %v8427, %v8787
  %v8958 = vadd.f32 %v8428, %v8792
  %v8959 = vadd.f32 %v8429, %v8797
  %v8960 = vadd.f32 %v8430, %v8802
  %v8961 = vadd.f32 %v8431, %v8807
  %v8962 = vadd.f32 %v8432, %v8812
  %v8963 = vadd.f32 %v8433, %v8817
  %v8964 = vadd.f32 %v8434, %v8822
  %v8965 = vadd.f32 %v8435, %v8827
  %v8966 = vadd.f32 %v8436, %v8832
  %v8967 = vadd.f32 %v8437, %v8837
  %v8968 = vadd.f32 %v8438, %v8842
  %v8969 = vadd.f32 %v8439, %v8847
  %v8970 = vadd.f32 %v8440, %v8852
  %v8971 = vadd.f32 %v8441, %v8857
  %v8972 = vadd.f32 %v8442, %v8862
  %v8973 = vadd.f32 %v8443, %v8867
  %v8974 = vadd.f32 %v8444, %v8872
  %v8975 = vadd.f32 %v8445, %v8877
  %v8976 = vadd.f32 %v8446, %v8882
  %v8977 = vadd.f32 %v8447, %v8887
  %v8978 = vadd.f32 %v8448, %v8892
  %v8979 = vadd.f32 %v8449, %v8897
  %v8980 = vadd.f32 %v8450, %v8902
  %v8981 = vadd.f32 %v8451, %v8907
  %v8982 = vadd.f32 %v8452, %v8912
  %v8983 = vadd.f32 %v8453, %v8917
  %v8984 = vld [vmem:[%s6864 + $0x1] sm:$0xff]
  %v8985 = vld [vmem:[%s6864 + $0x9] sm:$0xff]
  %v8986 = vld [vmem:[%s6864 + $0x19] sm:$0xff]
  %v8987 = vld [vmem:[%s6864 + $0x21] sm:$0xff]
  %v8988 = vld [vmem:[%s6864 + $0x31] sm:$0xff]
  %v8989 = vld [vmem:[%s6864 + $0x39] sm:$0xff]
  %v8990 = vld [vmem:[%s6864 + $0x49] sm:$0xff]
  %v8991 = vld [vmem:[%s6864 + $0x51] sm:$0xff]
  %v8992 = vld [vmem:[%s6864 + $0x61] sm:$0xff]
  %v8993 = vld [vmem:[%s6864 + $0x69] sm:$0xff]
  %v8994 = vld [vmem:[%s6864 + $0x79] sm:$0xff]
  %v8995 = vld [vmem:[%s6864 + $0x81] sm:$0xff]
  %v8996 = vld [vmem:[%s6864 + $0x91] sm:$0xff]
  %v8997 = vld [vmem:[%s6864 + $0x99] sm:$0xff]
  %v8998 = vld [vmem:[%s6864 + $0xa9] sm:$0xff]
  %v8999 = vld [vmem:[%s6864 + $0xb1] sm:$0xff]
  %v9000 = vld [vmem:[%s6864 + $0xc1] sm:$0xff]
  %v9001 = vld [vmem:[%s6864 + $0xc9] sm:$0xff]
  %v9002 = vld [vmem:[%s6864 + $0xd9] sm:$0xff]
  %v9003 = vld [vmem:[%s6864 + $0xe1] sm:$0xff]
  %v9004 = vld [vmem:[%s6864 + $0xf1] sm:$0xff]
  %v9005 = vld [vmem:[%s6864 + $0xf9] sm:$0xff]
  %v9006 = vld [vmem:[%s6864 + $0x109] sm:$0xff]
  %v9007 = vld [vmem:[%s6864 + $0x111] sm:$0xff]
  %v9008 = vld [vmem:[%s6864 + $0x121] sm:$0xff]
  %v9009 = vld [vmem:[%s6864 + $0x129] sm:$0xff]
  %v9010 = vld [vmem:[%s6864 + $0x139] sm:$0xff]
  %v9011 = vld [vmem:[%s6864 + $0x141] sm:$0xff]
  %v9012 = vld [vmem:[%s6864 + $0x151] sm:$0xff]
  %v9013 = vld [vmem:[%s6864 + $0x159] sm:$0xff]
  %v9014 = vld [vmem:[%s6864 + $0x169] sm:$0xff]
  %v9015 = vld [vmem:[%s6864 + $0x171] sm:$0xff]
  %v9016 = vld [vmem:[%s6864 + $0x1b1] sm:$0xff]
  %v9017 = vld [vmem:[%s6864 + $0x1b9] sm:$0xff]
  %v9018 = vld [vmem:[%s6864 + $0x1c9] sm:$0xff]
  %v9019 = vld [vmem:[%s6864 + $0x1d1] sm:$0xff]
  %v9020 = vld [vmem:[%s6864 + $0x1e1] sm:$0xff]
  %v9021 = vld [vmem:[%s6864 + $0x1e9] sm:$0xff]
  %v9022 = vld [vmem:[%s6864 + $0x1f9] sm:$0xff]
  %v9023 = vld [vmem:[%s6864 + $0x201] sm:$0xff]
  %v9024 = vld [vmem:[%s6864 + $0x211] sm:$0xff]
  %v9025 = vld [vmem:[%s6864 + $0x219] sm:$0xff]
  %v9026 = vld [vmem:[%s6864 + $0x229] sm:$0xff]
  %v9027 = vld [vmem:[%s6864 + $0x231] sm:$0xff]
  %v9028 = vld [vmem:[%s6864 + $0x241] sm:$0xff]
  %v9029 = vld [vmem:[%s6864 + $0x249] sm:$0xff]
  %v9030 = vld [vmem:[%s6864 + $0x259] sm:$0xff]
  %v9031 = vld [vmem:[%s6864 + $0x261] sm:$0xff]
  %v9032 = vld [vmem:[%s6864 + $0x271] sm:$0xff]
  %v9033 = vld [vmem:[%s6864 + $0x279] sm:$0xff]
  %v9034 = vld [vmem:[%s6864 + $0x289] sm:$0xff]
  %v9035 = vld [vmem:[%s6864 + $0x291] sm:$0xff]
  %v9036 = vld [vmem:[%s6864 + $0x2a1] sm:$0xff]
  %v9037 = vld [vmem:[%s6864 + $0x2a9] sm:$0xff]
  %v9038 = vld [vmem:[%s6864 + $0x2b9] sm:$0xff]
  %v9039 = vld [vmem:[%s6864 + $0x2c1] sm:$0xff]
  %v9040 = vld [vmem:[%s6864 + $0x2d1] sm:$0xff]
  %v9041 = vld [vmem:[%s6864 + $0x2d9] sm:$0xff]
  %v9042 = vld [vmem:[%s6864 + $0x2e9] sm:$0xff]
  %v9043 = vld [vmem:[%s6864 + $0x2f1] sm:$0xff]
  %v9044 = vld [vmem:[%s6864 + $0x301] sm:$0xff]
  %v9045 = vld [vmem:[%s6864 + $0x309] sm:$0xff]
  %v9046 = vld [vmem:[%s6864 + $0x319] sm:$0xff]
  %v9047 = vld [vmem:[%s6864 + $0x321] sm:$0xff]
  %s9048 = scalar_lea.vmem %s4, 512
  %v9049 = vld [vmem:[%s9048] sm:$0xff]
  %v9050 = vld [vmem:[%s9048 + $0x8] sm:$0xff]
  %v9051 = vld [vmem:[%s9048 + $0x10] sm:$0xff]
  %v9052 = vld [vmem:[%s9048 + $0x18] sm:$0xff]
  %v9053 = vld [vmem:[%s9048 + $0x20] sm:$0xff]
  %v9054 = vld [vmem:[%s9048 + $0x28] sm:$0xff]
  %v9055 = vld [vmem:[%s9048 + $0x30] sm:$0xff]
  %v9056 = vld [vmem:[%s9048 + $0x38] sm:$0xff]
  %v9057 = vld [vmem:[%s9048 + $0x40] sm:$0xff]
  %v9058 = vld [vmem:[%s9048 + $0x48] sm:$0xff]
  %v9059 = vld [vmem:[%s9048 + $0x50] sm:$0xff]
  %v9060 = vld [vmem:[%s9048 + $0x58] sm:$0xff]
  %v9061 = vld [vmem:[%s9048 + $0x60] sm:$0xff]
  %v9062 = vld [vmem:[%s9048 + $0x68] sm:$0xff]
  %v9063 = vld [vmem:[%s9048 + $0x70] sm:$0xff]
  %v9064 = vld [vmem:[%s9048 + $0x78] sm:$0xff]
  %9065 = vmatprep.subr.mxu0 0.0
  %9066 = vmatpush1.msra.mxu0 %v9049
  %9067 = vmatprep.subr.mxu0 0.0
  %9068 = vmatpush1.msra.mxu0 %v9050
  %9069 = vmatprep.subr.mxu0 0.0
  %9070 = vmatpush1.msra.mxu0 %v9051
  %9071 = vmatprep.subr.mxu0 0.0
  %9072 = vmatpush1.msra.mxu0 %v9052
  %9073 = vmatprep.subr.mxu0 0.0
  %9074 = vmatpush1.msra.mxu0 %v9053
  %9075 = vmatprep.subr.mxu0 0.0
  %9076 = vmatpush1.msra.mxu0 %v9054
  %9077 = vmatprep.subr.mxu0 0.0
  %9078 = vmatpush1.msra.mxu0 %v9055
  %9079 = vmatprep.subr.mxu0 0.0
  %9080 = vmatpush1.msra.mxu0 %v9056
  %9081 = vmatprep.subr.mxu0 0.0
  %9082 = vmatpush1.msra.mxu0 %v9057
  %9083 = vmatprep.subr.mxu0 0.0
  %9084 = vmatpush1.msra.mxu0 %v9058
  %9085 = vmatprep.subr.mxu0 0.0
  %9086 = vmatpush1.msra.mxu0 %v9059
  %9087 = vmatprep.subr.mxu0 0.0
  %9088 = vmatpush1.msra.mxu0 %v9060
  %9089 = vmatprep.subr.mxu0 0.0
  %9090 = vmatpush1.msra.mxu0 %v9061
  %9091 = vmatprep.subr.mxu0 0.0
  %9092 = vmatpush1.msra.mxu0 %v9062
  %9093 = vmatprep.subr.mxu0 0.0
  %9094 = vmatpush1.msra.mxu0 %v9063
  %9095 = vmatprep.subr.mxu0 0.0
  %9096 = vmatpush1.msra.mxu0 %v9064
  %9097 = vmatprep.subr.mxu0 0.0
  %9098 = vmatpush1.msra.mxu0 0.0
  %9099 = vmatprep.subr.mxu0 0.0
  %9100 = vmatpush1.msra.mxu0 0.0
  %9101 = vmatprep.subr.mxu0 0.0
  %9102 = vmatpush1.msra.mxu0 0.0
  %9103 = vmatprep.subr.mxu0 0.0
  %9104 = vmatpush1.msra.mxu0 0.0
  %9105 = vmatprep.subr.mxu0 0.0
  %9106 = vmatpush1.msra.mxu0 0.0
  %9107 = vmatprep.subr.mxu0 0.0
  %9108 = vmatpush1.msra.mxu0 0.0
  %9109 = vmatprep.subr.mxu0 0.0
  %9110 = vmatpush1.msra.mxu0 0.0
  %9111 = vmatprep.subr.mxu0 0.0
  %9112 = vmatpush1.msra.mxu0 0.0
  %9113 = vmatprep.subr.mxu0 0.0
  %9114 = vmatpush1.msra.mxu0 0.0
  %9115 = vmatprep.subr.mxu0 0.0
  %9116 = vmatpush1.msra.mxu0 0.0
  %9117 = vmatprep.subr.mxu0 0.0
  %9118 = vmatpush1.msra.mxu0 0.0
  %9119 = vmatprep.subr.mxu0 0.0
  %9120 = vmatpush1.msra.mxu0 0.0
  %9121 = vmatprep.subr.mxu0 0.0
  %9122 = vmatpush1.msra.mxu0 0.0
  %9123 = vmatprep.subr.mxu0 0.0
  %9124 = vmatpush1.msra.mxu0 0.0
  %9125 = vmatprep.subr.mxu0 0.0
  %9126 = vmatpush1.msra.mxu0 0.0
  %9127 = vmatprep.subr.mxu0 0.0
  %9128 = vmatpush1.msra.mxu0 0.0
  %9129 = vmatprep.mubr.f32.mxu0 0.0
  %9130 = vmatmul.mubr.f32.gmra.mrb[0].mxu0 %v8984
  %v9131 = vpop.f32.mrb[0].mxu0
  %v9132 = vadd.f32 0.0, %v9131
  %v9133 = vpop.f32.mrb[0].mxu0
  %9134 = vmatprep.mubr.f32.mxu0 0.0
  %9135 = vmatmul.mubr.f32.gmra.mrb[0].mxu0 %v8985
  %v9136 = vpop.f32.mrb[0].mxu0
  %v9137 = vadd.f32 0.0, %v9136
  %v9138 = vpop.f32.mrb[0].mxu0
  %9139 = vmatprep.mubr.f32.mxu0 0.0
  %9140 = vmatmul.mubr.f32.gmra.mrb[0].mxu0 %v8986
  %v9141 = vpop.f32.mrb[0].mxu0
  %v9142 = vadd.f32 0.0, %v9141
  %v9143 = vpop.f32.mrb[0].mxu0
  %9144 = vmatprep.mubr.f32.mxu0 0.0
  %9145 = vmatmul.mubr.f32.gmra.mrb[0].mxu0 %v8987
  %v9146 = vpop.f32.mrb[0].mxu0
  %v9147 = vadd.f32 0.0, %v9146
  %v9148 = vpop.f32.mrb[0].mxu0
  %9149 = vmatprep.mubr.f32.mxu0 0.0
  %9150 = vmatmul.mubr.f32.gmra.mrb[0].mxu0 %v8988
  %v9151 = vpop.f32.mrb[0].mxu0
  %v9152 = vadd.f32 0.0, %v9151
  %v9153 = vpop.f32.mrb[0].mxu0
  %9154 = vmatprep.mubr.f32.mxu0 0.0
  %9155 = vmatmul.mubr.f32.gmra.mrb[0].mxu0 %v8989
  %v9156 = vpop.f32.mrb[0].mxu0
  %v9157 = vadd.f32 0.0, %v9156
  %v9158 = vpop.f32.mrb[0].mxu0
  %9159 = vmatprep.mubr.f32.mxu0 0.0
  %9160 = vmatmul.mubr.f32.gmra.mrb[0].mxu0 %v8990
  %v9161 = vpop.f32.mrb[0].mxu0
  %v9162 = vadd.f32 0.0, %v9161
  %v9163 = vpop.f32.mrb[0].mxu0
  %9164 = vmatprep.mubr.f32.mxu0 0.0
  %9165 = vmatmul.mubr.f32.gmra.mrb[0].mxu0 %v8991
  %v9166 = vpop.f32.mrb[0].mxu0
  %v9167 = vadd.f32 0.0, %v9166
  %v9168 = vpop.f32.mrb[0].mxu0
  %9169 = vmatprep.mubr.f32.mxu0 0.0
  %9170 = vmatmul.mubr.f32.gmra.mrb[0].mxu0 %v8992
  %v9171 = vpop.f32.mrb[0].mxu0
  %v9172 = vadd.f32 0.0, %v9171
  %v9173 = vpop.f32.mrb[0].mxu0
  %9174 = vmatprep.mubr.f32.mxu0 0.0
  %9175 = vmatmul.mubr.f32.gmra.mrb[0].mxu0 %v8993
  %v9176 = vpop.f32.mrb[0].mxu0
  %v9177 = vadd.f32 0.0, %v9176
  %v9178 = vpop.f32.mrb[0].mxu0
  %9179 = vmatprep.mubr.f32.mxu0 0.0
  %9180 = vmatmul.mubr.f32.gmra.mrb[0].mxu0 %v8994
  %v9181 = vpop.f32.mrb[0].mxu0
  %v9182 = vadd.f32 0.0, %v9181
  %v9183 = vpop.f32.mrb[0].mxu0
  %9184 = vmatprep.mubr.f32.mxu0 0.0
  %9185 = vmatmul.mubr.f32.gmra.mrb[0].mxu0 %v8995
  %v9186 = vpop.f32.mrb[0].mxu0
  %v9187 = vadd.f32 0.0, %v9186
  %v9188 = vpop.f32.mrb[0].mxu0
  %9189 = vmatprep.mubr.f32.mxu0 0.0
  %9190 = vmatmul.mubr.f32.gmra.mrb[0].mxu0 %v8996
  %v9191 = vpop.f32.mrb[0].mxu0
  %v9192 = vadd.f32 0.0, %v9191
  %v9193 = vpop.f32.mrb[0].mxu0
  %9194 = vmatprep.mubr.f32.mxu0 0.0
  %9195 = vmatmul.mubr.f32.gmra.mrb[0].mxu0 %v8997
  %v9196 = vpop.f32.mrb[0].mxu0
  %v9197 = vadd.f32 0.0, %v9196
  %v9198 = vpop.f32.mrb[0].mxu0
  %9199 = vmatprep.mubr.f32.mxu0 0.0
  %9200 = vmatmul.mubr.f32.gmra.mrb[0].mxu0 %v8998
  %v9201 = vpop.f32.mrb[0].mxu0
  %v9202 = vadd.f32 0.0, %v9201
  %v9203 = vpop.f32.mrb[0].mxu0
  %9204 = vmatprep.mubr.f32.mxu0 0.0
  %9205 = vmatmul.mubr.f32.gmra.mrb[0].mxu0 %v8999
  %v9206 = vpop.f32.mrb[0].mxu0
  %v9207 = vadd.f32 0.0, %v9206
  %v9208 = vpop.f32.mrb[0].mxu0
  %9209 = vmatprep.mubr.f32.mxu0 0.0
  %9210 = vmatmul.mubr.f32.gmra.mrb[0].mxu0 %v9000
  %v9211 = vpop.f32.mrb[0].mxu0
  %v9212 = vadd.f32 0.0, %v9211
  %v9213 = vpop.f32.mrb[0].mxu0
  %9214 = vmatprep.mubr.f32.mxu0 0.0
  %9215 = vmatmul.mubr.f32.gmra.mrb[0].mxu0 %v9001
  %v9216 = vpop.f32.mrb[0].mxu0
  %v9217 = vadd.f32 0.0, %v9216
  %v9218 = vpop.f32.mrb[0].mxu0
  %9219 = vmatprep.mubr.f32.mxu0 0.0
  %9220 = vmatmul.mubr.f32.gmra.mrb[0].mxu0 %v9002
  %v9221 = vpop.f32.mrb[0].mxu0
  %v9222 = vadd.f32 0.0, %v9221
  %v9223 = vpop.f32.mrb[0].mxu0
  %9224 = vmatprep.mubr.f32.mxu0 0.0
  %9225 = vmatmul.mubr.f32.gmra.mrb[0].mxu0 %v9003
  %v9226 = vpop.f32.mrb[0].mxu0
  %v9227 = vadd.f32 0.0, %v9226
  %v9228 = vpop.f32.mrb[0].mxu0
  %9229 = vmatprep.mubr.f32.mxu0 0.0
  %9230 = vmatmul.mubr.f32.gmra.mrb[0].mxu0 %v9004
  %v9231 = vpop.f32.mrb[0].mxu0
  %v9232 = vadd.f32 0.0, %v9231
  %v9233 = vpop.f32.mrb[0].mxu0
  %9234 = vmatprep.mubr.f32.mxu0 0.0
  %9235 = vmatmul.mubr.f32.gmra.mrb[0].mxu0 %v9005
  %v9236 = vpop.f32.mrb[0].mxu0
  %v9237 = vadd.f32 0.0, %v9236
  %v9238 = vpop.f32.mrb[0].mxu0
  %9239 = vmatprep.mubr.f32.mxu0 0.0
  %9240 = vmatmul.mubr.f32.gmra.mrb[0].mxu0 %v9006
  %v9241 = vpop.f32.mrb[0].mxu0
  %v9242 = vadd.f32 0.0, %v9241
  %v9243 = vpop.f32.mrb[0].mxu0
  %9244 = vmatprep.mubr.f32.mxu0 0.0
  %9245 = vmatmul.mubr.f32.gmra.mrb[0].mxu0 %v9007
  %v9246 = vpop.f32.mrb[0].mxu0
  %v9247 = vadd.f32 0.0, %v9246
  %v9248 = vpop.f32.mrb[0].mxu0
  %9249 = vmatprep.mubr.f32.mxu0 0.0
  %9250 = vmatmul.mubr.f32.gmra.mrb[0].mxu0 %v9008
  %v9251 = vpop.f32.mrb[0].mxu0
  %v9252 = vadd.f32 0.0, %v9251
  %v9253 = vpop.f32.mrb[0].mxu0
  %9254 = vmatprep.mubr.f32.mxu0 0.0
  %9255 = vmatmul.mubr.f32.gmra.mrb[0].mxu0 %v9009
  %v9256 = vpop.f32.mrb[0].mxu0
  %v9257 = vadd.f32 0.0, %v9256
  %v9258 = vpop.f32.mrb[0].mxu0
  %9259 = vmatprep.mubr.f32.mxu0 0.0
  %9260 = vmatmul.mubr.f32.gmra.mrb[0].mxu0 %v9010
  %v9261 = vpop.f32.mrb[0].mxu0
  %v9262 = vadd.f32 0.0, %v9261
  %v9263 = vpop.f32.mrb[0].mxu0
  %9264 = vmatprep.mubr.f32.mxu0 0.0
  %9265 = vmatmul.mubr.f32.gmra.mrb[0].mxu0 %v9011
  %v9266 = vpop.f32.mrb[0].mxu0
  %v9267 = vadd.f32 0.0, %v9266
  %v9268 = vpop.f32.mrb[0].mxu0
  %9269 = vmatprep.mubr.f32.mxu0 0.0
  %9270 = vmatmul.mubr.f32.gmra.mrb[0].mxu0 %v9012
  %v9271 = vpop.f32.mrb[0].mxu0
  %v9272 = vadd.f32 0.0, %v9271
  %v9273 = vpop.f32.mrb[0].mxu0
  %9274 = vmatprep.mubr.f32.mxu0 0.0
  %9275 = vmatmul.mubr.f32.gmra.mrb[0].mxu0 %v9013
  %v9276 = vpop.f32.mrb[0].mxu0
  %v9277 = vadd.f32 0.0, %v9276
  %v9278 = vpop.f32.mrb[0].mxu0
  %9279 = vmatprep.mubr.f32.mxu0 0.0
  %9280 = vmatmul.mubr.f32.gmra.mrb[0].mxu0 %v9014
  %v9281 = vpop.f32.mrb[0].mxu0
  %v9282 = vadd.f32 0.0, %v9281
  %v9283 = vpop.f32.mrb[0].mxu0
  %9284 = vmatprep.mubr.f32.mxu0 0.0
  %9285 = vmatmul.mubr.f32.gmra.mrb[0].mxu0 %v9015
  %v9286 = vpop.f32.mrb[0].mxu0
  %v9287 = vadd.f32 0.0, %v9286
  %v9288 = vpop.f32.mrb[0].mxu0
  %9289 = vmatprep.mubr.f32.mxu0 0.0
  %9290 = vmatmul.mubr.f32.gmra.mrb[0].mxu0 %v9016
  %v9291 = vpop.f32.mrb[0].mxu0
  %v9292 = vadd.f32 0.0, %v9291
  %v9293 = vpop.f32.mrb[0].mxu0
  %9294 = vmatprep.mubr.f32.mxu0 0.0
  %9295 = vmatmul.mubr.f32.gmra.mrb[0].mxu0 %v9017
  %v9296 = vpop.f32.mrb[0].mxu0
  %v9297 = vadd.f32 0.0, %v9296
  %v9298 = vpop.f32.mrb[0].mxu0
  %9299 = vmatprep.mubr.f32.mxu0 0.0
  %9300 = vmatmul.mubr.f32.gmra.mrb[0].mxu0 %v9018
  %v9301 = vpop.f32.mrb[0].mxu0
  %v9302 = vadd.f32 0.0, %v9301
  %v9303 = vpop.f32.mrb[0].mxu0
  %9304 = vmatprep.mubr.f32.mxu0 0.0
  %9305 = vmatmul.mubr.f32.gmra.mrb[0].mxu0 %v9019
  %v9306 = vpop.f32.mrb[0].mxu0
  %v9307 = vadd.f32 0.0, %v9306
  %v9308 = vpop.f32.mrb[0].mxu0
  %9309 = vmatprep.mubr.f32.mxu0 0.0
  %9310 = vmatmul.mubr.f32.gmra.mrb[0].mxu0 %v9020
  %v9311 = vpop.f32.mrb[0].mxu0
  %v9312 = vadd.f32 0.0, %v9311
  %v9313 = vpop.f32.mrb[0].mxu0
  %9314 = vmatprep.mubr.f32.mxu0 0.0
  %9315 = vmatmul.mubr.f32.gmra.mrb[0].mxu0 %v9021
  %v9316 = vpop.f32.mrb[0].mxu0
  %v9317 = vadd.f32 0.0, %v9316
  %v9318 = vpop.f32.mrb[0].mxu0
  %9319 = vmatprep.mubr.f32.mxu0 0.0
  %9320 = vmatmul.mubr.f32.gmra.mrb[0].mxu0 %v9022
  %v9321 = vpop.f32.mrb[0].mxu0
  %v9322 = vadd.f32 0.0, %v9321
  %v9323 = vpop.f32.mrb[0].mxu0
  %9324 = vmatprep.mubr.f32.mxu0 0.0
  %9325 = vmatmul.mubr.f32.gmra.mrb[0].mxu0 %v9023
  %v9326 = vpop.f32.mrb[0].mxu0
  %v9327 = vadd.f32 0.0, %v9326
  %v9328 = vpop.f32.mrb[0].mxu0
  %9329 = vmatprep.mubr.f32.mxu0 0.0
  %9330 = vmatmul.mubr.f32.gmra.mrb[0].mxu0 %v9024
  %v9331 = vpop.f32.mrb[0].mxu0
  %v9332 = vadd.f32 0.0, %v9331
  %v9333 = vpop.f32.mrb[0].mxu0
  %9334 = vmatprep.mubr.f32.mxu0 0.0
  %9335 = vmatmul.mubr.f32.gmra.mrb[0].mxu0 %v9025
  %v9336 = vpop.f32.mrb[0].mxu0
  %v9337 = vadd.f32 0.0, %v9336
  %v9338 = vpop.f32.mrb[0].mxu0
  %9339 = vmatprep.mubr.f32.mxu0 0.0
  %9340 = vmatmul.mubr.f32.gmra.mrb[0].mxu0 %v9026
  %v9341 = vpop.f32.mrb[0].mxu0
  %v9342 = vadd.f32 0.0, %v9341
  %v9343 = vpop.f32.mrb[0].mxu0
  %9344 = vmatprep.mubr.f32.mxu0 0.0
  %9345 = vmatmul.mubr.f32.gmra.mrb[0].mxu0 %v9027
  %v9346 = vpop.f32.mrb[0].mxu0
  %v9347 = vadd.f32 0.0, %v9346
  %v9348 = vpop.f32.mrb[0].mxu0
  %9349 = vmatprep.mubr.f32.mxu0 0.0
  %9350 = vmatmul.mubr.f32.gmra.mrb[0].mxu0 %v9028
  %v9351 = vpop.f32.mrb[0].mxu0
  %v9352 = vadd.f32 0.0, %v9351
  %v9353 = vpop.f32.mrb[0].mxu0
  %9354 = vmatprep.mubr.f32.mxu0 0.0
  %9355 = vmatmul.mubr.f32.gmra.mrb[0].mxu0 %v9029
  %v9356 = vpop.f32.mrb[0].mxu0
  %v9357 = vadd.f32 0.0, %v9356
  %v9358 = vpop.f32.mrb[0].mxu0
  %9359 = vmatprep.mubr.f32.mxu0 0.0
  %9360 = vmatmul.mubr.f32.gmra.mrb[0].mxu0 %v9030
  %v9361 = vpop.f32.mrb[0].mxu0
  %v9362 = vadd.f32 0.0, %v9361
  %v9363 = vpop.f32.mrb[0].mxu0
  %9364 = vmatprep.mubr.f32.mxu0 0.0
  %9365 = vmatmul.mubr.f32.gmra.mrb[0].mxu0 %v9031
  %v9366 = vpop.f32.mrb[0].mxu0
  %v9367 = vadd.f32 0.0, %v9366
  %v9368 = vpop.f32.mrb[0].mxu0
  %9369 = vmatprep.mubr.f32.mxu0 0.0
  %9370 = vmatmul.mubr.f32.gmra.mrb[0].mxu0 %v9032
  %v9371 = vpop.f32.mrb[0].mxu0
  %v9372 = vadd.f32 0.0, %v9371
  %v9373 = vpop.f32.mrb[0].mxu0
  %9374 = vmatprep.mubr.f32.mxu0 0.0
  %9375 = vmatmul.mubr.f32.gmra.mrb[0].mxu0 %v9033
  %v9376 = vpop.f32.mrb[0].mxu0
  %v9377 = vadd.f32 0.0, %v9376
  %v9378 = vpop.f32.mrb[0].mxu0
  %9379 = vmatprep.mubr.f32.mxu0 0.0
  %9380 = vmatmul.mubr.f32.gmra.mrb[0].mxu0 %v9034
  %v9381 = vpop.f32.mrb[0].mxu0
  %v9382 = vadd.f32 0.0, %v9381
  %v9383 = vpop.f32.mrb[0].mxu0
  %9384 = vmatprep.mubr.f32.mxu0 0.0
  %9385 = vmatmul.mubr.f32.gmra.mrb[0].mxu0 %v9035
  %v9386 = vpop.f32.mrb[0].mxu0
  %v9387 = vadd.f32 0.0, %v9386
  %v9388 = vpop.f32.mrb[0].mxu0
  %9389 = vmatprep.mubr.f32.mxu0 0.0
  %9390 = vmatmul.mubr.f32.gmra.mrb[0].mxu0 %v9036
  %v9391 = vpop.f32.mrb[0].mxu0
  %v9392 = vadd.f32 0.0, %v9391
  %v9393 = vpop.f32.mrb[0].mxu0
  %9394 = vmatprep.mubr.f32.mxu0 0.0
  %9395 = vmatmul.mubr.f32.gmra.mrb[0].mxu0 %v9037
  %v9396 = vpop.f32.mrb[0].mxu0
  %v9397 = vadd.f32 0.0, %v9396
  %v9398 = vpop.f32.mrb[0].mxu0
  %9399 = vmatprep.mubr.f32.mxu0 0.0
  %9400 = vmatmul.mubr.f32.gmra.mrb[0].mxu0 %v9038
  %v9401 = vpop.f32.mrb[0].mxu0
  %v9402 = vadd.f32 0.0, %v9401
  %v9403 = vpop.f32.mrb[0].mxu0
  %9404 = vmatprep.mubr.f32.mxu0 0.0
  %9405 = vmatmul.mubr.f32.gmra.mrb[0].mxu0 %v9039
  %v9406 = vpop.f32.mrb[0].mxu0
  %v9407 = vadd.f32 0.0, %v9406
  %v9408 = vpop.f32.mrb[0].mxu0
  %9409 = vmatprep.mubr.f32.mxu0 0.0
  %9410 = vmatmul.mubr.f32.gmra.mrb[0].mxu0 %v9040
  %v9411 = vpop.f32.mrb[0].mxu0
  %v9412 = vadd.f32 0.0, %v9411
  %v9413 = vpop.f32.mrb[0].mxu0
  %9414 = vmatprep.mubr.f32.mxu0 0.0
  %9415 = vmatmul.mubr.f32.gmra.mrb[0].mxu0 %v9041
  %v9416 = vpop.f32.mrb[0].mxu0
  %v9417 = vadd.f32 0.0, %v9416
  %v9418 = vpop.f32.mrb[0].mxu0
  %9419 = vmatprep.mubr.f32.mxu0 0.0
  %9420 = vmatmul.mubr.f32.gmra.mrb[0].mxu0 %v9042
  %v9421 = vpop.f32.mrb[0].mxu0
  %v9422 = vadd.f32 0.0, %v9421
  %v9423 = vpop.f32.mrb[0].mxu0
  %9424 = vmatprep.mubr.f32.mxu0 0.0
  %9425 = vmatmul.mubr.f32.gmra.mrb[0].mxu0 %v9043
  %v9426 = vpop.f32.mrb[0].mxu0
  %v9427 = vadd.f32 0.0, %v9426
  %v9428 = vpop.f32.mrb[0].mxu0
  %9429 = vmatprep.mubr.f32.mxu0 0.0
  %9430 = vmatmul.mubr.f32.gmra.mrb[0].mxu0 %v9044
  %v9431 = vpop.f32.mrb[0].mxu0
  %v9432 = vadd.f32 0.0, %v9431
  %v9433 = vpop.f32.mrb[0].mxu0
  %9434 = vmatprep.mubr.f32.mxu0 0.0
  %9435 = vmatmul.mubr.f32.gmra.mrb[0].mxu0 %v9045
  %v9436 = vpop.f32.mrb[0].mxu0
  %v9437 = vadd.f32 0.0, %v9436
  %v9438 = vpop.f32.mrb[0].mxu0
  %9439 = vmatprep.mubr.f32.mxu0 0.0
  %9440 = vmatmul.mubr.f32.gmra.mrb[0].mxu0 %v9046
  %v9441 = vpop.f32.mrb[0].mxu0
  %v9442 = vadd.f32 0.0, %v9441
  %v9443 = vpop.f32.mrb[0].mxu0
  %9444 = vmatprep.mubr.f32.mxu0 0.0
  %9445 = vmatmul.mubr.f32.gmra.mrb[0].mxu0 %v9047
  %v9446 = vpop.f32.mrb[0].mxu0
  %v9447 = vadd.f32 0.0, %v9446
  %v9448 = vpop.f32.mrb[0].mxu0
  %9449 = vdwg.mxu0
  %v9450 = vadd.f32 %v8920, %v9132
  %v9451 = vadd.f32 %v8921, %v9137
  %v9452 = vadd.f32 %v8922, %v9142
  %v9453 = vadd.f32 %v8923, %v9147
  %v9454 = vadd.f32 %v8924, %v9152
  %v9455 = vadd.f32 %v8925, %v9157
  %v9456 = vadd.f32 %v8926, %v9162
  %v9457 = vadd.f32 %v8927, %v9167
  %v9458 = vadd.f32 %v8928, %v9172
  %v9459 = vadd.f32 %v8929, %v9177
  %v9460 = vadd.f32 %v8930, %v9182
  %v9461 = vadd.f32 %v8931, %v9187
  %v9462 = vadd.f32 %v8932, %v9192
  %v9463 = vadd.f32 %v8933, %v9197
  %v9464 = vadd.f32 %v8934, %v9202
  %v9465 = vadd.f32 %v8935, %v9207
  %v9466 = vadd.f32 %v8936, %v9212
  %v9467 = vadd.f32 %v8937, %v9217
  %v9468 = vadd.f32 %v8938, %v9222
  %v9469 = vadd.f32 %v8939, %v9227
  %v9470 = vadd.f32 %v8940, %v9232
  %v9471 = vadd.f32 %v8941, %v9237
  %v9472 = vadd.f32 %v8942, %v9242
  %v9473 = vadd.f32 %v8943, %v9247
  %v9474 = vadd.f32 %v8944, %v9252
  %v9475 = vadd.f32 %v8945, %v9257
  %v9476 = vadd.f32 %v8946, %v9262
  %v9477 = vadd.f32 %v8947, %v9267
  %v9478 = vadd.f32 %v8948, %v9272
  %v9479 = vadd.f32 %v8949, %v9277
  %v9480 = vadd.f32 %v8950, %v9282
  %v9481 = vadd.f32 %v8951, %v9287
  %v9482 = vadd.f32 %v8952, %v9292
  %v9483 = vadd.f32 %v8953, %v9297
  %v9484 = vadd.f32 %v8954, %v9302
  %v9485 = vadd.f32 %v8955, %v9307
  %v9486 = vadd.f32 %v8956, %v9312
  %v9487 = vadd.f32 %v8957, %v9317
  %v9488 = vadd.f32 %v8958, %v9322
  %v9489 = vadd.f32 %v8959, %v9327
  %v9490 = vadd.f32 %v8960, %v9332
  %v9491 = vadd.f32 %v8961, %v9337
  %v9492 = vadd.f32 %v8962, %v9342
  %v9493 = vadd.f32 %v8963, %v9347
  %v9494 = vadd.f32 %v8964, %v9352
  %v9495 = vadd.f32 %v8965, %v9357
  %v9496 = vadd.f32 %v8966, %v9362
  %v9497 = vadd.f32 %v8967, %v9367
  %v9498 = vadd.f32 %v8968, %v9372
  %v9499 = vadd.f32 %v8969, %v9377
  %v9500 = vadd.f32 %v8970, %v9382
  %v9501 = vadd.f32 %v8971, %v9387
  %v9502 = vadd.f32 %v8972, %v9392
  %v9503 = vadd.f32 %v8973, %v9397
  %v9504 = vadd.f32 %v8974, %v9402
  %v9505 = vadd.f32 %v8975, %v9407
  %v9506 = vadd.f32 %v8976, %v9412
  %v9507 = vadd.f32 %v8977, %v9417
  %v9508 = vadd.f32 %v8978, %v9422
  %v9509 = vadd.f32 %v8979, %v9427
  %v9510 = vadd.f32 %v8980, %v9432
  %v9511 = vadd.f32 %v8981, %v9437
  %v9512 = vadd.f32 %v8982, %v9442
  %v9513 = vadd.f32 %v8983, %v9447
  %v9514 = vld [vmem:[%s6864 + $0x2] sm:$0xff]
  %v9515 = vld [vmem:[%s6864 + $0xa] sm:$0xff]
  %v9516 = vld [vmem:[%s6864 + $0x1a] sm:$0xff]
  %v9517 = vld [vmem:[%s6864 + $0x22] sm:$0xff]
  %v9518 = vld [vmem:[%s6864 + $0x32] sm:$0xff]
  %v9519 = vld [vmem:[%s6864 + $0x3a] sm:$0xff]
  %v9520 = vld [vmem:[%s6864 + $0x4a] sm:$0xff]
  %v9521 = vld [vmem:[%s6864 + $0x52] sm:$0xff]
  %v9522 = vld [vmem:[%s6864 + $0x62] sm:$0xff]
  %v9523 = vld [vmem:[%s6864 + $0x6a] sm:$0xff]
  %v9524 = vld [vmem:[%s6864 + $0x7a] sm:$0xff]
  %v9525 = vld [vmem:[%s6864 + $0x82] sm:$0xff]
  %v9526 = vld [vmem:[%s6864 + $0x92] sm:$0xff]
  %v9527 = vld [vmem:[%s6864 + $0x9a] sm:$0xff]
  %v9528 = vld [vmem:[%s6864 + $0xaa] sm:$0xff]
  %v9529 = vld [vmem:[%s6864 + $0xb2] sm:$0xff]
  %v9530 = vld [vmem:[%s6864 + $0xc2] sm:$0xff]
  %v9531 = vld [vmem:[%s6864 + $0xca] sm:$0xff]
  %v9532 = vld [vmem:[%s6864 + $0xda] sm:$0xff]
  %v9533 = vld [vmem:[%s6864 + $0xe2] sm:$0xff]
  %v9534 = vld [vmem:[%s6864 + $0xf2] sm:$0xff]
  %v9535 = vld [vmem:[%s6864 + $0xfa] sm:$0xff]
  %v9536 = vld [vmem:[%s6864 + $0x10a] sm:$0xff]
  %v9537 = vld [vmem:[%s6864 + $0x112] sm:$0xff]
  %v9538 = vld [vmem:[%s6864 + $0x122] sm:$0xff]
  %v9539 = vld [vmem:[%s6864 + $0x12a] sm:$0xff]
  %v9540 = vld [vmem:[%s6864 + $0x13a] sm:$0xff]
  %v9541 = vld [vmem:[%s6864 + $0x142] sm:$0xff]
  %v9542 = vld [vmem:[%s6864 + $0x152] sm:$0xff]
  %v9543 = vld [vmem:[%s6864 + $0x15a] sm:$0xff]
  %v9544 = vld [vmem:[%s6864 + $0x16a] sm:$0xff]
  %v9545 = vld [vmem:[%s6864 + $0x172] sm:$0xff]
  %v9546 = vld [vmem:[%s6864 + $0x1b2] sm:$0xff]
  %v9547 = vld [vmem:[%s6864 + $0x1ba] sm:$0xff]
  %v9548 = vld [vmem:[%s6864 + $0x1ca] sm:$0xff]
  %v9549 = vld [vmem:[%s6864 + $0x1d2] sm:$0xff]
  %v9550 = vld [vmem:[%s6864 + $0x1e2] sm:$0xff]
  %v9551 = vld [vmem:[%s6864 + $0x1ea] sm:$0xff]
  %v9552 = vld [vmem:[%s6864 + $0x1fa] sm:$0xff]
  %v9553 = vld [vmem:[%s6864 + $0x202] sm:$0xff]
  %v9554 = vld [vmem:[%s6864 + $0x212] sm:$0xff]
  %v9555 = vld [vmem:[%s6864 + $0x21a] sm:$0xff]
  %v9556 = vld [vmem:[%s6864 + $0x22a] sm:$0xff]
  %v9557 = vld [vmem:[%s6864 + $0x232] sm:$0xff]
  %v9558 = vld [vmem:[%s6864 + $0x242] sm:$0xff]
  %v9559 = vld [vmem:[%s6864 + $0x24a] sm:$0xff]
  %v9560 = vld [vmem:[%s6864 + $0x25a] sm:$0xff]
  %v9561 = vld [vmem:[%s6864 + $0x262] sm:$0xff]
  %v9562 = vld [vmem:[%s6864 + $0x272] sm:$0xff]
  %v9563 = vld [vmem:[%s6864 + $0x27a] sm:$0xff]
  %v9564 = vld [vmem:[%s6864 + $0x28a] sm:$0xff]
  %v9565 = vld [vmem:[%s6864 + $0x292] sm:$0xff]
  %v9566 = vld [vmem:[%s6864 + $0x2a2] sm:$0xff]
  %v9567 = vld [vmem:[%s6864 + $0x2aa] sm:$0xff]
  %v9568 = vld [vmem:[%s6864 + $0x2ba] sm:$0xff]
  %v9569 = vld [vmem:[%s6864 + $0x2c2] sm:$0xff]
  %v9570 = vld [vmem:[%s6864 + $0x2d2] sm:$0xff]
  %v9571 = vld [vmem:[%s6864 + $0x2da] sm:$0xff]
  %v9572 = vld [vmem:[%s6864 + $0x2ea] sm:$0xff]
  %v9573 = vld [vmem:[%s6864 + $0x2f2] sm:$0xff]
  %v9574 = vld [vmem:[%s6864 + $0x302] sm:$0xff]
  %v9575 = vld [vmem:[%s6864 + $0x30a] sm:$0xff]
  %v9576 = vld [vmem:[%s6864 + $0x31a] sm:$0xff]
  %v9577 = vld [vmem:[%s6864 + $0x322] sm:$0xff]
  %s9578 = scalar_lea.vmem %s4, 640
  %v9579 = vld [vmem:[%s9578] sm:$0xff]
  %v9580 = vld [vmem:[%s9578 + $0x8] sm:$0xff]
  %v9581 = vld [vmem:[%s9578 + $0x10] sm:$0xff]
  %v9582 = vld [vmem:[%s9578 + $0x18] sm:$0xff]
  %v9583 = vld [vmem:[%s9578 + $0x20] sm:$0xff]
  %v9584 = vld [vmem:[%s9578 + $0x28] sm:$0xff]
  %v9585 = vld [vmem:[%s9578 + $0x30] sm:$0xff]
  %v9586 = vld [vmem:[%s9578 + $0x38] sm:$0xff]
  %v9587 = vld [vmem:[%s9578 + $0x40] sm:$0xff]
  %v9588 = vld [vmem:[%s9578 + $0x48] sm:$0xff]
  %v9589 = vld [vmem:[%s9578 + $0x50] sm:$0xff]
  %v9590 = vld [vmem:[%s9578 + $0x58] sm:$0xff]
  %v9591 = vld [vmem:[%s9578 + $0x60] sm:$0xff]
  %v9592 = vld [vmem:[%s9578 + $0x68] sm:$0xff]
  %v9593 = vld [vmem:[%s9578 + $0x70] sm:$0xff]
  %v9594 = vld [vmem:[%s9578 + $0x78] sm:$0xff]
  %9595 = vmatprep.subr.mxu0 0.0
  %9596 = vmatpush1.msra.mxu0 %v9579
  %9597 = vmatprep.subr.mxu0 0.0
  %9598 = vmatpush1.msra.mxu0 %v9580
  %9599 = vmatprep.subr.mxu0 0.0
  %9600 = vmatpush1.msra.mxu0 %v9581
  %9601 = vmatprep.subr.mxu0 0.0
  %9602 = vmatpush1.msra.mxu0 %v9582
  %9603 = vmatprep.subr.mxu0 0.0
  %9604 = vmatpush1.msra.mxu0 %v9583
  %9605 = vmatprep.subr.mxu0 0.0
  %9606 = vmatpush1.msra.mxu0 %v9584
  %9607 = vmatprep.subr.mxu0 0.0
  %9608 = vmatpush1.msra.mxu0 %v9585
  %9609 = vmatprep.subr.mxu0 0.0
  %9610 = vmatpush1.msra.mxu0 %v9586
  %9611 = vmatprep.subr.mxu0 0.0
  %9612 = vmatpush1.msra.mxu0 %v9587
  %9613 = vmatprep.subr.mxu0 0.0
  %9614 = vmatpush1.msra.mxu0 %v9588
  %9615 = vmatprep.subr.mxu0 0.0
  %9616 = vmatpush1.msra.mxu0 %v9589
  %9617 = vmatprep.subr.mxu0 0.0
  %9618 = vmatpush1.msra.mxu0 %v9590
  %9619 = vmatprep.subr.mxu0 0.0
  %9620 = vmatpush1.msra.mxu0 %v9591
  %9621 = vmatprep.subr.mxu0 0.0
  %9622 = vmatpush1.msra.mxu0 %v9592
  %9623 = vmatprep.subr.mxu0 0.0
  %9624 = vmatpush1.msra.mxu0 %v9593
  %9625 = vmatprep.subr.mxu0 0.0
  %9626 = vmatpush1.msra.mxu0 %v9594
  %9627 = vmatprep.subr.mxu0 0.0
  %9628 = vmatpush1.msra.mxu0 0.0
  %9629 = vmatprep.subr.mxu0 0.0
  %9630 = vmatpush1.msra.mxu0 0.0
  %9631 = vmatprep.subr.mxu0 0.0
  %9632 = vmatpush1.msra.mxu0 0.0
  %9633 = vmatprep.subr.mxu0 0.0
  %9634 = vmatpush1.msra.mxu0 0.0
  %9635 = vmatprep.subr.mxu0 0.0
  %9636 = vmatpush1.msra.mxu0 0.0
  %9637 = vmatprep.subr.mxu0 0.0
  %9638 = vmatpush1.msra.mxu0 0.0
  %9639 = vmatprep.subr.mxu0 0.0
  %9640 = vmatpush1.msra.mxu0 0.0
  %9641 = vmatprep.subr.mxu0 0.0
  %9642 = vmatpush1.msra.mxu0 0.0
  %9643 = vmatprep.subr.mxu0 0.0
  %9644 = vmatpush1.msra.mxu0 0.0
  %9645 = vmatprep.subr.mxu0 0.0
  %9646 = vmatpush1.msra.mxu0 0.0
  %9647 = vmatprep.subr.mxu0 0.0
  %9648 = vmatpush1.msra.mxu0 0.0
  %9649 = vmatprep.subr.mxu0 0.0
  %9650 = vmatpush1.msra.mxu0 0.0
  %9651 = vmatprep.subr.mxu0 0.0
  %9652 = vmatpush1.msra.mxu0 0.0
  %9653 = vmatprep.subr.mxu0 0.0
  %9654 = vmatpush1.msra.mxu0 0.0
  %9655 = vmatprep.subr.mxu0 0.0
  %9656 = vmatpush1.msra.mxu0 0.0
  %9657 = vmatprep.subr.mxu0 0.0
  %9658 = vmatpush1.msra.mxu0 0.0
  %9659 = vmatprep.mubr.f32.mxu0 0.0
  %9660 = vmatmul.mubr.f32.gmra.mrb[0].mxu0 %v9514
  %v9661 = vpop.f32.mrb[0].mxu0
  %v9662 = vadd.f32 0.0, %v9661
  %v9663 = vpop.f32.mrb[0].mxu0
  %9664 = vmatprep.mubr.f32.mxu0 0.0
  %9665 = vmatmul.mubr.f32.gmra.mrb[0].mxu0 %v9515
  %v9666 = vpop.f32.mrb[0].mxu0
  %v9667 = vadd.f32 0.0, %v9666
  %v9668 = vpop.f32.mrb[0].mxu0
  %9669 = vmatprep.mubr.f32.mxu0 0.0
  %9670 = vmatmul.mubr.f32.gmra.mrb[0].mxu0 %v9516
  %v9671 = vpop.f32.mrb[0].mxu0
  %v9672 = vadd.f32 0.0, %v9671
  %v9673 = vpop.f32.mrb[0].mxu0
  %9674 = vmatprep.mubr.f32.mxu0 0.0
  %9675 = vmatmul.mubr.f32.gmra.mrb[0].mxu0 %v9517
  %v9676 = vpop.f32.mrb[0].mxu0
  %v9677 = vadd.f32 0.0, %v9676
  %v9678 = vpop.f32.mrb[0].mxu0
  %9679 = vmatprep.mubr.f32.mxu0 0.0
  %9680 = vmatmul.mubr.f32.gmra.mrb[0].mxu0 %v9518
  %v9681 = vpop.f32.mrb[0].mxu0
  %v9682 = vadd.f32 0.0, %v9681
  %v9683 = vpop.f32.mrb[0].mxu0
  %9684 = vmatprep.mubr.f32.mxu0 0.0
  %9685 = vmatmul.mubr.f32.gmra.mrb[0].mxu0 %v9519
  %v9686 = vpop.f32.mrb[0].mxu0
  %v9687 = vadd.f32 0.0, %v9686
  %v9688 = vpop.f32.mrb[0].mxu0
  %9689 = vmatprep.mubr.f32.mxu0 0.0
  %9690 = vmatmul.mubr.f32.gmra.mrb[0].mxu0 %v9520
  %v9691 = vpop.f32.mrb[0].mxu0
  %v9692 = vadd.f32 0.0, %v9691
  %v9693 = vpop.f32.mrb[0].mxu0
  %9694 = vmatprep.mubr.f32.mxu0 0.0
  %9695 = vmatmul.mubr.f32.gmra.mrb[0].mxu0 %v9521
  %v9696 = vpop.f32.mrb[0].mxu0
  %v9697 = vadd.f32 0.0, %v9696
  %v9698 = vpop.f32.mrb[0].mxu0
  %9699 = vmatprep.mubr.f32.mxu0 0.0
  %9700 = vmatmul.mubr.f32.gmra.mrb[0].mxu0 %v9522
  %v9701 = vpop.f32.mrb[0].mxu0
  %v9702 = vadd.f32 0.0, %v9701
  %v9703 = vpop.f32.mrb[0].mxu0
  %9704 = vmatprep.mubr.f32.mxu0 0.0
  %9705 = vmatmul.mubr.f32.gmra.mrb[0].mxu0 %v9523
  %v9706 = vpop.f32.mrb[0].mxu0
  %v9707 = vadd.f32 0.0, %v9706
  %v9708 = vpop.f32.mrb[0].mxu0
  %9709 = vmatprep.mubr.f32.mxu0 0.0
  %9710 = vmatmul.mubr.f32.gmra.mrb[0].mxu0 %v9524
  %v9711 = vpop.f32.mrb[0].mxu0
  %v9712 = vadd.f32 0.0, %v9711
  %v9713 = vpop.f32.mrb[0].mxu0
  %9714 = vmatprep.mubr.f32.mxu0 0.0
  %9715 = vmatmul.mubr.f32.gmra.mrb[0].mxu0 %v9525
  %v9716 = vpop.f32.mrb[0].mxu0
  %v9717 = vadd.f32 0.0, %v9716
  %v9718 = vpop.f32.mrb[0].mxu0
  %9719 = vmatprep.mubr.f32.mxu0 0.0
  %9720 = vmatmul.mubr.f32.gmra.mrb[0].mxu0 %v9526
  %v9721 = vpop.f32.mrb[0].mxu0
  %v9722 = vadd.f32 0.0, %v9721
  %v9723 = vpop.f32.mrb[0].mxu0
  %9724 = vmatprep.mubr.f32.mxu0 0.0
  %9725 = vmatmul.mubr.f32.gmra.mrb[0].mxu0 %v9527
  %v9726 = vpop.f32.mrb[0].mxu0
  %v9727 = vadd.f32 0.0, %v9726
  %v9728 = vpop.f32.mrb[0].mxu0
  %9729 = vmatprep.mubr.f32.mxu0 0.0
  %9730 = vmatmul.mubr.f32.gmra.mrb[0].mxu0 %v9528
  %v9731 = vpop.f32.mrb[0].mxu0
  %v9732 = vadd.f32 0.0, %v9731
  %v9733 = vpop.f32.mrb[0].mxu0
  %9734 = vmatprep.mubr.f32.mxu0 0.0
  %9735 = vmatmul.mubr.f32.gmra.mrb[0].mxu0 %v9529
  %v9736 = vpop.f32.mrb[0].mxu0
  %v9737 = vadd.f32 0.0, %v9736
  %v9738 = vpop.f32.mrb[0].mxu0
  %9739 = vmatprep.mubr.f32.mxu0 0.0
  %9740 = vmatmul.mubr.f32.gmra.mrb[0].mxu0 %v9530
  %v9741 = vpop.f32.mrb[0].mxu0
  %v9742 = vadd.f32 0.0, %v9741
  %v9743 = vpop.f32.mrb[0].mxu0
  %9744 = vmatprep.mubr.f32.mxu0 0.0
  %9745 = vmatmul.mubr.f32.gmra.mrb[0].mxu0 %v9531
  %v9746 = vpop.f32.mrb[0].mxu0
  %v9747 = vadd.f32 0.0, %v9746
  %v9748 = vpop.f32.mrb[0].mxu0
  %9749 = vmatprep.mubr.f32.mxu0 0.0
  %9750 = vmatmul.mubr.f32.gmra.mrb[0].mxu0 %v9532
  %v9751 = vpop.f32.mrb[0].mxu0
  %v9752 = vadd.f32 0.0, %v9751
  %v9753 = vpop.f32.mrb[0].mxu0
  %9754 = vmatprep.mubr.f32.mxu0 0.0
  %9755 = vmatmul.mubr.f32.gmra.mrb[0].mxu0 %v9533
  %v9756 = vpop.f32.mrb[0].mxu0
  %v9757 = vadd.f32 0.0, %v9756
  %v9758 = vpop.f32.mrb[0].mxu0
  %9759 = vmatprep.mubr.f32.mxu0 0.0
  %9760 = vmatmul.mubr.f32.gmra.mrb[0].mxu0 %v9534
  %v9761 = vpop.f32.mrb[0].mxu0
  %v9762 = vadd.f32 0.0, %v9761
  %v9763 = vpop.f32.mrb[0].mxu0
  %9764 = vmatprep.mubr.f32.mxu0 0.0
  %9765 = vmatmul.mubr.f32.gmra.mrb[0].mxu0 %v9535
  %v9766 = vpop.f32.mrb[0].mxu0
  %v9767 = vadd.f32 0.0, %v9766
  %v9768 = vpop.f32.mrb[0].mxu0
  %9769 = vmatprep.mubr.f32.mxu0 0.0
  %9770 = vmatmul.mubr.f32.gmra.mrb[0].mxu0 %v9536
  %v9771 = vpop.f32.mrb[0].mxu0
  %v9772 = vadd.f32 0.0, %v9771
  %v9773 = vpop.f32.mrb[0].mxu0
  %9774 = vmatprep.mubr.f32.mxu0 0.0
  %9775 = vmatmul.mubr.f32.gmra.mrb[0].mxu0 %v9537
  %v9776 = vpop.f32.mrb[0].mxu0
  %v9777 = vadd.f32 0.0, %v9776
  %v9778 = vpop.f32.mrb[0].mxu0
  %9779 = vmatprep.mubr.f32.mxu0 0.0
  %9780 = vmatmul.mubr.f32.gmra.mrb[0].mxu0 %v9538
  %v9781 = vpop.f32.mrb[0].mxu0
  %v9782 = vadd.f32 0.0, %v9781
  %v9783 = vpop.f32.mrb[0].mxu0
  %9784 = vmatprep.mubr.f32.mxu0 0.0
  %9785 = vmatmul.mubr.f32.gmra.mrb[0].mxu0 %v9539
  %v9786 = vpop.f32.mrb[0].mxu0
  %v9787 = vadd.f32 0.0, %v9786
  %v9788 = vpop.f32.mrb[0].mxu0
  %9789 = vmatprep.mubr.f32.mxu0 0.0
  %9790 = vmatmul.mubr.f32.gmra.mrb[0].mxu0 %v9540
  %v9791 = vpop.f32.mrb[0].mxu0
  %v9792 = vadd.f32 0.0, %v9791
  %v9793 = vpop.f32.mrb[0].mxu0
  %9794 = vmatprep.mubr.f32.mxu0 0.0
  %9795 = vmatmul.mubr.f32.gmra.mrb[0].mxu0 %v9541
  %v9796 = vpop.f32.mrb[0].mxu0
  %v9797 = vadd.f32 0.0, %v9796
  %v9798 = vpop.f32.mrb[0].mxu0
  %9799 = vmatprep.mubr.f32.mxu0 0.0
  %9800 = vmatmul.mubr.f32.gmra.mrb[0].mxu0 %v9542
  %v9801 = vpop.f32.mrb[0].mxu0
  %v9802 = vadd.f32 0.0, %v9801
  %v9803 = vpop.f32.mrb[0].mxu0
  %9804 = vmatprep.mubr.f32.mxu0 0.0
  %9805 = vmatmul.mubr.f32.gmra.mrb[0].mxu0 %v9543
  %v9806 = vpop.f32.mrb[0].mxu0
  %v9807 = vadd.f32 0.0, %v9806
  %v9808 = vpop.f32.mrb[0].mxu0
  %9809 = vmatprep.mubr.f32.mxu0 0.0
  %9810 = vmatmul.mubr.f32.gmra.mrb[0].mxu0 %v9544
  %v9811 = vpop.f32.mrb[0].mxu0
  %v9812 = vadd.f32 0.0, %v9811
  %v9813 = vpop.f32.mrb[0].mxu0
  %9814 = vmatprep.mubr.f32.mxu0 0.0
  %9815 = vmatmul.mubr.f32.gmra.mrb[0].mxu0 %v9545
  %v9816 = vpop.f32.mrb[0].mxu0
  %v9817 = vadd.f32 0.0, %v9816
  %v9818 = vpop.f32.mrb[0].mxu0
  %9819 = vmatprep.mubr.f32.mxu0 0.0
  %9820 = vmatmul.mubr.f32.gmra.mrb[0].mxu0 %v9546
  %v9821 = vpop.f32.mrb[0].mxu0
  %v9822 = vadd.f32 0.0, %v9821
  %v9823 = vpop.f32.mrb[0].mxu0
  %9824 = vmatprep.mubr.f32.mxu0 0.0
  %9825 = vmatmul.mubr.f32.gmra.mrb[0].mxu0 %v9547
  %v9826 = vpop.f32.mrb[0].mxu0
  %v9827 = vadd.f32 0.0, %v9826
  %v9828 = vpop.f32.mrb[0].mxu0
  %9829 = vmatprep.mubr.f32.mxu0 0.0
  %9830 = vmatmul.mubr.f32.gmra.mrb[0].mxu0 %v9548
  %v9831 = vpop.f32.mrb[0].mxu0
  %v9832 = vadd.f32 0.0, %v9831
  %v9833 = vpop.f32.mrb[0].mxu0
  %9834 = vmatprep.mubr.f32.mxu0 0.0
  %9835 = vmatmul.mubr.f32.gmra.mrb[0].mxu0 %v9549
  %v9836 = vpop.f32.mrb[0].mxu0
  %v9837 = vadd.f32 0.0, %v9836
  %v9838 = vpop.f32.mrb[0].mxu0
  %9839 = vmatprep.mubr.f32.mxu0 0.0
  %9840 = vmatmul.mubr.f32.gmra.mrb[0].mxu0 %v9550
  %v9841 = vpop.f32.mrb[0].mxu0
  %v9842 = vadd.f32 0.0, %v9841
  %v9843 = vpop.f32.mrb[0].mxu0
  %9844 = vmatprep.mubr.f32.mxu0 0.0
  %9845 = vmatmul.mubr.f32.gmra.mrb[0].mxu0 %v9551
  %v9846 = vpop.f32.mrb[0].mxu0
  %v9847 = vadd.f32 0.0, %v9846
  %v9848 = vpop.f32.mrb[0].mxu0
  %9849 = vmatprep.mubr.f32.mxu0 0.0
  %9850 = vmatmul.mubr.f32.gmra.mrb[0].mxu0 %v9552
  %v9851 = vpop.f32.mrb[0].mxu0
  %v9852 = vadd.f32 0.0, %v9851
  %v9853 = vpop.f32.mrb[0].mxu0
  %9854 = vmatprep.mubr.f32.mxu0 0.0
  %9855 = vmatmul.mubr.f32.gmra.mrb[0].mxu0 %v9553
  %v9856 = vpop.f32.mrb[0].mxu0
  %v9857 = vadd.f32 0.0, %v9856
  %v9858 = vpop.f32.mrb[0].mxu0
  %9859 = vmatprep.mubr.f32.mxu0 0.0
  %9860 = vmatmul.mubr.f32.gmra.mrb[0].mxu0 %v9554
  %v9861 = vpop.f32.mrb[0].mxu0
  %v9862 = vadd.f32 0.0, %v9861
  %v9863 = vpop.f32.mrb[0].mxu0
  %9864 = vmatprep.mubr.f32.mxu0 0.0
  %9865 = vmatmul.mubr.f32.gmra.mrb[0].mxu0 %v9555
  %v9866 = vpop.f32.mrb[0].mxu0
  %v9867 = vadd.f32 0.0, %v9866
  %v9868 = vpop.f32.mrb[0].mxu0
  %9869 = vmatprep.mubr.f32.mxu0 0.0
  %9870 = vmatmul.mubr.f32.gmra.mrb[0].mxu0 %v9556
  %v9871 = vpop.f32.mrb[0].mxu0
  %v9872 = vadd.f32 0.0, %v9871
  %v9873 = vpop.f32.mrb[0].mxu0
  %9874 = vmatprep.mubr.f32.mxu0 0.0
  %9875 = vmatmul.mubr.f32.gmra.mrb[0].mxu0 %v9557
  %v9876 = vpop.f32.mrb[0].mxu0
  %v9877 = vadd.f32 0.0, %v9876
  %v9878 = vpop.f32.mrb[0].mxu0
  %9879 = vmatprep.mubr.f32.mxu0 0.0
  %9880 = vmatmul.mubr.f32.gmra.mrb[0].mxu0 %v9558
  %v9881 = vpop.f32.mrb[0].mxu0
  %v9882 = vadd.f32 0.0, %v9881
  %v9883 = vpop.f32.mrb[0].mxu0
  %9884 = vmatprep.mubr.f32.mxu0 0.0
  %9885 = vmatmul.mubr.f32.gmra.mrb[0].mxu0 %v9559
  %v9886 = vpop.f32.mrb[0].mxu0
  %v9887 = vadd.f32 0.0, %v9886
  %v9888 = vpop.f32.mrb[0].mxu0
  %9889 = vmatprep.mubr.f32.mxu0 0.0
  %9890 = vmatmul.mubr.f32.gmra.mrb[0].mxu0 %v9560
  %v9891 = vpop.f32.mrb[0].mxu0
  %v9892 = vadd.f32 0.0, %v9891
  %v9893 = vpop.f32.mrb[0].mxu0
  %9894 = vmatprep.mubr.f32.mxu0 0.0
  %9895 = vmatmul.mubr.f32.gmra.mrb[0].mxu0 %v9561
  %v9896 = vpop.f32.mrb[0].mxu0
  %v9897 = vadd.f32 0.0, %v9896
  %v9898 = vpop.f32.mrb[0].mxu0
  %9899 = vmatprep.mubr.f32.mxu0 0.0
  %9900 = vmatmul.mubr.f32.gmra.mrb[0].mxu0 %v9562
  %v9901 = vpop.f32.mrb[0].mxu0
  %v9902 = vadd.f32 0.0, %v9901
  %v9903 = vpop.f32.mrb[0].mxu0
  %9904 = vmatprep.mubr.f32.mxu0 0.0
  %9905 = vmatmul.mubr.f32.gmra.mrb[0].mxu0 %v9563
  %v9906 = vpop.f32.mrb[0].mxu0
  %v9907 = vadd.f32 0.0, %v9906
  %v9908 = vpop.f32.mrb[0].mxu0
  %9909 = vmatprep.mubr.f32.mxu0 0.0
  %9910 = vmatmul.mubr.f32.gmra.mrb[0].mxu0 %v9564
  %v9911 = vpop.f32.mrb[0].mxu0
  %v9912 = vadd.f32 0.0, %v9911
  %v9913 = vpop.f32.mrb[0].mxu0
  %9914 = vmatprep.mubr.f32.mxu0 0.0
  %9915 = vmatmul.mubr.f32.gmra.mrb[0].mxu0 %v9565
  %v9916 = vpop.f32.mrb[0].mxu0
  %v9917 = vadd.f32 0.0, %v9916
  %v9918 = vpop.f32.mrb[0].mxu0
  %9919 = vmatprep.mubr.f32.mxu0 0.0
  %9920 = vmatmul.mubr.f32.gmra.mrb[0].mxu0 %v9566
  %v9921 = vpop.f32.mrb[0].mxu0
  %v9922 = vadd.f32 0.0, %v9921
  %v9923 = vpop.f32.mrb[0].mxu0
  %9924 = vmatprep.mubr.f32.mxu0 0.0
  %9925 = vmatmul.mubr.f32.gmra.mrb[0].mxu0 %v9567
  %v9926 = vpop.f32.mrb[0].mxu0
  %v9927 = vadd.f32 0.0, %v9926
  %v9928 = vpop.f32.mrb[0].mxu0
  %9929 = vmatprep.mubr.f32.mxu0 0.0
  %9930 = vmatmul.mubr.f32.gmra.mrb[0].mxu0 %v9568
  %v9931 = vpop.f32.mrb[0].mxu0
  %v9932 = vadd.f32 0.0, %v9931
  %v9933 = vpop.f32.mrb[0].mxu0
  %9934 = vmatprep.mubr.f32.mxu0 0.0
  %9935 = vmatmul.mubr.f32.gmra.mrb[0].mxu0 %v9569
  %v9936 = vpop.f32.mrb[0].mxu0
  %v9937 = vadd.f32 0.0, %v9936
  %v9938 = vpop.f32.mrb[0].mxu0
  %9939 = vmatprep.mubr.f32.mxu0 0.0
  %9940 = vmatmul.mubr.f32.gmra.mrb[0].mxu0 %v9570
  %v9941 = vpop.f32.mrb[0].mxu0
  %v9942 = vadd.f32 0.0, %v9941
  %v9943 = vpop.f32.mrb[0].mxu0
  %9944 = vmatprep.mubr.f32.mxu0 0.0
  %9945 = vmatmul.mubr.f32.gmra.mrb[0].mxu0 %v9571
  %v9946 = vpop.f32.mrb[0].mxu0
  %v9947 = vadd.f32 0.0, %v9946
  %v9948 = vpop.f32.mrb[0].mxu0
  %9949 = vmatprep.mubr.f32.mxu0 0.0
  %9950 = vmatmul.mubr.f32.gmra.mrb[0].mxu0 %v9572
  %v9951 = vpop.f32.mrb[0].mxu0
  %v9952 = vadd.f32 0.0, %v9951
  %v9953 = vpop.f32.mrb[0].mxu0
  %9954 = vmatprep.mubr.f32.mxu0 0.0
  %9955 = vmatmul.mubr.f32.gmra.mrb[0].mxu0 %v9573
  %v9956 = vpop.f32.mrb[0].mxu0
  %v9957 = vadd.f32 0.0, %v9956
  %v9958 = vpop.f32.mrb[0].mxu0
  %9959 = vmatprep.mubr.f32.mxu0 0.0
  %9960 = vmatmul.mubr.f32.gmra.mrb[0].mxu0 %v9574
  %v9961 = vpop.f32.mrb[0].mxu0
  %v9962 = vadd.f32 0.0, %v9961
  %v9963 = vpop.f32.mrb[0].mxu0
  %9964 = vmatprep.mubr.f32.mxu0 0.0
  %9965 = vmatmul.mubr.f32.gmra.mrb[0].mxu0 %v9575
  %v9966 = vpop.f32.mrb[0].mxu0
  %v9967 = vadd.f32 0.0, %v9966
  %v9968 = vpop.f32.mrb[0].mxu0
  %9969 = vmatprep.mubr.f32.mxu0 0.0
  %9970 = vmatmul.mubr.f32.gmra.mrb[0].mxu0 %v9576
  %v9971 = vpop.f32.mrb[0].mxu0
  %v9972 = vadd.f32 0.0, %v9971
  %v9973 = vpop.f32.mrb[0].mxu0
  %9974 = vmatprep.mubr.f32.mxu0 0.0
  %9975 = vmatmul.mubr.f32.gmra.mrb[0].mxu0 %v9577
  %v9976 = vpop.f32.mrb[0].mxu0
  %v9977 = vadd.f32 0.0, %v9976
  %v9978 = vpop.f32.mrb[0].mxu0
  %9979 = vdwg.mxu0
  %v9980 = vadd.f32 %v9450, %v9662
  %v9981 = vadd.f32 %v9451, %v9667
  %v9982 = vadd.f32 %v9452, %v9672
  %v9983 = vadd.f32 %v9453, %v9677
  %v9984 = vadd.f32 %v9454, %v9682
  %v9985 = vadd.f32 %v9455, %v9687
  %v9986 = vadd.f32 %v9456, %v9692
  %v9987 = vadd.f32 %v9457, %v9697
  %v9988 = vadd.f32 %v9458, %v9702
  %v9989 = vadd.f32 %v9459, %v9707
  %v9990 = vadd.f32 %v9460, %v9712
  %v9991 = vadd.f32 %v9461, %v9717
  %v9992 = vadd.f32 %v9462, %v9722
  %v9993 = vadd.f32 %v9463, %v9727
  %v9994 = vadd.f32 %v9464, %v9732
  %v9995 = vadd.f32 %v9465, %v9737
  %v9996 = vadd.f32 %v9466, %v9742
  %v9997 = vadd.f32 %v9467, %v9747
  %v9998 = vadd.f32 %v9468, %v9752
  %v9999 = vadd.f32 %v9469, %v9757
  %v10000 = vadd.f32 %v9470, %v9762
  %v10001 = vadd.f32 %v9471, %v9767
  %v10002 = vadd.f32 %v9472, %v9772
  %v10003 = vadd.f32 %v9473, %v9777
  %v10004 = vadd.f32 %v9474, %v9782
  %v10005 = vadd.f32 %v9475, %v9787
  %v10006 = vadd.f32 %v9476, %v9792
  %v10007 = vadd.f32 %v9477, %v9797
  %v10008 = vadd.f32 %v9478, %v9802
  %v10009 = vadd.f32 %v9479, %v9807
  %v10010 = vadd.f32 %v9480, %v9812
  %v10011 = vadd.f32 %v9481, %v9817
  %v10012 = vadd.f32 %v9482, %v9822
  %v10013 = vadd.f32 %v9483, %v9827
  %v10014 = vadd.f32 %v9484, %v9832
  %v10015 = vadd.f32 %v9485, %v9837
  %v10016 = vadd.f32 %v9486, %v9842
  %v10017 = vadd.f32 %v9487, %v9847
  %v10018 = vadd.f32 %v9488, %v9852
  %v10019 = vadd.f32 %v9489, %v9857
  %v10020 = vadd.f32 %v9490, %v9862
  %v10021 = vadd.f32 %v9491, %v9867
  %v10022 = vadd.f32 %v9492, %v9872
  %v10023 = vadd.f32 %v9493, %v9877
  %v10024 = vadd.f32 %v9494, %v9882
  %v10025 = vadd.f32 %v9495, %v9887
  %v10026 = vadd.f32 %v9496, %v9892
  %v10027 = vadd.f32 %v9497, %v9897
  %v10028 = vadd.f32 %v9498, %v9902
  %v10029 = vadd.f32 %v9499, %v9907
  %v10030 = vadd.f32 %v9500, %v9912
  %v10031 = vadd.f32 %v9501, %v9917
  %v10032 = vadd.f32 %v9502, %v9922
  %v10033 = vadd.f32 %v9503, %v9927
  %v10034 = vadd.f32 %v9504, %v9932
  %v10035 = vadd.f32 %v9505, %v9937
  %v10036 = vadd.f32 %v9506, %v9942
  %v10037 = vadd.f32 %v9507, %v9947
  %v10038 = vadd.f32 %v9508, %v9952
  %v10039 = vadd.f32 %v9509, %v9957
  %v10040 = vadd.f32 %v9510, %v9962
  %v10041 = vadd.f32 %v9511, %v9967
  %v10042 = vadd.f32 %v9512, %v9972
  %v10043 = vadd.f32 %v9513, %v9977
  %s10044 = scalar_lea.vmem [#allocation2], 48
  %v10045 = vld [vmem:[%s10044] sm:$0xff]
  %v10046 = vld [vmem:[%s10044 + $0x8] sm:$0xff]
  %v10047 = vld [vmem:[%s10044 + $0x18] sm:$0xff]
  %v10048 = vld [vmem:[%s10044 + $0x20] sm:$0xff]
  %v10049 = vld [vmem:[%s10044 + $0x30] sm:$0xff]
  %v10050 = vld [vmem:[%s10044 + $0x38] sm:$0xff]
  %v10051 = vld [vmem:[%s10044 + $0x48] sm:$0xff]
  %v10052 = vld [vmem:[%s10044 + $0x50] sm:$0xff]
  %v10053 = vld [vmem:[%s10044 + $0x60] sm:$0xff]
  %v10054 = vld [vmem:[%s10044 + $0x68] sm:$0xff]
  %v10055 = vld [vmem:[%s10044 + $0x78] sm:$0xff]
  %v10056 = vld [vmem:[%s10044 + $0x80] sm:$0xff]
  %v10057 = vld [vmem:[%s10044 + $0x90] sm:$0xff]
  %v10058 = vld [vmem:[%s10044 + $0x98] sm:$0xff]
  %v10059 = vld [vmem:[%s10044 + $0xa8] sm:$0xff]
  %v10060 = vld [vmem:[%s10044 + $0xb0] sm:$0xff]
  %v10061 = vld [vmem:[%s10044 + $0xc0] sm:$0xff]
  %v10062 = vld [vmem:[%s10044 + $0xc8] sm:$0xff]
  %v10063 = vld [vmem:[%s10044 + $0xd8] sm:$0xff]
  %v10064 = vld [vmem:[%s10044 + $0xe0] sm:$0xff]
  %v10065 = vld [vmem:[%s10044 + $0xf0] sm:$0xff]
  %v10066 = vld [vmem:[%s10044 + $0xf8] sm:$0xff]
  %v10067 = vld [vmem:[%s10044 + $0x108] sm:$0xff]
  %v10068 = vld [vmem:[%s10044 + $0x110] sm:$0xff]
  %v10069 = vld [vmem:[%s10044 + $0x120] sm:$0xff]
  %v10070 = vld [vmem:[%s10044 + $0x128] sm:$0xff]
  %v10071 = vld [vmem:[%s10044 + $0x138] sm:$0xff]
  %v10072 = vld [vmem:[%s10044 + $0x140] sm:$0xff]
  %v10073 = vld [vmem:[%s10044 + $0x150] sm:$0xff]
  %v10074 = vld [vmem:[%s10044 + $0x158] sm:$0xff]
  %v10075 = vld [vmem:[%s10044 + $0x168] sm:$0xff]
  %v10076 = vld [vmem:[%s10044 + $0x170] sm:$0xff]
  %v10077 = vld [vmem:[%s10044 + $0x1b0] sm:$0xff]
  %v10078 = vld [vmem:[%s10044 + $0x1b8] sm:$0xff]
  %v10079 = vld [vmem:[%s10044 + $0x1c8] sm:$0xff]
  %v10080 = vld [vmem:[%s10044 + $0x1d0] sm:$0xff]
  %v10081 = vld [vmem:[%s10044 + $0x1e0] sm:$0xff]
  %v10082 = vld [vmem:[%s10044 + $0x1e8] sm:$0xff]
  %v10083 = vld [vmem:[%s10044 + $0x1f8] sm:$0xff]
  %v10084 = vld [vmem:[%s10044 + $0x200] sm:$0xff]
  %v10085 = vld [vmem:[%s10044 + $0x210] sm:$0xff]
  %v10086 = vld [vmem:[%s10044 + $0x218] sm:$0xff]
  %v10087 = vld [vmem:[%s10044 + $0x228] sm:$0xff]
  %v10088 = vld [vmem:[%s10044 + $0x230] sm:$0xff]
  %v10089 = vld [vmem:[%s10044 + $0x240] sm:$0xff]
  %v10090 = vld [vmem:[%s10044 + $0x248] sm:$0xff]
  %v10091 = vld [vmem:[%s10044 + $0x258] sm:$0xff]
  %v10092 = vld [vmem:[%s10044 + $0x260] sm:$0xff]
  %v10093 = vld [vmem:[%s10044 + $0x270] sm:$0xff]
  %v10094 = vld [vmem:[%s10044 + $0x278] sm:$0xff]
  %v10095 = vld [vmem:[%s10044 + $0x288] sm:$0xff]
  %v10096 = vld [vmem:[%s10044 + $0x290] sm:$0xff]
  %v10097 = vld [vmem:[%s10044 + $0x2a0] sm:$0xff]
  %v10098 = vld [vmem:[%s10044 + $0x2a8] sm:$0xff]
  %v10099 = vld [vmem:[%s10044 + $0x2b8] sm:$0xff]
  %v10100 = vld [vmem:[%s10044 + $0x2c0] sm:$0xff]
  %v10101 = vld [vmem:[%s10044 + $0x2d0] sm:$0xff]
  %v10102 = vld [vmem:[%s10044 + $0x2d8] sm:$0xff]
  %v10103 = vld [vmem:[%s10044 + $0x2e8] sm:$0xff]
  %v10104 = vld [vmem:[%s10044 + $0x2f0] sm:$0xff]
  %v10105 = vld [vmem:[%s10044 + $0x300] sm:$0xff]
  %v10106 = vld [vmem:[%s10044 + $0x308] sm:$0xff]
  %v10107 = vld [vmem:[%s10044 + $0x318] sm:$0xff]
  %v10108 = vld [vmem:[%s10044 + $0x320] sm:$0xff]
  %s10109 = scalar_lea.vmem %s4, 768
  %v10110 = vld [vmem:[%s10109] sm:$0xff]
  %v10111 = vld [vmem:[%s10109 + $0x8] sm:$0xff]
  %v10112 = vld [vmem:[%s10109 + $0x10] sm:$0xff]
  %v10113 = vld [vmem:[%s10109 + $0x18] sm:$0xff]
  %v10114 = vld [vmem:[%s10109 + $0x20] sm:$0xff]
  %v10115 = vld [vmem:[%s10109 + $0x28] sm:$0xff]
  %v10116 = vld [vmem:[%s10109 + $0x30] sm:$0xff]
  %v10117 = vld [vmem:[%s10109 + $0x38] sm:$0xff]
  %v10118 = vld [vmem:[%s10109 + $0x40] sm:$0xff]
  %v10119 = vld [vmem:[%s10109 + $0x48] sm:$0xff]
  %v10120 = vld [vmem:[%s10109 + $0x50] sm:$0xff]
  %v10121 = vld [vmem:[%s10109 + $0x58] sm:$0xff]
  %v10122 = vld [vmem:[%s10109 + $0x60] sm:$0xff]
  %v10123 = vld [vmem:[%s10109 + $0x68] sm:$0xff]
  %v10124 = vld [vmem:[%s10109 + $0x70] sm:$0xff]
  %v10125 = vld [vmem:[%s10109 + $0x78] sm:$0xff]
  %10126 = vmatprep.subr.mxu0 0.0
  %10127 = vmatpush1.msra.mxu0 %v10110
  %10128 = vmatprep.subr.mxu0 0.0
  %10129 = vmatpush1.msra.mxu0 %v10111
  %10130 = vmatprep.subr.mxu0 0.0
  %10131 = vmatpush1.msra.mxu0 %v10112
  %10132 = vmatprep.subr.mxu0 0.0
  %10133 = vmatpush1.msra.mxu0 %v10113
  %10134 = vmatprep.subr.mxu0 0.0
  %10135 = vmatpush1.msra.mxu0 %v10114
  %10136 = vmatprep.subr.mxu0 0.0
  %10137 = vmatpush1.msra.mxu0 %v10115
  %10138 = vmatprep.subr.mxu0 0.0
  %10139 = vmatpush1.msra.mxu0 %v10116
  %10140 = vmatprep.subr.mxu0 0.0
  %10141 = vmatpush1.msra.mxu0 %v10117
  %10142 = vmatprep.subr.mxu0 0.0
  %10143 = vmatpush1.msra.mxu0 %v10118
  %10144 = vmatprep.subr.mxu0 0.0
  %10145 = vmatpush1.msra.mxu0 %v10119
  %10146 = vmatprep.subr.mxu0 0.0
  %10147 = vmatpush1.msra.mxu0 %v10120
  %10148 = vmatprep.subr.mxu0 0.0
  %10149 = vmatpush1.msra.mxu0 %v10121
  %10150 = vmatprep.subr.mxu0 0.0
  %10151 = vmatpush1.msra.mxu0 %v10122
  %10152 = vmatprep.subr.mxu0 0.0
  %10153 = vmatpush1.msra.mxu0 %v10123
  %10154 = vmatprep.subr.mxu0 0.0
  %10155 = vmatpush1.msra.mxu0 %v10124
  %10156 = vmatprep.subr.mxu0 0.0
  %10157 = vmatpush1.msra.mxu0 %v10125
  %10158 = vmatprep.subr.mxu0 0.0
  %10159 = vmatpush1.msra.mxu0 0.0
  %10160 = vmatprep.subr.mxu0 0.0
  %10161 = vmatpush1.msra.mxu0 0.0
  %10162 = vmatprep.subr.mxu0 0.0
  %10163 = vmatpush1.msra.mxu0 0.0
  %10164 = vmatprep.subr.mxu0 0.0
  %10165 = vmatpush1.msra.mxu0 0.0
  %10166 = vmatprep.subr.mxu0 0.0
  %10167 = vmatpush1.msra.mxu0 0.0
  %10168 = vmatprep.subr.mxu0 0.0
  %10169 = vmatpush1.msra.mxu0 0.0
  %10170 = vmatprep.subr.mxu0 0.0
  %10171 = vmatpush1.msra.mxu0 0.0
  %10172 = vmatprep.subr.mxu0 0.0
  %10173 = vmatpush1.msra.mxu0 0.0
  %10174 = vmatprep.subr.mxu0 0.0
  %10175 = vmatpush1.msra.mxu0 0.0
  %10176 = vmatprep.subr.mxu0 0.0
  %10177 = vmatpush1.msra.mxu0 0.0
  %10178 = vmatprep.subr.mxu0 0.0
  %10179 = vmatpush1.msra.mxu0 0.0
  %10180 = vmatprep.subr.mxu0 0.0
  %10181 = vmatpush1.msra.mxu0 0.0
  %10182 = vmatprep.subr.mxu0 0.0
  %10183 = vmatpush1.msra.mxu0 0.0
  %10184 = vmatprep.subr.mxu0 0.0
  %10185 = vmatpush1.msra.mxu0 0.0
  %10186 = vmatprep.subr.mxu0 0.0
  %10187 = vmatpush1.msra.mxu0 0.0
  %10188 = vmatprep.subr.mxu0 0.0
  %10189 = vmatpush1.msra.mxu0 0.0
  %10190 = vmatprep.mubr.f32.mxu0 0.0
  %10191 = vmatmul.mubr.f32.gmra.mrb[0].mxu0 %v10045
  %v10192 = vpop.f32.mrb[0].mxu0
  %v10193 = vadd.f32 0.0, %v10192
  %v10194 = vpop.f32.mrb[0].mxu0
  %10195 = vmatprep.mubr.f32.mxu0 0.0
  %10196 = vmatmul.mubr.f32.gmra.mrb[0].mxu0 %v10046
  %v10197 = vpop.f32.mrb[0].mxu0
  %v10198 = vadd.f32 0.0, %v10197
  %v10199 = vpop.f32.mrb[0].mxu0
  %10200 = vmatprep.mubr.f32.mxu0 0.0
  %10201 = vmatmul.mubr.f32.gmra.mrb[0].mxu0 %v10047
  %v10202 = vpop.f32.mrb[0].mxu0
  %v10203 = vadd.f32 0.0, %v10202
  %v10204 = vpop.f32.mrb[0].mxu0
  %10205 = vmatprep.mubr.f32.mxu0 0.0
  %10206 = vmatmul.mubr.f32.gmra.mrb[0].mxu0 %v10048
  %v10207 = vpop.f32.mrb[0].mxu0
  %v10208 = vadd.f32 0.0, %v10207
  %v10209 = vpop.f32.mrb[0].mxu0
  %10210 = vmatprep.mubr.f32.mxu0 0.0
  %10211 = vmatmul.mubr.f32.gmra.mrb[0].mxu0 %v10049
  %v10212 = vpop.f32.mrb[0].mxu0
  %v10213 = vadd.f32 0.0, %v10212
  %v10214 = vpop.f32.mrb[0].mxu0
  %10215 = vmatprep.mubr.f32.mxu0 0.0
  %10216 = vmatmul.mubr.f32.gmra.mrb[0].mxu0 %v10050
  %v10217 = vpop.f32.mrb[0].mxu0
  %v10218 = vadd.f32 0.0, %v10217
  %v10219 = vpop.f32.mrb[0].mxu0
  %10220 = vmatprep.mubr.f32.mxu0 0.0
  %10221 = vmatmul.mubr.f32.gmra.mrb[0].mxu0 %v10051
  %v10222 = vpop.f32.mrb[0].mxu0
  %v10223 = vadd.f32 0.0, %v10222
  %v10224 = vpop.f32.mrb[0].mxu0
  %10225 = vmatprep.mubr.f32.mxu0 0.0
  %10226 = vmatmul.mubr.f32.gmra.mrb[0].mxu0 %v10052
  %v10227 = vpop.f32.mrb[0].mxu0
  %v10228 = vadd.f32 0.0, %v10227
  %v10229 = vpop.f32.mrb[0].mxu0
  %10230 = vmatprep.mubr.f32.mxu0 0.0
  %10231 = vmatmul.mubr.f32.gmra.mrb[0].mxu0 %v10053
  %v10232 = vpop.f32.mrb[0].mxu0
  %v10233 = vadd.f32 0.0, %v10232
  %v10234 = vpop.f32.mrb[0].mxu0
  %10235 = vmatprep.mubr.f32.mxu0 0.0
  %10236 = vmatmul.mubr.f32.gmra.mrb[0].mxu0 %v10054
  %v10237 = vpop.f32.mrb[0].mxu0
  %v10238 = vadd.f32 0.0, %v10237
  %v10239 = vpop.f32.mrb[0].mxu0
  %10240 = vmatprep.mubr.f32.mxu0 0.0
  %10241 = vmatmul.mubr.f32.gmra.mrb[0].mxu0 %v10055
  %v10242 = vpop.f32.mrb[0].mxu0
  %v10243 = vadd.f32 0.0, %v10242
  %v10244 = vpop.f32.mrb[0].mxu0
  %10245 = vmatprep.mubr.f32.mxu0 0.0
  %10246 = vmatmul.mubr.f32.gmra.mrb[0].mxu0 %v10056
  %v10247 = vpop.f32.mrb[0].mxu0
  %v10248 = vadd.f32 0.0, %v10247
  %v10249 = vpop.f32.mrb[0].mxu0
  %10250 = vmatprep.mubr.f32.mxu0 0.0
  %10251 = vmatmul.mubr.f32.gmra.mrb[0].mxu0 %v10057
  %v10252 = vpop.f32.mrb[0].mxu0
  %v10253 = vadd.f32 0.0, %v10252
  %v10254 = vpop.f32.mrb[0].mxu0
  %10255 = vmatprep.mubr.f32.mxu0 0.0
  %10256 = vmatmul.mubr.f32.gmra.mrb[0].mxu0 %v10058
  %v10257 = vpop.f32.mrb[0].mxu0
  %v10258 = vadd.f32 0.0, %v10257
  %v10259 = vpop.f32.mrb[0].mxu0
  %10260 = vmatprep.mubr.f32.mxu0 0.0
  %10261 = vmatmul.mubr.f32.gmra.mrb[0].mxu0 %v10059
  %v10262 = vpop.f32.mrb[0].mxu0
  %v10263 = vadd.f32 0.0, %v10262
  %v10264 = vpop.f32.mrb[0].mxu0
  %10265 = vmatprep.mubr.f32.mxu0 0.0
  %10266 = vmatmul.mubr.f32.gmra.mrb[0].mxu0 %v10060
  %v10267 = vpop.f32.mrb[0].mxu0
  %v10268 = vadd.f32 0.0, %v10267
  %v10269 = vpop.f32.mrb[0].mxu0
  %10270 = vmatprep.mubr.f32.mxu0 0.0
  %10271 = vmatmul.mubr.f32.gmra.mrb[0].mxu0 %v10061
  %v10272 = vpop.f32.mrb[0].mxu0
  %v10273 = vadd.f32 0.0, %v10272
  %v10274 = vpop.f32.mrb[0].mxu0
  %10275 = vmatprep.mubr.f32.mxu0 0.0
  %10276 = vmatmul.mubr.f32.gmra.mrb[0].mxu0 %v10062
  %v10277 = vpop.f32.mrb[0].mxu0
  %v10278 = vadd.f32 0.0, %v10277
  %v10279 = vpop.f32.mrb[0].mxu0
  %10280 = vmatprep.mubr.f32.mxu0 0.0
  %10281 = vmatmul.mubr.f32.gmra.mrb[0].mxu0 %v10063
  %v10282 = vpop.f32.mrb[0].mxu0
  %v10283 = vadd.f32 0.0, %v10282
  %v10284 = vpop.f32.mrb[0].mxu0
  %10285 = vmatprep.mubr.f32.mxu0 0.0
  %10286 = vmatmul.mubr.f32.gmra.mrb[0].mxu0 %v10064
  %v10287 = vpop.f32.mrb[0].mxu0
  %v10288 = vadd.f32 0.0, %v10287
  %v10289 = vpop.f32.mrb[0].mxu0
  %10290 = vmatprep.mubr.f32.mxu0 0.0
  %10291 = vmatmul.mubr.f32.gmra.mrb[0].mxu0 %v10065
  %v10292 = vpop.f32.mrb[0].mxu0
  %v10293 = vadd.f32 0.0, %v10292
  %v10294 = vpop.f32.mrb[0].mxu0
  %10295 = vmatprep.mubr.f32.mxu0 0.0
  %10296 = vmatmul.mubr.f32.gmra.mrb[0].mxu0 %v10066
  %v10297 = vpop.f32.mrb[0].mxu0
  %v10298 = vadd.f32 0.0, %v10297
  %v10299 = vpop.f32.mrb[0].mxu0
  %10300 = vmatprep.mubr.f32.mxu0 0.0
  %10301 = vmatmul.mubr.f32.gmra.mrb[0].mxu0 %v10067
  %v10302 = vpop.f32.mrb[0].mxu0
  %v10303 = vadd.f32 0.0, %v10302
  %v10304 = vpop.f32.mrb[0].mxu0
  %10305 = vmatprep.mubr.f32.mxu0 0.0
  %10306 = vmatmul.mubr.f32.gmra.mrb[0].mxu0 %v10068
  %v10307 = vpop.f32.mrb[0].mxu0
  %v10308 = vadd.f32 0.0, %v10307
  %v10309 = vpop.f32.mrb[0].mxu0
  %10310 = vmatprep.mubr.f32.mxu0 0.0
  %10311 = vmatmul.mubr.f32.gmra.mrb[0].mxu0 %v10069
  %v10312 = vpop.f32.mrb[0].mxu0
  %v10313 = vadd.f32 0.0, %v10312
  %v10314 = vpop.f32.mrb[0].mxu0
  %10315 = vmatprep.mubr.f32.mxu0 0.0
  %10316 = vmatmul.mubr.f32.gmra.mrb[0].mxu0 %v10070
  %v10317 = vpop.f32.mrb[0].mxu0
  %v10318 = vadd.f32 0.0, %v10317
  %v10319 = vpop.f32.mrb[0].mxu0
  %10320 = vmatprep.mubr.f32.mxu0 0.0
  %10321 = vmatmul.mubr.f32.gmra.mrb[0].mxu0 %v10071
  %v10322 = vpop.f32.mrb[0].mxu0
  %v10323 = vadd.f32 0.0, %v10322
  %v10324 = vpop.f32.mrb[0].mxu0
  %10325 = vmatprep.mubr.f32.mxu0 0.0
  %10326 = vmatmul.mubr.f32.gmra.mrb[0].mxu0 %v10072
  %v10327 = vpop.f32.mrb[0].mxu0
  %v10328 = vadd.f32 0.0, %v10327
  %v10329 = vpop.f32.mrb[0].mxu0
  %10330 = vmatprep.mubr.f32.mxu0 0.0
  %10331 = vmatmul.mubr.f32.gmra.mrb[0].mxu0 %v10073
  %v10332 = vpop.f32.mrb[0].mxu0
  %v10333 = vadd.f32 0.0, %v10332
  %v10334 = vpop.f32.mrb[0].mxu0
  %10335 = vmatprep.mubr.f32.mxu0 0.0
  %10336 = vmatmul.mubr.f32.gmra.mrb[0].mxu0 %v10074
  %v10337 = vpop.f32.mrb[0].mxu0
  %v10338 = vadd.f32 0.0, %v10337
  %v10339 = vpop.f32.mrb[0].mxu0
  %10340 = vmatprep.mubr.f32.mxu0 0.0
  %10341 = vmatmul.mubr.f32.gmra.mrb[0].mxu0 %v10075
  %v10342 = vpop.f32.mrb[0].mxu0
  %v10343 = vadd.f32 0.0, %v10342
  %v10344 = vpop.f32.mrb[0].mxu0
  %10345 = vmatprep.mubr.f32.mxu0 0.0
  %10346 = vmatmul.mubr.f32.gmra.mrb[0].mxu0 %v10076
  %v10347 = vpop.f32.mrb[0].mxu0
  %v10348 = vadd.f32 0.0, %v10347
  %v10349 = vpop.f32.mrb[0].mxu0
  %10350 = vmatprep.mubr.f32.mxu0 0.0
  %10351 = vmatmul.mubr.f32.gmra.mrb[0].mxu0 %v10077
  %v10352 = vpop.f32.mrb[0].mxu0
  %v10353 = vadd.f32 0.0, %v10352
  %v10354 = vpop.f32.mrb[0].mxu0
  %10355 = vmatprep.mubr.f32.mxu0 0.0
  %10356 = vmatmul.mubr.f32.gmra.mrb[0].mxu0 %v10078
  %v10357 = vpop.f32.mrb[0].mxu0
  %v10358 = vadd.f32 0.0, %v10357
  %v10359 = vpop.f32.mrb[0].mxu0
  %10360 = vmatprep.mubr.f32.mxu0 0.0
  %10361 = vmatmul.mubr.f32.gmra.mrb[0].mxu0 %v10079
  %v10362 = vpop.f32.mrb[0].mxu0
  %v10363 = vadd.f32 0.0, %v10362
  %v10364 = vpop.f32.mrb[0].mxu0
  %10365 = vmatprep.mubr.f32.mxu0 0.0
  %10366 = vmatmul.mubr.f32.gmra.mrb[0].mxu0 %v10080
  %v10367 = vpop.f32.mrb[0].mxu0
  %v10368 = vadd.f32 0.0, %v10367
  %v10369 = vpop.f32.mrb[0].mxu0
  %10370 = vmatprep.mubr.f32.mxu0 0.0
  %10371 = vmatmul.mubr.f32.gmra.mrb[0].mxu0 %v10081
  %v10372 = vpop.f32.mrb[0].mxu0
  %v10373 = vadd.f32 0.0, %v10372
  %v10374 = vpop.f32.mrb[0].mxu0
  %10375 = vmatprep.mubr.f32.mxu0 0.0
  %10376 = vmatmul.mubr.f32.gmra.mrb[0].mxu0 %v10082
  %v10377 = vpop.f32.mrb[0].mxu0
  %v10378 = vadd.f32 0.0, %v10377
  %v10379 = vpop.f32.mrb[0].mxu0
  %10380 = vmatprep.mubr.f32.mxu0 0.0
  %10381 = vmatmul.mubr.f32.gmra.mrb[0].mxu0 %v10083
  %v10382 = vpop.f32.mrb[0].mxu0
  %v10383 = vadd.f32 0.0, %v10382
  %v10384 = vpop.f32.mrb[0].mxu0
  %10385 = vmatprep.mubr.f32.mxu0 0.0
  %10386 = vmatmul.mubr.f32.gmra.mrb[0].mxu0 %v10084
  %v10387 = vpop.f32.mrb[0].mxu0
  %v10388 = vadd.f32 0.0, %v10387
  %v10389 = vpop.f32.mrb[0].mxu0
  %10390 = vmatprep.mubr.f32.mxu0 0.0
  %10391 = vmatmul.mubr.f32.gmra.mrb[0].mxu0 %v10085
  %v10392 = vpop.f32.mrb[0].mxu0
  %v10393 = vadd.f32 0.0, %v10392
  %v10394 = vpop.f32.mrb[0].mxu0
  %10395 = vmatprep.mubr.f32.mxu0 0.0
  %10396 = vmatmul.mubr.f32.gmra.mrb[0].mxu0 %v10086
  %v10397 = vpop.f32.mrb[0].mxu0
  %v10398 = vadd.f32 0.0, %v10397
  %v10399 = vpop.f32.mrb[0].mxu0
  %10400 = vmatprep.mubr.f32.mxu0 0.0
  %10401 = vmatmul.mubr.f32.gmra.mrb[0].mxu0 %v10087
  %v10402 = vpop.f32.mrb[0].mxu0
  %v10403 = vadd.f32 0.0, %v10402
  %v10404 = vpop.f32.mrb[0].mxu0
  %10405 = vmatprep.mubr.f32.mxu0 0.0
  %10406 = vmatmul.mubr.f32.gmra.mrb[0].mxu0 %v10088
  %v10407 = vpop.f32.mrb[0].mxu0
  %v10408 = vadd.f32 0.0, %v10407
  %v10409 = vpop.f32.mrb[0].mxu0
  %10410 = vmatprep.mubr.f32.mxu0 0.0
  %10411 = vmatmul.mubr.f32.gmra.mrb[0].mxu0 %v10089
  %v10412 = vpop.f32.mrb[0].mxu0
  %v10413 = vadd.f32 0.0, %v10412
  %v10414 = vpop.f32.mrb[0].mxu0
  %10415 = vmatprep.mubr.f32.mxu0 0.0
  %10416 = vmatmul.mubr.f32.gmra.mrb[0].mxu0 %v10090
  %v10417 = vpop.f32.mrb[0].mxu0
  %v10418 = vadd.f32 0.0, %v10417
  %v10419 = vpop.f32.mrb[0].mxu0
  %10420 = vmatprep.mubr.f32.mxu0 0.0
  %10421 = vmatmul.mubr.f32.gmra.mrb[0].mxu0 %v10091
  %v10422 = vpop.f32.mrb[0].mxu0
  %v10423 = vadd.f32 0.0, %v10422
  %v10424 = vpop.f32.mrb[0].mxu0
  %10425 = vmatprep.mubr.f32.mxu0 0.0
  %10426 = vmatmul.mubr.f32.gmra.mrb[0].mxu0 %v10092
  %v10427 = vpop.f32.mrb[0].mxu0
  %v10428 = vadd.f32 0.0, %v10427
  %v10429 = vpop.f32.mrb[0].mxu0
  %10430 = vmatprep.mubr.f32.mxu0 0.0
  %10431 = vmatmul.mubr.f32.gmra.mrb[0].mxu0 %v10093
  %v10432 = vpop.f32.mrb[0].mxu0
  %v10433 = vadd.f32 0.0, %v10432
  %v10434 = vpop.f32.mrb[0].mxu0
  %10435 = vmatprep.mubr.f32.mxu0 0.0
  %10436 = vmatmul.mubr.f32.gmra.mrb[0].mxu0 %v10094
  %v10437 = vpop.f32.mrb[0].mxu0
  %v10438 = vadd.f32 0.0, %v10437
  %v10439 = vpop.f32.mrb[0].mxu0
  %10440 = vmatprep.mubr.f32.mxu0 0.0
  %10441 = vmatmul.mubr.f32.gmra.mrb[0].mxu0 %v10095
  %v10442 = vpop.f32.mrb[0].mxu0
  %v10443 = vadd.f32 0.0, %v10442
  %v10444 = vpop.f32.mrb[0].mxu0
  %10445 = vmatprep.mubr.f32.mxu0 0.0
  %10446 = vmatmul.mubr.f32.gmra.mrb[0].mxu0 %v10096
  %v10447 = vpop.f32.mrb[0].mxu0
  %v10448 = vadd.f32 0.0, %v10447
  %v10449 = vpop.f32.mrb[0].mxu0
  %10450 = vmatprep.mubr.f32.mxu0 0.0
  %10451 = vmatmul.mubr.f32.gmra.mrb[0].mxu0 %v10097
  %v10452 = vpop.f32.mrb[0].mxu0
  %v10453 = vadd.f32 0.0, %v10452
  %v10454 = vpop.f32.mrb[0].mxu0
  %10455 = vmatprep.mubr.f32.mxu0 0.0
  %10456 = vmatmul.mubr.f32.gmra.mrb[0].mxu0 %v10098
  %v10457 = vpop.f32.mrb[0].mxu0
  %v10458 = vadd.f32 0.0, %v10457
  %v10459 = vpop.f32.mrb[0].mxu0
  %10460 = vmatprep.mubr.f32.mxu0 0.0
  %10461 = vmatmul.mubr.f32.gmra.mrb[0].mxu0 %v10099
  %v10462 = vpop.f32.mrb[0].mxu0
  %v10463 = vadd.f32 0.0, %v10462
  %v10464 = vpop.f32.mrb[0].mxu0
  %10465 = vmatprep.mubr.f32.mxu0 0.0
  %10466 = vmatmul.mubr.f32.gmra.mrb[0].mxu0 %v10100
  %v10467 = vpop.f32.mrb[0].mxu0
  %v10468 = vadd.f32 0.0, %v10467
  %v10469 = vpop.f32.mrb[0].mxu0
  %10470 = vmatprep.mubr.f32.mxu0 0.0
  %10471 = vmatmul.mubr.f32.gmra.mrb[0].mxu0 %v10101
  %v10472 = vpop.f32.mrb[0].mxu0
  %v10473 = vadd.f32 0.0, %v10472
  %v10474 = vpop.f32.mrb[0].mxu0
  %10475 = vmatprep.mubr.f32.mxu0 0.0
  %10476 = vmatmul.mubr.f32.gmra.mrb[0].mxu0 %v10102
  %v10477 = vpop.f32.mrb[0].mxu0
  %v10478 = vadd.f32 0.0, %v10477
  %v10479 = vpop.f32.mrb[0].mxu0
  %10480 = vmatprep.mubr.f32.mxu0 0.0
  %10481 = vmatmul.mubr.f32.gmra.mrb[0].mxu0 %v10103
  %v10482 = vpop.f32.mrb[0].mxu0
  %v10483 = vadd.f32 0.0, %v10482
  %v10484 = vpop.f32.mrb[0].mxu0
  %10485 = vmatprep.mubr.f32.mxu0 0.0
  %10486 = vmatmul.mubr.f32.gmra.mrb[0].mxu0 %v10104
  %v10487 = vpop.f32.mrb[0].mxu0
  %v10488 = vadd.f32 0.0, %v10487
  %v10489 = vpop.f32.mrb[0].mxu0
  %10490 = vmatprep.mubr.f32.mxu0 0.0
  %10491 = vmatmul.mubr.f32.gmra.mrb[0].mxu0 %v10105
  %v10492 = vpop.f32.mrb[0].mxu0
  %v10493 = vadd.f32 0.0, %v10492
  %v10494 = vpop.f32.mrb[0].mxu0
  %10495 = vmatprep.mubr.f32.mxu0 0.0
  %10496 = vmatmul.mubr.f32.gmra.mrb[0].mxu0 %v10106
  %v10497 = vpop.f32.mrb[0].mxu0
  %v10498 = vadd.f32 0.0, %v10497
  %v10499 = vpop.f32.mrb[0].mxu0
  %10500 = vmatprep.mubr.f32.mxu0 0.0
  %10501 = vmatmul.mubr.f32.gmra.mrb[0].mxu0 %v10107
  %v10502 = vpop.f32.mrb[0].mxu0
  %v10503 = vadd.f32 0.0, %v10502
  %v10504 = vpop.f32.mrb[0].mxu0
  %10505 = vmatprep.mubr.f32.mxu0 0.0
  %10506 = vmatmul.mubr.f32.gmra.mrb[0].mxu0 %v10108
  %v10507 = vpop.f32.mrb[0].mxu0
  %v10508 = vadd.f32 0.0, %v10507
  %v10509 = vpop.f32.mrb[0].mxu0
  %10510 = vdwg.mxu0
  %v10511 = vadd.f32 %v9980, %v10193
  %v10512 = vadd.f32 %v9981, %v10198
  %v10513 = vadd.f32 %v9982, %v10203
  %v10514 = vadd.f32 %v9983, %v10208
  %v10515 = vadd.f32 %v9984, %v10213
  %v10516 = vadd.f32 %v9985, %v10218
  %v10517 = vadd.f32 %v9986, %v10223
  %v10518 = vadd.f32 %v9987, %v10228
  %v10519 = vadd.f32 %v9988, %v10233
  %v10520 = vadd.f32 %v9989, %v10238
  %v10521 = vadd.f32 %v9990, %v10243
  %v10522 = vadd.f32 %v9991, %v10248
  %v10523 = vadd.f32 %v9992, %v10253
  %v10524 = vadd.f32 %v9993, %v10258
  %v10525 = vadd.f32 %v9994, %v10263
  %v10526 = vadd.f32 %v9995, %v10268
  %v10527 = vadd.f32 %v9996, %v10273
  %v10528 = vadd.f32 %v9997, %v10278
  %v10529 = vadd.f32 %v9998, %v10283
  %v10530 = vadd.f32 %v9999, %v10288
  %v10531 = vadd.f32 %v10000, %v10293
  %v10532 = vadd.f32 %v10001, %v10298
  %v10533 = vadd.f32 %v10002, %v10303
  %v10534 = vadd.f32 %v10003, %v10308
  %v10535 = vadd.f32 %v10004, %v10313
  %v10536 = vadd.f32 %v10005, %v10318
  %v10537 = vadd.f32 %v10006, %v10323
  %v10538 = vadd.f32 %v10007, %v10328
  %v10539 = vadd.f32 %v10008, %v10333
  %v10540 = vadd.f32 %v10009, %v10338
  %v10541 = vadd.f32 %v10010, %v10343
  %v10542 = vadd.f32 %v10011, %v10348
  %v10543 = vadd.f32 %v10012, %v10353
  %v10544 = vadd.f32 %v10013, %v10358
  %v10545 = vadd.f32 %v10014, %v10363
  %v10546 = vadd.f32 %v10015, %v10368
  %v10547 = vadd.f32 %v10016, %v10373
  %v10548 = vadd.f32 %v10017, %v10378
  %v10549 = vadd.f32 %v10018, %v10383
  %v10550 = vadd.f32 %v10019, %v10388
  %v10551 = vadd.f32 %v10020, %v10393
  %v10552 = vadd.f32 %v10021, %v10398
  %v10553 = vadd.f32 %v10022, %v10403
  %v10554 = vadd.f32 %v10023, %v10408
  %v10555 = vadd.f32 %v10024, %v10413
  %v10556 = vadd.f32 %v10025, %v10418
  %v10557 = vadd.f32 %v10026, %v10423
  %v10558 = vadd.f32 %v10027, %v10428
  %v10559 = vadd.f32 %v10028, %v10433
  %v10560 = vadd.f32 %v10029, %v10438
  %v10561 = vadd.f32 %v10030, %v10443
  %v10562 = vadd.f32 %v10031, %v10448
  %v10563 = vadd.f32 %v10032, %v10453
  %v10564 = vadd.f32 %v10033, %v10458
  %v10565 = vadd.f32 %v10034, %v10463
  %v10566 = vadd.f32 %v10035, %v10468
  %v10567 = vadd.f32 %v10036, %v10473
  %v10568 = vadd.f32 %v10037, %v10478
  %v10569 = vadd.f32 %v10038, %v10483
  %v10570 = vadd.f32 %v10039, %v10488
  %v10571 = vadd.f32 %v10040, %v10493
  %v10572 = vadd.f32 %v10041, %v10498
  %v10573 = vadd.f32 %v10042, %v10503
  %v10574 = vadd.f32 %v10043, %v10508
  %v10575 = vld [vmem:[%s10044 + $0x1] sm:$0xff]
  %v10576 = vld [vmem:[%s10044 + $0x9] sm:$0xff]
  %v10577 = vld [vmem:[%s10044 + $0x19] sm:$0xff]
  %v10578 = vld [vmem:[%s10044 + $0x21] sm:$0xff]
  %v10579 = vld [vmem:[%s10044 + $0x31] sm:$0xff]
  %v10580 = vld [vmem:[%s10044 + $0x39] sm:$0xff]
  %v10581 = vld [vmem:[%s10044 + $0x49] sm:$0xff]
  %v10582 = vld [vmem:[%s10044 + $0x51] sm:$0xff]
  %v10583 = vld [vmem:[%s10044 + $0x61] sm:$0xff]
  %v10584 = vld [vmem:[%s10044 + $0x69] sm:$0xff]
  %v10585 = vld [vmem:[%s10044 + $0x79] sm:$0xff]
  %v10586 = vld [vmem:[%s10044 + $0x81] sm:$0xff]
  %v10587 = vld [vmem:[%s10044 + $0x91] sm:$0xff]
  %v10588 = vld [vmem:[%s10044 + $0x99] sm:$0xff]
  %v10589 = vld [vmem:[%s10044 + $0xa9] sm:$0xff]
  %v10590 = vld [vmem:[%s10044 + $0xb1] sm:$0xff]
  %v10591 = vld [vmem:[%s10044 + $0xc1] sm:$0xff]
  %v10592 = vld [vmem:[%s10044 + $0xc9] sm:$0xff]
  %v10593 = vld [vmem:[%s10044 + $0xd9] sm:$0xff]
  %v10594 = vld [vmem:[%s10044 + $0xe1] sm:$0xff]
  %v10595 = vld [vmem:[%s10044 + $0xf1] sm:$0xff]
  %v10596 = vld [vmem:[%s10044 + $0xf9] sm:$0xff]
  %v10597 = vld [vmem:[%s10044 + $0x109] sm:$0xff]
  %v10598 = vld [vmem:[%s10044 + $0x111] sm:$0xff]
  %v10599 = vld [vmem:[%s10044 + $0x121] sm:$0xff]
  %v10600 = vld [vmem:[%s10044 + $0x129] sm:$0xff]
  %v10601 = vld [vmem:[%s10044 + $0x139] sm:$0xff]
  %v10602 = vld [vmem:[%s10044 + $0x141] sm:$0xff]
  %v10603 = vld [vmem:[%s10044 + $0x151] sm:$0xff]
  %v10604 = vld [vmem:[%s10044 + $0x159] sm:$0xff]
  %v10605 = vld [vmem:[%s10044 + $0x169] sm:$0xff]
  %v10606 = vld [vmem:[%s10044 + $0x171] sm:$0xff]
  %v10607 = vld [vmem:[%s10044 + $0x1b1] sm:$0xff]
  %v10608 = vld [vmem:[%s10044 + $0x1b9] sm:$0xff]
  %v10609 = vld [vmem:[%s10044 + $0x1c9] sm:$0xff]
  %v10610 = vld [vmem:[%s10044 + $0x1d1] sm:$0xff]
  %v10611 = vld [vmem:[%s10044 + $0x1e1] sm:$0xff]
  %v10612 = vld [vmem:[%s10044 + $0x1e9] sm:$0xff]
  %v10613 = vld [vmem:[%s10044 + $0x1f9] sm:$0xff]
  %v10614 = vld [vmem:[%s10044 + $0x201] sm:$0xff]
  %v10615 = vld [vmem:[%s10044 + $0x211] sm:$0xff]
  %v10616 = vld [vmem:[%s10044 + $0x219] sm:$0xff]
  %v10617 = vld [vmem:[%s10044 + $0x229] sm:$0xff]
  %v10618 = vld [vmem:[%s10044 + $0x231] sm:$0xff]
  %v10619 = vld [vmem:[%s10044 + $0x241] sm:$0xff]
  %v10620 = vld [vmem:[%s10044 + $0x249] sm:$0xff]
  %v10621 = vld [vmem:[%s10044 + $0x259] sm:$0xff]
  %v10622 = vld [vmem:[%s10044 + $0x261] sm:$0xff]
  %v10623 = vld [vmem:[%s10044 + $0x271] sm:$0xff]
  %v10624 = vld [vmem:[%s10044 + $0x279] sm:$0xff]
  %v10625 = vld [vmem:[%s10044 + $0x289] sm:$0xff]
  %v10626 = vld [vmem:[%s10044 + $0x291] sm:$0xff]
  %v10627 = vld [vmem:[%s10044 + $0x2a1] sm:$0xff]
  %v10628 = vld [vmem:[%s10044 + $0x2a9] sm:$0xff]
  %v10629 = vld [vmem:[%s10044 + $0x2b9] sm:$0xff]
  %v10630 = vld [vmem:[%s10044 + $0x2c1] sm:$0xff]
  %v10631 = vld [vmem:[%s10044 + $0x2d1] sm:$0xff]
  %v10632 = vld [vmem:[%s10044 + $0x2d9] sm:$0xff]
  %v10633 = vld [vmem:[%s10044 + $0x2e9] sm:$0xff]
  %v10634 = vld [vmem:[%s10044 + $0x2f1] sm:$0xff]
  %v10635 = vld [vmem:[%s10044 + $0x301] sm:$0xff]
  %v10636 = vld [vmem:[%s10044 + $0x309] sm:$0xff]
  %v10637 = vld [vmem:[%s10044 + $0x319] sm:$0xff]
  %v10638 = vld [vmem:[%s10044 + $0x321] sm:$0xff]
  %s10639 = scalar_lea.vmem %s4, 896
  %v10640 = vld [vmem:[%s10639] sm:$0xff]
  %v10641 = vld [vmem:[%s10639 + $0x8] sm:$0xff]
  %v10642 = vld [vmem:[%s10639 + $0x10] sm:$0xff]
  %v10643 = vld [vmem:[%s10639 + $0x18] sm:$0xff]
  %v10644 = vld [vmem:[%s10639 + $0x20] sm:$0xff]
  %v10645 = vld [vmem:[%s10639 + $0x28] sm:$0xff]
  %v10646 = vld [vmem:[%s10639 + $0x30] sm:$0xff]
  %v10647 = vld [vmem:[%s10639 + $0x38] sm:$0xff]
  %v10648 = vld [vmem:[%s10639 + $0x40] sm:$0xff]
  %v10649 = vld [vmem:[%s10639 + $0x48] sm:$0xff]
  %v10650 = vld [vmem:[%s10639 + $0x50] sm:$0xff]
  %v10651 = vld [vmem:[%s10639 + $0x58] sm:$0xff]
  %v10652 = vld [vmem:[%s10639 + $0x60] sm:$0xff]
  %v10653 = vld [vmem:[%s10639 + $0x68] sm:$0xff]
  %v10654 = vld [vmem:[%s10639 + $0x70] sm:$0xff]
  %v10655 = vld [vmem:[%s10639 + $0x78] sm:$0xff]
  %10656 = vmatprep.subr.mxu0 0.0
  %10657 = vmatpush1.msra.mxu0 %v10640
  %10658 = vmatprep.subr.mxu0 0.0
  %10659 = vmatpush1.msra.mxu0 %v10641
  %10660 = vmatprep.subr.mxu0 0.0
  %10661 = vmatpush1.msra.mxu0 %v10642
  %10662 = vmatprep.subr.mxu0 0.0
  %10663 = vmatpush1.msra.mxu0 %v10643
  %10664 = vmatprep.subr.mxu0 0.0
  %10665 = vmatpush1.msra.mxu0 %v10644
  %10666 = vmatprep.subr.mxu0 0.0
  %10667 = vmatpush1.msra.mxu0 %v10645
  %10668 = vmatprep.subr.mxu0 0.0
  %10669 = vmatpush1.msra.mxu0 %v10646
  %10670 = vmatprep.subr.mxu0 0.0
  %10671 = vmatpush1.msra.mxu0 %v10647
  %10672 = vmatprep.subr.mxu0 0.0
  %10673 = vmatpush1.msra.mxu0 %v10648
  %10674 = vmatprep.subr.mxu0 0.0
  %10675 = vmatpush1.msra.mxu0 %v10649
  %10676 = vmatprep.subr.mxu0 0.0
  %10677 = vmatpush1.msra.mxu0 %v10650
  %10678 = vmatprep.subr.mxu0 0.0
  %10679 = vmatpush1.msra.mxu0 %v10651
  %10680 = vmatprep.subr.mxu0 0.0
  %10681 = vmatpush1.msra.mxu0 %v10652
  %10682 = vmatprep.subr.mxu0 0.0
  %10683 = vmatpush1.msra.mxu0 %v10653
  %10684 = vmatprep.subr.mxu0 0.0
  %10685 = vmatpush1.msra.mxu0 %v10654
  %10686 = vmatprep.subr.mxu0 0.0
  %10687 = vmatpush1.msra.mxu0 %v10655
  %10688 = vmatprep.subr.mxu0 0.0
  %10689 = vmatpush1.msra.mxu0 0.0
  %10690 = vmatprep.subr.mxu0 0.0
  %10691 = vmatpush1.msra.mxu0 0.0
  %10692 = vmatprep.subr.mxu0 0.0
  %10693 = vmatpush1.msra.mxu0 0.0
  %10694 = vmatprep.subr.mxu0 0.0
  %10695 = vmatpush1.msra.mxu0 0.0
  %10696 = vmatprep.subr.mxu0 0.0
  %10697 = vmatpush1.msra.mxu0 0.0
  %10698 = vmatprep.subr.mxu0 0.0
  %10699 = vmatpush1.msra.mxu0 0.0
  %10700 = vmatprep.subr.mxu0 0.0
  %10701 = vmatpush1.msra.mxu0 0.0
  %10702 = vmatprep.subr.mxu0 0.0
  %10703 = vmatpush1.msra.mxu0 0.0
  %10704 = vmatprep.subr.mxu0 0.0
  %10705 = vmatpush1.msra.mxu0 0.0
  %10706 = vmatprep.subr.mxu0 0.0
  %10707 = vmatpush1.msra.mxu0 0.0
  %10708 = vmatprep.subr.mxu0 0.0
  %10709 = vmatpush1.msra.mxu0 0.0
  %10710 = vmatprep.subr.mxu0 0.0
  %10711 = vmatpush1.msra.mxu0 0.0
  %10712 = vmatprep.subr.mxu0 0.0
  %10713 = vmatpush1.msra.mxu0 0.0
  %10714 = vmatprep.subr.mxu0 0.0
  %10715 = vmatpush1.msra.mxu0 0.0
  %10716 = vmatprep.subr.mxu0 0.0
  %10717 = vmatpush1.msra.mxu0 0.0
  %10718 = vmatprep.subr.mxu0 0.0
  %10719 = vmatpush1.msra.mxu0 0.0
  %10720 = vmatprep.mubr.f32.mxu0 0.0
  %10721 = vmatmul.mubr.f32.gmra.mrb[0].mxu0 %v10575
  %v10722 = vpop.f32.mrb[0].mxu0
  %v10723 = vadd.f32 0.0, %v10722
  %v10724 = vpop.f32.mrb[0].mxu0
  %10725 = vmatprep.mubr.f32.mxu0 0.0
  %10726 = vmatmul.mubr.f32.gmra.mrb[0].mxu0 %v10576
  %v10727 = vpop.f32.mrb[0].mxu0
  %v10728 = vadd.f32 0.0, %v10727
  %v10729 = vpop.f32.mrb[0].mxu0
  %10730 = vmatprep.mubr.f32.mxu0 0.0
  %10731 = vmatmul.mubr.f32.gmra.mrb[0].mxu0 %v10577
  %v10732 = vpop.f32.mrb[0].mxu0
  %v10733 = vadd.f32 0.0, %v10732
  %v10734 = vpop.f32.mrb[0].mxu0
  %10735 = vmatprep.mubr.f32.mxu0 0.0
  %10736 = vmatmul.mubr.f32.gmra.mrb[0].mxu0 %v10578
  %v10737 = vpop.f32.mrb[0].mxu0
  %v10738 = vadd.f32 0.0, %v10737
  %v10739 = vpop.f32.mrb[0].mxu0
  %10740 = vmatprep.mubr.f32.mxu0 0.0
  %10741 = vmatmul.mubr.f32.gmra.mrb[0].mxu0 %v10579
  %v10742 = vpop.f32.mrb[0].mxu0
  %v10743 = vadd.f32 0.0, %v10742
  %v10744 = vpop.f32.mrb[0].mxu0
  %10745 = vmatprep.mubr.f32.mxu0 0.0
  %10746 = vmatmul.mubr.f32.gmra.mrb[0].mxu0 %v10580
  %v10747 = vpop.f32.mrb[0].mxu0
  %v10748 = vadd.f32 0.0, %v10747
  %v10749 = vpop.f32.mrb[0].mxu0
  %10750 = vmatprep.mubr.f32.mxu0 0.0
  %10751 = vmatmul.mubr.f32.gmra.mrb[0].mxu0 %v10581
  %v10752 = vpop.f32.mrb[0].mxu0
  %v10753 = vadd.f32 0.0, %v10752
  %v10754 = vpop.f32.mrb[0].mxu0
  %10755 = vmatprep.mubr.f32.mxu0 0.0
  %10756 = vmatmul.mubr.f32.gmra.mrb[0].mxu0 %v10582
  %v10757 = vpop.f32.mrb[0].mxu0
  %v10758 = vadd.f32 0.0, %v10757
  %v10759 = vpop.f32.mrb[0].mxu0
  %10760 = vmatprep.mubr.f32.mxu0 0.0
  %10761 = vmatmul.mubr.f32.gmra.mrb[0].mxu0 %v10583
  %v10762 = vpop.f32.mrb[0].mxu0
  %v10763 = vadd.f32 0.0, %v10762
  %v10764 = vpop.f32.mrb[0].mxu0
  %10765 = vmatprep.mubr.f32.mxu0 0.0
  %10766 = vmatmul.mubr.f32.gmra.mrb[0].mxu0 %v10584
  %v10767 = vpop.f32.mrb[0].mxu0
  %v10768 = vadd.f32 0.0, %v10767
  %v10769 = vpop.f32.mrb[0].mxu0
  %10770 = vmatprep.mubr.f32.mxu0 0.0
  %10771 = vmatmul.mubr.f32.gmra.mrb[0].mxu0 %v10585
  %v10772 = vpop.f32.mrb[0].mxu0
  %v10773 = vadd.f32 0.0, %v10772
  %v10774 = vpop.f32.mrb[0].mxu0
  %10775 = vmatprep.mubr.f32.mxu0 0.0
  %10776 = vmatmul.mubr.f32.gmra.mrb[0].mxu0 %v10586
  %v10777 = vpop.f32.mrb[0].mxu0
  %v10778 = vadd.f32 0.0, %v10777
  %v10779 = vpop.f32.mrb[0].mxu0
  %10780 = vmatprep.mubr.f32.mxu0 0.0
  %10781 = vmatmul.mubr.f32.gmra.mrb[0].mxu0 %v10587
  %v10782 = vpop.f32.mrb[0].mxu0
  %v10783 = vadd.f32 0.0, %v10782
  %v10784 = vpop.f32.mrb[0].mxu0
  %10785 = vmatprep.mubr.f32.mxu0 0.0
  %10786 = vmatmul.mubr.f32.gmra.mrb[0].mxu0 %v10588
  %v10787 = vpop.f32.mrb[0].mxu0
  %v10788 = vadd.f32 0.0, %v10787
  %v10789 = vpop.f32.mrb[0].mxu0
  %10790 = vmatprep.mubr.f32.mxu0 0.0
  %10791 = vmatmul.mubr.f32.gmra.mrb[0].mxu0 %v10589
  %v10792 = vpop.f32.mrb[0].mxu0
  %v10793 = vadd.f32 0.0, %v10792
  %v10794 = vpop.f32.mrb[0].mxu0
  %10795 = vmatprep.mubr.f32.mxu0 0.0
  %10796 = vmatmul.mubr.f32.gmra.mrb[0].mxu0 %v10590
  %v10797 = vpop.f32.mrb[0].mxu0
  %v10798 = vadd.f32 0.0, %v10797
  %v10799 = vpop.f32.mrb[0].mxu0
  %10800 = vmatprep.mubr.f32.mxu0 0.0
  %10801 = vmatmul.mubr.f32.gmra.mrb[0].mxu0 %v10591
  %v10802 = vpop.f32.mrb[0].mxu0
  %v10803 = vadd.f32 0.0, %v10802
  %v10804 = vpop.f32.mrb[0].mxu0
  %10805 = vmatprep.mubr.f32.mxu0 0.0
  %10806 = vmatmul.mubr.f32.gmra.mrb[0].mxu0 %v10592
  %v10807 = vpop.f32.mrb[0].mxu0
  %v10808 = vadd.f32 0.0, %v10807
  %v10809 = vpop.f32.mrb[0].mxu0
  %10810 = vmatprep.mubr.f32.mxu0 0.0
  %10811 = vmatmul.mubr.f32.gmra.mrb[0].mxu0 %v10593
  %v10812 = vpop.f32.mrb[0].mxu0
  %v10813 = vadd.f32 0.0, %v10812
  %v10814 = vpop.f32.mrb[0].mxu0
  %10815 = vmatprep.mubr.f32.mxu0 0.0
  %10816 = vmatmul.mubr.f32.gmra.mrb[0].mxu0 %v10594
  %v10817 = vpop.f32.mrb[0].mxu0
  %v10818 = vadd.f32 0.0, %v10817
  %v10819 = vpop.f32.mrb[0].mxu0
  %10820 = vmatprep.mubr.f32.mxu0 0.0
  %10821 = vmatmul.mubr.f32.gmra.mrb[0].mxu0 %v10595
  %v10822 = vpop.f32.mrb[0].mxu0
  %v10823 = vadd.f32 0.0, %v10822
  %v10824 = vpop.f32.mrb[0].mxu0
  %10825 = vmatprep.mubr.f32.mxu0 0.0
  %10826 = vmatmul.mubr.f32.gmra.mrb[0].mxu0 %v10596
  %v10827 = vpop.f32.mrb[0].mxu0
  %v10828 = vadd.f32 0.0, %v10827
  %v10829 = vpop.f32.mrb[0].mxu0
  %10830 = vmatprep.mubr.f32.mxu0 0.0
  %10831 = vmatmul.mubr.f32.gmra.mrb[0].mxu0 %v10597
  %v10832 = vpop.f32.mrb[0].mxu0
  %v10833 = vadd.f32 0.0, %v10832
  %v10834 = vpop.f32.mrb[0].mxu0
  %10835 = vmatprep.mubr.f32.mxu0 0.0
  %10836 = vmatmul.mubr.f32.gmra.mrb[0].mxu0 %v10598
  %v10837 = vpop.f32.mrb[0].mxu0
  %v10838 = vadd.f32 0.0, %v10837
  %v10839 = vpop.f32.mrb[0].mxu0
  %10840 = vmatprep.mubr.f32.mxu0 0.0
  %10841 = vmatmul.mubr.f32.gmra.mrb[0].mxu0 %v10599
  %v10842 = vpop.f32.mrb[0].mxu0
  %v10843 = vadd.f32 0.0, %v10842
  %v10844 = vpop.f32.mrb[0].mxu0
  %10845 = vmatprep.mubr.f32.mxu0 0.0
  %10846 = vmatmul.mubr.f32.gmra.mrb[0].mxu0 %v10600
  %v10847 = vpop.f32.mrb[0].mxu0
  %v10848 = vadd.f32 0.0, %v10847
  %v10849 = vpop.f32.mrb[0].mxu0
  %10850 = vmatprep.mubr.f32.mxu0 0.0
  %10851 = vmatmul.mubr.f32.gmra.mrb[0].mxu0 %v10601
  %v10852 = vpop.f32.mrb[0].mxu0
  %v10853 = vadd.f32 0.0, %v10852
  %v10854 = vpop.f32.mrb[0].mxu0
  %10855 = vmatprep.mubr.f32.mxu0 0.0
  %10856 = vmatmul.mubr.f32.gmra.mrb[0].mxu0 %v10602
  %v10857 = vpop.f32.mrb[0].mxu0
  %v10858 = vadd.f32 0.0, %v10857
  %v10859 = vpop.f32.mrb[0].mxu0
  %10860 = vmatprep.mubr.f32.mxu0 0.0
  %10861 = vmatmul.mubr.f32.gmra.mrb[0].mxu0 %v10603
  %v10862 = vpop.f32.mrb[0].mxu0
  %v10863 = vadd.f32 0.0, %v10862
  %v10864 = vpop.f32.mrb[0].mxu0
  %10865 = vmatprep.mubr.f32.mxu0 0.0
  %10866 = vmatmul.mubr.f32.gmra.mrb[0].mxu0 %v10604
  %v10867 = vpop.f32.mrb[0].mxu0
  %v10868 = vadd.f32 0.0, %v10867
  %v10869 = vpop.f32.mrb[0].mxu0
  %10870 = vmatprep.mubr.f32.mxu0 0.0
  %10871 = vmatmul.mubr.f32.gmra.mrb[0].mxu0 %v10605
  %v10872 = vpop.f32.mrb[0].mxu0
  %v10873 = vadd.f32 0.0, %v10872
  %v10874 = vpop.f32.mrb[0].mxu0
  %10875 = vmatprep.mubr.f32.mxu0 0.0
  %10876 = vmatmul.mubr.f32.gmra.mrb[0].mxu0 %v10606
  %v10877 = vpop.f32.mrb[0].mxu0
  %v10878 = vadd.f32 0.0, %v10877
  %v10879 = vpop.f32.mrb[0].mxu0
  %10880 = vmatprep.mubr.f32.mxu0 0.0
  %10881 = vmatmul.mubr.f32.gmra.mrb[0].mxu0 %v10607
  %v10882 = vpop.f32.mrb[0].mxu0
  %v10883 = vadd.f32 0.0, %v10882
  %v10884 = vpop.f32.mrb[0].mxu0
  %10885 = vmatprep.mubr.f32.mxu0 0.0
  %10886 = vmatmul.mubr.f32.gmra.mrb[0].mxu0 %v10608
  %v10887 = vpop.f32.mrb[0].mxu0
  %v10888 = vadd.f32 0.0, %v10887
  %v10889 = vpop.f32.mrb[0].mxu0
  %10890 = vmatprep.mubr.f32.mxu0 0.0
  %10891 = vmatmul.mubr.f32.gmra.mrb[0].mxu0 %v10609
  %v10892 = vpop.f32.mrb[0].mxu0
  %v10893 = vadd.f32 0.0, %v10892
  %v10894 = vpop.f32.mrb[0].mxu0
  %10895 = vmatprep.mubr.f32.mxu0 0.0
  %10896 = vmatmul.mubr.f32.gmra.mrb[0].mxu0 %v10610
  %v10897 = vpop.f32.mrb[0].mxu0
  %v10898 = vadd.f32 0.0, %v10897
  %v10899 = vpop.f32.mrb[0].mxu0
  %10900 = vmatprep.mubr.f32.mxu0 0.0
  %10901 = vmatmul.mubr.f32.gmra.mrb[0].mxu0 %v10611
  %v10902 = vpop.f32.mrb[0].mxu0
  %v10903 = vadd.f32 0.0, %v10902
  %v10904 = vpop.f32.mrb[0].mxu0
  %10905 = vmatprep.mubr.f32.mxu0 0.0
  %10906 = vmatmul.mubr.f32.gmra.mrb[0].mxu0 %v10612
  %v10907 = vpop.f32.mrb[0].mxu0
  %v10908 = vadd.f32 0.0, %v10907
  %v10909 = vpop.f32.mrb[0].mxu0
  %10910 = vmatprep.mubr.f32.mxu0 0.0
  %10911 = vmatmul.mubr.f32.gmra.mrb[0].mxu0 %v10613
  %v10912 = vpop.f32.mrb[0].mxu0
  %v10913 = vadd.f32 0.0, %v10912
  %v10914 = vpop.f32.mrb[0].mxu0
  %10915 = vmatprep.mubr.f32.mxu0 0.0
  %10916 = vmatmul.mubr.f32.gmra.mrb[0].mxu0 %v10614
  %v10917 = vpop.f32.mrb[0].mxu0
  %v10918 = vadd.f32 0.0, %v10917
  %v10919 = vpop.f32.mrb[0].mxu0
  %10920 = vmatprep.mubr.f32.mxu0 0.0
  %10921 = vmatmul.mubr.f32.gmra.mrb[0].mxu0 %v10615
  %v10922 = vpop.f32.mrb[0].mxu0
  %v10923 = vadd.f32 0.0, %v10922
  %v10924 = vpop.f32.mrb[0].mxu0
  %10925 = vmatprep.mubr.f32.mxu0 0.0
  %10926 = vmatmul.mubr.f32.gmra.mrb[0].mxu0 %v10616
  %v10927 = vpop.f32.mrb[0].mxu0
  %v10928 = vadd.f32 0.0, %v10927
  %v10929 = vpop.f32.mrb[0].mxu0
  %10930 = vmatprep.mubr.f32.mxu0 0.0
  %10931 = vmatmul.mubr.f32.gmra.mrb[0].mxu0 %v10617
  %v10932 = vpop.f32.mrb[0].mxu0
  %v10933 = vadd.f32 0.0, %v10932
  %v10934 = vpop.f32.mrb[0].mxu0
  %10935 = vmatprep.mubr.f32.mxu0 0.0
  %10936 = vmatmul.mubr.f32.gmra.mrb[0].mxu0 %v10618
  %v10937 = vpop.f32.mrb[0].mxu0
  %v10938 = vadd.f32 0.0, %v10937
  %v10939 = vpop.f32.mrb[0].mxu0
  %10940 = vmatprep.mubr.f32.mxu0 0.0
  %10941 = vmatmul.mubr.f32.gmra.mrb[0].mxu0 %v10619
  %v10942 = vpop.f32.mrb[0].mxu0
  %v10943 = vadd.f32 0.0, %v10942
  %v10944 = vpop.f32.mrb[0].mxu0
  %10945 = vmatprep.mubr.f32.mxu0 0.0
  %10946 = vmatmul.mubr.f32.gmra.mrb[0].mxu0 %v10620
  %v10947 = vpop.f32.mrb[0].mxu0
  %v10948 = vadd.f32 0.0, %v10947
  %v10949 = vpop.f32.mrb[0].mxu0
  %10950 = vmatprep.mubr.f32.mxu0 0.0
  %10951 = vmatmul.mubr.f32.gmra.mrb[0].mxu0 %v10621
  %v10952 = vpop.f32.mrb[0].mxu0
  %v10953 = vadd.f32 0.0, %v10952
  %v10954 = vpop.f32.mrb[0].mxu0
  %10955 = vmatprep.mubr.f32.mxu0 0.0
  %10956 = vmatmul.mubr.f32.gmra.mrb[0].mxu0 %v10622
  %v10957 = vpop.f32.mrb[0].mxu0
  %v10958 = vadd.f32 0.0, %v10957
  %v10959 = vpop.f32.mrb[0].mxu0
  %10960 = vmatprep.mubr.f32.mxu0 0.0
  %10961 = vmatmul.mubr.f32.gmra.mrb[0].mxu0 %v10623
  %v10962 = vpop.f32.mrb[0].mxu0
  %v10963 = vadd.f32 0.0, %v10962
  %v10964 = vpop.f32.mrb[0].mxu0
  %10965 = vmatprep.mubr.f32.mxu0 0.0
  %10966 = vmatmul.mubr.f32.gmra.mrb[0].mxu0 %v10624
  %v10967 = vpop.f32.mrb[0].mxu0
  %v10968 = vadd.f32 0.0, %v10967
  %v10969 = vpop.f32.mrb[0].mxu0
  %10970 = vmatprep.mubr.f32.mxu0 0.0
  %10971 = vmatmul.mubr.f32.gmra.mrb[0].mxu0 %v10625
  %v10972 = vpop.f32.mrb[0].mxu0
  %v10973 = vadd.f32 0.0, %v10972
  %v10974 = vpop.f32.mrb[0].mxu0
  %10975 = vmatprep.mubr.f32.mxu0 0.0
  %10976 = vmatmul.mubr.f32.gmra.mrb[0].mxu0 %v10626
  %v10977 = vpop.f32.mrb[0].mxu0
  %v10978 = vadd.f32 0.0, %v10977
  %v10979 = vpop.f32.mrb[0].mxu0
  %10980 = vmatprep.mubr.f32.mxu0 0.0
  %10981 = vmatmul.mubr.f32.gmra.mrb[0].mxu0 %v10627
  %v10982 = vpop.f32.mrb[0].mxu0
  %v10983 = vadd.f32 0.0, %v10982
  %v10984 = vpop.f32.mrb[0].mxu0
  %10985 = vmatprep.mubr.f32.mxu0 0.0
  %10986 = vmatmul.mubr.f32.gmra.mrb[0].mxu0 %v10628
  %v10987 = vpop.f32.mrb[0].mxu0
  %v10988 = vadd.f32 0.0, %v10987
  %v10989 = vpop.f32.mrb[0].mxu0
  %10990 = vmatprep.mubr.f32.mxu0 0.0
  %10991 = vmatmul.mubr.f32.gmra.mrb[0].mxu0 %v10629
  %v10992 = vpop.f32.mrb[0].mxu0
  %v10993 = vadd.f32 0.0, %v10992
  %v10994 = vpop.f32.mrb[0].mxu0
  %10995 = vmatprep.mubr.f32.mxu0 0.0
  %10996 = vmatmul.mubr.f32.gmra.mrb[0].mxu0 %v10630
  %v10997 = vpop.f32.mrb[0].mxu0
  %v10998 = vadd.f32 0.0, %v10997
  %v10999 = vpop.f32.mrb[0].mxu0
  %11000 = vmatprep.mubr.f32.mxu0 0.0
  %11001 = vmatmul.mubr.f32.gmra.mrb[0].mxu0 %v10631
  %v11002 = vpop.f32.mrb[0].mxu0
  %v11003 = vadd.f32 0.0, %v11002
  %v11004 = vpop.f32.mrb[0].mxu0
  %11005 = vmatprep.mubr.f32.mxu0 0.0
  %11006 = vmatmul.mubr.f32.gmra.mrb[0].mxu0 %v10632
  %v11007 = vpop.f32.mrb[0].mxu0
  %v11008 = vadd.f32 0.0, %v11007
  %v11009 = vpop.f32.mrb[0].mxu0
  %11010 = vmatprep.mubr.f32.mxu0 0.0
  %11011 = vmatmul.mubr.f32.gmra.mrb[0].mxu0 %v10633
  %v11012 = vpop.f32.mrb[0].mxu0
  %v11013 = vadd.f32 0.0, %v11012
  %v11014 = vpop.f32.mrb[0].mxu0
  %11015 = vmatprep.mubr.f32.mxu0 0.0
  %11016 = vmatmul.mubr.f32.gmra.mrb[0].mxu0 %v10634
  %v11017 = vpop.f32.mrb[0].mxu0
  %v11018 = vadd.f32 0.0, %v11017
  %v11019 = vpop.f32.mrb[0].mxu0
  %11020 = vmatprep.mubr.f32.mxu0 0.0
  %11021 = vmatmul.mubr.f32.gmra.mrb[0].mxu0 %v10635
  %v11022 = vpop.f32.mrb[0].mxu0
  %v11023 = vadd.f32 0.0, %v11022
  %v11024 = vpop.f32.mrb[0].mxu0
  %11025 = vmatprep.mubr.f32.mxu0 0.0
  %11026 = vmatmul.mubr.f32.gmra.mrb[0].mxu0 %v10636
  %v11027 = vpop.f32.mrb[0].mxu0
  %v11028 = vadd.f32 0.0, %v11027
  %v11029 = vpop.f32.mrb[0].mxu0
  %11030 = vmatprep.mubr.f32.mxu0 0.0
  %11031 = vmatmul.mubr.f32.gmra.mrb[0].mxu0 %v10637
  %v11032 = vpop.f32.mrb[0].mxu0
  %v11033 = vadd.f32 0.0, %v11032
  %v11034 = vpop.f32.mrb[0].mxu0
  %11035 = vmatprep.mubr.f32.mxu0 0.0
  %11036 = vmatmul.mubr.f32.gmra.mrb[0].mxu0 %v10638
  %v11037 = vpop.f32.mrb[0].mxu0
  %v11038 = vadd.f32 0.0, %v11037
  %v11039 = vpop.f32.mrb[0].mxu0
  %11040 = vdwg.mxu0
  %v11041 = vadd.f32 %v10511, %v10723
  %v11042 = vadd.f32 %v10512, %v10728
  %v11043 = vadd.f32 %v10513, %v10733
  %v11044 = vadd.f32 %v10514, %v10738
  %v11045 = vadd.f32 %v10515, %v10743
  %v11046 = vadd.f32 %v10516, %v10748
  %v11047 = vadd.f32 %v10517, %v10753
  %v11048 = vadd.f32 %v10518, %v10758
  %v11049 = vadd.f32 %v10519, %v10763
  %v11050 = vadd.f32 %v10520, %v10768
  %v11051 = vadd.f32 %v10521, %v10773
  %v11052 = vadd.f32 %v10522, %v10778
  %v11053 = vadd.f32 %v10523, %v10783
  %v11054 = vadd.f32 %v10524, %v10788
  %v11055 = vadd.f32 %v10525, %v10793
  %v11056 = vadd.f32 %v10526, %v10798
  %v11057 = vadd.f32 %v10527, %v10803
  %v11058 = vadd.f32 %v10528, %v10808
  %v11059 = vadd.f32 %v10529, %v10813
  %v11060 = vadd.f32 %v10530, %v10818
  %v11061 = vadd.f32 %v10531, %v10823
  %v11062 = vadd.f32 %v10532, %v10828
  %v11063 = vadd.f32 %v10533, %v10833
  %v11064 = vadd.f32 %v10534, %v10838
  %v11065 = vadd.f32 %v10535, %v10843
  %v11066 = vadd.f32 %v10536, %v10848
  %v11067 = vadd.f32 %v10537, %v10853
  %v11068 = vadd.f32 %v10538, %v10858
  %v11069 = vadd.f32 %v10539, %v10863
  %v11070 = vadd.f32 %v10540, %v10868
  %v11071 = vadd.f32 %v10541, %v10873
  %v11072 = vadd.f32 %v10542, %v10878
  %v11073 = vadd.f32 %v10543, %v10883
  %v11074 = vadd.f32 %v10544, %v10888
  %v11075 = vadd.f32 %v10545, %v10893
  %v11076 = vadd.f32 %v10546, %v10898
  %v11077 = vadd.f32 %v10547, %v10903
  %v11078 = vadd.f32 %v10548, %v10908
  %v11079 = vadd.f32 %v10549, %v10913
  %v11080 = vadd.f32 %v10550, %v10918
  %v11081 = vadd.f32 %v10551, %v10923
  %v11082 = vadd.f32 %v10552, %v10928
  %v11083 = vadd.f32 %v10553, %v10933
  %v11084 = vadd.f32 %v10554, %v10938
  %v11085 = vadd.f32 %v10555, %v10943
  %v11086 = vadd.f32 %v10556, %v10948
  %v11087 = vadd.f32 %v10557, %v10953
  %v11088 = vadd.f32 %v10558, %v10958
  %v11089 = vadd.f32 %v10559, %v10963
  %v11090 = vadd.f32 %v10560, %v10968
  %v11091 = vadd.f32 %v10561, %v10973
  %v11092 = vadd.f32 %v10562, %v10978
  %v11093 = vadd.f32 %v10563, %v10983
  %v11094 = vadd.f32 %v10564, %v10988
  %v11095 = vadd.f32 %v10565, %v10993
  %v11096 = vadd.f32 %v10566, %v10998
  %v11097 = vadd.f32 %v10567, %v11003
  %v11098 = vadd.f32 %v10568, %v11008
  %v11099 = vadd.f32 %v10569, %v11013
  %v11100 = vadd.f32 %v10570, %v11018
  %v11101 = vadd.f32 %v10571, %v11023
  %v11102 = vadd.f32 %v10572, %v11028
  %v11103 = vadd.f32 %v10573, %v11033
  %v11104 = vadd.f32 %v10574, %v11038
  %v11105 = vld [vmem:[%s10044 + $0x2] sm:$0xff]
  %v11106 = vld [vmem:[%s10044 + $0xa] sm:$0xff]
  %v11107 = vld [vmem:[%s10044 + $0x1a] sm:$0xff]
  %v11108 = vld [vmem:[%s10044 + $0x22] sm:$0xff]
  %v11109 = vld [vmem:[%s10044 + $0x32] sm:$0xff]
  %v11110 = vld [vmem:[%s10044 + $0x3a] sm:$0xff]
  %v11111 = vld [vmem:[%s10044 + $0x4a] sm:$0xff]
  %v11112 = vld [vmem:[%s10044 + $0x52] sm:$0xff]
  %v11113 = vld [vmem:[%s10044 + $0x62] sm:$0xff]
  %v11114 = vld [vmem:[%s10044 + $0x6a] sm:$0xff]
  %v11115 = vld [vmem:[%s10044 + $0x7a] sm:$0xff]
  %v11116 = vld [vmem:[%s10044 + $0x82] sm:$0xff]
  %v11117 = vld [vmem:[%s10044 + $0x92] sm:$0xff]
  %v11118 = vld [vmem:[%s10044 + $0x9a] sm:$0xff]
  %v11119 = vld [vmem:[%s10044 + $0xaa] sm:$0xff]
  %v11120 = vld [vmem:[%s10044 + $0xb2] sm:$0xff]
  %v11121 = vld [vmem:[%s10044 + $0xc2] sm:$0xff]
  %v11122 = vld [vmem:[%s10044 + $0xca] sm:$0xff]
  %v11123 = vld [vmem:[%s10044 + $0xda] sm:$0xff]
  %v11124 = vld [vmem:[%s10044 + $0xe2] sm:$0xff]
  %v11125 = vld [vmem:[%s10044 + $0xf2] sm:$0xff]
  %v11126 = vld [vmem:[%s10044 + $0xfa] sm:$0xff]
  %v11127 = vld [vmem:[%s10044 + $0x10a] sm:$0xff]
  %v11128 = vld [vmem:[%s10044 + $0x112] sm:$0xff]
  %v11129 = vld [vmem:[%s10044 + $0x122] sm:$0xff]
  %v11130 = vld [vmem:[%s10044 + $0x12a] sm:$0xff]
  %v11131 = vld [vmem:[%s10044 + $0x13a] sm:$0xff]
  %v11132 = vld [vmem:[%s10044 + $0x142] sm:$0xff]
  %v11133 = vld [vmem:[%s10044 + $0x152] sm:$0xff]
  %v11134 = vld [vmem:[%s10044 + $0x15a] sm:$0xff]
  %v11135 = vld [vmem:[%s10044 + $0x16a] sm:$0xff]
  %v11136 = vld [vmem:[%s10044 + $0x172] sm:$0xff]
  %v11137 = vld [vmem:[%s10044 + $0x1b2] sm:$0xff]
  %v11138 = vld [vmem:[%s10044 + $0x1ba] sm:$0xff]
  %v11139 = vld [vmem:[%s10044 + $0x1ca] sm:$0xff]
  %v11140 = vld [vmem:[%s10044 + $0x1d2] sm:$0xff]
  %v11141 = vld [vmem:[%s10044 + $0x1e2] sm:$0xff]
  %v11142 = vld [vmem:[%s10044 + $0x1ea] sm:$0xff]
  %v11143 = vld [vmem:[%s10044 + $0x1fa] sm:$0xff]
  %v11144 = vld [vmem:[%s10044 + $0x202] sm:$0xff]
  %v11145 = vld [vmem:[%s10044 + $0x212] sm:$0xff]
  %v11146 = vld [vmem:[%s10044 + $0x21a] sm:$0xff]
  %v11147 = vld [vmem:[%s10044 + $0x22a] sm:$0xff]
  %v11148 = vld [vmem:[%s10044 + $0x232] sm:$0xff]
  %v11149 = vld [vmem:[%s10044 + $0x242] sm:$0xff]
  %v11150 = vld [vmem:[%s10044 + $0x24a] sm:$0xff]
  %v11151 = vld [vmem:[%s10044 + $0x25a] sm:$0xff]
  %v11152 = vld [vmem:[%s10044 + $0x262] sm:$0xff]
  %v11153 = vld [vmem:[%s10044 + $0x272] sm:$0xff]
  %v11154 = vld [vmem:[%s10044 + $0x27a] sm:$0xff]
  %v11155 = vld [vmem:[%s10044 + $0x28a] sm:$0xff]
  %v11156 = vld [vmem:[%s10044 + $0x292] sm:$0xff]
  %v11157 = vld [vmem:[%s10044 + $0x2a2] sm:$0xff]
  %v11158 = vld [vmem:[%s10044 + $0x2aa] sm:$0xff]
  %v11159 = vld [vmem:[%s10044 + $0x2ba] sm:$0xff]
  %v11160 = vld [vmem:[%s10044 + $0x2c2] sm:$0xff]
  %v11161 = vld [vmem:[%s10044 + $0x2d2] sm:$0xff]
  %v11162 = vld [vmem:[%s10044 + $0x2da] sm:$0xff]
  %v11163 = vld [vmem:[%s10044 + $0x2ea] sm:$0xff]
  %v11164 = vld [vmem:[%s10044 + $0x2f2] sm:$0xff]
  %v11165 = vld [vmem:[%s10044 + $0x302] sm:$0xff]
  %v11166 = vld [vmem:[%s10044 + $0x30a] sm:$0xff]
  %v11167 = vld [vmem:[%s10044 + $0x31a] sm:$0xff]
  %v11168 = vld [vmem:[%s10044 + $0x322] sm:$0xff]
  %s11169 = scalar_lea.vmem %s4, 1024
  %v11170 = vld [vmem:[%s11169] sm:$0xff]
  %v11171 = vld [vmem:[%s11169 + $0x8] sm:$0xff]
  %v11172 = vld [vmem:[%s11169 + $0x10] sm:$0xff]
  %v11173 = vld [vmem:[%s11169 + $0x18] sm:$0xff]
  %v11174 = vld [vmem:[%s11169 + $0x20] sm:$0xff]
  %v11175 = vld [vmem:[%s11169 + $0x28] sm:$0xff]
  %v11176 = vld [vmem:[%s11169 + $0x30] sm:$0xff]
  %v11177 = vld [vmem:[%s11169 + $0x38] sm:$0xff]
  %v11178 = vld [vmem:[%s11169 + $0x40] sm:$0xff]
  %v11179 = vld [vmem:[%s11169 + $0x48] sm:$0xff]
  %v11180 = vld [vmem:[%s11169 + $0x50] sm:$0xff]
  %v11181 = vld [vmem:[%s11169 + $0x58] sm:$0xff]
  %v11182 = vld [vmem:[%s11169 + $0x60] sm:$0xff]
  %v11183 = vld [vmem:[%s11169 + $0x68] sm:$0xff]
  %v11184 = vld [vmem:[%s11169 + $0x70] sm:$0xff]
  %v11185 = vld [vmem:[%s11169 + $0x78] sm:$0xff]
  %11186 = vmatprep.subr.mxu0 0.0
  %11187 = vmatpush1.msra.mxu0 %v11170
  %11188 = vmatprep.subr.mxu0 0.0
  %11189 = vmatpush1.msra.mxu0 %v11171
  %11190 = vmatprep.subr.mxu0 0.0
  %11191 = vmatpush1.msra.mxu0 %v11172
  %11192 = vmatprep.subr.mxu0 0.0
  %11193 = vmatpush1.msra.mxu0 %v11173
  %11194 = vmatprep.subr.mxu0 0.0
  %11195 = vmatpush1.msra.mxu0 %v11174
  %11196 = vmatprep.subr.mxu0 0.0
  %11197 = vmatpush1.msra.mxu0 %v11175
  %11198 = vmatprep.subr.mxu0 0.0
  %11199 = vmatpush1.msra.mxu0 %v11176
  %11200 = vmatprep.subr.mxu0 0.0
  %11201 = vmatpush1.msra.mxu0 %v11177
  %11202 = vmatprep.subr.mxu0 0.0
  %11203 = vmatpush1.msra.mxu0 %v11178
  %11204 = vmatprep.subr.mxu0 0.0
  %11205 = vmatpush1.msra.mxu0 %v11179
  %11206 = vmatprep.subr.mxu0 0.0
  %11207 = vmatpush1.msra.mxu0 %v11180
  %11208 = vmatprep.subr.mxu0 0.0
  %11209 = vmatpush1.msra.mxu0 %v11181
  %11210 = vmatprep.subr.mxu0 0.0
  %11211 = vmatpush1.msra.mxu0 %v11182
  %11212 = vmatprep.subr.mxu0 0.0
  %11213 = vmatpush1.msra.mxu0 %v11183
  %11214 = vmatprep.subr.mxu0 0.0
  %11215 = vmatpush1.msra.mxu0 %v11184
  %11216 = vmatprep.subr.mxu0 0.0
  %11217 = vmatpush1.msra.mxu0 %v11185
  %11218 = vmatprep.subr.mxu0 0.0
  %11219 = vmatpush1.msra.mxu0 0.0
  %11220 = vmatprep.subr.mxu0 0.0
  %11221 = vmatpush1.msra.mxu0 0.0
  %11222 = vmatprep.subr.mxu0 0.0
  %11223 = vmatpush1.msra.mxu0 0.0
  %11224 = vmatprep.subr.mxu0 0.0
  %11225 = vmatpush1.msra.mxu0 0.0
  %11226 = vmatprep.subr.mxu0 0.0
  %11227 = vmatpush1.msra.mxu0 0.0
  %11228 = vmatprep.subr.mxu0 0.0
  %11229 = vmatpush1.msra.mxu0 0.0
  %11230 = vmatprep.subr.mxu0 0.0
  %11231 = vmatpush1.msra.mxu0 0.0
  %11232 = vmatprep.subr.mxu0 0.0
  %11233 = vmatpush1.msra.mxu0 0.0
  %11234 = vmatprep.subr.mxu0 0.0
  %11235 = vmatpush1.msra.mxu0 0.0
  %11236 = vmatprep.subr.mxu0 0.0
  %11237 = vmatpush1.msra.mxu0 0.0
  %11238 = vmatprep.subr.mxu0 0.0
  %11239 = vmatpush1.msra.mxu0 0.0
  %11240 = vmatprep.subr.mxu0 0.0
  %11241 = vmatpush1.msra.mxu0 0.0
  %11242 = vmatprep.subr.mxu0 0.0
  %11243 = vmatpush1.msra.mxu0 0.0
  %11244 = vmatprep.subr.mxu0 0.0
  %11245 = vmatpush1.msra.mxu0 0.0
  %11246 = vmatprep.subr.mxu0 0.0
  %11247 = vmatpush1.msra.mxu0 0.0
  %11248 = vmatprep.subr.mxu0 0.0
  %11249 = vmatpush1.msra.mxu0 0.0
  %11250 = vmatprep.mubr.f32.mxu0 0.0
  %11251 = vmatmul.mubr.f32.gmra.mrb[0].mxu0 %v11105
  %v11252 = vpop.f32.mrb[0].mxu0
  %v11253 = vadd.f32 0.0, %v11252
  %v11254 = vpop.f32.mrb[0].mxu0
  %11255 = vmatprep.mubr.f32.mxu0 0.0
  %11256 = vmatmul.mubr.f32.gmra.mrb[0].mxu0 %v11106
  %v11257 = vpop.f32.mrb[0].mxu0
  %v11258 = vadd.f32 0.0, %v11257
  %v11259 = vpop.f32.mrb[0].mxu0
  %11260 = vmatprep.mubr.f32.mxu0 0.0
  %11261 = vmatmul.mubr.f32.gmra.mrb[0].mxu0 %v11107
  %v11262 = vpop.f32.mrb[0].mxu0
  %v11263 = vadd.f32 0.0, %v11262
  %v11264 = vpop.f32.mrb[0].mxu0
  %11265 = vmatprep.mubr.f32.mxu0 0.0
  %11266 = vmatmul.mubr.f32.gmra.mrb[0].mxu0 %v11108
  %v11267 = vpop.f32.mrb[0].mxu0
  %v11268 = vadd.f32 0.0, %v11267
  %v11269 = vpop.f32.mrb[0].mxu0
  %11270 = vmatprep.mubr.f32.mxu0 0.0
  %11271 = vmatmul.mubr.f32.gmra.mrb[0].mxu0 %v11109
  %v11272 = vpop.f32.mrb[0].mxu0
  %v11273 = vadd.f32 0.0, %v11272
  %v11274 = vpop.f32.mrb[0].mxu0
  %11275 = vmatprep.mubr.f32.mxu0 0.0
  %11276 = vmatmul.mubr.f32.gmra.mrb[0].mxu0 %v11110
  %v11277 = vpop.f32.mrb[0].mxu0
  %v11278 = vadd.f32 0.0, %v11277
  %v11279 = vpop.f32.mrb[0].mxu0
  %11280 = vmatprep.mubr.f32.mxu0 0.0
  %11281 = vmatmul.mubr.f32.gmra.mrb[0].mxu0 %v11111
  %v11282 = vpop.f32.mrb[0].mxu0
  %v11283 = vadd.f32 0.0, %v11282
  %v11284 = vpop.f32.mrb[0].mxu0
  %11285 = vmatprep.mubr.f32.mxu0 0.0
  %11286 = vmatmul.mubr.f32.gmra.mrb[0].mxu0 %v11112
  %v11287 = vpop.f32.mrb[0].mxu0
  %v11288 = vadd.f32 0.0, %v11287
  %v11289 = vpop.f32.mrb[0].mxu0
  %11290 = vmatprep.mubr.f32.mxu0 0.0
  %11291 = vmatmul.mubr.f32.gmra.mrb[0].mxu0 %v11113
  %v11292 = vpop.f32.mrb[0].mxu0
  %v11293 = vadd.f32 0.0, %v11292
  %v11294 = vpop.f32.mrb[0].mxu0
  %11295 = vmatprep.mubr.f32.mxu0 0.0
  %11296 = vmatmul.mubr.f32.gmra.mrb[0].mxu0 %v11114
  %v11297 = vpop.f32.mrb[0].mxu0
  %v11298 = vadd.f32 0.0, %v11297
  %v11299 = vpop.f32.mrb[0].mxu0
  %11300 = vmatprep.mubr.f32.mxu0 0.0
  %11301 = vmatmul.mubr.f32.gmra.mrb[0].mxu0 %v11115
  %v11302 = vpop.f32.mrb[0].mxu0
  %v11303 = vadd.f32 0.0, %v11302
  %v11304 = vpop.f32.mrb[0].mxu0
  %11305 = vmatprep.mubr.f32.mxu0 0.0
  %11306 = vmatmul.mubr.f32.gmra.mrb[0].mxu0 %v11116
  %v11307 = vpop.f32.mrb[0].mxu0
  %v11308 = vadd.f32 0.0, %v11307
  %v11309 = vpop.f32.mrb[0].mxu0
  %11310 = vmatprep.mubr.f32.mxu0 0.0
  %11311 = vmatmul.mubr.f32.gmra.mrb[0].mxu0 %v11117
  %v11312 = vpop.f32.mrb[0].mxu0
  %v11313 = vadd.f32 0.0, %v11312
  %v11314 = vpop.f32.mrb[0].mxu0
  %11315 = vmatprep.mubr.f32.mxu0 0.0
  %11316 = vmatmul.mubr.f32.gmra.mrb[0].mxu0 %v11118
  %v11317 = vpop.f32.mrb[0].mxu0
  %v11318 = vadd.f32 0.0, %v11317
  %v11319 = vpop.f32.mrb[0].mxu0
  %11320 = vmatprep.mubr.f32.mxu0 0.0
  %11321 = vmatmul.mubr.f32.gmra.mrb[0].mxu0 %v11119
  %v11322 = vpop.f32.mrb[0].mxu0
  %v11323 = vadd.f32 0.0, %v11322
  %v11324 = vpop.f32.mrb[0].mxu0
  %11325 = vmatprep.mubr.f32.mxu0 0.0
  %11326 = vmatmul.mubr.f32.gmra.mrb[0].mxu0 %v11120
  %v11327 = vpop.f32.mrb[0].mxu0
  %v11328 = vadd.f32 0.0, %v11327
  %v11329 = vpop.f32.mrb[0].mxu0
  %11330 = vmatprep.mubr.f32.mxu0 0.0
  %11331 = vmatmul.mubr.f32.gmra.mrb[0].mxu0 %v11121
  %v11332 = vpop.f32.mrb[0].mxu0
  %v11333 = vadd.f32 0.0, %v11332
  %v11334 = vpop.f32.mrb[0].mxu0
  %11335 = vmatprep.mubr.f32.mxu0 0.0
  %11336 = vmatmul.mubr.f32.gmra.mrb[0].mxu0 %v11122
  %v11337 = vpop.f32.mrb[0].mxu0
  %v11338 = vadd.f32 0.0, %v11337
  %v11339 = vpop.f32.mrb[0].mxu0
  %11340 = vmatprep.mubr.f32.mxu0 0.0
  %11341 = vmatmul.mubr.f32.gmra.mrb[0].mxu0 %v11123
  %v11342 = vpop.f32.mrb[0].mxu0
  %v11343 = vadd.f32 0.0, %v11342
  %v11344 = vpop.f32.mrb[0].mxu0
  %11345 = vmatprep.mubr.f32.mxu0 0.0
  %11346 = vmatmul.mubr.f32.gmra.mrb[0].mxu0 %v11124
  %v11347 = vpop.f32.mrb[0].mxu0
  %v11348 = vadd.f32 0.0, %v11347
  %v11349 = vpop.f32.mrb[0].mxu0
  %11350 = vmatprep.mubr.f32.mxu0 0.0
  %11351 = vmatmul.mubr.f32.gmra.mrb[0].mxu0 %v11125
  %v11352 = vpop.f32.mrb[0].mxu0
  %v11353 = vadd.f32 0.0, %v11352
  %v11354 = vpop.f32.mrb[0].mxu0
  %11355 = vmatprep.mubr.f32.mxu0 0.0
  %11356 = vmatmul.mubr.f32.gmra.mrb[0].mxu0 %v11126
  %v11357 = vpop.f32.mrb[0].mxu0
  %v11358 = vadd.f32 0.0, %v11357
  %v11359 = vpop.f32.mrb[0].mxu0
  %11360 = vmatprep.mubr.f32.mxu0 0.0
  %11361 = vmatmul.mubr.f32.gmra.mrb[0].mxu0 %v11127
  %v11362 = vpop.f32.mrb[0].mxu0
  %v11363 = vadd.f32 0.0, %v11362
  %v11364 = vpop.f32.mrb[0].mxu0
  %11365 = vmatprep.mubr.f32.mxu0 0.0
  %11366 = vmatmul.mubr.f32.gmra.mrb[0].mxu0 %v11128
  %v11367 = vpop.f32.mrb[0].mxu0
  %v11368 = vadd.f32 0.0, %v11367
  %v11369 = vpop.f32.mrb[0].mxu0
  %11370 = vmatprep.mubr.f32.mxu0 0.0
  %11371 = vmatmul.mubr.f32.gmra.mrb[0].mxu0 %v11129
  %v11372 = vpop.f32.mrb[0].mxu0
  %v11373 = vadd.f32 0.0, %v11372
  %v11374 = vpop.f32.mrb[0].mxu0
  %11375 = vmatprep.mubr.f32.mxu0 0.0
  %11376 = vmatmul.mubr.f32.gmra.mrb[0].mxu0 %v11130
  %v11377 = vpop.f32.mrb[0].mxu0
  %v11378 = vadd.f32 0.0, %v11377
  %v11379 = vpop.f32.mrb[0].mxu0
  %11380 = vmatprep.mubr.f32.mxu0 0.0
  %11381 = vmatmul.mubr.f32.gmra.mrb[0].mxu0 %v11131
  %v11382 = vpop.f32.mrb[0].mxu0
  %v11383 = vadd.f32 0.0, %v11382
  %v11384 = vpop.f32.mrb[0].mxu0
  %11385 = vmatprep.mubr.f32.mxu0 0.0
  %11386 = vmatmul.mubr.f32.gmra.mrb[0].mxu0 %v11132
  %v11387 = vpop.f32.mrb[0].mxu0
  %v11388 = vadd.f32 0.0, %v11387
  %v11389 = vpop.f32.mrb[0].mxu0
  %11390 = vmatprep.mubr.f32.mxu0 0.0
  %11391 = vmatmul.mubr.f32.gmra.mrb[0].mxu0 %v11133
  %v11392 = vpop.f32.mrb[0].mxu0
  %v11393 = vadd.f32 0.0, %v11392
  %v11394 = vpop.f32.mrb[0].mxu0
  %11395 = vmatprep.mubr.f32.mxu0 0.0
  %11396 = vmatmul.mubr.f32.gmra.mrb[0].mxu0 %v11134
  %v11397 = vpop.f32.mrb[0].mxu0
  %v11398 = vadd.f32 0.0, %v11397
  %v11399 = vpop.f32.mrb[0].mxu0
  %11400 = vmatprep.mubr.f32.mxu0 0.0
  %11401 = vmatmul.mubr.f32.gmra.mrb[0].mxu0 %v11135
  %v11402 = vpop.f32.mrb[0].mxu0
  %v11403 = vadd.f32 0.0, %v11402
  %v11404 = vpop.f32.mrb[0].mxu0
  %11405 = vmatprep.mubr.f32.mxu0 0.0
  %11406 = vmatmul.mubr.f32.gmra.mrb[0].mxu0 %v11136
  %v11407 = vpop.f32.mrb[0].mxu0
  %v11408 = vadd.f32 0.0, %v11407
  %v11409 = vpop.f32.mrb[0].mxu0
  %11410 = vmatprep.mubr.f32.mxu0 0.0
  %11411 = vmatmul.mubr.f32.gmra.mrb[0].mxu0 %v11137
  %v11412 = vpop.f32.mrb[0].mxu0
  %v11413 = vadd.f32 0.0, %v11412
  %v11414 = vpop.f32.mrb[0].mxu0
  %11415 = vmatprep.mubr.f32.mxu0 0.0
  %11416 = vmatmul.mubr.f32.gmra.mrb[0].mxu0 %v11138
  %v11417 = vpop.f32.mrb[0].mxu0
  %v11418 = vadd.f32 0.0, %v11417
  %v11419 = vpop.f32.mrb[0].mxu0
  %11420 = vmatprep.mubr.f32.mxu0 0.0
  %11421 = vmatmul.mubr.f32.gmra.mrb[0].mxu0 %v11139
  %v11422 = vpop.f32.mrb[0].mxu0
  %v11423 = vadd.f32 0.0, %v11422
  %v11424 = vpop.f32.mrb[0].mxu0
  %11425 = vmatprep.mubr.f32.mxu0 0.0
  %11426 = vmatmul.mubr.f32.gmra.mrb[0].mxu0 %v11140
  %v11427 = vpop.f32.mrb[0].mxu0
  %v11428 = vadd.f32 0.0, %v11427
  %v11429 = vpop.f32.mrb[0].mxu0
  %11430 = vmatprep.mubr.f32.mxu0 0.0
  %11431 = vmatmul.mubr.f32.gmra.mrb[0].mxu0 %v11141
  %v11432 = vpop.f32.mrb[0].mxu0
  %v11433 = vadd.f32 0.0, %v11432
  %v11434 = vpop.f32.mrb[0].mxu0
  %11435 = vmatprep.mubr.f32.mxu0 0.0
  %11436 = vmatmul.mubr.f32.gmra.mrb[0].mxu0 %v11142
  %v11437 = vpop.f32.mrb[0].mxu0
  %v11438 = vadd.f32 0.0, %v11437
  %v11439 = vpop.f32.mrb[0].mxu0
  %11440 = vmatprep.mubr.f32.mxu0 0.0
  %11441 = vmatmul.mubr.f32.gmra.mrb[0].mxu0 %v11143
  %v11442 = vpop.f32.mrb[0].mxu0
  %v11443 = vadd.f32 0.0, %v11442
  %v11444 = vpop.f32.mrb[0].mxu0
  %11445 = vmatprep.mubr.f32.mxu0 0.0
  %11446 = vmatmul.mubr.f32.gmra.mrb[0].mxu0 %v11144
  %v11447 = vpop.f32.mrb[0].mxu0
  %v11448 = vadd.f32 0.0, %v11447
  %v11449 = vpop.f32.mrb[0].mxu0
  %11450 = vmatprep.mubr.f32.mxu0 0.0
  %11451 = vmatmul.mubr.f32.gmra.mrb[0].mxu0 %v11145
  %v11452 = vpop.f32.mrb[0].mxu0
  %v11453 = vadd.f32 0.0, %v11452
  %v11454 = vpop.f32.mrb[0].mxu0
  %11455 = vmatprep.mubr.f32.mxu0 0.0
  %11456 = vmatmul.mubr.f32.gmra.mrb[0].mxu0 %v11146
  %v11457 = vpop.f32.mrb[0].mxu0
  %v11458 = vadd.f32 0.0, %v11457
  %v11459 = vpop.f32.mrb[0].mxu0
  %11460 = vmatprep.mubr.f32.mxu0 0.0
  %11461 = vmatmul.mubr.f32.gmra.mrb[0].mxu0 %v11147
  %v11462 = vpop.f32.mrb[0].mxu0
  %v11463 = vadd.f32 0.0, %v11462
  %v11464 = vpop.f32.mrb[0].mxu0
  %11465 = vmatprep.mubr.f32.mxu0 0.0
  %11466 = vmatmul.mubr.f32.gmra.mrb[0].mxu0 %v11148
  %v11467 = vpop.f32.mrb[0].mxu0
  %v11468 = vadd.f32 0.0, %v11467
  %v11469 = vpop.f32.mrb[0].mxu0
  %11470 = vmatprep.mubr.f32.mxu0 0.0
  %11471 = vmatmul.mubr.f32.gmra.mrb[0].mxu0 %v11149
  %v11472 = vpop.f32.mrb[0].mxu0
  %v11473 = vadd.f32 0.0, %v11472
  %v11474 = vpop.f32.mrb[0].mxu0
  %11475 = vmatprep.mubr.f32.mxu0 0.0
  %11476 = vmatmul.mubr.f32.gmra.mrb[0].mxu0 %v11150
  %v11477 = vpop.f32.mrb[0].mxu0
  %v11478 = vadd.f32 0.0, %v11477
  %v11479 = vpop.f32.mrb[0].mxu0
  %11480 = vmatprep.mubr.f32.mxu0 0.0
  %11481 = vmatmul.mubr.f32.gmra.mrb[0].mxu0 %v11151
  %v11482 = vpop.f32.mrb[0].mxu0
  %v11483 = vadd.f32 0.0, %v11482
  %v11484 = vpop.f32.mrb[0].mxu0
  %11485 = vmatprep.mubr.f32.mxu0 0.0
  %11486 = vmatmul.mubr.f32.gmra.mrb[0].mxu0 %v11152
  %v11487 = vpop.f32.mrb[0].mxu0
  %v11488 = vadd.f32 0.0, %v11487
  %v11489 = vpop.f32.mrb[0].mxu0
  %11490 = vmatprep.mubr.f32.mxu0 0.0
  %11491 = vmatmul.mubr.f32.gmra.mrb[0].mxu0 %v11153
  %v11492 = vpop.f32.mrb[0].mxu0
  %v11493 = vadd.f32 0.0, %v11492
  %v11494 = vpop.f32.mrb[0].mxu0
  %11495 = vmatprep.mubr.f32.mxu0 0.0
  %11496 = vmatmul.mubr.f32.gmra.mrb[0].mxu0 %v11154
  %v11497 = vpop.f32.mrb[0].mxu0
  %v11498 = vadd.f32 0.0, %v11497
  %v11499 = vpop.f32.mrb[0].mxu0
  %11500 = vmatprep.mubr.f32.mxu0 0.0
  %11501 = vmatmul.mubr.f32.gmra.mrb[0].mxu0 %v11155
  %v11502 = vpop.f32.mrb[0].mxu0
  %v11503 = vadd.f32 0.0, %v11502
  %v11504 = vpop.f32.mrb[0].mxu0
  %11505 = vmatprep.mubr.f32.mxu0 0.0
  %11506 = vmatmul.mubr.f32.gmra.mrb[0].mxu0 %v11156
  %v11507 = vpop.f32.mrb[0].mxu0
  %v11508 = vadd.f32 0.0, %v11507
  %v11509 = vpop.f32.mrb[0].mxu0
  %11510 = vmatprep.mubr.f32.mxu0 0.0
  %11511 = vmatmul.mubr.f32.gmra.mrb[0].mxu0 %v11157
  %v11512 = vpop.f32.mrb[0].mxu0
  %v11513 = vadd.f32 0.0, %v11512
  %v11514 = vpop.f32.mrb[0].mxu0
  %11515 = vmatprep.mubr.f32.mxu0 0.0
  %11516 = vmatmul.mubr.f32.gmra.mrb[0].mxu0 %v11158
  %v11517 = vpop.f32.mrb[0].mxu0
  %v11518 = vadd.f32 0.0, %v11517
  %v11519 = vpop.f32.mrb[0].mxu0
  %11520 = vmatprep.mubr.f32.mxu0 0.0
  %11521 = vmatmul.mubr.f32.gmra.mrb[0].mxu0 %v11159
  %v11522 = vpop.f32.mrb[0].mxu0
  %v11523 = vadd.f32 0.0, %v11522
  %v11524 = vpop.f32.mrb[0].mxu0
  %11525 = vmatprep.mubr.f32.mxu0 0.0
  %11526 = vmatmul.mubr.f32.gmra.mrb[0].mxu0 %v11160
  %v11527 = vpop.f32.mrb[0].mxu0
  %v11528 = vadd.f32 0.0, %v11527
  %v11529 = vpop.f32.mrb[0].mxu0
  %11530 = vmatprep.mubr.f32.mxu0 0.0
  %11531 = vmatmul.mubr.f32.gmra.mrb[0].mxu0 %v11161
  %v11532 = vpop.f32.mrb[0].mxu0
  %v11533 = vadd.f32 0.0, %v11532
  %v11534 = vpop.f32.mrb[0].mxu0
  %11535 = vmatprep.mubr.f32.mxu0 0.0
  %11536 = vmatmul.mubr.f32.gmra.mrb[0].mxu0 %v11162
  %v11537 = vpop.f32.mrb[0].mxu0
  %v11538 = vadd.f32 0.0, %v11537
  %v11539 = vpop.f32.mrb[0].mxu0
  %11540 = vmatprep.mubr.f32.mxu0 0.0
  %11541 = vmatmul.mubr.f32.gmra.mrb[0].mxu0 %v11163
  %v11542 = vpop.f32.mrb[0].mxu0
  %v11543 = vadd.f32 0.0, %v11542
  %v11544 = vpop.f32.mrb[0].mxu0
  %11545 = vmatprep.mubr.f32.mxu0 0.0
  %11546 = vmatmul.mubr.f32.gmra.mrb[0].mxu0 %v11164
  %v11547 = vpop.f32.mrb[0].mxu0
  %v11548 = vadd.f32 0.0, %v11547
  %v11549 = vpop.f32.mrb[0].mxu0
  %11550 = vmatprep.mubr.f32.mxu0 0.0
  %11551 = vmatmul.mubr.f32.gmra.mrb[0].mxu0 %v11165
  %v11552 = vpop.f32.mrb[0].mxu0
  %v11553 = vadd.f32 0.0, %v11552
  %v11554 = vpop.f32.mrb[0].mxu0
  %11555 = vmatprep.mubr.f32.mxu0 0.0
  %11556 = vmatmul.mubr.f32.gmra.mrb[0].mxu0 %v11166
  %v11557 = vpop.f32.mrb[0].mxu0
  %v11558 = vadd.f32 0.0, %v11557
  %v11559 = vpop.f32.mrb[0].mxu0
  %11560 = vmatprep.mubr.f32.mxu0 0.0
  %11561 = vmatmul.mubr.f32.gmra.mrb[0].mxu0 %v11167
  %v11562 = vpop.f32.mrb[0].mxu0
  %v11563 = vadd.f32 0.0, %v11562
  %v11564 = vpop.f32.mrb[0].mxu0
  %11565 = vmatprep.mubr.f32.mxu0 0.0
  %11566 = vmatmul.mubr.f32.gmra.mrb[0].mxu0 %v11168
  %v11567 = vpop.f32.mrb[0].mxu0
  %v11568 = vadd.f32 0.0, %v11567
  %v11569 = vpop.f32.mrb[0].mxu0
  %11570 = vdwg.mxu0
  %v11571 = vadd.f32 %v11041, %v11253
  %v11572 = vadd.f32 %v11042, %v11258
  %v11573 = vadd.f32 %v11043, %v11263
  %v11574 = vadd.f32 %v11044, %v11268
  %v11575 = vadd.f32 %v11045, %v11273
  %v11576 = vadd.f32 %v11046, %v11278
  %v11577 = vadd.f32 %v11047, %v11283
  %v11578 = vadd.f32 %v11048, %v11288
  %v11579 = vadd.f32 %v11049, %v11293
  %v11580 = vadd.f32 %v11050, %v11298
  %v11581 = vadd.f32 %v11051, %v11303
  %v11582 = vadd.f32 %v11052, %v11308
  %v11583 = vadd.f32 %v11053, %v11313
  %v11584 = vadd.f32 %v11054, %v11318
  %v11585 = vadd.f32 %v11055, %v11323
  %v11586 = vadd.f32 %v11056, %v11328
  %v11587 = vadd.f32 %v11057, %v11333
  %v11588 = vadd.f32 %v11058, %v11338
  %v11589 = vadd.f32 %v11059, %v11343
  %v11590 = vadd.f32 %v11060, %v11348
  %v11591 = vadd.f32 %v11061, %v11353
  %v11592 = vadd.f32 %v11062, %v11358
  %v11593 = vadd.f32 %v11063, %v11363
  %v11594 = vadd.f32 %v11064, %v11368
  %v11595 = vadd.f32 %v11065, %v11373
  %v11596 = vadd.f32 %v11066, %v11378
  %v11597 = vadd.f32 %v11067, %v11383
  %v11598 = vadd.f32 %v11068, %v11388
  %v11599 = vadd.f32 %v11069, %v11393
  %v11600 = vadd.f32 %v11070, %v11398
  %v11601 = vadd.f32 %v11071, %v11403
  %v11602 = vadd.f32 %v11072, %v11408
  %v11603 = vadd.f32 %v11073, %v11413
  %v11604 = vadd.f32 %v11074, %v11418
  %v11605 = vadd.f32 %v11075, %v11423
  %v11606 = vadd.f32 %v11076, %v11428
  %v11607 = vadd.f32 %v11077, %v11433
  %v11608 = vadd.f32 %v11078, %v11438
  %v11609 = vadd.f32 %v11079, %v11443
  %v11610 = vadd.f32 %v11080, %v11448
  %v11611 = vadd.f32 %v11081, %v11453
  %v11612 = vadd.f32 %v11082, %v11458
  %v11613 = vadd.f32 %v11083, %v11463
  %v11614 = vadd.f32 %v11084, %v11468
  %v11615 = vadd.f32 %v11085, %v11473
  %v11616 = vadd.f32 %v11086, %v11478
  %v11617 = vadd.f32 %v11087, %v11483
  %v11618 = vadd.f32 %v11088, %v11488
  %v11619 = vadd.f32 %v11089, %v11493
  %v11620 = vadd.f32 %v11090, %v11498
  %v11621 = vadd.f32 %v11091, %v11503
  %v11622 = vadd.f32 %v11092, %v11508
  %v11623 = vadd.f32 %v11093, %v11513
  %v11624 = vadd.f32 %v11094, %v11518
  %v11625 = vadd.f32 %v11095, %v11523
  %v11626 = vadd.f32 %v11096, %v11528
  %v11627 = vadd.f32 %v11097, %v11533
  %v11628 = vadd.f32 %v11098, %v11538
  %v11629 = vadd.f32 %v11099, %v11543
  %v11630 = vadd.f32 %v11100, %v11548
  %v11631 = vadd.f32 %v11101, %v11553
  %v11632 = vadd.f32 %v11102, %v11558
  %v11633 = vadd.f32 %v11103, %v11563
  %v11634 = vadd.f32 %v11104, %v11568
  %v11635 = vld [vmem:[%s5] sm:$0x1]
  %v11636 = vld [vmem:[%s6] sm:$0x1]
  %11637 = vmatprep.subr.mxu0 0.0
  %11638 = vmatpush1.msra.mxu0 %v11571
  %11639 = vmatprep.subr.mxu0 0.0
  %11640 = vmatpush1.msra.mxu0 %v11572
  %11641 = vmatprep.subr.mxu0 0.0
  %11642 = vmatpush1.msra.mxu0 %v11573
  %11643 = vmatprep.subr.mxu0 0.0
  %11644 = vmatpush1.msra.mxu0 %v11574
  %11645 = vmatprep.subr.mxu0 0.0
  %11646 = vmatpush1.msra.mxu0 %v11575
  %11647 = vmatprep.subr.mxu0 0.0
  %11648 = vmatpush1.msra.mxu0 %v11576
  %11649 = vmatprep.subr.mxu0 0.0
  %11650 = vmatpush1.msra.mxu0 %v11577
  %11651 = vmatprep.subr.mxu0 0.0
  %11652 = vmatpush1.msra.mxu0 %v11578
  %11653 = vmatprep.subr.mxu0 0.0
  %11654 = vmatpush1.msra.mxu0 %v11579
  %11655 = vmatprep.subr.mxu0 0.0
  %11656 = vmatpush1.msra.mxu0 %v11580
  %11657 = vmatprep.subr.mxu0 0.0
  %11658 = vmatpush1.msra.mxu0 %v11581
  %11659 = vmatprep.subr.mxu0 0.0
  %11660 = vmatpush1.msra.mxu0 %v11582
  %11661 = vmatprep.subr.mxu0 0.0
  %11662 = vmatpush1.msra.mxu0 %v11583
  %11663 = vmatprep.subr.mxu0 0.0
  %11664 = vmatpush1.msra.mxu0 %v11584
  %11665 = vmatprep.subr.mxu0 0.0
  %11666 = vmatpush1.msra.mxu0 %v11585
  %11667 = vmatprep.subr.mxu0 0.0
  %11668 = vmatpush1.msra.mxu0 %v11586
  %11669 = vmatprep.subr.mxu0 0.0
  %11670 = vmatpush1.msra.mxu0 %v11587
  %11671 = vmatprep.subr.mxu0 0.0
  %11672 = vmatpush1.msra.mxu0 %v11588
  %11673 = vmatprep.subr.mxu0 0.0
  %11674 = vmatpush1.msra.mxu0 %v11589
  %11675 = vmatprep.subr.mxu0 0.0
  %11676 = vmatpush1.msra.mxu0 %v11590
  %11677 = vmatprep.subr.mxu0 0.0
  %11678 = vmatpush1.msra.mxu0 %v11591
  %11679 = vmatprep.subr.mxu0 0.0
  %11680 = vmatpush1.msra.mxu0 %v11592
  %11681 = vmatprep.subr.mxu0 0.0
  %11682 = vmatpush1.msra.mxu0 %v11593
  %11683 = vmatprep.subr.mxu0 0.0
  %11684 = vmatpush1.msra.mxu0 %v11594
  %11685 = vmatprep.subr.mxu0 0.0
  %11686 = vmatpush1.msra.mxu0 %v11595
  %11687 = vmatprep.subr.mxu0 0.0
  %11688 = vmatpush1.msra.mxu0 %v11596
  %11689 = vmatprep.subr.mxu0 0.0
  %11690 = vmatpush1.msra.mxu0 %v11597
  %11691 = vmatprep.subr.mxu0 0.0
  %11692 = vmatpush1.msra.mxu0 %v11598
  %11693 = vmatprep.subr.mxu0 0.0
  %11694 = vmatpush1.msra.mxu0 %v11599
  %11695 = vmatprep.subr.mxu0 0.0
  %11696 = vmatpush1.msra.mxu0 %v11600
  %11697 = vmatprep.subr.mxu0 0.0
  %11698 = vmatpush1.msra.mxu0 %v11601
  %11699 = vmatprep.subr.mxu0 0.0
  %11700 = vmatpush1.msra.mxu0 %v11602
  %11701 = vmatprep.mubr.f32.mxu0 1.0
  %11702 = vmatmul.mubr.f32.gmra.mrb[0].mxu0 1.0
  %v11703 = vpop.f32.mrb[0].mxu0
  %v11704 = vadd.f32 0.0, %v11703
  %v11705 = vpop.f32.mrb[0].mxu0
  %11706 = vdwg.mxu0
  %11707 = vmatprep.subr.mxu0 0.0
  %11708 = vmatpush1.msra.mxu0 %v11603
  %11709 = vmatprep.subr.mxu0 0.0
  %11710 = vmatpush1.msra.mxu0 %v11604
  %11711 = vmatprep.subr.mxu0 0.0
  %11712 = vmatpush1.msra.mxu0 %v11605
  %11713 = vmatprep.subr.mxu0 0.0
  %11714 = vmatpush1.msra.mxu0 %v11606
  %11715 = vmatprep.subr.mxu0 0.0
  %11716 = vmatpush1.msra.mxu0 %v11607
  %11717 = vmatprep.subr.mxu0 0.0
  %11718 = vmatpush1.msra.mxu0 %v11608
  %11719 = vmatprep.subr.mxu0 0.0
  %11720 = vmatpush1.msra.mxu0 %v11609
  %11721 = vmatprep.subr.mxu0 0.0
  %11722 = vmatpush1.msra.mxu0 %v11610
  %11723 = vmatprep.subr.mxu0 0.0
  %11724 = vmatpush1.msra.mxu0 %v11611
  %11725 = vmatprep.subr.mxu0 0.0
  %11726 = vmatpush1.msra.mxu0 %v11612
  %11727 = vmatprep.subr.mxu0 0.0
  %11728 = vmatpush1.msra.mxu0 %v11613
  %11729 = vmatprep.subr.mxu0 0.0
  %11730 = vmatpush1.msra.mxu0 %v11614
  %11731 = vmatprep.subr.mxu0 0.0
  %11732 = vmatpush1.msra.mxu0 %v11615
  %11733 = vmatprep.subr.mxu0 0.0
  %11734 = vmatpush1.msra.mxu0 %v11616
  %11735 = vmatprep.subr.mxu0 0.0
  %11736 = vmatpush1.msra.mxu0 %v11617
  %11737 = vmatprep.subr.mxu0 0.0
  %11738 = vmatpush1.msra.mxu0 %v11618
  %11739 = vmatprep.subr.mxu0 0.0
  %11740 = vmatpush1.msra.mxu0 %v11619
  %11741 = vmatprep.subr.mxu0 0.0
  %11742 = vmatpush1.msra.mxu0 %v11620
  %11743 = vmatprep.subr.mxu0 0.0
  %11744 = vmatpush1.msra.mxu0 %v11621
  %11745 = vmatprep.subr.mxu0 0.0
  %11746 = vmatpush1.msra.mxu0 %v11622
  %11747 = vmatprep.subr.mxu0 0.0
  %11748 = vmatpush1.msra.mxu0 %v11623
  %11749 = vmatprep.subr.mxu0 0.0
  %11750 = vmatpush1.msra.mxu0 %v11624
  %11751 = vmatprep.subr.mxu0 0.0
  %11752 = vmatpush1.msra.mxu0 %v11625
  %11753 = vmatprep.subr.mxu0 0.0
  %11754 = vmatpush1.msra.mxu0 %v11626
  %11755 = vmatprep.subr.mxu0 0.0
  %11756 = vmatpush1.msra.mxu0 %v11627
  %11757 = vmatprep.subr.mxu0 0.0
  %11758 = vmatpush1.msra.mxu0 %v11628
  %11759 = vmatprep.subr.mxu0 0.0
  %11760 = vmatpush1.msra.mxu0 %v11629
  %11761 = vmatprep.subr.mxu0 0.0
  %11762 = vmatpush1.msra.mxu0 %v11630
  %11763 = vmatprep.subr.mxu0 0.0
  %11764 = vmatpush1.msra.mxu0 %v11631
  %11765 = vmatprep.subr.mxu0 0.0
  %11766 = vmatpush1.msra.mxu0 %v11632
  %11767 = vmatprep.subr.mxu0 0.0
  %11768 = vmatpush1.msra.mxu0 %v11633
  %11769 = vmatprep.subr.mxu0 0.0
  %11770 = vmatpush1.msra.mxu0 %v11634
  %11771 = vmatprep.mubr.f32.mxu0 1.0
  %11772 = vmatmul.mubr.f32.gmra.mrb[0].mxu0 1.0
  %v11773 = vpop.f32.mrb[0].mxu0
  %v11774 = vadd.f32 %v11704, %v11773
  %v11775 = vpop.f32.mrb[0].mxu0
  %11776 = vdwg.mxu0
  %v11777 = vmul.f32 %v11571, %v11571
  %v11778 = vmul.f32 %v11572, %v11572
  %v11779 = vmul.f32 %v11573, %v11573
  %v11780 = vmul.f32 %v11574, %v11574
  %v11781 = vmul.f32 %v11575, %v11575
  %v11782 = vmul.f32 %v11576, %v11576
  %v11783 = vmul.f32 %v11577, %v11577
  %v11784 = vmul.f32 %v11578, %v11578
  %v11785 = vmul.f32 %v11579, %v11579
  %v11786 = vmul.f32 %v11580, %v11580
  %v11787 = vmul.f32 %v11581, %v11581
  %v11788 = vmul.f32 %v11582, %v11582
  %v11789 = vmul.f32 %v11583, %v11583
  %v11790 = vmul.f32 %v11584, %v11584
  %v11791 = vmul.f32 %v11585, %v11585
  %v11792 = vmul.f32 %v11586, %v11586
  %v11793 = vmul.f32 %v11587, %v11587
  %v11794 = vmul.f32 %v11588, %v11588
  %v11795 = vmul.f32 %v11589, %v11589
  %v11796 = vmul.f32 %v11590, %v11590
  %v11797 = vmul.f32 %v11591, %v11591
  %v11798 = vmul.f32 %v11592, %v11592
  %v11799 = vmul.f32 %v11593, %v11593
  %v11800 = vmul.f32 %v11594, %v11594
  %v11801 = vmul.f32 %v11595, %v11595
  %v11802 = vmul.f32 %v11596, %v11596
  %v11803 = vmul.f32 %v11597, %v11597
  %v11804 = vmul.f32 %v11598, %v11598
  %v11805 = vmul.f32 %v11599, %v11599
  %v11806 = vmul.f32 %v11600, %v11600
  %v11807 = vmul.f32 %v11601, %v11601
  %v11808 = vmul.f32 %v11602, %v11602
  %v11809 = vmul.f32 %v11603, %v11603
  %v11810 = vmul.f32 %v11604, %v11604
  %v11811 = vmul.f32 %v11605, %v11605
  %v11812 = vmul.f32 %v11606, %v11606
  %v11813 = vmul.f32 %v11607, %v11607
  %v11814 = vmul.f32 %v11608, %v11608
  %v11815 = vmul.f32 %v11609, %v11609
  %v11816 = vmul.f32 %v11610, %v11610
  %v11817 = vmul.f32 %v11611, %v11611
  %v11818 = vmul.f32 %v11612, %v11612
  %v11819 = vmul.f32 %v11613, %v11613
  %v11820 = vmul.f32 %v11614, %v11614
  %v11821 = vmul.f32 %v11615, %v11615
  %v11822 = vmul.f32 %v11616, %v11616
  %v11823 = vmul.f32 %v11617, %v11617
  %v11824 = vmul.f32 %v11618, %v11618
  %v11825 = vmul.f32 %v11619, %v11619
  %v11826 = vmul.f32 %v11620, %v11620
  %v11827 = vmul.f32 %v11621, %v11621
  %v11828 = vmul.f32 %v11622, %v11622
  %v11829 = vmul.f32 %v11623, %v11623
  %v11830 = vmul.f32 %v11624, %v11624
  %v11831 = vmul.f32 %v11625, %v11625
  %v11832 = vmul.f32 %v11626, %v11626
  %v11833 = vmul.f32 %v11627, %v11627
  %v11834 = vmul.f32 %v11628, %v11628
  %v11835 = vmul.f32 %v11629, %v11629
  %v11836 = vmul.f32 %v11630, %v11630
  %v11837 = vmul.f32 %v11631, %v11631
  %v11838 = vmul.f32 %v11632, %v11632
  %v11839 = vmul.f32 %v11633, %v11633
  %v11840 = vmul.f32 %v11634, %v11634
  %11841 = vmatprep.subr.mxu0 0.0
  %11842 = vmatpush1.msra.mxu0 %v11777
  %11843 = vmatprep.subr.mxu0 0.0
  %11844 = vmatpush1.msra.mxu0 %v11778
  %11845 = vmatprep.subr.mxu0 0.0
  %11846 = vmatpush1.msra.mxu0 %v11779
  %11847 = vmatprep.subr.mxu0 0.0
  %11848 = vmatpush1.msra.mxu0 %v11780
  %11849 = vmatprep.subr.mxu0 0.0
  %11850 = vmatpush1.msra.mxu0 %v11781
  %11851 = vmatprep.subr.mxu0 0.0
  %11852 = vmatpush1.msra.mxu0 %v11782
  %11853 = vmatprep.subr.mxu0 0.0
  %11854 = vmatpush1.msra.mxu0 %v11783
  %11855 = vmatprep.subr.mxu0 0.0
  %11856 = vmatpush1.msra.mxu0 %v11784
  %11857 = vmatprep.subr.mxu0 0.0
  %11858 = vmatpush1.msra.mxu0 %v11785
  %11859 = vmatprep.subr.mxu0 0.0
  %11860 = vmatpush1.msra.mxu0 %v11786
  %11861 = vmatprep.subr.mxu0 0.0
  %11862 = vmatpush1.msra.mxu0 %v11787
  %11863 = vmatprep.subr.mxu0 0.0
  %11864 = vmatpush1.msra.mxu0 %v11788
  %11865 = vmatprep.subr.mxu0 0.0
  %11866 = vmatpush1.msra.mxu0 %v11789
  %11867 = vmatprep.subr.mxu0 0.0
  %11868 = vmatpush1.msra.mxu0 %v11790
  %11869 = vmatprep.subr.mxu0 0.0
  %11870 = vmatpush1.msra.mxu0 %v11791
  %11871 = vmatprep.subr.mxu0 0.0
  %11872 = vmatpush1.msra.mxu0 %v11792
  %11873 = vmatprep.subr.mxu0 0.0
  %11874 = vmatpush1.msra.mxu0 %v11793
  %11875 = vmatprep.subr.mxu0 0.0
  %11876 = vmatpush1.msra.mxu0 %v11794
  %11877 = vmatprep.subr.mxu0 0.0
  %11878 = vmatpush1.msra.mxu0 %v11795
  %11879 = vmatprep.subr.mxu0 0.0
  %11880 = vmatpush1.msra.mxu0 %v11796
  %11881 = vmatprep.subr.mxu0 0.0
  %11882 = vmatpush1.msra.mxu0 %v11797
  %11883 = vmatprep.subr.mxu0 0.0
  %11884 = vmatpush1.msra.mxu0 %v11798
  %11885 = vmatprep.subr.mxu0 0.0
  %11886 = vmatpush1.msra.mxu0 %v11799
  %11887 = vmatprep.subr.mxu0 0.0
  %11888 = vmatpush1.msra.mxu0 %v11800
  %11889 = vmatprep.subr.mxu0 0.0
  %11890 = vmatpush1.msra.mxu0 %v11801
  %11891 = vmatprep.subr.mxu0 0.0
  %11892 = vmatpush1.msra.mxu0 %v11802
  %11893 = vmatprep.subr.mxu0 0.0
  %11894 = vmatpush1.msra.mxu0 %v11803
  %11895 = vmatprep.subr.mxu0 0.0
  %11896 = vmatpush1.msra.mxu0 %v11804
  %11897 = vmatprep.subr.mxu0 0.0
  %11898 = vmatpush1.msra.mxu0 %v11805
  %11899 = vmatprep.subr.mxu0 0.0
  %11900 = vmatpush1.msra.mxu0 %v11806
  %11901 = vmatprep.subr.mxu0 0.0
  %11902 = vmatpush1.msra.mxu0 %v11807
  %11903 = vmatprep.subr.mxu0 0.0
  %11904 = vmatpush1.msra.mxu0 %v11808
  %11905 = vmatprep.mubr.f32.mxu0 1.0
  %11906 = vmatmul.mubr.f32.gmra.mrb[0].mxu0 1.0
  %v11907 = vpop.f32.mrb[0].mxu0
  %v11908 = vadd.f32 0.0, %v11907
  %v11909 = vpop.f32.mrb[0].mxu0
  %11910 = vdwg.mxu0
  %11911 = vmatprep.subr.mxu0 0.0
  %11912 = vmatpush1.msra.mxu0 %v11809
  %11913 = vmatprep.subr.mxu0 0.0
  %11914 = vmatpush1.msra.mxu0 %v11810
  %11915 = vmatprep.subr.mxu0 0.0
  %11916 = vmatpush1.msra.mxu0 %v11811
  %11917 = vmatprep.subr.mxu0 0.0
  %11918 = vmatpush1.msra.mxu0 %v11812
  %11919 = vmatprep.subr.mxu0 0.0
  %11920 = vmatpush1.msra.mxu0 %v11813
  %11921 = vmatprep.subr.mxu0 0.0
  %11922 = vmatpush1.msra.mxu0 %v11814
  %11923 = vmatprep.subr.mxu0 0.0
  %11924 = vmatpush1.msra.mxu0 %v11815
  %11925 = vmatprep.subr.mxu0 0.0
  %11926 = vmatpush1.msra.mxu0 %v11816
  %11927 = vmatprep.subr.mxu0 0.0
  %11928 = vmatpush1.msra.mxu0 %v11817
  %11929 = vmatprep.subr.mxu0 0.0
  %11930 = vmatpush1.msra.mxu0 %v11818
  %11931 = vmatprep.subr.mxu0 0.0
  %11932 = vmatpush1.msra.mxu0 %v11819
  %11933 = vmatprep.subr.mxu0 0.0
  %11934 = vmatpush1.msra.mxu0 %v11820
  %11935 = vmatprep.subr.mxu0 0.0
  %11936 = vmatpush1.msra.mxu0 %v11821
  %11937 = vmatprep.subr.mxu0 0.0
  %11938 = vmatpush1.msra.mxu0 %v11822
  %11939 = vmatprep.subr.mxu0 0.0
  %11940 = vmatpush1.msra.mxu0 %v11823
  %11941 = vmatprep.subr.mxu0 0.0
  %11942 = vmatpush1.msra.mxu0 %v11824
  %11943 = vmatprep.subr.mxu0 0.0
  %11944 = vmatpush1.msra.mxu0 %v11825
  %11945 = vmatprep.subr.mxu0 0.0
  %11946 = vmatpush1.msra.mxu0 %v11826
  %11947 = vmatprep.subr.mxu0 0.0
  %11948 = vmatpush1.msra.mxu0 %v11827
  %11949 = vmatprep.subr.mxu0 0.0
  %11950 = vmatpush1.msra.mxu0 %v11828
  %11951 = vmatprep.subr.mxu0 0.0
  %11952 = vmatpush1.msra.mxu0 %v11829
  %11953 = vmatprep.subr.mxu0 0.0
  %11954 = vmatpush1.msra.mxu0 %v11830
  %11955 = vmatprep.subr.mxu0 0.0
  %11956 = vmatpush1.msra.mxu0 %v11831
  %11957 = vmatprep.subr.mxu0 0.0
  %11958 = vmatpush1.msra.mxu0 %v11832
  %11959 = vmatprep.subr.mxu0 0.0
  %11960 = vmatpush1.msra.mxu0 %v11833
  %11961 = vmatprep.subr.mxu0 0.0
  %11962 = vmatpush1.msra.mxu0 %v11834
  %11963 = vmatprep.subr.mxu0 0.0
  %11964 = vmatpush1.msra.mxu0 %v11835
  %11965 = vmatprep.subr.mxu0 0.0
  %11966 = vmatpush1.msra.mxu0 %v11836
  %11967 = vmatprep.subr.mxu0 0.0
  %11968 = vmatpush1.msra.mxu0 %v11837
  %11969 = vmatprep.subr.mxu0 0.0
  %11970 = vmatpush1.msra.mxu0 %v11838
  %11971 = vmatprep.subr.mxu0 0.0
  %11972 = vmatpush1.msra.mxu0 %v11839
  %11973 = vmatprep.subr.mxu0 0.0
  %11974 = vmatpush1.msra.mxu0 %v11840
  %11975 = vmatprep.mubr.f32.mxu0 1.0
  %11976 = vmatmul.mubr.f32.gmra.mrb[0].mxu0 1.0
  %v11977 = vpop.f32.mrb[0].mxu0
  %v11978 = vadd.f32 %v11908, %v11977
  %v11979 = vpop.f32.mrb[0].mxu0
  %11980 = vdwg.mxu0
  %v11981 = vmul.f32 %v11774, 0.001953125
  %v11982 = vmul.f32 %v11978, 0.001953125
  %v11983 = vmul.f32 %v11981, %v11981
  %v11984 = vsub.f32 %v11982, %v11983
  %v11985 = vmax.f32 %v11984, 0.0
  %v11986 = vadd.f32 %v11985, 1e-05
  %v11987 = vrsqrt.pop %v11986
  %v11988 = vmul.f32 %v11635, %v11987
  %v11989 = vmul.f32 %v11981, %v11988
  %v11990 = vsub.f32 %v11636, %v11989
  %v11992 = vlaneseq
  %v11993 = vshrl.u32 %v11992, 7
  %v11994 = vsub.s32 0, %v11993
  %v11995 = vrot.slane %v11988, %v11994
  %v11997 = vmul.f32 %v11571, %v11995
  %v11998 = vmul.f32 %v11572, %v11995
  %v11999 = vmul.f32 %v11573, %v11995
  %v12000 = vmul.f32 %v11574, %v11995
  %v12001 = vmul.f32 %v11575, %v11995
  %v12002 = vmul.f32 %v11576, %v11995
  %v12003 = vmul.f32 %v11577, %v11995
  %v12004 = vmul.f32 %v11578, %v11995
  %v12005 = vmul.f32 %v11579, %v11995
  %v12006 = vmul.f32 %v11580, %v11995
  %v12007 = vmul.f32 %v11581, %v11995
  %v12008 = vmul.f32 %v11582, %v11995
  %v12009 = vmul.f32 %v11583, %v11995
  %v12010 = vmul.f32 %v11584, %v11995
  %v12011 = vmul.f32 %v11585, %v11995
  %v12012 = vmul.f32 %v11586, %v11995
  %v12013 = vmul.f32 %v11587, %v11995
  %v12014 = vmul.f32 %v11588, %v11995
  %v12015 = vmul.f32 %v11589, %v11995
  %v12016 = vmul.f32 %v11590, %v11995
  %v12017 = vmul.f32 %v11591, %v11995
  %v12018 = vmul.f32 %v11592, %v11995
  %v12019 = vmul.f32 %v11593, %v11995
  %v12020 = vmul.f32 %v11594, %v11995
  %v12021 = vmul.f32 %v11595, %v11995
  %v12022 = vmul.f32 %v11596, %v11995
  %v12023 = vmul.f32 %v11597, %v11995
  %v12024 = vmul.f32 %v11598, %v11995
  %v12025 = vmul.f32 %v11599, %v11995
  %v12026 = vmul.f32 %v11600, %v11995
  %v12027 = vmul.f32 %v11601, %v11995
  %v12028 = vmul.f32 %v11602, %v11995
  %v12029 = vmul.f32 %v11603, %v11995
  %v12030 = vmul.f32 %v11604, %v11995
  %v12031 = vmul.f32 %v11605, %v11995
  %v12032 = vmul.f32 %v11606, %v11995
  %v12033 = vmul.f32 %v11607, %v11995
  %v12034 = vmul.f32 %v11608, %v11995
  %v12035 = vmul.f32 %v11609, %v11995
  %v12036 = vmul.f32 %v11610, %v11995
  %v12037 = vmul.f32 %v11611, %v11995
  %v12038 = vmul.f32 %v11612, %v11995
  %v12039 = vmul.f32 %v11613, %v11995
  %v12040 = vmul.f32 %v11614, %v11995
  %v12041 = vmul.f32 %v11615, %v11995
  %v12042 = vmul.f32 %v11616, %v11995
  %v12043 = vmul.f32 %v11617, %v11995
  %v12044 = vmul.f32 %v11618, %v11995
  %v12045 = vmul.f32 %v11619, %v11995
  %v12046 = vmul.f32 %v11620, %v11995
  %v12047 = vmul.f32 %v11621, %v11995
  %v12048 = vmul.f32 %v11622, %v11995
  %v12049 = vmul.f32 %v11623, %v11995
  %v12050 = vmul.f32 %v11624, %v11995
  %v12051 = vmul.f32 %v11625, %v11995
  %v12052 = vmul.f32 %v11626, %v11995
  %v12053 = vmul.f32 %v11627, %v11995
  %v12054 = vmul.f32 %v11628, %v11995
  %v12055 = vmul.f32 %v11629, %v11995
  %v12056 = vmul.f32 %v11630, %v11995
  %v12057 = vmul.f32 %v11631, %v11995
  %v12058 = vmul.f32 %v11632, %v11995
  %v12059 = vmul.f32 %v11633, %v11995
  %v12060 = vmul.f32 %v11634, %v11995
  %v12062 = vlaneseq
  %v12063 = vshrl.u32 %v12062, 7
  %v12064 = vsub.s32 0, %v12063
  %v12065 = vrot.slane %v11990, %v12064
  %v12067 = vadd.f32 %v11997, %v12065
  %v12068 = vadd.f32 %v11998, %v12065
  %v12069 = vadd.f32 %v11999, %v12065
  %v12070 = vadd.f32 %v12000, %v12065
  %v12071 = vadd.f32 %v12001, %v12065
  %v12072 = vadd.f32 %v12002, %v12065
  %v12073 = vadd.f32 %v12003, %v12065
  %v12074 = vadd.f32 %v12004, %v12065
  %v12075 = vadd.f32 %v12005, %v12065
  %v12076 = vadd.f32 %v12006, %v12065
  %v12077 = vadd.f32 %v12007, %v12065
  %v12078 = vadd.f32 %v12008, %v12065
  %v12079 = vadd.f32 %v12009, %v12065
  %v12080 = vadd.f32 %v12010, %v12065
  %v12081 = vadd.f32 %v12011, %v12065
  %v12082 = vadd.f32 %v12012, %v12065
  %v12083 = vadd.f32 %v12013, %v12065
  %v12084 = vadd.f32 %v12014, %v12065
  %v12085 = vadd.f32 %v12015, %v12065
  %v12086 = vadd.f32 %v12016, %v12065
  %v12087 = vadd.f32 %v12017, %v12065
  %v12088 = vadd.f32 %v12018, %v12065
  %v12089 = vadd.f32 %v12019, %v12065
  %v12090 = vadd.f32 %v12020, %v12065
  %v12091 = vadd.f32 %v12021, %v12065
  %v12092 = vadd.f32 %v12022, %v12065
  %v12093 = vadd.f32 %v12023, %v12065
  %v12094 = vadd.f32 %v12024, %v12065
  %v12095 = vadd.f32 %v12025, %v12065
  %v12096 = vadd.f32 %v12026, %v12065
  %v12097 = vadd.f32 %v12027, %v12065
  %v12098 = vadd.f32 %v12028, %v12065
  %v12099 = vadd.f32 %v12029, %v12065
  %v12100 = vadd.f32 %v12030, %v12065
  %v12101 = vadd.f32 %v12031, %v12065
  %v12102 = vadd.f32 %v12032, %v12065
  %v12103 = vadd.f32 %v12033, %v12065
  %v12104 = vadd.f32 %v12034, %v12065
  %v12105 = vadd.f32 %v12035, %v12065
  %v12106 = vadd.f32 %v12036, %v12065
  %v12107 = vadd.f32 %v12037, %v12065
  %v12108 = vadd.f32 %v12038, %v12065
  %v12109 = vadd.f32 %v12039, %v12065
  %v12110 = vadd.f32 %v12040, %v12065
  %v12111 = vadd.f32 %v12041, %v12065
  %v12112 = vadd.f32 %v12042, %v12065
  %v12113 = vadd.f32 %v12043, %v12065
  %v12114 = vadd.f32 %v12044, %v12065
  %v12115 = vadd.f32 %v12045, %v12065
  %v12116 = vadd.f32 %v12046, %v12065
  %v12117 = vadd.f32 %v12047, %v12065
  %v12118 = vadd.f32 %v12048, %v12065
  %v12119 = vadd.f32 %v12049, %v12065
  %v12120 = vadd.f32 %v12050, %v12065
  %v12121 = vadd.f32 %v12051, %v12065
  %v12122 = vadd.f32 %v12052, %v12065
  %v12123 = vadd.f32 %v12053, %v12065
  %v12124 = vadd.f32 %v12054, %v12065
  %v12125 = vadd.f32 %v12055, %v12065
  %v12126 = vadd.f32 %v12056, %v12065
  %v12127 = vadd.f32 %v12057, %v12065
  %v12128 = vadd.f32 %v12058, %v12065
  %v12129 = vadd.f32 %v12059, %v12065
  %v12130 = vadd.f32 %v12060, %v12065
  %v12131 = vmax.f32 %v12067, 0.0
  %v12132 = vmax.f32 %v12068, 0.0
  %v12133 = vmax.f32 %v12069, 0.0
  %v12134 = vmax.f32 %v12070, 0.0
  %v12135 = vmax.f32 %v12071, 0.0
  %v12136 = vmax.f32 %v12072, 0.0
  %v12137 = vmax.f32 %v12073, 0.0
  %v12138 = vmax.f32 %v12074, 0.0
  %v12139 = vmax.f32 %v12075, 0.0
  %v12140 = vmax.f32 %v12076, 0.0
  %v12141 = vmax.f32 %v12077, 0.0
  %v12142 = vmax.f32 %v12078, 0.0
  %v12143 = vmax.f32 %v12079, 0.0
  %v12144 = vmax.f32 %v12080, 0.0
  %v12145 = vmax.f32 %v12081, 0.0
  %v12146 = vmax.f32 %v12082, 0.0
  %v12147 = vmax.f32 %v12083, 0.0
  %v12148 = vmax.f32 %v12084, 0.0
  %v12149 = vmax.f32 %v12085, 0.0
  %v12150 = vmax.f32 %v12086, 0.0
  %v12151 = vmax.f32 %v12087, 0.0
  %v12152 = vmax.f32 %v12088, 0.0
  %v12153 = vmax.f32 %v12089, 0.0
  %v12154 = vmax.f32 %v12090, 0.0
  %v12155 = vmax.f32 %v12091, 0.0
  %v12156 = vmax.f32 %v12092, 0.0
  %v12157 = vmax.f32 %v12093, 0.0
  %v12158 = vmax.f32 %v12094, 0.0
  %v12159 = vmax.f32 %v12095, 0.0
  %v12160 = vmax.f32 %v12096, 0.0
  %v12161 = vmax.f32 %v12097, 0.0
  %v12162 = vmax.f32 %v12098, 0.0
  %v12163 = vmax.f32 %v12099, 0.0
  %v12164 = vmax.f32 %v12100, 0.0
  %v12165 = vmax.f32 %v12101, 0.0
  %v12166 = vmax.f32 %v12102, 0.0
  %v12167 = vmax.f32 %v12103, 0.0
  %v12168 = vmax.f32 %v12104, 0.0
  %v12169 = vmax.f32 %v12105, 0.0
  %v12170 = vmax.f32 %v12106, 0.0
  %v12171 = vmax.f32 %v12107, 0.0
  %v12172 = vmax.f32 %v12108, 0.0
  %v12173 = vmax.f32 %v12109, 0.0
  %v12174 = vmax.f32 %v12110, 0.0
  %v12175 = vmax.f32 %v12111, 0.0
  %v12176 = vmax.f32 %v12112, 0.0
  %v12177 = vmax.f32 %v12113, 0.0
  %v12178 = vmax.f32 %v12114, 0.0
  %v12179 = vmax.f32 %v12115, 0.0
  %v12180 = vmax.f32 %v12116, 0.0
  %v12181 = vmax.f32 %v12117, 0.0
  %v12182 = vmax.f32 %v12118, 0.0
  %v12183 = vmax.f32 %v12119, 0.0
  %v12184 = vmax.f32 %v12120, 0.0
  %v12185 = vmax.f32 %v12121, 0.0
  %v12186 = vmax.f32 %v12122, 0.0
  %v12187 = vmax.f32 %v12123, 0.0
  %v12188 = vmax.f32 %v12124, 0.0
  %v12189 = vmax.f32 %v12125, 0.0
  %v12190 = vmax.f32 %v12126, 0.0
  %v12191 = vmax.f32 %v12127, 0.0
  %v12192 = vmax.f32 %v12128, 0.0
  %v12193 = vmax.f32 %v12129, 0.0
  %v12194 = vmax.f32 %v12130, 0.0
  %12195 = vst [vmem:[%s7] sm:$0xff] %v12131
  %12196 = vst [vmem:[%s7 + $0x8] sm:$0xff] %v12132
  %12197 = vst [vmem:[%s7 + $0x10] sm:$0xff] %v12133
  %12198 = vst [vmem:[%s7 + $0x18] sm:$0xff] %v12134
  %12199 = vst [vmem:[%s7 + $0x20] sm:$0xff] %v12135
  %12200 = vst [vmem:[%s7 + $0x28] sm:$0xff] %v12136
  %12201 = vst [vmem:[%s7 + $0x30] sm:$0xff] %v12137
  %12202 = vst [vmem:[%s7 + $0x38] sm:$0xff] %v12138
  %12203 = vst [vmem:[%s7 + $0x40] sm:$0xff] %v12139
  %12204 = vst [vmem:[%s7 + $0x48] sm:$0xff] %v12140
  %12205 = vst [vmem:[%s7 + $0x50] sm:$0xff] %v12141
  %12206 = vst [vmem:[%s7 + $0x58] sm:$0xff] %v12142
  %12207 = vst [vmem:[%s7 + $0x60] sm:$0xff] %v12143
  %12208 = vst [vmem:[%s7 + $0x68] sm:$0xff] %v12144
  %12209 = vst [vmem:[%s7 + $0x70] sm:$0xff] %v12145
  %12210 = vst [vmem:[%s7 + $0x78] sm:$0xff] %v12146
  %12211 = vst [vmem:[%s7 + $0x80] sm:$0xff] %v12147
  %12212 = vst [vmem:[%s7 + $0x88] sm:$0xff] %v12148
  %12213 = vst [vmem:[%s7 + $0x90] sm:$0xff] %v12149
  %12214 = vst [vmem:[%s7 + $0x98] sm:$0xff] %v12150
  %12215 = vst [vmem:[%s7 + $0xa0] sm:$0xff] %v12151
  %12216 = vst [vmem:[%s7 + $0xa8] sm:$0xff] %v12152
  %12217 = vst [vmem:[%s7 + $0xb0] sm:$0xff] %v12153
  %12218 = vst [vmem:[%s7 + $0xb8] sm:$0xff] %v12154
  %12219 = vst [vmem:[%s7 + $0xc0] sm:$0xff] %v12155
  %12220 = vst [vmem:[%s7 + $0xc8] sm:$0xff] %v12156
  %12221 = vst [vmem:[%s7 + $0xd0] sm:$0xff] %v12157
  %12222 = vst [vmem:[%s7 + $0xd8] sm:$0xff] %v12158
  %12223 = vst [vmem:[%s7 + $0xe0] sm:$0xff] %v12159
  %12224 = vst [vmem:[%s7 + $0xe8] sm:$0xff] %v12160
  %12225 = vst [vmem:[%s7 + $0xf0] sm:$0xff] %v12161
  %12226 = vst [vmem:[%s7 + $0xf8] sm:$0xff] %v12162
  %12227 = vst [vmem:[%s7 + $0x100] sm:$0xff] %v12163
  %12228 = vst [vmem:[%s7 + $0x108] sm:$0xff] %v12164
  %12229 = vst [vmem:[%s7 + $0x110] sm:$0xff] %v12165
  %12230 = vst [vmem:[%s7 + $0x118] sm:$0xff] %v12166
  %12231 = vst [vmem:[%s7 + $0x120] sm:$0xff] %v12167
  %12232 = vst [vmem:[%s7 + $0x128] sm:$0xff] %v12168
  %12233 = vst [vmem:[%s7 + $0x130] sm:$0xff] %v12169
  %12234 = vst [vmem:[%s7 + $0x138] sm:$0xff] %v12170
  %12235 = vst [vmem:[%s7 + $0x140] sm:$0xff] %v12171
  %12236 = vst [vmem:[%s7 + $0x148] sm:$0xff] %v12172
  %12237 = vst [vmem:[%s7 + $0x150] sm:$0xff] %v12173
  %12238 = vst [vmem:[%s7 + $0x158] sm:$0xff] %v12174
  %12239 = vst [vmem:[%s7 + $0x160] sm:$0xff] %v12175
  %12240 = vst [vmem:[%s7 + $0x168] sm:$0xff] %v12176
  %12241 = vst [vmem:[%s7 + $0x170] sm:$0xff] %v12177
  %12242 = vst [vmem:[%s7 + $0x178] sm:$0xff] %v12178
  %12243 = vst [vmem:[%s7 + $0x180] sm:$0xff] %v12179
  %12244 = vst [vmem:[%s7 + $0x188] sm:$0xff] %v12180
  %12245 = vst [vmem:[%s7 + $0x190] sm:$0xff] %v12181
  %12246 = vst [vmem:[%s7 + $0x198] sm:$0xff] %v12182
  %12247 = vst [vmem:[%s7 + $0x1a0] sm:$0xff] %v12183
  %12248 = vst [vmem:[%s7 + $0x1a8] sm:$0xff] %v12184
  %12249 = vst [vmem:[%s7 + $0x1b0] sm:$0xff] %v12185
  %12250 = vst [vmem:[%s7 + $0x1b8] sm:$0xff] %v12186
  %12251 = vst [vmem:[%s7 + $0x1c0] sm:$0xff] %v12187
  %12252 = vst [vmem:[%s7 + $0x1c8] sm:$0xff] %v12188
  %12253 = vst [vmem:[%s7 + $0x1d0] sm:$0xff] %v12189
  %12254 = vst [vmem:[%s7 + $0x1d8] sm:$0xff] %v12190
  %12255 = vst [vmem:[%s7 + $0x1e0] sm:$0xff] %v12191
  %12256 = vst [vmem:[%s7 + $0x1e8] sm:$0xff] %v12192
  %12257 = vst [vmem:[%s7 + $0x1f0] sm:$0xff] %v12193
  %12258 = vst [vmem:[%s7 + $0x1f8] sm:$0xff] %v12194
  // Predicated region
  $region30: #{bottleneck_forward.1} parent=0 // pred_check
    _
  $region31: #{bottleneck_forward.1} parent=0 // pred_check_branch
    %12260 = sbr.rel (0) target = $region33
  $region32: #{bottleneck_forward.1} parent=0 // pred_region
    _
  $region33: #{bottleneck_forward.1} parent=0 // pred_fallthru
    _
  // Predicated region
  $region34: #{bottleneck_forward.1} parent=0 // pred_check
    _
  $region35: #{bottleneck_forward.1} parent=0 // pred_check_branch
    %12262 = sbr.rel (0) target = $region37
  $region36: #{bottleneck_forward.1} parent=0 // pred_region
    _
  $region37: #{bottleneck_forward.1} parent=0 // pred_fallthru
    _

</llo_original>
